<compile_context>
chip_gen: v7x
topology: tpu7x:2x2x1
jax: 0.10.0
libtpu: 0.0.40
codegen_flags: <defaults>
</compile_context>

<pallas_src>
import math

import numpy as np
import jax
import jax.numpy as jnp
from jax import lax
from jax.experimental import pallas as pl
from jax.experimental.pallas import tpu as pltpu


# ----------------------------------------------------------------------------
# fused whole-network kernel
# ----------------------------------------------------------------------------
def _build_kernel(cfg):
    units = cfg["units"]          # 17 conv descriptors (static python dicts)
    blocks = cfg["blocks"]        # 8 BasicBlock descriptors ({"stride": 1|2})
    R0, L0 = cfg["R0"], cfg["L0"]
    N, n_lm, k = cfg["N"], cfg["n_lm"], cfg["k"]
    Npool, n_res = cfg["Npool"], cfg["n_res"]

    def kernel(x_ref, y_ref, w_ref, aux_ref, feat_ref, pred_ref, mask_ref):
        # per-resolution boundary-mask rows (precomputed host-side, f32 [1, R0]);
        # loaded once and reused by every conv at that resolution.
        masks = [(aux_ref[Npool + 2 * r:Npool + 2 * r + 1, :],
                  aux_ref[Npool + 2 * r + 1:Npool + 2 * r + 2, :])
                 for r in range(n_res)]

        def conv_unit(x, u, r):
            """K=3 conv (+ fused BN scale, + fused 1x1 shortcut rows) at dilation 2^r.

            x: [Cin, R0] f32.  Returns [rows, R0] f32 (bias already added)."""
            s = 1 << r
            ml, mr = masks[r]
            xm1 = pltpu.roll(x, s, axis=1) * ml           # x[:, p - s], boundary-zeroed
            xp1 = pltpu.roll(x, R0 - s, axis=1) * mr      # x[:, p + s], boundary-zeroed
            stacked = jnp.concatenate([xm1, x, xp1], axis=0)          # [3*Cin, R0]
            wall = w_ref[u["off"]:u["off"] + u["rows"], 0:u["kt"]]    # static slice
            taps = wall[:, 0:u["kt"] - 1].astype(jnp.bfloat16)        # [rows, 3*Cin]
            bias = wall[:, u["kt"] - 1:u["kt"]]                       # [rows, 1] f32
            y = jnp.dot(taps, stacked.astype(jnp.bfloat16),
                        preferred_element_type=jnp.float32)
            return y + bias

        # ---- stem: conv1 + bn1 + relu ---------------------------------------
        r = 0
        x = jnp.maximum(conv_unit(x_ref[...], units[0], r), 0.0)     # [dim, R0]

        # ---- 4 layers x 2 BasicBlocks ----------------------------------------
        ui = 1
        for blk in blocks:
            u1, u2 = units[ui], units[ui + 1]
            ui += 2
            cout = u1["cout"]
            y1 = conv_unit(x, u1, r)                 # conv1 (+ fused 1x1 shortcut rows)
            h = jnp.maximum(y1[:cout], 0.0)
            sc = y1[cout:] if u1["fused_sc"] else x  # identity shortcut otherwise
            if blk["stride"] == 2:
                r += 1                               # output lives on the 2x-dilated grid
            x = jnp.maximum(conv_unit(h, u2, r) + sc, 0.0)

        # ---- avg_pool1d(4) + gather of real samples + transpose (via one dot) --
        # TODO(synk): generic channel-major flatten for avg_pool output length > 1
        #             (only the Lp == 1 path is implemented).
        pt = aux_ref[0:Npool, :].astype(jnp.bfloat16)                # [Npool, R0]
        feat = lax.dot_general(pt, x.astype(jnp.bfloat16),
                               (((1,), (1,)), ((), ())),
                               preferred_element_type=jnp.float32)   # [Npool, C]
        feature = feat[:N, :]
        feat_ref[...] = feature

        # ---- adjacency (L1-normalized) + prediction ---------------------------
        f_lm = feature[:n_lm, :]
        f_tg = feature[n_lm:, :]
        adj = lax.dot_general(f_tg, f_lm, (((1,), (1,)), ((), ())),
                              preferred_element_type=jnp.float32)    # [n_tg, n_lm]
        adj = adj / jnp.maximum(jnp.sum(jnp.abs(adj), axis=1, keepdims=True), 1e-12)
        yp = y_ref[...]                                              # [N, 128] (cols >=2 are 0)
        pred_ref[...] = jnp.dot(adj, yp[:n_lm, :],
                                preferred_element_type=jnp.float32)  # [n_tg, 128]

        # ---- squared pairwise distances + kNN mask ----------------------------
        g = lax.dot_general(yp, yp, (((1,), (1,)), ((), ())),
                            preferred_element_type=jnp.float32)      # [N, N]
        yy = yp * yp
        sq_i = jnp.sum(yy, axis=1, keepdims=True)                    # [N, 1]
        sq_j = lax.dot_general(jnp.ones((1, yy.shape[1]), jnp.float32), yy,
                               (((1,), (1,)), ((), ())),
                               preferred_element_type=jnp.float32)   # [1, N]
        d0 = jnp.maximum(sq_i + sq_j - 2.0 * g, 0.0)
        col = lax.broadcasted_iota(jnp.int32, (N, N), 1).astype(jnp.float32)

        def knn_step(_, carry):                      # k smallest, ties -> lowest index
            d, m = carry
            mn = jnp.min(d, axis=1, keepdims=True)
            cand = jnp.where(d <= mn, col, jnp.float32(N))
            j = jnp.min(cand, axis=1, keepdims=True)
            sel = col == j
            return jnp.where(sel, jnp.float32(1e30), d), jnp.where(sel, 1.0, m)

        _, mask = lax.fori_loop(0, k, knn_step,
                                (d0, jnp.zeros((N, N), jnp.float32)),
                                unroll=True)
        mask_ref[...] = mask

    return kernel


# ----------------------------------------------------------------------------
# host-side constant packing
# ----------------------------------------------------------------------------
def pack_weights(params):
    """Fold BN into the conv weights, fuse 1x1 shortcuts, and pack everything into
    one lane-dense f32 slab [total_rows, 128] plus static per-conv descriptors."""
    units, blobs, blocks = [], [], []

    def add_unit(w, scale, bias, wsc=None, ssc=None, bsc=None):
        cout, cin, kk = w.shape
        assert kk == 3
        kt = 3 * cin + 1                       # tap0|tap1|tap2 columns + bias column
        rows = cout * (2 if wsc is not None else 1)
        alloc = ((rows + 7) // 8) * 8          # keep every block 8-row (tile) aligned
        blk = jnp.zeros((alloc, 128), jnp.float32)
        wm = jnp.transpose(scale[:, None, None] * w, (0, 2, 1)).reshape(cout, 3 * cin)
        blk = blk.at[:cout, :3 * cin].set(wm)
        blk = blk.at[:cout, 3 * cin].set(bias)
        if wsc is not None:                    # 1x1 shortcut rides as extra rows, center tap
            blk = blk.at[cout:rows, cin:2 * cin].set(ssc[:, None] * wsc[:, :, 0])
            blk = blk.at[cout:rows, 3 * cin].set(bsc)
        units.append(dict(cin=int(cin), cout=int(cout), rows=int(rows), kt=int(kt),
                          fused_sc=wsc is not None, off=None))
        blobs.append(blk)

    add_unit(params["conv1_w"], params["conv1_s"], params["conv1_b"])
    for layer in params["layers"]:
        for b in layer:
            blocks.append(dict(stride=int(b["stride"])))
            add_unit(b["w1"], b["s1"], b["b1"], b.get("wsc"), b.get("ssc"), b.get("bsc"))
            add_unit(b["w2"], b["s2"], b["b2"])

    off = 0
    for u, blk in zip(units, blobs):
        u["off"] = off
        off += blk.shape[0]
    w_slab = jnp.concatenate(blobs, axis=0)
    return w_slab, units, blocks


def build_aux(N, Np, L0, n_res):
    """Aux slab [Npool + 2*n_res (+pad), R0]: rows 0..Npool-1 = avg_pool(4)+flatten
    matrix (only first N rows non-zero), then 2 boundary-mask rows per resolution."""
    R0 = Np * L0
    Npool = ((N + 7) // 8) * 8
    pos = np.arange(R0) % L0
    s_fin = 1 << (n_res - 1)
    PT = np.zeros((Npool, R0), np.float32)
    for n in range(N):
        for t in range(4):                     # avg_pool1d(kernel=4) over positions 0..3
            PT[n, n * L0 + t * s_fin] = 0.25
    msk = np.zeros((2 * n_res, R0), np.float32)
    for r in range(n_res):
        s = 1 << r
        msk[2 * r] = (pos >= s).astype(np.float32)        # left-tap in-bounds
        msk[2 * r + 1] = (pos < L0 - s).astype(np.float32)  # right-tap in-bounds
    aux = np.concatenate([PT, msk], axis=0)
    pad = (-aux.shape[0]) % 8
    if pad:
        aux = np.concatenate([aux, np.zeros((pad, R0), np.float32)], axis=0)
    return jnp.asarray(aux), Npool


# ----------------------------------------------------------------------------
# synthetic parameter init (PyTorch layouts; BN pre-folded to eval-mode scale/bias)
# ----------------------------------------------------------------------------
def init_conv(key, cout, cin, k):
    return jax.random.normal(key, (cout, cin, k), jnp.float32) * (1.0 / math.sqrt(cin * k))


def init_bn(key, c):
    k1, k2, k3, k4 = jax.random.split(key, 4)
    gamma = 1.0 + 0.1 * jax.random.normal(k1, (c,), jnp.float32)
    beta = 0.1 * jax.random.normal(k2, (c,), jnp.float32)
    mean = 0.1 * jax.random.normal(k3, (c,), jnp.float32)
    var = 1.0 + 0.1 * jnp.abs(jax.random.normal(k4, (c,), jnp.float32))
    scale = gamma * lax.rsqrt(var + 1e-5)
    bias = beta - mean * scale
    return scale, bias


def init_params(key, dim, dim_z):
    keys = iter(jax.random.split(key, 64))
    p = {"strides": [1, 2, 2, 2]}
    p["conv1_w"] = init_conv(next(keys), dim, 1, 3)
    p["conv1_s"], p["conv1_b"] = init_bn(next(keys), dim)
    chans = [dim, dim_z // 8, dim_z // 4, dim_z // 2, dim_z]
    layers = []
    for li in range(4):
        cin, cout, st = chans[li], chans[li + 1], p["strides"][li]
        blks = []
        for s in (st, 1):
            b = {"stride": s, "w1": init_conv(next(keys), cout, cin, 3)}
            b["s1"], b["b1"] = init_bn(next(keys), cout)
            b["w2"] = init_conv(next(keys), cout, cout, 3)
            b["s2"], b["b2"] = init_bn(next(keys), cout)
            if s != 1 or cin != cout:
                b["wsc"] = init_conv(next(keys), cout, cin, 1)
                b["ssc"], b["bsc"] = init_bn(next(keys), cout)
            blks.append(b)
            cin = cout
        layers.append(blks)
    p["layers"] = layers
    return p


# ----------------------------------------------------------------------------
# model forward (one fused pallas_call)
# ----------------------------------------------------------------------------
def rip_geo_contrast_forward(params, lm_X, lm_Y, tg_X, tg_Y, lm_delay, tg_delay):
    n_lm, n_tg = lm_Y.shape[0], tg_Y.shape[0]
    N = n_lm + n_tg

    lm_feat = jnp.concatenate([lm_X, lm_delay[:, None]], axis=1)
    tg_feat = jnp.concatenate([tg_X, tg_delay[:, None]], axis=1)
    X = jnp.concatenate([lm_feat, tg_feat], axis=0).astype(jnp.float32)   # [N, L0]
    Y = jnp.concatenate([lm_Y, tg_Y], axis=0).astype(jnp.float32)         # [N, 2]
    L0 = X.shape[1]

    n_s2 = sum(1 for s in params["strides"] if s == 2)
    assert L0 % (1 << n_s2) == 0, "stride-2 layers need length divisible by 2^#strides"
    L_final = L0 >> n_s2
    assert L_final >= 4, "avg_pool1d(4) needs final length >= 4"
    Lp = L_final // 4
    assert Lp == 1, "only the avg-pool output length == 1 path is implemented"
    n_res = n_s2 + 1

    # pad the batch so the flattened lane width Np*L0 is a multiple of 128
    align = max(1, 128 // math.gcd(128, L0))
    Np = ((N + align - 1) // align) * align
    R0 = Np * L0
    Xp = jnp.zeros((Np, L0), jnp.float32).at[:N].set(X)
    x_flat = Xp.reshape(1, R0)

    # coordinates padded to 128 lanes: distances are unchanged, pred matmul is lane-dense
    Ypad = jnp.zeros((N, 128), jnp.float32).at[:, :2].set(Y)

    w_slab, units, blocks = pack_weights(params)
    aux, Npool = build_aux(N, Np, L0, n_res)
    c_final = units[-1]["cout"]

    if N < 5:
        k = N
    elif N < 30:
        k = int(0.4 * N)
    else:
        k = int(0.1 * N)

    cfg = dict(N=N, n_lm=n_lm, R0=R0, L0=L0, k=k, Npool=Npool, n_res=n_res,
               units=units, blocks=blocks)

    inputs = [x_flat, Ypad, w_slab, aux]

    def _full_spec(a):
        shape = a.shape
        return pl.BlockSpec(shape, lambda i, _n=len(shape): (0,) * _n)

    out_shape = (jax.ShapeDtypeStruct((N, c_final * Lp), jnp.float32),
                 jax.ShapeDtypeStruct((n_tg, 128), jnp.float32),
                 jax.ShapeDtypeStruct((N, N), jnp.float32))
    out_specs = (pl.BlockSpec((N, c_final * Lp), lambda i: (0, 0)),
                 pl.BlockSpec((n_tg, 128), lambda i: (0, 0)),
                 pl.BlockSpec((N, N), lambda i: (0, 0)))

    feature, pred_pad, mask = pl.pallas_call(
        _build_kernel(cfg),
        out_shape=out_shape,
        grid=(1,),
        in_specs=[_full_spec(a) for a in inputs],
        out_specs=out_specs,
        compiler_params=pltpu.CompilerParams(
            dimension_semantics=("arbitrary",),
            vmem_limit_bytes=32 * 1024 * 1024),
    )(*inputs)

    return feature, pred_pad[:, :2], mask


# ----------------------------------------------------------------------------
# main
# ----------------------------------------------------------------------------
if __name__ == "__main__":
    key = jax.random.PRNGKey(0)
    keys = jax.random.split(key, 8)

    N_LM, N_TG, F = 16, 8, 31          # sequence length L0 = F + 1 = 32
    DIM, DIM_Z = 8, 32                 # channels: 8 -> 4 -> 8 -> 16 -> 32

    lm_X = jax.random.normal(keys[0], (N_LM, F), jnp.float32)
    lm_Y = jax.random.normal(keys[1], (N_LM, 2), jnp.float32)
    tg_X = jax.random.normal(keys[2], (N_TG, F), jnp.float32)
    tg_Y = jax.random.normal(keys[3], (N_TG, 2), jnp.float32)
    lm_delay = jax.random.normal(keys[4], (N_LM,), jnp.float32)
    tg_delay = jax.random.normal(keys[5], (N_TG,), jnp.float32)

    params = init_params(keys[6], DIM, DIM_Z)

    feature, pred, mask = rip_geo_contrast_forward(
        params, lm_X, lm_Y, tg_X, tg_Y, lm_delay, tg_delay)
    jax.block_until_ready((feature, pred, mask))

    N = N_LM + N_TG
    assert feature.shape == (N, DIM_Z), feature.shape
    assert pred.shape == (N_TG, 2), pred.shape
    assert mask.shape == (N, N), mask.shape
    assert bool(jnp.all(jnp.isfinite(feature))), "non-finite feature"
    assert bool(jnp.all(jnp.sum(mask, axis=1) == 9.0)), "kNN mask row sums wrong"

    print("KERNEL_OK")
</pallas_src>

<mosaic_0001>
module attributes {stable_mosaic.version = 11 : i64} {
  func.func @kernel(%arg0: i32, %arg1: memref<1x768xf32, #tpu.memory_space<vmem>>, %arg2: memref<24x128xf32, #tpu.memory_space<vmem>>, %arg3: memref<320x128xf32, #tpu.memory_space<vmem>>, %arg4: memref<32x768xf32, #tpu.memory_space<vmem>>, %arg5: memref<24x32xf32, #tpu.memory_space<vmem>>, %arg6: memref<8x128xf32, #tpu.memory_space<vmem>>, %arg7: memref<24x24xf32, #tpu.memory_space<vmem>>) attributes {dimension_semantics = [#tpu.dimension_semantics<arbitrary>], iteration_bounds = array<i64: 1>, scalar_prefetch = 0 : i64, scratch_operands = 0 : i64, tpu.core_type = #tpu.core_type<tc>, window_params = [{pipeline_mode = #tpu.pipeline_mode<synchronous>, transform_indices = @transform_0, window_bounds = array<i64: 1, 768>}, {pipeline_mode = #tpu.pipeline_mode<synchronous>, transform_indices = @transform_1, window_bounds = array<i64: 24, 128>}, {pipeline_mode = #tpu.pipeline_mode<synchronous>, transform_indices = @transform_2, window_bounds = array<i64: 320, 128>}, {pipeline_mode = #tpu.pipeline_mode<synchronous>, transform_indices = @transform_3, window_bounds = array<i64: 32, 768>}, {pipeline_mode = #tpu.pipeline_mode<synchronous>, transform_indices = @transform_4, window_bounds = array<i64: 24, 32>}, {pipeline_mode = #tpu.pipeline_mode<synchronous>, transform_indices = @transform_5, window_bounds = array<i64: 8, 128>}, {pipeline_mode = #tpu.pipeline_mode<synchronous>, transform_indices = @transform_6, window_bounds = array<i64: 24, 24>}]} {
    %c24 = arith.constant 24 : index
    %c0 = arith.constant 0 : index
    %0 = vector.load %arg4[%c24, %c0] : memref<32x768xf32, #tpu.memory_space<vmem>>, vector<1x768xf32>
    %c25 = arith.constant 25 : index
    %c0_0 = arith.constant 0 : index
    %1 = vector.load %arg4[%c25, %c0_0] : memref<32x768xf32, #tpu.memory_space<vmem>>, vector<1x768xf32>
    %c26 = arith.constant 26 : index
    %c0_1 = arith.constant 0 : index
    %2 = vector.load %arg4[%c26, %c0_1] : memref<32x768xf32, #tpu.memory_space<vmem>>, vector<1x768xf32>
    %c27 = arith.constant 27 : index
    %c0_2 = arith.constant 0 : index
    %3 = vector.load %arg4[%c27, %c0_2] : memref<32x768xf32, #tpu.memory_space<vmem>>, vector<1x768xf32>
    %c28 = arith.constant 28 : index
    %c0_3 = arith.constant 0 : index
    %4 = vector.load %arg4[%c28, %c0_3] : memref<32x768xf32, #tpu.memory_space<vmem>>, vector<1x768xf32>
    %c29 = arith.constant 29 : index
    %c0_4 = arith.constant 0 : index
    %5 = vector.load %arg4[%c29, %c0_4] : memref<32x768xf32, #tpu.memory_space<vmem>>, vector<1x768xf32>
    %c30 = arith.constant 30 : index
    %c0_5 = arith.constant 0 : index
    %6 = vector.load %arg4[%c30, %c0_5] : memref<32x768xf32, #tpu.memory_space<vmem>>, vector<1x768xf32>
    %c31 = arith.constant 31 : index
    %c0_6 = arith.constant 0 : index
    %7 = vector.load %arg4[%c31, %c0_6] : memref<32x768xf32, #tpu.memory_space<vmem>>, vector<1x768xf32>
    %c0_7 = arith.constant 0 : index
    %c0_8 = arith.constant 0 : index
    %8 = vector.load %arg1[%c0_7, %c0_8] : memref<1x768xf32, #tpu.memory_space<vmem>>, vector<1x768xf32>
    %c1_i32 = arith.constant 1 : i32
    %9 = tpu.dynamic_rotate %8 by %c1_i32 dim 1 : vector<1x768xf32>, i32 -> vector<1x768xf32>
    %10 = arith.mulf %9, %0 : vector<1x768xf32>
    %c767_i32 = arith.constant 767 : i32
    %11 = tpu.dynamic_rotate %8 by %c767_i32 dim 1 : vector<1x768xf32>, i32 -> vector<1x768xf32>
    %12 = arith.mulf %11, %1 : vector<1x768xf32>
    %13 = tpu.concatenate %10, %8, %12 in 0 : vector<1x768xf32>, vector<1x768xf32>, vector<1x768xf32> -> vector<3x768xf32>
    %c0_9 = arith.constant 0 : index
    %c0_10 = arith.constant 0 : index
    %14 = vector.load %arg3[%c0_9, %c0_10] : memref<320x128xf32, #tpu.memory_space<vmem>>, vector<8x4xf32>
    %15 = vector.extract_strided_slice %14 {offsets = [0, 0], sizes = [8, 3], strides = [1, 1]} : vector<8x4xf32> to vector<8x3xf32>
    %16 = arith.truncf %15 : vector<8x3xf32> to vector<8x3xbf16>
    %17 = vector.extract_strided_slice %14 {offsets = [0, 3], sizes = [8, 1], strides = [1, 1]} : vector<8x4xf32> to vector<8x1xf32>
    %18 = arith.truncf %13 : vector<3x768xf32> to vector<3x768xbf16>
    %cst = arith.constant dense<0.000000e+00> : vector<8x768xf32>
    %19 = tpu.matmul %16, %18, %cst {dimension_numbers = #tpu.dot_dimension_numbers<[1], [0], [0], [1], [0, 0, 1, 1], [], []>} : vector<8x3xbf16>, vector<3x768xbf16>, vector<8x768xf32> -> vector<8x768xf32>
    %20 = vector.broadcast %17 : vector<8x1xf32> to vector<8x768xf32>
    %21 = arith.addf %19, %20 : vector<8x768xf32>
    %cst_11 = arith.constant 0.000000e+00 : f32
    %22 = vector.broadcast %cst_11 : f32 to vector<8x768xf32>
    %23 = arith.maximumf %21, %22 : vector<8x768xf32>
    %c1_i32_12 = arith.constant 1 : i32
    %24 = tpu.dynamic_rotate %23 by %c1_i32_12 dim 1 : vector<8x768xf32>, i32 -> vector<8x768xf32>
    %25 = vector.broadcast %0 : vector<1x768xf32> to vector<8x768xf32>
    %26 = arith.mulf %24, %25 : vector<8x768xf32>
    %c767_i32_13 = arith.constant 767 : i32
    %27 = tpu.dynamic_rotate %23 by %c767_i32_13 dim 1 : vector<8x768xf32>, i32 -> vector<8x768xf32>
    %28 = vector.broadcast %1 : vector<1x768xf32> to vector<8x768xf32>
    %29 = arith.mulf %27, %28 : vector<8x768xf32>
    %30 = tpu.concatenate %26, %23, %29 in 0 : vector<8x768xf32>, vector<8x768xf32>, vector<8x768xf32> -> vector<24x768xf32>
    %c8 = arith.constant 8 : index
    %c0_14 = arith.constant 0 : index
    %31 = vector.load %arg3[%c8, %c0_14] : memref<320x128xf32, #tpu.memory_space<vmem>>, vector<8x25xf32>
    %32 = vector.extract_strided_slice %31 {offsets = [0, 0], sizes = [8, 24], strides = [1, 1]} : vector<8x25xf32> to vector<8x24xf32>
    %33 = arith.truncf %32 : vector<8x24xf32> to vector<8x24xbf16>
    %34 = vector.extract_strided_slice %31 {offsets = [0, 24], sizes = [8, 1], strides = [1, 1]} : vector<8x25xf32> to vector<8x1xf32>
    %35 = arith.truncf %30 : vector<24x768xf32> to vector<24x768xbf16>
    %cst_15 = arith.constant dense<0.000000e+00> : vector<8x768xf32>
    %36 = tpu.matmul %33, %35, %cst_15 {dimension_numbers = #tpu.dot_dimension_numbers<[1], [0], [0], [1], [0, 0, 1, 1], [], []>} : vector<8x24xbf16>, vector<24x768xbf16>, vector<8x768xf32> -> vector<8x768xf32>
    %37 = vector.broadcast %34 : vector<8x1xf32> to vector<8x768xf32>
    %38 = arith.addf %36, %37 : vector<8x768xf32>
    %39 = vector.extract_strided_slice %38 {offsets = [0, 0], sizes = [4, 768], strides = [1, 1]} : vector<8x768xf32> to vector<4x768xf32>
    %cst_16 = arith.constant 0.000000e+00 : f32
    %40 = vector.broadcast %cst_16 : f32 to vector<4x768xf32>
    %41 = arith.maximumf %39, %40 : vector<4x768xf32>
    %42 = vector.extract_strided_slice %38 {offsets = [4, 0], sizes = [4, 768], strides = [1, 1]} : vector<8x768xf32> to vector<4x768xf32>
    %c1_i32_17 = arith.constant 1 : i32
    %43 = tpu.dynamic_rotate %41 by %c1_i32_17 dim 1 : vector<4x768xf32>, i32 -> vector<4x768xf32>
    %44 = vector.broadcast %0 : vector<1x768xf32> to vector<4x768xf32>
    %45 = arith.mulf %43, %44 : vector<4x768xf32>
    %c767_i32_18 = arith.constant 767 : i32
    %46 = tpu.dynamic_rotate %41 by %c767_i32_18 dim 1 : vector<4x768xf32>, i32 -> vector<4x768xf32>
    %47 = vector.broadcast %1 : vector<1x768xf32> to vector<4x768xf32>
    %48 = arith.mulf %46, %47 : vector<4x768xf32>
    %49 = tpu.concatenate %45, %41, %48 in 0 : vector<4x768xf32>, vector<4x768xf32>, vector<4x768xf32> -> vector<12x768xf32>
    %c16 = arith.constant 16 : index
    %c0_19 = arith.constant 0 : index
    %50 = vector.load %arg3[%c16, %c0_19] : memref<320x128xf32, #tpu.memory_space<vmem>>, vector<4x13xf32>
    %51 = vector.extract_strided_slice %50 {offsets = [0, 0], sizes = [4, 12], strides = [1, 1]} : vector<4x13xf32> to vector<4x12xf32>
    %52 = arith.truncf %51 : vector<4x12xf32> to vector<4x12xbf16>
    %53 = vector.extract_strided_slice %50 {offsets = [0, 12], sizes = [4, 1], strides = [1, 1]} : vector<4x13xf32> to vector<4x1xf32>
    %54 = arith.truncf %49 : vector<12x768xf32> to vector<12x768xbf16>
    %cst_20 = arith.constant dense<0.000000e+00> : vector<4x768xf32>
    %55 = tpu.matmul %52, %54, %cst_20 {dimension_numbers = #tpu.dot_dimension_numbers<[1], [0], [0], [1], [0, 0, 1, 1], [], []>} : vector<4x12xbf16>, vector<12x768xbf16>, vector<4x768xf32> -> vector<4x768xf32>
    %56 = vector.broadcast %53 : vector<4x1xf32> to vector<4x768xf32>
    %57 = arith.addf %55, %56 : vector<4x768xf32>
    %58 = arith.addf %57, %42 : vector<4x768xf32>
    %cst_21 = arith.constant 0.000000e+00 : f32
    %59 = vector.broadcast %cst_21 : f32 to vector<4x768xf32>
    %60 = arith.maximumf %58, %59 : vector<4x768xf32>
    %c1_i32_22 = arith.constant 1 : i32
    %61 = tpu.dynamic_rotate %60 by %c1_i32_22 dim 1 : vector<4x768xf32>, i32 -> vector<4x768xf32>
    %62 = vector.broadcast %0 : vector<1x768xf32> to vector<4x768xf32>
    %63 = arith.mulf %61, %62 : vector<4x768xf32>
    %c767_i32_23 = arith.constant 767 : i32
    %64 = tpu.dynamic_rotate %60 by %c767_i32_23 dim 1 : vector<4x768xf32>, i32 -> vector<4x768xf32>
    %65 = vector.broadcast %1 : vector<1x768xf32> to vector<4x768xf32>
    %66 = arith.mulf %64, %65 : vector<4x768xf32>
    %67 = tpu.concatenate %63, %60, %66 in 0 : vector<4x768xf32>, vector<4x768xf32>, vector<4x768xf32> -> vector<12x768xf32>
    %c24_24 = arith.constant 24 : index
    %c0_25 = arith.constant 0 : index
    %68 = vector.load %arg3[%c24_24, %c0_25] : memref<320x128xf32, #tpu.memory_space<vmem>>, vector<4x13xf32>
    %69 = vector.extract_strided_slice %68 {offsets = [0, 0], sizes = [4, 12], strides = [1, 1]} : vector<4x13xf32> to vector<4x12xf32>
    %70 = arith.truncf %69 : vector<4x12xf32> to vector<4x12xbf16>
    %71 = vector.extract_strided_slice %68 {offsets = [0, 12], sizes = [4, 1], strides = [1, 1]} : vector<4x13xf32> to vector<4x1xf32>
    %72 = arith.truncf %67 : vector<12x768xf32> to vector<12x768xbf16>
    %cst_26 = arith.constant dense<0.000000e+00> : vector<4x768xf32>
    %73 = tpu.matmul %70, %72, %cst_26 {dimension_numbers = #tpu.dot_dimension_numbers<[1], [0], [0], [1], [0, 0, 1, 1], [], []>} : vector<4x12xbf16>, vector<12x768xbf16>, vector<4x768xf32> -> vector<4x768xf32>
    %74 = vector.broadcast %71 : vector<4x1xf32> to vector<4x768xf32>
    %75 = arith.addf %73, %74 : vector<4x768xf32>
    %cst_27 = arith.constant 0.000000e+00 : f32
    %76 = vector.broadcast %cst_27 : f32 to vector<4x768xf32>
    %77 = arith.maximumf %75, %76 : vector<4x768xf32>
    %c1_i32_28 = arith.constant 1 : i32
    %78 = tpu.dynamic_rotate %77 by %c1_i32_28 dim 1 : vector<4x768xf32>, i32 -> vector<4x768xf32>
    %79 = vector.broadcast %0 : vector<1x768xf32> to vector<4x768xf32>
    %80 = arith.mulf %78, %79 : vector<4x768xf32>
    %c767_i32_29 = arith.constant 767 : i32
    %81 = tpu.dynamic_rotate %77 by %c767_i32_29 dim 1 : vector<4x768xf32>, i32 -> vector<4x768xf32>
    %82 = vector.broadcast %1 : vector<1x768xf32> to vector<4x768xf32>
    %83 = arith.mulf %81, %82 : vector<4x768xf32>
    %84 = tpu.concatenate %80, %77, %83 in 0 : vector<4x768xf32>, vector<4x768xf32>, vector<4x768xf32> -> vector<12x768xf32>
    %c32 = arith.constant 32 : index
    %c0_30 = arith.constant 0 : index
    %85 = vector.load %arg3[%c32, %c0_30] : memref<320x128xf32, #tpu.memory_space<vmem>>, vector<4x13xf32>
    %86 = vector.extract_strided_slice %85 {offsets = [0, 0], sizes = [4, 12], strides = [1, 1]} : vector<4x13xf32> to vector<4x12xf32>
    %87 = arith.truncf %86 : vector<4x12xf32> to vector<4x12xbf16>
    %88 = vector.extract_strided_slice %85 {offsets = [0, 12], sizes = [4, 1], strides = [1, 1]} : vector<4x13xf32> to vector<4x1xf32>
    %89 = arith.truncf %84 : vector<12x768xf32> to vector<12x768xbf16>
    %cst_31 = arith.constant dense<0.000000e+00> : vector<4x768xf32>
    %90 = tpu.matmul %87, %89, %cst_31 {dimension_numbers = #tpu.dot_dimension_numbers<[1], [0], [0], [1], [0, 0, 1, 1], [], []>} : vector<4x12xbf16>, vector<12x768xbf16>, vector<4x768xf32> -> vector<4x768xf32>
    %91 = vector.broadcast %88 : vector<4x1xf32> to vector<4x768xf32>
    %92 = arith.addf %90, %91 : vector<4x768xf32>
    %93 = arith.addf %92, %60 : vector<4x768xf32>
    %cst_32 = arith.constant 0.000000e+00 : f32
    %94 = vector.broadcast %cst_32 : f32 to vector<4x768xf32>
    %95 = arith.maximumf %93, %94 : vector<4x768xf32>
    %c1_i32_33 = arith.constant 1 : i32
    %96 = tpu.dynamic_rotate %95 by %c1_i32_33 dim 1 : vector<4x768xf32>, i32 -> vector<4x768xf32>
    %97 = vector.broadcast %0 : vector<1x768xf32> to vector<4x768xf32>
    %98 = arith.mulf %96, %97 : vector<4x768xf32>
    %c767_i32_34 = arith.constant 767 : i32
    %99 = tpu.dynamic_rotate %95 by %c767_i32_34 dim 1 : vector<4x768xf32>, i32 -> vector<4x768xf32>
    %100 = vector.broadcast %1 : vector<1x768xf32> to vector<4x768xf32>
    %101 = arith.mulf %99, %100 : vector<4x768xf32>
    %102 = tpu.concatenate %98, %95, %101 in 0 : vector<4x768xf32>, vector<4x768xf32>, vector<4x768xf32> -> vector<12x768xf32>
    %c40 = arith.constant 40 : index
    %c0_35 = arith.constant 0 : index
    %103 = vector.load %arg3[%c40, %c0_35] : memref<320x128xf32, #tpu.memory_space<vmem>>, vector<16x13xf32>
    %104 = vector.extract_strided_slice %103 {offsets = [0, 0], sizes = [16, 12], strides = [1, 1]} : vector<16x13xf32> to vector<16x12xf32>
    %105 = arith.truncf %104 : vector<16x12xf32> to vector<16x12xbf16>
    %106 = vector.extract_strided_slice %103 {offsets = [0, 12], sizes = [16, 1], strides = [1, 1]} : vector<16x13xf32> to vector<16x1xf32>
    %107 = arith.truncf %102 : vector<12x768xf32> to vector<12x768xbf16>
    %cst_36 = arith.constant dense<0.000000e+00> : vector<16x768xf32>
    %108 = tpu.matmul %105, %107, %cst_36 {dimension_numbers = #tpu.dot_dimension_numbers<[1], [0], [0], [1], [0, 0, 1, 1], [], []>} : vector<16x12xbf16>, vector<12x768xbf16>, vector<16x768xf32> -> vector<16x768xf32>
    %109 = vector.broadcast %106 : vector<16x1xf32> to vector<16x768xf32>
    %110 = arith.addf %108, %109 : vector<16x768xf32>
    %111 = vector.extract_strided_slice %110 {offsets = [0, 0], sizes = [8, 768], strides = [1, 1]} : vector<16x768xf32> to vector<8x768xf32>
    %cst_37 = arith.constant 0.000000e+00 : f32
    %112 = vector.broadcast %cst_37 : f32 to vector<8x768xf32>
    %113 = arith.maximumf %111, %112 : vector<8x768xf32>
    %114 = vector.extract_strided_slice %110 {offsets = [8, 0], sizes = [8, 768], strides = [1, 1]} : vector<16x768xf32> to vector<8x768xf32>
    %c2_i32 = arith.constant 2 : i32
    %115 = tpu.dynamic_rotate %113 by %c2_i32 dim 1 : vector<8x768xf32>, i32 -> vector<8x768xf32>
    %116 = vector.broadcast %2 : vector<1x768xf32> to vector<8x768xf32>
    %117 = arith.mulf %115, %116 : vector<8x768xf32>
    %c766_i32 = arith.constant 766 : i32
    %118 = tpu.dynamic_rotate %113 by %c766_i32 dim 1 : vector<8x768xf32>, i32 -> vector<8x768xf32>
    %119 = vector.broadcast %3 : vector<1x768xf32> to vector<8x768xf32>
    %120 = arith.mulf %118, %119 : vector<8x768xf32>
    %121 = tpu.concatenate %117, %113, %120 in 0 : vector<8x768xf32>, vector<8x768xf32>, vector<8x768xf32> -> vector<24x768xf32>
    %c56 = arith.constant 56 : index
    %c0_38 = arith.constant 0 : index
    %122 = vector.load %arg3[%c56, %c0_38] : memref<320x128xf32, #tpu.memory_space<vmem>>, vector<8x25xf32>
    %123 = vector.extract_strided_slice %122 {offsets = [0, 0], sizes = [8, 24], strides = [1, 1]} : vector<8x25xf32> to vector<8x24xf32>
    %124 = arith.truncf %123 : vector<8x24xf32> to vector<8x24xbf16>
    %125 = vector.extract_strided_slice %122 {offsets = [0, 24], sizes = [8, 1], strides = [1, 1]} : vector<8x25xf32> to vector<8x1xf32>
    %126 = arith.truncf %121 : vector<24x768xf32> to vector<24x768xbf16>
    %cst_39 = arith.constant dense<0.000000e+00> : vector<8x768xf32>
    %127 = tpu.matmul %124, %126, %cst_39 {dimension_numbers = #tpu.dot_dimension_numbers<[1], [0], [0], [1], [0, 0, 1, 1], [], []>} : vector<8x24xbf16>, vector<24x768xbf16>, vector<8x768xf32> -> vector<8x768xf32>
    %128 = vector.broadcast %125 : vector<8x1xf32> to vector<8x768xf32>
    %129 = arith.addf %127, %128 : vector<8x768xf32>
    %130 = arith.addf %129, %114 : vector<8x768xf32>
    %cst_40 = arith.constant 0.000000e+00 : f32
    %131 = vector.broadcast %cst_40 : f32 to vector<8x768xf32>
    %132 = arith.maximumf %130, %131 : vector<8x768xf32>
    %c2_i32_41 = arith.constant 2 : i32
    %133 = tpu.dynamic_rotate %132 by %c2_i32_41 dim 1 : vector<8x768xf32>, i32 -> vector<8x768xf32>
    %134 = vector.broadcast %2 : vector<1x768xf32> to vector<8x768xf32>
    %135 = arith.mulf %133, %134 : vector<8x768xf32>
    %c766_i32_42 = arith.constant 766 : i32
    %136 = tpu.dynamic_rotate %132 by %c766_i32_42 dim 1 : vector<8x768xf32>, i32 -> vector<8x768xf32>
    %137 = vector.broadcast %3 : vector<1x768xf32> to vector<8x768xf32>
    %138 = arith.mulf %136, %137 : vector<8x768xf32>
    %139 = tpu.concatenate %135, %132, %138 in 0 : vector<8x768xf32>, vector<8x768xf32>, vector<8x768xf32> -> vector<24x768xf32>
    %c64 = arith.constant 64 : index
    %c0_43 = arith.constant 0 : index
    %140 = vector.load %arg3[%c64, %c0_43] : memref<320x128xf32, #tpu.memory_space<vmem>>, vector<8x25xf32>
    %141 = vector.extract_strided_slice %140 {offsets = [0, 0], sizes = [8, 24], strides = [1, 1]} : vector<8x25xf32> to vector<8x24xf32>
    %142 = arith.truncf %141 : vector<8x24xf32> to vector<8x24xbf16>
    %143 = vector.extract_strided_slice %140 {offsets = [0, 24], sizes = [8, 1], strides = [1, 1]} : vector<8x25xf32> to vector<8x1xf32>
    %144 = arith.truncf %139 : vector<24x768xf32> to vector<24x768xbf16>
    %cst_44 = arith.constant dense<0.000000e+00> : vector<8x768xf32>
    %145 = tpu.matmul %142, %144, %cst_44 {dimension_numbers = #tpu.dot_dimension_numbers<[1], [0], [0], [1], [0, 0, 1, 1], [], []>} : vector<8x24xbf16>, vector<24x768xbf16>, vector<8x768xf32> -> vector<8x768xf32>
    %146 = vector.broadcast %143 : vector<8x1xf32> to vector<8x768xf32>
    %147 = arith.addf %145, %146 : vector<8x768xf32>
    %cst_45 = arith.constant 0.000000e+00 : f32
    %148 = vector.broadcast %cst_45 : f32 to vector<8x768xf32>
    %149 = arith.maximumf %147, %148 : vector<8x768xf32>
    %c2_i32_46 = arith.constant 2 : i32
    %150 = tpu.dynamic_rotate %149 by %c2_i32_46 dim 1 : vector<8x768xf32>, i32 -> vector<8x768xf32>
    %151 = vector.broadcast %2 : vector<1x768xf32> to vector<8x768xf32>
    %152 = arith.mulf %150, %151 : vector<8x768xf32>
    %c766_i32_47 = arith.constant 766 : i32
    %153 = tpu.dynamic_rotate %149 by %c766_i32_47 dim 1 : vector<8x768xf32>, i32 -> vector<8x768xf32>
    %154 = vector.broadcast %3 : vector<1x768xf32> to vector<8x768xf32>
    %155 = arith.mulf %153, %154 : vector<8x768xf32>
    %156 = tpu.concatenate %152, %149, %155 in 0 : vector<8x768xf32>, vector<8x768xf32>, vector<8x768xf32> -> vector<24x768xf32>
    %c72 = arith.constant 72 : index
    %c0_48 = arith.constant 0 : index
    %157 = vector.load %arg3[%c72, %c0_48] : memref<320x128xf32, #tpu.memory_space<vmem>>, vector<8x25xf32>
    %158 = vector.extract_strided_slice %157 {offsets = [0, 0], sizes = [8, 24], strides = [1, 1]} : vector<8x25xf32> to vector<8x24xf32>
    %159 = arith.truncf %158 : vector<8x24xf32> to vector<8x24xbf16>
    %160 = vector.extract_strided_slice %157 {offsets = [0, 24], sizes = [8, 1], strides = [1, 1]} : vector<8x25xf32> to vector<8x1xf32>
    %161 = arith.truncf %156 : vector<24x768xf32> to vector<24x768xbf16>
    %cst_49 = arith.constant dense<0.000000e+00> : vector<8x768xf32>
    %162 = tpu.matmul %159, %161, %cst_49 {dimension_numbers = #tpu.dot_dimension_numbers<[1], [0], [0], [1], [0, 0, 1, 1], [], []>} : vector<8x24xbf16>, vector<24x768xbf16>, vector<8x768xf32> -> vector<8x768xf32>
    %163 = vector.broadcast %160 : vector<8x1xf32> to vector<8x768xf32>
    %164 = arith.addf %162, %163 : vector<8x768xf32>
    %165 = arith.addf %164, %132 : vector<8x768xf32>
    %cst_50 = arith.constant 0.000000e+00 : f32
    %166 = vector.broadcast %cst_50 : f32 to vector<8x768xf32>
    %167 = arith.maximumf %165, %166 : vector<8x768xf32>
    %c2_i32_51 = arith.constant 2 : i32
    %168 = tpu.dynamic_rotate %167 by %c2_i32_51 dim 1 : vector<8x768xf32>, i32 -> vector<8x768xf32>
    %169 = vector.broadcast %2 : vector<1x768xf32> to vector<8x768xf32>
    %170 = arith.mulf %168, %169 : vector<8x768xf32>
    %c766_i32_52 = arith.constant 766 : i32
    %171 = tpu.dynamic_rotate %167 by %c766_i32_52 dim 1 : vector<8x768xf32>, i32 -> vector<8x768xf32>
    %172 = vector.broadcast %3 : vector<1x768xf32> to vector<8x768xf32>
    %173 = arith.mulf %171, %172 : vector<8x768xf32>
    %174 = tpu.concatenate %170, %167, %173 in 0 : vector<8x768xf32>, vector<8x768xf32>, vector<8x768xf32> -> vector<24x768xf32>
    %c80 = arith.constant 80 : index
    %c0_53 = arith.constant 0 : index
    %175 = vector.load %arg3[%c80, %c0_53] : memref<320x128xf32, #tpu.memory_space<vmem>>, vector<32x25xf32>
    %176 = vector.extract_strided_slice %175 {offsets = [0, 0], sizes = [32, 24], strides = [1, 1]} : vector<32x25xf32> to vector<32x24xf32>
    %177 = arith.truncf %176 : vector<32x24xf32> to vector<32x24xbf16>
    %178 = vector.extract_strided_slice %175 {offsets = [0, 24], sizes = [32, 1], strides = [1, 1]} : vector<32x25xf32> to vector<32x1xf32>
    %179 = arith.truncf %174 : vector<24x768xf32> to vector<24x768xbf16>
    %cst_54 = arith.constant dense<0.000000e+00> : vector<32x768xf32>
    %180 = tpu.matmul %177, %179, %cst_54 {dimension_numbers = #tpu.dot_dimension_numbers<[1], [0], [0], [1], [0, 0, 1, 1], [], []>} : vector<32x24xbf16>, vector<24x768xbf16>, vector<32x768xf32> -> vector<32x768xf32>
    %181 = vector.broadcast %178 : vector<32x1xf32> to vector<32x768xf32>
    %182 = arith.addf %180, %181 : vector<32x768xf32>
    %183 = vector.extract_strided_slice %182 {offsets = [0, 0], sizes = [16, 768], strides = [1, 1]} : vector<32x768xf32> to vector<16x768xf32>
    %cst_55 = arith.constant 0.000000e+00 : f32
    %184 = vector.broadcast %cst_55 : f32 to vector<16x768xf32>
    %185 = arith.maximumf %183, %184 : vector<16x768xf32>
    %186 = vector.extract_strided_slice %182 {offsets = [16, 0], sizes = [16, 768], strides = [1, 1]} : vector<32x768xf32> to vector<16x768xf32>
    %c4_i32 = arith.constant 4 : i32
    %187 = tpu.dynamic_rotate %185 by %c4_i32 dim 1 : vector<16x768xf32>, i32 -> vector<16x768xf32>
    %188 = vector.broadcast %4 : vector<1x768xf32> to vector<16x768xf32>
    %189 = arith.mulf %187, %188 : vector<16x768xf32>
    %c764_i32 = arith.constant 764 : i32
    %190 = tpu.dynamic_rotate %185 by %c764_i32 dim 1 : vector<16x768xf32>, i32 -> vector<16x768xf32>
    %191 = vector.broadcast %5 : vector<1x768xf32> to vector<16x768xf32>
    %192 = arith.mulf %190, %191 : vector<16x768xf32>
    %193 = tpu.concatenate %189, %185, %192 in 0 : vector<16x768xf32>, vector<16x768xf32>, vector<16x768xf32> -> vector<48x768xf32>
    %c112 = arith.constant 112 : index
    %c0_56 = arith.constant 0 : index
    %194 = vector.load %arg3[%c112, %c0_56] : memref<320x128xf32, #tpu.memory_space<vmem>>, vector<16x49xf32>
    %195 = vector.extract_strided_slice %194 {offsets = [0, 0], sizes = [16, 48], strides = [1, 1]} : vector<16x49xf32> to vector<16x48xf32>
    %196 = arith.truncf %195 : vector<16x48xf32> to vector<16x48xbf16>
    %197 = vector.extract_strided_slice %194 {offsets = [0, 48], sizes = [16, 1], strides = [1, 1]} : vector<16x49xf32> to vector<16x1xf32>
    %198 = arith.truncf %193 : vector<48x768xf32> to vector<48x768xbf16>
    %cst_57 = arith.constant dense<0.000000e+00> : vector<16x768xf32>
    %199 = tpu.matmul %196, %198, %cst_57 {dimension_numbers = #tpu.dot_dimension_numbers<[1], [0], [0], [1], [0, 0, 1, 1], [], []>} : vector<16x48xbf16>, vector<48x768xbf16>, vector<16x768xf32> -> vector<16x768xf32>
    %200 = vector.broadcast %197 : vector<16x1xf32> to vector<16x768xf32>
    %201 = arith.addf %199, %200 : vector<16x768xf32>
    %202 = arith.addf %201, %186 : vector<16x768xf32>
    %cst_58 = arith.constant 0.000000e+00 : f32
    %203 = vector.broadcast %cst_58 : f32 to vector<16x768xf32>
    %204 = arith.maximumf %202, %203 : vector<16x768xf32>
    %c4_i32_59 = arith.constant 4 : i32
    %205 = tpu.dynamic_rotate %204 by %c4_i32_59 dim 1 : vector<16x768xf32>, i32 -> vector<16x768xf32>
    %206 = vector.broadcast %4 : vector<1x768xf32> to vector<16x768xf32>
    %207 = arith.mulf %205, %206 : vector<16x768xf32>
    %c764_i32_60 = arith.constant 764 : i32
    %208 = tpu.dynamic_rotate %204 by %c764_i32_60 dim 1 : vector<16x768xf32>, i32 -> vector<16x768xf32>
    %209 = vector.broadcast %5 : vector<1x768xf32> to vector<16x768xf32>
    %210 = arith.mulf %208, %209 : vector<16x768xf32>
    %211 = tpu.concatenate %207, %204, %210 in 0 : vector<16x768xf32>, vector<16x768xf32>, vector<16x768xf32> -> vector<48x768xf32>
    %c128 = arith.constant 128 : index
    %c0_61 = arith.constant 0 : index
    %212 = vector.load %arg3[%c128, %c0_61] : memref<320x128xf32, #tpu.memory_space<vmem>>, vector<16x49xf32>
    %213 = vector.extract_strided_slice %212 {offsets = [0, 0], sizes = [16, 48], strides = [1, 1]} : vector<16x49xf32> to vector<16x48xf32>
    %214 = arith.truncf %213 : vector<16x48xf32> to vector<16x48xbf16>
    %215 = vector.extract_strided_slice %212 {offsets = [0, 48], sizes = [16, 1], strides = [1, 1]} : vector<16x49xf32> to vector<16x1xf32>
    %216 = arith.truncf %211 : vector<48x768xf32> to vector<48x768xbf16>
    %cst_62 = arith.constant dense<0.000000e+00> : vector<16x768xf32>
    %217 = tpu.matmul %214, %216, %cst_62 {dimension_numbers = #tpu.dot_dimension_numbers<[1], [0], [0], [1], [0, 0, 1, 1], [], []>} : vector<16x48xbf16>, vector<48x768xbf16>, vector<16x768xf32> -> vector<16x768xf32>
    %218 = vector.broadcast %215 : vector<16x1xf32> to vector<16x768xf32>
    %219 = arith.addf %217, %218 : vector<16x768xf32>
    %cst_63 = arith.constant 0.000000e+00 : f32
    %220 = vector.broadcast %cst_63 : f32 to vector<16x768xf32>
    %221 = arith.maximumf %219, %220 : vector<16x768xf32>
    %c4_i32_64 = arith.constant 4 : i32
    %222 = tpu.dynamic_rotate %221 by %c4_i32_64 dim 1 : vector<16x768xf32>, i32 -> vector<16x768xf32>
    %223 = vector.broadcast %4 : vector<1x768xf32> to vector<16x768xf32>
    %224 = arith.mulf %222, %223 : vector<16x768xf32>
    %c764_i32_65 = arith.constant 764 : i32
    %225 = tpu.dynamic_rotate %221 by %c764_i32_65 dim 1 : vector<16x768xf32>, i32 -> vector<16x768xf32>
    %226 = vector.broadcast %5 : vector<1x768xf32> to vector<16x768xf32>
    %227 = arith.mulf %225, %226 : vector<16x768xf32>
    %228 = tpu.concatenate %224, %221, %227 in 0 : vector<16x768xf32>, vector<16x768xf32>, vector<16x768xf32> -> vector<48x768xf32>
    %c144 = arith.constant 144 : index
    %c0_66 = arith.constant 0 : index
    %229 = vector.load %arg3[%c144, %c0_66] : memref<320x128xf32, #tpu.memory_space<vmem>>, vector<16x49xf32>
    %230 = vector.extract_strided_slice %229 {offsets = [0, 0], sizes = [16, 48], strides = [1, 1]} : vector<16x49xf32> to vector<16x48xf32>
    %231 = arith.truncf %230 : vector<16x48xf32> to vector<16x48xbf16>
    %232 = vector.extract_strided_slice %229 {offsets = [0, 48], sizes = [16, 1], strides = [1, 1]} : vector<16x49xf32> to vector<16x1xf32>
    %233 = arith.truncf %228 : vector<48x768xf32> to vector<48x768xbf16>
    %cst_67 = arith.constant dense<0.000000e+00> : vector<16x768xf32>
    %234 = tpu.matmul %231, %233, %cst_67 {dimension_numbers = #tpu.dot_dimension_numbers<[1], [0], [0], [1], [0, 0, 1, 1], [], []>} : vector<16x48xbf16>, vector<48x768xbf16>, vector<16x768xf32> -> vector<16x768xf32>
    %235 = vector.broadcast %232 : vector<16x1xf32> to vector<16x768xf32>
    %236 = arith.addf %234, %235 : vector<16x768xf32>
    %237 = arith.addf %236, %204 : vector<16x768xf32>
    %cst_68 = arith.constant 0.000000e+00 : f32
    %238 = vector.broadcast %cst_68 : f32 to vector<16x768xf32>
    %239 = arith.maximumf %237, %238 : vector<16x768xf32>
    %c4_i32_69 = arith.constant 4 : i32
    %240 = tpu.dynamic_rotate %239 by %c4_i32_69 dim 1 : vector<16x768xf32>, i32 -> vector<16x768xf32>
    %241 = vector.broadcast %4 : vector<1x768xf32> to vector<16x768xf32>
    %242 = arith.mulf %240, %241 : vector<16x768xf32>
    %c764_i32_70 = arith.constant 764 : i32
    %243 = tpu.dynamic_rotate %239 by %c764_i32_70 dim 1 : vector<16x768xf32>, i32 -> vector<16x768xf32>
    %244 = vector.broadcast %5 : vector<1x768xf32> to vector<16x768xf32>
    %245 = arith.mulf %243, %244 : vector<16x768xf32>
    %246 = tpu.concatenate %242, %239, %245 in 0 : vector<16x768xf32>, vector<16x768xf32>, vector<16x768xf32> -> vector<48x768xf32>
    %c160 = arith.constant 160 : index
    %c0_71 = arith.constant 0 : index
    %247 = vector.load %arg3[%c160, %c0_71] : memref<320x128xf32, #tpu.memory_space<vmem>>, vector<64x49xf32>
    %248 = vector.extract_strided_slice %247 {offsets = [0, 0], sizes = [64, 48], strides = [1, 1]} : vector<64x49xf32> to vector<64x48xf32>
    %249 = arith.truncf %248 : vector<64x48xf32> to vector<64x48xbf16>
    %250 = vector.extract_strided_slice %247 {offsets = [0, 48], sizes = [64, 1], strides = [1, 1]} : vector<64x49xf32> to vector<64x1xf32>
    %251 = arith.truncf %246 : vector<48x768xf32> to vector<48x768xbf16>
    %cst_72 = arith.constant dense<0.000000e+00> : vector<64x768xf32>
    %252 = tpu.matmul %249, %251, %cst_72 {dimension_numbers = #tpu.dot_dimension_numbers<[1], [0], [0], [1], [0, 0, 1, 1], [], []>} : vector<64x48xbf16>, vector<48x768xbf16>, vector<64x768xf32> -> vector<64x768xf32>
    %253 = vector.broadcast %250 : vector<64x1xf32> to vector<64x768xf32>
    %254 = arith.addf %252, %253 : vector<64x768xf32>
    %255 = vector.extract_strided_slice %254 {offsets = [0, 0], sizes = [32, 768], strides = [1, 1]} : vector<64x768xf32> to vector<32x768xf32>
    %cst_73 = arith.constant 0.000000e+00 : f32
    %256 = vector.broadcast %cst_73 : f32 to vector<32x768xf32>
    %257 = arith.maximumf %255, %256 : vector<32x768xf32>
    %258 = vector.extract_strided_slice %254 {offsets = [32, 0], sizes = [32, 768], strides = [1, 1]} : vector<64x768xf32> to vector<32x768xf32>
    %c8_i32 = arith.constant 8 : i32
    %259 = tpu.dynamic_rotate %257 by %c8_i32 dim 1 : vector<32x768xf32>, i32 -> vector<32x768xf32>
    %260 = vector.broadcast %6 : vector<1x768xf32> to vector<32x768xf32>
    %261 = arith.mulf %259, %260 : vector<32x768xf32>
    %c760_i32 = arith.constant 760 : i32
    %262 = tpu.dynamic_rotate %257 by %c760_i32 dim 1 : vector<32x768xf32>, i32 -> vector<32x768xf32>
    %263 = vector.broadcast %7 : vector<1x768xf32> to vector<32x768xf32>
    %264 = arith.mulf %262, %263 : vector<32x768xf32>
    %265 = tpu.concatenate %261, %257, %264 in 0 : vector<32x768xf32>, vector<32x768xf32>, vector<32x768xf32> -> vector<96x768xf32>
    %c224 = arith.constant 224 : index
    %c0_74 = arith.constant 0 : index
    %266 = vector.load %arg3[%c224, %c0_74] : memref<320x128xf32, #tpu.memory_space<vmem>>, vector<32x97xf32>
    %267 = vector.extract_strided_slice %266 {offsets = [0, 0], sizes = [32, 96], strides = [1, 1]} : vector<32x97xf32> to vector<32x96xf32>
    %268 = arith.truncf %267 : vector<32x96xf32> to vector<32x96xbf16>
    %269 = vector.extract_strided_slice %266 {offsets = [0, 96], sizes = [32, 1], strides = [1, 1]} : vector<32x97xf32> to vector<32x1xf32>
    %270 = arith.truncf %265 : vector<96x768xf32> to vector<96x768xbf16>
    %cst_75 = arith.constant dense<0.000000e+00> : vector<32x768xf32>
    %271 = tpu.matmul %268, %270, %cst_75 {dimension_numbers = #tpu.dot_dimension_numbers<[1], [0], [0], [1], [0, 0, 1, 1], [], []>} : vector<32x96xbf16>, vector<96x768xbf16>, vector<32x768xf32> -> vector<32x768xf32>
    %272 = vector.broadcast %269 : vector<32x1xf32> to vector<32x768xf32>
    %273 = arith.addf %271, %272 : vector<32x768xf32>
    %274 = arith.addf %273, %258 : vector<32x768xf32>
    %cst_76 = arith.constant 0.000000e+00 : f32
    %275 = vector.broadcast %cst_76 : f32 to vector<32x768xf32>
    %276 = arith.maximumf %274, %275 : vector<32x768xf32>
    %c8_i32_77 = arith.constant 8 : i32
    %277 = tpu.dynamic_rotate %276 by %c8_i32_77 dim 1 : vector<32x768xf32>, i32 -> vector<32x768xf32>
    %278 = vector.broadcast %6 : vector<1x768xf32> to vector<32x768xf32>
    %279 = arith.mulf %277, %278 : vector<32x768xf32>
    %c760_i32_78 = arith.constant 760 : i32
    %280 = tpu.dynamic_rotate %276 by %c760_i32_78 dim 1 : vector<32x768xf32>, i32 -> vector<32x768xf32>
    %281 = vector.broadcast %7 : vector<1x768xf32> to vector<32x768xf32>
    %282 = arith.mulf %280, %281 : vector<32x768xf32>
    %283 = tpu.concatenate %279, %276, %282 in 0 : vector<32x768xf32>, vector<32x768xf32>, vector<32x768xf32> -> vector<96x768xf32>
    %c256 = arith.constant 256 : index
    %c0_79 = arith.constant 0 : index
    %284 = vector.load %arg3[%c256, %c0_79] : memref<320x128xf32, #tpu.memory_space<vmem>>, vector<32x97xf32>
    %285 = vector.extract_strided_slice %284 {offsets = [0, 0], sizes = [32, 96], strides = [1, 1]} : vector<32x97xf32> to vector<32x96xf32>
    %286 = arith.truncf %285 : vector<32x96xf32> to vector<32x96xbf16>
    %287 = vector.extract_strided_slice %284 {offsets = [0, 96], sizes = [32, 1], strides = [1, 1]} : vector<32x97xf32> to vector<32x1xf32>
    %288 = arith.truncf %283 : vector<96x768xf32> to vector<96x768xbf16>
    %cst_80 = arith.constant dense<0.000000e+00> : vector<32x768xf32>
    %289 = tpu.matmul %286, %288, %cst_80 {dimension_numbers = #tpu.dot_dimension_numbers<[1], [0], [0], [1], [0, 0, 1, 1], [], []>} : vector<32x96xbf16>, vector<96x768xbf16>, vector<32x768xf32> -> vector<32x768xf32>
    %290 = vector.broadcast %287 : vector<32x1xf32> to vector<32x768xf32>
    %291 = arith.addf %289, %290 : vector<32x768xf32>
    %cst_81 = arith.constant 0.000000e+00 : f32
    %292 = vector.broadcast %cst_81 : f32 to vector<32x768xf32>
    %293 = arith.maximumf %291, %292 : vector<32x768xf32>
    %c8_i32_82 = arith.constant 8 : i32
    %294 = tpu.dynamic_rotate %293 by %c8_i32_82 dim 1 : vector<32x768xf32>, i32 -> vector<32x768xf32>
    %295 = vector.broadcast %6 : vector<1x768xf32> to vector<32x768xf32>
    %296 = arith.mulf %294, %295 : vector<32x768xf32>
    %c760_i32_83 = arith.constant 760 : i32
    %297 = tpu.dynamic_rotate %293 by %c760_i32_83 dim 1 : vector<32x768xf32>, i32 -> vector<32x768xf32>
    %298 = vector.broadcast %7 : vector<1x768xf32> to vector<32x768xf32>
    %299 = arith.mulf %297, %298 : vector<32x768xf32>
    %300 = tpu.concatenate %296, %293, %299 in 0 : vector<32x768xf32>, vector<32x768xf32>, vector<32x768xf32> -> vector<96x768xf32>
    %c288 = arith.constant 288 : index
    %c0_84 = arith.constant 0 : index
    %301 = vector.load %arg3[%c288, %c0_84] : memref<320x128xf32, #tpu.memory_space<vmem>>, vector<32x97xf32>
    %302 = vector.extract_strided_slice %301 {offsets = [0, 0], sizes = [32, 96], strides = [1, 1]} : vector<32x97xf32> to vector<32x96xf32>
    %303 = arith.truncf %302 : vector<32x96xf32> to vector<32x96xbf16>
    %304 = vector.extract_strided_slice %301 {offsets = [0, 96], sizes = [32, 1], strides = [1, 1]} : vector<32x97xf32> to vector<32x1xf32>
    %305 = arith.truncf %300 : vector<96x768xf32> to vector<96x768xbf16>
    %cst_85 = arith.constant dense<0.000000e+00> : vector<32x768xf32>
    %306 = tpu.matmul %303, %305, %cst_85 {dimension_numbers = #tpu.dot_dimension_numbers<[1], [0], [0], [1], [0, 0, 1, 1], [], []>} : vector<32x96xbf16>, vector<96x768xbf16>, vector<32x768xf32> -> vector<32x768xf32>
    %307 = vector.broadcast %304 : vector<32x1xf32> to vector<32x768xf32>
    %308 = arith.addf %306, %307 : vector<32x768xf32>
    %309 = arith.addf %308, %276 : vector<32x768xf32>
    %cst_86 = arith.constant 0.000000e+00 : f32
    %310 = vector.broadcast %cst_86 : f32 to vector<32x768xf32>
    %311 = arith.maximumf %309, %310 : vector<32x768xf32>
    %c0_87 = arith.constant 0 : index
    %c0_88 = arith.constant 0 : index
    %312 = vector.load %arg4[%c0_87, %c0_88] : memref<32x768xf32, #tpu.memory_space<vmem>>, vector<24x768xf32>
    %313 = arith.truncf %312 : vector<24x768xf32> to vector<24x768xbf16>
    %314 = arith.truncf %311 : vector<32x768xf32> to vector<32x768xbf16>
    %cst_89 = arith.constant dense<0.000000e+00> : vector<24x32xf32>
    %315 = tpu.matmul %313, %314, %cst_89 {dimension_numbers = #tpu.dot_dimension_numbers<[1], [1], [0], [0], [0, 0, 1, 0], [], []>} : vector<24x768xbf16>, vector<32x768xbf16>, vector<24x32xf32> -> vector<24x32xf32>
    %c0_90 = arith.constant 0 : index
    %c0_91 = arith.constant 0 : index
    %316 = vector.load %arg5[%c0_90, %c0_91] : memref<24x32xf32, #tpu.memory_space<vmem>>, vector<24x32xf32>
    tpu.vector_store %arg5[%c0_90, %c0_91], %315 {strides = array<i32>} : memref<24x32xf32, #tpu.memory_space<vmem>>, vector<24x32xf32>,
    %317 = vector.extract_strided_slice %315 {offsets = [0, 0], sizes = [16, 32], strides = [1, 1]} : vector<24x32xf32> to vector<16x32xf32>
    %318 = vector.extract_strided_slice %315 {offsets = [16, 0], sizes = [8, 32], strides = [1, 1]} : vector<24x32xf32> to vector<8x32xf32>
    %cst_92 = arith.constant dense<0.000000e+00> : vector<8x16xf32>
    %319 = tpu.matmul %318, %317, %cst_92 {dimension_numbers = #tpu.dot_dimension_numbers<[1], [1], [0], [0], [0, 0, 1, 0], [], []>} : vector<8x32xf32>, vector<16x32xf32>, vector<8x16xf32> -> vector<8x16xf32>
    %320 = math.absf %319 : vector<8x16xf32>
    %cst_93 = arith.constant dense<0.000000e+00> : vector<8xf32>
    %321 = vector.multi_reduction <add>, %320, %cst_93 [1] : vector<8x16xf32> to vector<8xf32>
    %322 = vector.shape_cast %321 : vector<8xf32> to vector<8x1xf32>
    %cst_94 = arith.constant 9.99999996E-13 : f32
    %323 = vector.broadcast %cst_94 : f32 to vector<8x1xf32>
    %324 = arith.maximumf %322, %323 : vector<8x1xf32>
    %325 = vector.broadcast %324 : vector<8x1xf32> to vector<8x16xf32>
    %326 = arith.divf %319, %325 : vector<8x16xf32>
    %c0_95 = arith.constant 0 : index
    %c0_96 = arith.constant 0 : index
    %327 = vector.load %arg2[%c0_95, %c0_96] : memref<24x128xf32, #tpu.memory_space<vmem>>, vector<24x128xf32>
    %328 = vector.extract_strided_slice %327 {offsets = [0, 0], sizes = [16, 128], strides = [1, 1]} : vector<24x128xf32> to vector<16x128xf32>
    %cst_97 = arith.constant dense<0.000000e+00> : vector<8x128xf32>
    %329 = tpu.matmul %326, %328, %cst_97 {dimension_numbers = #tpu.dot_dimension_numbers<[1], [0], [0], [1], [0, 0, 1, 1], [], []>} : vector<8x16xf32>, vector<16x128xf32>, vector<8x128xf32> -> vector<8x128xf32>
    %c0_98 = arith.constant 0 : index
    %c0_99 = arith.constant 0 : index
    %330 = vector.load %arg6[%c0_98, %c0_99] : memref<8x128xf32, #tpu.memory_space<vmem>>, vector<8x128xf32>
    tpu.vector_store %arg6[%c0_98, %c0_99], %329 {strides = array<i32>} : memref<8x128xf32, #tpu.memory_space<vmem>>, vector<8x128xf32>,
    %cst_100 = arith.constant dense<0.000000e+00> : vector<24x24xf32>
    %331 = tpu.matmul %327, %327, %cst_100 {dimension_numbers = #tpu.dot_dimension_numbers<[1], [1], [0], [0], [0, 0, 1, 0], [], []>} : vector<24x128xf32>, vector<24x128xf32>, vector<24x24xf32> -> vector<24x24xf32>
    %332 = arith.mulf %327, %327 : vector<24x128xf32>
    %cst_101 = arith.constant dense<0.000000e+00> : vector<24xf32>
    %333 = vector.multi_reduction <add>, %332, %cst_101 [1] : vector<24x128xf32> to vector<24xf32>
    %334 = vector.shape_cast %333 : vector<24xf32> to vector<24x1xf32>
    %cst_102 = arith.constant 1.000000e+00 : f32
    %335 = vector.broadcast %cst_102 : f32 to vector<1x128xf32>
    %cst_103 = arith.constant dense<0.000000e+00> : vector<1x24xf32>
    %336 = tpu.matmul %335, %332, %cst_103 {dimension_numbers = #tpu.dot_dimension_numbers<[1], [1], [0], [0], [0, 0, 1, 0], [], []>} : vector<1x128xf32>, vector<24x128xf32>, vector<1x24xf32> -> vector<1x24xf32>
    %337 = vector.broadcast %334 : vector<24x1xf32> to vector<24x24xf32>
    %338 = vector.broadcast %336 : vector<1x24xf32> to vector<24x24xf32>
    %339 = arith.addf %337, %338 : vector<24x24xf32>
    %cst_104 = arith.constant 2.000000e+00 : f32
    %340 = vector.broadcast %cst_104 : f32 to vector<24x24xf32>
    %341 = arith.mulf %340, %331 : vector<24x24xf32>
    %342 = arith.subf %339, %341 : vector<24x24xf32>
    %cst_105 = arith.constant 0.000000e+00 : f32
    %343 = vector.broadcast %cst_105 : f32 to vector<24x24xf32>
    %344 = arith.maximumf %342, %343 : vector<24x24xf32>
    %345 = tpu.iota {dimensions = array<i32: 1>} : vector<24x24xi32>
    %346 = arith.sitofp %345 : vector<24x24xi32> to vector<24x24xf32>
    %cst_106 = arith.constant 0.000000e+00 : f32
    %347 = vector.broadcast %cst_106 : f32 to vector<24x24xf32>
    %c0_i32 = arith.constant 0 : i32
    %cst_107 = arith.constant dense<0x7F800000> : vector<24xf32>
    %348 = vector.multi_reduction <minimumf>, %344, %cst_107 [1] : vector<24x24xf32> to vector<24xf32>
    %349 = vector.shape_cast %348 : vector<24xf32> to vector<24x1xf32>
    %350 = vector.broadcast %349 : vector<24x1xf32> to vector<24x24xf32>
    %351 = arith.cmpf ole, %344, %350 : vector<24x24xf32>
    %cst_108 = arith.constant 2.400000e+01 : f32
    %352 = vector.broadcast %cst_108 : f32 to vector<24x24xf32>
    %353 = arith.select %351, %346, %352 : vector<24x24xi1>, vector<24x24xf32>
    %cst_109 = arith.constant dense<0x7F800000> : vector<24xf32>
    %354 = vector.multi_reduction <minimumf>, %353, %cst_109 [1] : vector<24x24xf32> to vector<24xf32>
    %355 = vector.shape_cast %354 : vector<24xf32> to vector<24x1xf32>
    %356 = vector.broadcast %355 : vector<24x1xf32> to vector<24x24xf32>
    %357 = arith.cmpf oeq, %346, %356 : vector<24x24xf32>
    %cst_110 = arith.constant 1.000000e+30 : f32
    %358 = vector.broadcast %cst_110 : f32 to vector<24x24xf32>
    %359 = arith.select %357, %358, %344 : vector<24x24xi1>, vector<24x24xf32>
    %cst_111 = arith.constant 1.000000e+00 : f32
    %360 = vector.broadcast %cst_111 : f32 to vector<24x24xf32>
    %361 = arith.select %357, %360, %347 : vector<24x24xi1>, vector<24x24xf32>
    %c1_i32_112 = arith.constant 1 : i32
    %cst_113 = arith.constant dense<0x7F800000> : vector<24xf32>
    %362 = vector.multi_reduction <minimumf>, %359, %cst_113 [1] : vector<24x24xf32> to vector<24xf32>
    %363 = vector.shape_cast %362 : vector<24xf32> to vector<24x1xf32>
    %364 = vector.broadcast %363 : vector<24x1xf32> to vector<24x24xf32>
    %365 = arith.cmpf ole, %359, %364 : vector<24x24xf32>
    %cst_114 = arith.constant 2.400000e+01 : f32
    %366 = vector.broadcast %cst_114 : f32 to vector<24x24xf32>
    %367 = arith.select %365, %346, %366 : vector<24x24xi1>, vector<24x24xf32>
    %cst_115 = arith.constant dense<0x7F800000> : vector<24xf32>
    %368 = vector.multi_reduction <minimumf>, %367, %cst_115 [1] : vector<24x24xf32> to vector<24xf32>
    %369 = vector.shape_cast %368 : vector<24xf32> to vector<24x1xf32>
    %370 = vector.broadcast %369 : vector<24x1xf32> to vector<24x24xf32>
    %371 = arith.cmpf oeq, %346, %370 : vector<24x24xf32>
    %cst_116 = arith.constant 1.000000e+30 : f32
    %372 = vector.broadcast %cst_116 : f32 to vector<24x24xf32>
    %373 = arith.select %371, %372, %359 : vector<24x24xi1>, vector<24x24xf32>
    %cst_117 = arith.constant 1.000000e+00 : f32
    %374 = vector.broadcast %cst_117 : f32 to vector<24x24xf32>
    %375 = arith.select %371, %374, %361 : vector<24x24xi1>, vector<24x24xf32>
    %c2_i32_118 = arith.constant 2 : i32
    %cst_119 = arith.constant dense<0x7F800000> : vector<24xf32>
    %376 = vector.multi_reduction <minimumf>, %373, %cst_119 [1] : vector<24x24xf32> to vector<24xf32>
    %377 = vector.shape_cast %376 : vector<24xf32> to vector<24x1xf32>
    %378 = vector.broadcast %377 : vector<24x1xf32> to vector<24x24xf32>
    %379 = arith.cmpf ole, %373, %378 : vector<24x24xf32>
    %cst_120 = arith.constant 2.400000e+01 : f32
    %380 = vector.broadcast %cst_120 : f32 to vector<24x24xf32>
    %381 = arith.select %379, %346, %380 : vector<24x24xi1>, vector<24x24xf32>
    %cst_121 = arith.constant dense<0x7F800000> : vector<24xf32>
    %382 = vector.multi_reduction <minimumf>, %381, %cst_121 [1] : vector<24x24xf32> to vector<24xf32>
    %383 = vector.shape_cast %382 : vector<24xf32> to vector<24x1xf32>
    %384 = vector.broadcast %383 : vector<24x1xf32> to vector<24x24xf32>
    %385 = arith.cmpf oeq, %346, %384 : vector<24x24xf32>
    %cst_122 = arith.constant 1.000000e+30 : f32
    %386 = vector.broadcast %cst_122 : f32 to vector<24x24xf32>
    %387 = arith.select %385, %386, %373 : vector<24x24xi1>, vector<24x24xf32>
    %cst_123 = arith.constant 1.000000e+00 : f32
    %388 = vector.broadcast %cst_123 : f32 to vector<24x24xf32>
    %389 = arith.select %385, %388, %375 : vector<24x24xi1>, vector<24x24xf32>
    %c3_i32 = arith.constant 3 : i32
    %cst_124 = arith.constant dense<0x7F800000> : vector<24xf32>
    %390 = vector.multi_reduction <minimumf>, %387, %cst_124 [1] : vector<24x24xf32> to vector<24xf32>
    %391 = vector.shape_cast %390 : vector<24xf32> to vector<24x1xf32>
    %392 = vector.broadcast %391 : vector<24x1xf32> to vector<24x24xf32>
    %393 = arith.cmpf ole, %387, %392 : vector<24x24xf32>
    %cst_125 = arith.constant 2.400000e+01 : f32
    %394 = vector.broadcast %cst_125 : f32 to vector<24x24xf32>
    %395 = arith.select %393, %346, %394 : vector<24x24xi1>, vector<24x24xf32>
    %cst_126 = arith.constant dense<0x7F800000> : vector<24xf32>
    %396 = vector.multi_reduction <minimumf>, %395, %cst_126 [1] : vector<24x24xf32> to vector<24xf32>
    %397 = vector.shape_cast %396 : vector<24xf32> to vector<24x1xf32>
    %398 = vector.broadcast %397 : vector<24x1xf32> to vector<24x24xf32>
    %399 = arith.cmpf oeq, %346, %398 : vector<24x24xf32>
    %cst_127 = arith.constant 1.000000e+30 : f32
    %400 = vector.broadcast %cst_127 : f32 to vector<24x24xf32>
    %401 = arith.select %399, %400, %387 : vector<24x24xi1>, vector<24x24xf32>
    %cst_128 = arith.constant 1.000000e+00 : f32
    %402 = vector.broadcast %cst_128 : f32 to vector<24x24xf32>
    %403 = arith.select %399, %402, %389 : vector<24x24xi1>, vector<24x24xf32>
    %c4_i32_129 = arith.constant 4 : i32
    %cst_130 = arith.constant dense<0x7F800000> : vector<24xf32>
    %404 = vector.multi_reduction <minimumf>, %401, %cst_130 [1] : vector<24x24xf32> to vector<24xf32>
    %405 = vector.shape_cast %404 : vector<24xf32> to vector<24x1xf32>
    %406 = vector.broadcast %405 : vector<24x1xf32> to vector<24x24xf32>
    %407 = arith.cmpf ole, %401, %406 : vector<24x24xf32>
    %cst_131 = arith.constant 2.400000e+01 : f32
    %408 = vector.broadcast %cst_131 : f32 to vector<24x24xf32>
    %409 = arith.select %407, %346, %408 : vector<24x24xi1>, vector<24x24xf32>
    %cst_132 = arith.constant dense<0x7F800000> : vector<24xf32>
    %410 = vector.multi_reduction <minimumf>, %409, %cst_132 [1] : vector<24x24xf32> to vector<24xf32>
    %411 = vector.shape_cast %410 : vector<24xf32> to vector<24x1xf32>
    %412 = vector.broadcast %411 : vector<24x1xf32> to vector<24x24xf32>
    %413 = arith.cmpf oeq, %346, %412 : vector<24x24xf32>
    %cst_133 = arith.constant 1.000000e+30 : f32
    %414 = vector.broadcast %cst_133 : f32 to vector<24x24xf32>
    %415 = arith.select %413, %414, %401 : vector<24x24xi1>, vector<24x24xf32>
    %cst_134 = arith.constant 1.000000e+00 : f32
    %416 = vector.broadcast %cst_134 : f32 to vector<24x24xf32>
    %417 = arith.select %413, %416, %403 : vector<24x24xi1>, vector<24x24xf32>
    %c5_i32 = arith.constant 5 : i32
    %cst_135 = arith.constant dense<0x7F800000> : vector<24xf32>
    %418 = vector.multi_reduction <minimumf>, %415, %cst_135 [1] : vector<24x24xf32> to vector<24xf32>
    %419 = vector.shape_cast %418 : vector<24xf32> to vector<24x1xf32>
    %420 = vector.broadcast %419 : vector<24x1xf32> to vector<24x24xf32>
    %421 = arith.cmpf ole, %415, %420 : vector<24x24xf32>
    %cst_136 = arith.constant 2.400000e+01 : f32
    %422 = vector.broadcast %cst_136 : f32 to vector<24x24xf32>
    %423 = arith.select %421, %346, %422 : vector<24x24xi1>, vector<24x24xf32>
    %cst_137 = arith.constant dense<0x7F800000> : vector<24xf32>
    %424 = vector.multi_reduction <minimumf>, %423, %cst_137 [1] : vector<24x24xf32> to vector<24xf32>
    %425 = vector.shape_cast %424 : vector<24xf32> to vector<24x1xf32>
    %426 = vector.broadcast %425 : vector<24x1xf32> to vector<24x24xf32>
    %427 = arith.cmpf oeq, %346, %426 : vector<24x24xf32>
    %cst_138 = arith.constant 1.000000e+30 : f32
    %428 = vector.broadcast %cst_138 : f32 to vector<24x24xf32>
    %429 = arith.select %427, %428, %415 : vector<24x24xi1>, vector<24x24xf32>
    %cst_139 = arith.constant 1.000000e+00 : f32
    %430 = vector.broadcast %cst_139 : f32 to vector<24x24xf32>
    %431 = arith.select %427, %430, %417 : vector<24x24xi1>, vector<24x24xf32>
    %c6_i32 = arith.constant 6 : i32
    %cst_140 = arith.constant dense<0x7F800000> : vector<24xf32>
    %432 = vector.multi_reduction <minimumf>, %429, %cst_140 [1] : vector<24x24xf32> to vector<24xf32>
    %433 = vector.shape_cast %432 : vector<24xf32> to vector<24x1xf32>
    %434 = vector.broadcast %433 : vector<24x1xf32> to vector<24x24xf32>
    %435 = arith.cmpf ole, %429, %434 : vector<24x24xf32>
    %cst_141 = arith.constant 2.400000e+01 : f32
    %436 = vector.broadcast %cst_141 : f32 to vector<24x24xf32>
    %437 = arith.select %435, %346, %436 : vector<24x24xi1>, vector<24x24xf32>
    %cst_142 = arith.constant dense<0x7F800000> : vector<24xf32>
    %438 = vector.multi_reduction <minimumf>, %437, %cst_142 [1] : vector<24x24xf32> to vector<24xf32>
    %439 = vector.shape_cast %438 : vector<24xf32> to vector<24x1xf32>
    %440 = vector.broadcast %439 : vector<24x1xf32> to vector<24x24xf32>
    %441 = arith.cmpf oeq, %346, %440 : vector<24x24xf32>
    %cst_143 = arith.constant 1.000000e+30 : f32
    %442 = vector.broadcast %cst_143 : f32 to vector<24x24xf32>
    %443 = arith.select %441, %442, %429 : vector<24x24xi1>, vector<24x24xf32>
    %cst_144 = arith.constant 1.000000e+00 : f32
    %444 = vector.broadcast %cst_144 : f32 to vector<24x24xf32>
    %445 = arith.select %441, %444, %431 : vector<24x24xi1>, vector<24x24xf32>
    %c7_i32 = arith.constant 7 : i32
    %cst_145 = arith.constant dense<0x7F800000> : vector<24xf32>
    %446 = vector.multi_reduction <minimumf>, %443, %cst_145 [1] : vector<24x24xf32> to vector<24xf32>
    %447 = vector.shape_cast %446 : vector<24xf32> to vector<24x1xf32>
    %448 = vector.broadcast %447 : vector<24x1xf32> to vector<24x24xf32>
    %449 = arith.cmpf ole, %443, %448 : vector<24x24xf32>
    %cst_146 = arith.constant 2.400000e+01 : f32
    %450 = vector.broadcast %cst_146 : f32 to vector<24x24xf32>
    %451 = arith.select %449, %346, %450 : vector<24x24xi1>, vector<24x24xf32>
    %cst_147 = arith.constant dense<0x7F800000> : vector<24xf32>
    %452 = vector.multi_reduction <minimumf>, %451, %cst_147 [1] : vector<24x24xf32> to vector<24xf32>
    %453 = vector.shape_cast %452 : vector<24xf32> to vector<24x1xf32>
    %454 = vector.broadcast %453 : vector<24x1xf32> to vector<24x24xf32>
    %455 = arith.cmpf oeq, %346, %454 : vector<24x24xf32>
    %cst_148 = arith.constant 1.000000e+30 : f32
    %456 = vector.broadcast %cst_148 : f32 to vector<24x24xf32>
    %457 = arith.select %455, %456, %443 : vector<24x24xi1>, vector<24x24xf32>
    %cst_149 = arith.constant 1.000000e+00 : f32
    %458 = vector.broadcast %cst_149 : f32 to vector<24x24xf32>
    %459 = arith.select %455, %458, %445 : vector<24x24xi1>, vector<24x24xf32>
    %c8_i32_150 = arith.constant 8 : i32
    %cst_151 = arith.constant dense<0x7F800000> : vector<24xf32>
    %460 = vector.multi_reduction <minimumf>, %457, %cst_151 [1] : vector<24x24xf32> to vector<24xf32>
    %461 = vector.shape_cast %460 : vector<24xf32> to vector<24x1xf32>
    %462 = vector.broadcast %461 : vector<24x1xf32> to vector<24x24xf32>
    %463 = arith.cmpf ole, %457, %462 : vector<24x24xf32>
    %cst_152 = arith.constant 2.400000e+01 : f32
    %464 = vector.broadcast %cst_152 : f32 to vector<24x24xf32>
    %465 = arith.select %463, %346, %464 : vector<24x24xi1>, vector<24x24xf32>
    %cst_153 = arith.constant dense<0x7F800000> : vector<24xf32>
    %466 = vector.multi_reduction <minimumf>, %465, %cst_153 [1] : vector<24x24xf32> to vector<24xf32>
    %467 = vector.shape_cast %466 : vector<24xf32> to vector<24x1xf32>
    %468 = vector.broadcast %467 : vector<24x1xf32> to vector<24x24xf32>
    %469 = arith.cmpf oeq, %346, %468 : vector<24x24xf32>
    %cst_154 = arith.constant 1.000000e+30 : f32
    %470 = vector.broadcast %cst_154 : f32 to vector<24x24xf32>
    %471 = arith.select %469, %470, %457 : vector<24x24xi1>, vector<24x24xf32>
    %cst_155 = arith.constant 1.000000e+00 : f32
    %472 = vector.broadcast %cst_155 : f32 to vector<24x24xf32>
    %473 = arith.select %469, %472, %459 : vector<24x24xi1>, vector<24x24xf32>
    %c0_156 = arith.constant 0 : index
    %c0_157 = arith.constant 0 : index
    %474 = vector.load %arg7[%c0_156, %c0_157] : memref<24x24xf32, #tpu.memory_space<vmem>>, vector<24x24xf32>
    tpu.vector_store %arg7[%c0_156, %c0_157], %473 {strides = array<i32>} : memref<24x24xf32, #tpu.memory_space<vmem>>, vector<24x24xf32>,
    return
  }
  func.func @transform_0(%arg0: i32) -> (i32, i32) {
    %c0_i32 = arith.constant 0 : i32
    %c0_i32_0 = arith.constant 0 : i32
    %c0_i32_1 = arith.constant 0 : i32
    return %c0_i32, %c0_i32_0 : i32, i32
  }
  func.func @transform_1(%arg0: i32) -> (i32, i32) {
    %c0_i32 = arith.constant 0 : i32
    %c0_i32_0 = arith.constant 0 : i32
    %c0_i32_1 = arith.constant 0 : i32
    return %c0_i32, %c0_i32_0 : i32, i32
  }
  func.func @transform_2(%arg0: i32) -> (i32, i32) {
    %c0_i32 = arith.constant 0 : i32
    %c0_i32_0 = arith.constant 0 : i32
    %c0_i32_1 = arith.constant 0 : i32
    return %c0_i32, %c0_i32_0 : i32, i32
  }
  func.func @transform_3(%arg0: i32) -> (i32, i32) {
    %c0_i32 = arith.constant 0 : i32
    %c0_i32_0 = arith.constant 0 : i32
    %c0_i32_1 = arith.constant 0 : i32
    return %c0_i32, %c0_i32_0 : i32, i32
  }
  func.func @transform_4(%arg0: i32) -> (i32, i32) {
    %c0_i32 = arith.constant 0 : i32
    %c0_i32_0 = arith.constant 0 : i32
    %c0_i32_1 = arith.constant 0 : i32
    return %c0_i32, %c0_i32_0 : i32, i32
  }
  func.func @transform_5(%arg0: i32) -> (i32, i32) {
    %c0_i32 = arith.constant 0 : i32
    %c0_i32_0 = arith.constant 0 : i32
    %c0_i32_1 = arith.constant 0 : i32
    return %c0_i32, %c0_i32_0 : i32, i32
  }
  func.func @transform_6(%arg0: i32) -> (i32, i32) {
    %c0_i32 = arith.constant 0 : i32
    %c0_i32_0 = arith.constant 0 : i32
    %c0_i32_1 = arith.constant 0 : i32
    return %c0_i32, %c0_i32_0 : i32, i32
  }
}

</mosaic_0001>

<llo_original>
// kernel: tpu_custom_call.1
$region0: #{tpu_custom_call.1}
  #allocation0 [shape = 'u32[]', space=smem, size = 0x4, offset = 0x4, fixed_abs, tag = 'smem constant byte address 0x4 - core index']
  #allocation1 [shape = 'u32[144,128]{1,0:T(1,128)}', space=vmem, size = 0x12000, scoped, tag = 'internal scratch']
  %s0 = inlined_call_operand.hbm [shape: f32[1,768], index: 0, kind: input, shape index: {}]
  %s1 = inlined_call_operand.hbm [shape: f32[24,128], index: 1, kind: input, shape index: {}]
  %s2 = inlined_call_operand.hbm [shape: f32[320,128], index: 2, kind: input, shape index: {}]
  %s3 = inlined_call_operand.hbm [shape: f32[32,768], index: 3, kind: input, shape index: {}]
  %s4 = inlined_call_operand.hbm [shape: f32[24,32], index: 4, kind: output, shape index: {0}]
  %s5 = inlined_call_operand.hbm [shape: f32[8,128], index: 5, kind: output, shape index: {1}]
  %s6 = inlined_call_operand.hbm [shape: f32[24,24], index: 6, kind: output, shape index: {2}]
  %7 = xla_tuple %s4, %s5, %s6
  %s8 = sld [smem:[#allocation0]]
  $region58: #{tpu_custom_call.1} parent=0
    _
  %s10 = ssub.s32 1, %s8
  %s11 = scalar_select 0, %s10, %s8
  $region1: #{tpu_custom_call.1} parent=0
    #allocation2 [shape = 'u8[3072]{0}', space=vmem, size = 0xc00, scoped, tag = 'input window, operand 0, single buffered']
    #allocation3 [shape = 's32[1]{0}', space=sflag, size = 0x4, scoped, tag = 'scoped memory for tpu_custom_call.1']
    #allocation4 [shape = 's32[1]{0}', space=sflag, size = 0x4, scoped, tag = 'scoped memory for tpu_custom_call.1']
    #allocation5 [shape = 'u8[12288]{0}', space=vmem, size = 0x3000, scoped, tag = 'input window, operand 1, single buffered']
    #allocation6 [shape = 's32[1]{0}', space=sflag, size = 0x4, scoped, tag = 'scoped memory for tpu_custom_call.1']
    #allocation7 [shape = 'u8[163840]{0}', space=vmem, size = 0x28000, scoped, tag = 'input window, operand 2, single buffered']
    #allocation8 [shape = 'u8[98304]{0}', space=vmem, size = 0x18000, scoped, tag = 'input window, operand 3, single buffered']
    #allocation9 [shape = 's32[1]{0}', space=sflag, size = 0x4, scoped, tag = 'scoped memory for tpu_custom_call.1']
    #allocation10 [shape = 'u8[12288]{0}', space=vmem, size = 0x3000, scoped, tag = 'output window, operand 0, single buffered']
    #allocation11 [shape = 'u8[4096]{0}', space=vmem, size = 0x1000, scoped, tag = 'output window, operand 1, single buffered']
    #allocation12 [shape = 's32[1]{0}', space=sflag, size = 0x4, scoped, tag = 'scoped memory for tpu_custom_call.1']
    #allocation13 [shape = 'u8[12288]{0}', space=vmem, size = 0x3000, scoped, tag = 'output window, operand 2, single buffered']
    %12 = vsyncpa [#allocation3], 0
    %13 = vsyncpa [#allocation6], 0
    %14 = vsyncpa [#allocation9], 0
    %15 = vsyncpa [#allocation4], 0
    %16 = vsyncpa [#allocation12], 0
    // Predicated region
    $region2: #{tpu_custom_call.1} parent=1 // pred_check
      _
    $region3: #{tpu_custom_call.1} parent=1 // pred_check_branch
      %18 = sbr.rel (0) target = $region5
    $region4: #{tpu_custom_call.1} parent=1 // pred_region
      %s20 = ssub.s32 96, 96
      %21 = vsyncadd [#allocation3], %s20
      %s23 = sshll.u32 [#allocation2], 4
      %s24 = int_to_ptr.vmem [resolvable:$true] %s23
      %26 = dma.hbm_to_vmem [thread:$0]  %s0, 96, %s24, [#allocation3]
    $region5: #{tpu_custom_call.1} parent=1 // pred_fallthru
      _
    // Predicated region
    $region6: #{tpu_custom_call.1} parent=1 // pred_check
      _
    $region7: #{tpu_custom_call.1} parent=1 // pred_check_branch
      %28 = sbr.rel (0) target = $region9
    $region8: #{tpu_custom_call.1} parent=1 // pred_region
      %s30 = ssub.s32 384, 384
      %31 = vsyncadd [#allocation6], %s30
      %s32 = sshll.u32 [#allocation5], 4
      %s33 = int_to_ptr.vmem [resolvable:$true] %s32
      %38 = dma.hbm_to_vmem [thread:$0]  %s1, 384, %s33, [#allocation6], 128, 128, 8
    $region9: #{tpu_custom_call.1} parent=1 // pred_fallthru
      _
    // Predicated region
    $region10: #{tpu_custom_call.1} parent=1 // pred_check
      _
    $region11: #{tpu_custom_call.1} parent=1 // pred_check_branch
      %40 = sbr.rel (0) target = $region13
    $region12: #{tpu_custom_call.1} parent=1 // pred_region
      %s42 = ssub.s32 5120, 5120
      %43 = vsyncadd [#allocation6], %s42
      %s44 = sshll.u32 [#allocation7], 4
      %s45 = int_to_ptr.vmem [resolvable:$true] %s44
      %50 = dma.hbm_to_vmem [thread:$0]  %s2, 5120, %s45, [#allocation6], 128, 128, 8
    $region13: #{tpu_custom_call.1} parent=1 // pred_fallthru
      _
    // Predicated region
    $region14: #{tpu_custom_call.1} parent=1 // pred_check
      _
    $region15: #{tpu_custom_call.1} parent=1 // pred_check_branch
      %52 = sbr.rel (0) target = $region17
    $region16: #{tpu_custom_call.1} parent=1 // pred_region
      %s54 = ssub.s32 3072, 3072
      %55 = vsyncadd [#allocation9], %s54
      %s56 = sshll.u32 [#allocation8], 4
      %s57 = int_to_ptr.vmem [resolvable:$true] %s56
      %62 = dma.hbm_to_vmem [thread:$0]  %s3, 3072, %s57, [#allocation9], 768, 768, 48
    $region17: #{tpu_custom_call.1} parent=1 // pred_fallthru
      _
    // Predicated region
    $region18: #{tpu_custom_call.1} parent=1 // pred_check
      _
    $region19: #{tpu_custom_call.1} parent=1 // pred_check_branch
      %64 = sbr.rel (0) target = $region21
    $region20: #{tpu_custom_call.1} parent=1 // pred_region
      %65 = dma.done [#allocation3], 96
    $region21: #{tpu_custom_call.1} parent=1 // pred_fallthru
      _
    // Predicated region
    $region22: #{tpu_custom_call.1} parent=1 // pred_check
      _
    $region23: #{tpu_custom_call.1} parent=1 // pred_check_branch
      %67 = sbr.rel (0) target = $region25
    $region24: #{tpu_custom_call.1} parent=1 // pred_region
      %68 = dma.done [#allocation6], 384
    $region25: #{tpu_custom_call.1} parent=1 // pred_fallthru
      _
    // Predicated region
    $region26: #{tpu_custom_call.1} parent=1 // pred_check
      _
    $region27: #{tpu_custom_call.1} parent=1 // pred_check_branch
      %70 = sbr.rel (0) target = $region29
    $region28: #{tpu_custom_call.1} parent=1 // pred_region
      %71 = dma.done [#allocation6], 5120
    $region29: #{tpu_custom_call.1} parent=1 // pred_fallthru
      _
    // Predicated region
    $region30: #{tpu_custom_call.1} parent=1 // pred_check
      _
    $region31: #{tpu_custom_call.1} parent=1 // pred_check_branch
      %73 = sbr.rel (0) target = $region33
    $region32: #{tpu_custom_call.1} parent=1 // pred_region
      %74 = dma.done [#allocation9], 3072
    $region33: #{tpu_custom_call.1} parent=1 // pred_fallthru
      _
    %s76 = scalar_lea.vmem [#allocation8], 144
    %v77 = vld [vmem:[%s76] ss:$8 sm:$0xf]
    %v78 = vld [vmem:[%s76] ss:$8 sm:$0x30]
    %v79 = vor.u32 %v77, %v78
    %s80 = scalar_lea.vmem [#allocation8], 145
    %v81 = vld [vmem:[%s80] ss:$8 sm:$0xf]
    %v82 = vld [vmem:[%s80] ss:$8 sm:$0x30]
    %v83 = vor.u32 %v81, %v82
    %s84 = scalar_lea.vmem [#allocation8], 146
    %v85 = vld [vmem:[%s84] ss:$8 sm:$0xf]
    %v86 = vld [vmem:[%s84] ss:$8 sm:$0x30]
    %v87 = vor.u32 %v85, %v86
    %s88 = scalar_lea.vmem [#allocation8], 147
    %v89 = vld [vmem:[%s88] ss:$8 sm:$0xf]
    %v90 = vld [vmem:[%s88] ss:$8 sm:$0x30]
    %v91 = vor.u32 %v89, %v90
    %s92 = scalar_lea.vmem [#allocation8], 148
    %v93 = vld [vmem:[%s92] ss:$8 sm:$0xf]
    %v94 = vld [vmem:[%s92] ss:$8 sm:$0x30]
    %v95 = vor.u32 %v93, %v94
    %s96 = scalar_lea.vmem [#allocation8], 149
    %v97 = vld [vmem:[%s96] ss:$8 sm:$0xf]
    %v98 = vld [vmem:[%s96] ss:$8 sm:$0x30]
    %v99 = vor.u32 %v97, %v98
    %s100 = scalar_lea.vmem [#allocation8], 150
    %v101 = vld [vmem:[%s100] ss:$8 sm:$0xf]
    %v102 = vld [vmem:[%s100] ss:$8 sm:$0x30]
    %v103 = vor.u32 %v101, %v102
    %s104 = scalar_lea.vmem [#allocation8], 151
    %v105 = vld [vmem:[%s104] ss:$8 sm:$0xf]
    %v106 = vld [vmem:[%s104] ss:$8 sm:$0x30]
    %v107 = vor.u32 %v105, %v106
    %v108 = vld [vmem:[#allocation2] sm:$0x3f]
    %v110 = vlaneseq
    %v111 = vshrl.u32 %v110, 7
    %v112 = vsub.s32 0, %v111
    %v113 = vrot.slane %v108, %v112
    %v114 = vlaneseq
    %v115 = vshrl.u32 %v114, 7
    %v116 = vsub.s32 1, %v115
    %v117 = vrot.slane %v108, %v116
    %v118 = vlaneseq
    %v119 = vshrl.u32 %v118, 7
    %v120 = vsub.s32 2, %v119
    %v121 = vrot.slane %v108, %v120
    %v122 = vlaneseq
    %v123 = vshrl.u32 %v122, 7
    %v124 = vsub.s32 3, %v123
    %v125 = vrot.slane %v108, %v124
    %v126 = vlaneseq
    %v127 = vshrl.u32 %v126, 7
    %v128 = vsub.s32 4, %v127
    %v129 = vrot.slane %v108, %v128
    %v130 = vlaneseq
    %v131 = vshrl.u32 %v130, 7
    %v132 = vsub.s32 5, %v131
    %v133 = vrot.slane %v108, %v132
    %140 = vrot.lane.b32.xlu0 %v113, 1
    %v141 = vpop.permute.xlu0 %140
    %142 = vrot.lane.b32.xlu0 %v117, 1
    %v143 = vpop.permute.xlu0 %142
    %144 = vrot.lane.b32.xlu0 %v121, 1
    %v145 = vpop.permute.xlu0 %144
    %146 = vrot.lane.b32.xlu0 %v125, 1
    %v147 = vpop.permute.xlu0 %146
    %148 = vrot.lane.b32.xlu0 %v129, 1
    %v149 = vpop.permute.xlu0 %148
    %150 = vrot.lane.b32.xlu0 %v133, 1
    %v151 = vpop.permute.xlu0 %150
    %v152 = vlaneseq
    %v153 = vand.u32 %v152, 127
    %vm154 = vcmp.lt.s32.totalorder %v153, 1
    %v155 = vsel %vm154, %v149, %v151
    %v156 = vsel %vm154, %v147, %v149
    %v157 = vsel %vm154, %v145, %v147
    %v158 = vsel %vm154, %v143, %v145
    %v159 = vsel %vm154, %v141, %v143
    %v160 = vsel %vm154, %v151, %v141
    %v162 = vlaneseq
    %v163 = vshrl.u32 %v162, 7
    %v164 = vsub.s32 0, %v163
    %v165 = vrot.slane %v79, %v164
    %v166 = vlaneseq
    %v167 = vshrl.u32 %v166, 7
    %v168 = vsub.s32 1, %v167
    %v169 = vrot.slane %v79, %v168
    %v170 = vlaneseq
    %v171 = vshrl.u32 %v170, 7
    %v172 = vsub.s32 2, %v171
    %v173 = vrot.slane %v79, %v172
    %v174 = vlaneseq
    %v175 = vshrl.u32 %v174, 7
    %v176 = vsub.s32 3, %v175
    %v177 = vrot.slane %v79, %v176
    %v178 = vlaneseq
    %v179 = vshrl.u32 %v178, 7
    %v180 = vsub.s32 4, %v179
    %v181 = vrot.slane %v79, %v180
    %v182 = vlaneseq
    %v183 = vshrl.u32 %v182, 7
    %v184 = vsub.s32 5, %v183
    %v185 = vrot.slane %v79, %v184
    %v192 = vmul.f32 %v160, %v165
    %v193 = vmul.f32 %v159, %v169
    %v194 = vmul.f32 %v158, %v173
    %v195 = vmul.f32 %v157, %v177
    %v196 = vmul.f32 %v156, %v181
    %v197 = vmul.f32 %v155, %v185
    %198 = vrot.lane.b32.xlu0 %v113, 127
    %v199 = vpop.permute.xlu0 %198
    %200 = vrot.lane.b32.xlu0 %v117, 127
    %v201 = vpop.permute.xlu0 %200
    %202 = vrot.lane.b32.xlu0 %v121, 127
    %v203 = vpop.permute.xlu0 %202
    %204 = vrot.lane.b32.xlu0 %v125, 127
    %v205 = vpop.permute.xlu0 %204
    %206 = vrot.lane.b32.xlu0 %v129, 127
    %v207 = vpop.permute.xlu0 %206
    %208 = vrot.lane.b32.xlu0 %v133, 127
    %v209 = vpop.permute.xlu0 %208
    %vm210 = vcmp.lt.s32.totalorder %v153, 127
    %v211 = vsel %vm210, %v207, %v209
    %v212 = vsel %vm210, %v205, %v207
    %v213 = vsel %vm210, %v203, %v205
    %v214 = vsel %vm210, %v201, %v203
    %v215 = vsel %vm210, %v199, %v201
    %v216 = vsel %vm210, %v209, %v199
    %v218 = vlaneseq
    %v219 = vshrl.u32 %v218, 7
    %v220 = vsub.s32 0, %v219
    %v221 = vrot.slane %v83, %v220
    %v222 = vlaneseq
    %v223 = vshrl.u32 %v222, 7
    %v224 = vsub.s32 1, %v223
    %v225 = vrot.slane %v83, %v224
    %v226 = vlaneseq
    %v227 = vshrl.u32 %v226, 7
    %v228 = vsub.s32 2, %v227
    %v229 = vrot.slane %v83, %v228
    %v230 = vlaneseq
    %v231 = vshrl.u32 %v230, 7
    %v232 = vsub.s32 3, %v231
    %v233 = vrot.slane %v83, %v232
    %v234 = vlaneseq
    %v235 = vshrl.u32 %v234, 7
    %v236 = vsub.s32 4, %v235
    %v237 = vrot.slane %v83, %v236
    %v238 = vlaneseq
    %v239 = vshrl.u32 %v238, 7
    %v240 = vsub.s32 5, %v239
    %v241 = vrot.slane %v83, %v240
    %v248 = vmul.f32 %v215, %v221
    %v249 = vmul.f32 %v214, %v225
    %v250 = vmul.f32 %v213, %v229
    %v251 = vmul.f32 %v212, %v233
    %v252 = vmul.f32 %v211, %v237
    %v253 = vmul.f32 %v216, %v241
    %v260 = vrot.slane %v248, 6
    %v261 = vrot.slane %v249, 6
    %v262 = vrot.slane %v250, 6
    %v263 = vrot.slane %v251, 6
    %v264 = vrot.slane %v252, 6
    %v265 = vrot.slane %v253, 6
    %vm272 = vcmask 1040384
    %v273 = vsel %vm272, %v192, %v113
    %v274 = vsel %vm272, %v193, %v117
    %v275 = vsel %vm272, %v194, %v121
    %v276 = vsel %vm272, %v195, %v125
    %v277 = vsel %vm272, %v196, %v129
    %v278 = vsel %vm272, %v197, %v133
    %vm279 = vcmask 1041408
    %v280 = vsel %vm279, %v273, %v260
    %v281 = vsel %vm279, %v274, %v261
    %v282 = vsel %vm279, %v275, %v262
    %v283 = vsel %vm279, %v276, %v263
    %v284 = vsel %vm279, %v277, %v264
    %v285 = vsel %vm279, %v278, %v265
    %v286 = vld [vmem:[#allocation7] sm:$0xff]
    %v287 = vpack.c.bf16 %v286, %v286
    %v288 = vpack.c.bf16 %v280, %v280
    %v289 = vpack.c.bf16 %v281, %v281
    %v290 = vpack.c.bf16 %v282, %v282
    %v291 = vpack.c.bf16 %v283, %v283
    %v292 = vpack.c.bf16 %v284, %v284
    %v293 = vpack.c.bf16 %v285, %v285
    %295 = vset.pattern.permute.xlu0 3
    %296 = vperm.xlu0 %295, %v286
    %v297 = vpop.permute.xlu0 %296
    %vm299 = vcmask 23552
    %v301 = vsel %vm299, %v287, 0
    %v303 = vsel %vm272, 4294967295, 65535
    %v304 = vsel %vm279, %v303, 0
    %v306 = vand.u32 %v288, %v304
    %v309 = vand.u32 %v289, %v304
    %v312 = vand.u32 %v290, %v304
    %v315 = vand.u32 %v291, %v304
    %v318 = vand.u32 %v292, %v304
    %v321 = vand.u32 %v293, %v304
    %323 = vmatprep.subr.bf16.mxu0 %v309
    %324 = vmatpush1.bf16.msra.mxu0 %v306
    %325 = vmatprep.subr.bf16.mxu0 0
    %326 = vmatpush1.bf16.msra.mxu0 0
    %327 = vmatprep.subr.bf16.mxu0 0
    %328 = vmatpush1.bf16.msra.mxu0 0
    %329 = vmatprep.subr.bf16.mxu0 0
    %330 = vmatpush1.bf16.msra.mxu0 0
    %331 = vmatprep.subr.bf16.mxu0 0
    %332 = vmatpush1.bf16.msra.mxu0 0
    %333 = vmatprep.subr.bf16.mxu0 0
    %334 = vmatpush1.bf16.msra.mxu0 0
    %335 = vmatprep.subr.bf16.mxu0 0
    %336 = vmatpush1.bf16.msra.mxu0 0
    %337 = vmatprep.subr.bf16.mxu0 0
    %338 = vmatpush1.bf16.msra.mxu0 0
    %339 = vmatprep.subr.bf16.mxu0 0
    %340 = vmatpush1.bf16.msra.mxu0 0
    %341 = vmatprep.subr.bf16.mxu0 0
    %342 = vmatpush1.bf16.msra.mxu0 0
    %343 = vmatprep.subr.bf16.mxu0 0
    %344 = vmatpush1.bf16.msra.mxu0 0
    %345 = vmatprep.subr.bf16.mxu0 0
    %346 = vmatpush1.bf16.msra.mxu0 0
    %347 = vmatprep.subr.bf16.mxu0 0
    %348 = vmatpush1.bf16.msra.mxu0 0
    %349 = vmatprep.subr.bf16.mxu0 0
    %350 = vmatpush1.bf16.msra.mxu0 0
    %351 = vmatprep.subr.bf16.mxu0 0
    %352 = vmatpush1.bf16.msra.mxu0 0
    %353 = vmatprep.subr.bf16.mxu0 0
    %354 = vmatpush1.bf16.msra.mxu0 0
    %355 = vmatprep.mubr.bf16.mxu0 0
    %356 = vmatmul.mubr.bf16.gmra.mrb[0].mxu0 %v301
    %v357 = vpop.f32.mrb[0].mxu0
    %v358 = vadd.f32 %v297, %v357
    %v359 = vpop.f32.mrb[0].mxu0
    %v360 = vadd.f32 %v297, %v359
    %v361 = vpop.f32.mrb[0].mxu0
    %v362 = vpop.f32.mrb[0].mxu0
    %363 = vdwg.mxu0
    %364 = vmatprep.subr.bf16.mxu0 %v315
    %365 = vmatpush1.bf16.msra.mxu0 %v312
    %366 = vmatprep.subr.bf16.mxu0 0
    %367 = vmatpush1.bf16.msra.mxu0 0
    %368 = vmatprep.subr.bf16.mxu0 0
    %369 = vmatpush1.bf16.msra.mxu0 0
    %370 = vmatprep.subr.bf16.mxu0 0
    %371 = vmatpush1.bf16.msra.mxu0 0
    %372 = vmatprep.subr.bf16.mxu0 0
    %373 = vmatpush1.bf16.msra.mxu0 0
    %374 = vmatprep.subr.bf16.mxu0 0
    %375 = vmatpush1.bf16.msra.mxu0 0
    %376 = vmatprep.subr.bf16.mxu0 0
    %377 = vmatpush1.bf16.msra.mxu0 0
    %378 = vmatprep.subr.bf16.mxu0 0
    %379 = vmatpush1.bf16.msra.mxu0 0
    %380 = vmatprep.subr.bf16.mxu0 0
    %381 = vmatpush1.bf16.msra.mxu0 0
    %382 = vmatprep.subr.bf16.mxu0 0
    %383 = vmatpush1.bf16.msra.mxu0 0
    %384 = vmatprep.subr.bf16.mxu0 0
    %385 = vmatpush1.bf16.msra.mxu0 0
    %386 = vmatprep.subr.bf16.mxu0 0
    %387 = vmatpush1.bf16.msra.mxu0 0
    %388 = vmatprep.subr.bf16.mxu0 0
    %389 = vmatpush1.bf16.msra.mxu0 0
    %390 = vmatprep.subr.bf16.mxu0 0
    %391 = vmatpush1.bf16.msra.mxu0 0
    %392 = vmatprep.subr.bf16.mxu0 0
    %393 = vmatpush1.bf16.msra.mxu0 0
    %394 = vmatprep.subr.bf16.mxu0 0
    %395 = vmatpush1.bf16.msra.mxu0 0
    %396 = vmatprep.mubr.bf16.mxu0 0
    %397 = vmatmul.mubr.bf16.gmra.mrb[0].mxu0 %v301
    %v398 = vpop.f32.mrb[0].mxu0
    %v399 = vadd.f32 %v297, %v398
    %v400 = vpop.f32.mrb[0].mxu0
    %v401 = vadd.f32 %v297, %v400
    %v402 = vpop.f32.mrb[0].mxu0
    %v403 = vpop.f32.mrb[0].mxu0
    %404 = vdwg.mxu0
    %405 = vmatprep.subr.bf16.mxu0 %v321
    %406 = vmatpush1.bf16.msra.mxu0 %v318
    %407 = vmatprep.subr.bf16.mxu0 0
    %408 = vmatpush1.bf16.msra.mxu0 0
    %409 = vmatprep.subr.bf16.mxu0 0
    %410 = vmatpush1.bf16.msra.mxu0 0
    %411 = vmatprep.subr.bf16.mxu0 0
    %412 = vmatpush1.bf16.msra.mxu0 0
    %413 = vmatprep.subr.bf16.mxu0 0
    %414 = vmatpush1.bf16.msra.mxu0 0
    %415 = vmatprep.subr.bf16.mxu0 0
    %416 = vmatpush1.bf16.msra.mxu0 0
    %417 = vmatprep.subr.bf16.mxu0 0
    %418 = vmatpush1.bf16.msra.mxu0 0
    %419 = vmatprep.subr.bf16.mxu0 0
    %420 = vmatpush1.bf16.msra.mxu0 0
    %421 = vmatprep.subr.bf16.mxu0 0
    %422 = vmatpush1.bf16.msra.mxu0 0
    %423 = vmatprep.subr.bf16.mxu0 0
    %424 = vmatpush1.bf16.msra.mxu0 0
    %425 = vmatprep.subr.bf16.mxu0 0
    %426 = vmatpush1.bf16.msra.mxu0 0
    %427 = vmatprep.subr.bf16.mxu0 0
    %428 = vmatpush1.bf16.msra.mxu0 0
    %429 = vmatprep.subr.bf16.mxu0 0
    %430 = vmatpush1.bf16.msra.mxu0 0
    %431 = vmatprep.subr.bf16.mxu0 0
    %432 = vmatpush1.bf16.msra.mxu0 0
    %433 = vmatprep.subr.bf16.mxu0 0
    %434 = vmatpush1.bf16.msra.mxu0 0
    %435 = vmatprep.subr.bf16.mxu0 0
    %436 = vmatpush1.bf16.msra.mxu0 0
    %437 = vmatprep.mubr.bf16.mxu0 0
    %438 = vmatmul.mubr.bf16.gmra.mrb[0].mxu0 %v301
    %v439 = vpop.f32.mrb[0].mxu0
    %v440 = vadd.f32 %v297, %v439
    %v441 = vpop.f32.mrb[0].mxu0
    %v442 = vadd.f32 %v297, %v441
    %v443 = vpop.f32.mrb[0].mxu0
    %v444 = vpop.f32.mrb[0].mxu0
    %445 = vdwg.mxu0
    %v446 = vmax.f32 %v358, 0.0
    %v447 = vmax.f32 %v360, 0.0
    %v448 = vmax.f32 %v399, 0.0
    %v449 = vmax.f32 %v401, 0.0
    %v450 = vmax.f32 %v440, 0.0
    %v451 = vmax.f32 %v442, 0.0
    %452 = vrot.lane.b32.xlu0 %v446, 1
    %v453 = vpop.permute.xlu0 %452
    %454 = vrot.lane.b32.xlu0 %v447, 1
    %v455 = vpop.permute.xlu0 %454
    %456 = vrot.lane.b32.xlu0 %v448, 1
    %v457 = vpop.permute.xlu0 %456
    %458 = vrot.lane.b32.xlu0 %v449, 1
    %v459 = vpop.permute.xlu0 %458
    %460 = vrot.lane.b32.xlu0 %v450, 1
    %v461 = vpop.permute.xlu0 %460
    %462 = vrot.lane.b32.xlu0 %v451, 1
    %v463 = vpop.permute.xlu0 %462
    %v464 = vsel %vm154, %v461, %v463
    %v465 = vsel %vm154, %v459, %v461
    %v466 = vsel %vm154, %v457, %v459
    %v467 = vsel %vm154, %v455, %v457
    %v468 = vsel %vm154, %v453, %v455
    %v469 = vsel %vm154, %v463, %v453
    %v470 = vmul.f32 %v469, %v165
    %v471 = vmul.f32 %v468, %v169
    %v472 = vmul.f32 %v467, %v173
    %v473 = vmul.f32 %v466, %v177
    %v474 = vmul.f32 %v465, %v181
    %v475 = vmul.f32 %v464, %v185
    %476 = vrot.lane.b32.xlu0 %v446, 127
    %v477 = vpop.permute.xlu0 %476
    %478 = vrot.lane.b32.xlu0 %v447, 127
    %v479 = vpop.permute.xlu0 %478
    %480 = vrot.lane.b32.xlu0 %v448, 127
    %v481 = vpop.permute.xlu0 %480
    %482 = vrot.lane.b32.xlu0 %v449, 127
    %v483 = vpop.permute.xlu0 %482
    %484 = vrot.lane.b32.xlu0 %v450, 127
    %v485 = vpop.permute.xlu0 %484
    %486 = vrot.lane.b32.xlu0 %v451, 127
    %v487 = vpop.permute.xlu0 %486
    %v488 = vsel %vm210, %v485, %v487
    %v489 = vsel %vm210, %v483, %v485
    %v490 = vsel %vm210, %v481, %v483
    %v491 = vsel %vm210, %v479, %v481
    %v492 = vsel %vm210, %v477, %v479
    %v493 = vsel %vm210, %v487, %v477
    %v494 = vmul.f32 %v492, %v221
    %v495 = vmul.f32 %v491, %v225
    %v496 = vmul.f32 %v490, %v229
    %v497 = vmul.f32 %v489, %v233
    %v498 = vmul.f32 %v488, %v237
    %v499 = vmul.f32 %v493, %v241
    %v500 = vld [vmem:[#allocation7 + $0x8] sm:$0xff]
    %v501 = vpack.c.bf16 %v500, %v500
    %v502 = vpack.c.bf16 %v446, %v470
    %v503 = vpack.c.bf16 %v447, %v471
    %v504 = vpack.c.bf16 %v448, %v472
    %v505 = vpack.c.bf16 %v449, %v473
    %v506 = vpack.c.bf16 %v450, %v474
    %v507 = vpack.c.bf16 %v451, %v475
    %v508 = vpack.c.bf16 %v494, %v494
    %v509 = vpack.c.bf16 %v495, %v495
    %v510 = vpack.c.bf16 %v496, %v496
    %v511 = vpack.c.bf16 %v497, %v497
    %v512 = vpack.c.bf16 %v498, %v498
    %v513 = vpack.c.bf16 %v499, %v499
    %515 = vset.pattern.permute.xlu0 24
    %516 = vperm.xlu0 %515, %v500
    %v517 = vpop.permute.xlu0 %516
    %vm519 = vcmask 195584
    %v521 = vsel %vm519, %v501, 0
    %vm523 = vcmask 1043456
    %v525 = vsel %vm523, %v508, 0
    %v528 = vsel %vm523, %v509, 0
    %v531 = vsel %vm523, %v510, 0
    %v534 = vsel %vm523, %v511, 0
    %v537 = vsel %vm523, %v512, 0
    %v540 = vsel %vm523, %v513, 0
    %542 = vmatprep.subr.bf16.mxu0 %v503
    %543 = vmatpush1.bf16.msra.mxu0 %v502
    %544 = vmatprep.subr.bf16.mxu0 %v528
    %545 = vmatpush1.bf16.msra.mxu0 %v525
    %546 = vmatprep.subr.bf16.mxu0 0
    %547 = vmatpush1.bf16.msra.mxu0 0
    %548 = vmatprep.subr.bf16.mxu0 0
    %549 = vmatpush1.bf16.msra.mxu0 0
    %550 = vmatprep.subr.bf16.mxu0 0
    %551 = vmatpush1.bf16.msra.mxu0 0
    %552 = vmatprep.subr.bf16.mxu0 0
    %553 = vmatpush1.bf16.msra.mxu0 0
    %554 = vmatprep.subr.bf16.mxu0 0
    %555 = vmatpush1.bf16.msra.mxu0 0
    %556 = vmatprep.subr.bf16.mxu0 0
    %557 = vmatpush1.bf16.msra.mxu0 0
    %558 = vmatprep.subr.bf16.mxu0 0
    %559 = vmatpush1.bf16.msra.mxu0 0
    %560 = vmatprep.subr.bf16.mxu0 0
    %561 = vmatpush1.bf16.msra.mxu0 0
    %562 = vmatprep.subr.bf16.mxu0 0
    %563 = vmatpush1.bf16.msra.mxu0 0
    %564 = vmatprep.subr.bf16.mxu0 0
    %565 = vmatpush1.bf16.msra.mxu0 0
    %566 = vmatprep.subr.bf16.mxu0 0
    %567 = vmatpush1.bf16.msra.mxu0 0
    %568 = vmatprep.subr.bf16.mxu0 0
    %569 = vmatpush1.bf16.msra.mxu0 0
    %570 = vmatprep.subr.bf16.mxu0 0
    %571 = vmatpush1.bf16.msra.mxu0 0
    %572 = vmatprep.subr.bf16.mxu0 0
    %573 = vmatpush1.bf16.msra.mxu0 0
    %574 = vmatprep.mubr.bf16.mxu0 0
    %575 = vmatmul.mubr.bf16.gmra.mrb[0].mxu0 %v521
    %v576 = vpop.f32.mrb[0].mxu0
    %v577 = vadd.f32 %v517, %v576
    %v578 = vpop.f32.mrb[0].mxu0
    %v579 = vadd.f32 %v517, %v578
    %v580 = vpop.f32.mrb[0].mxu0
    %v581 = vpop.f32.mrb[0].mxu0
    %582 = vdwg.mxu0
    %583 = vmatprep.subr.bf16.mxu0 %v505
    %584 = vmatpush1.bf16.msra.mxu0 %v504
    %585 = vmatprep.subr.bf16.mxu0 %v534
    %586 = vmatpush1.bf16.msra.mxu0 %v531
    %587 = vmatprep.subr.bf16.mxu0 0
    %588 = vmatpush1.bf16.msra.mxu0 0
    %589 = vmatprep.subr.bf16.mxu0 0
    %590 = vmatpush1.bf16.msra.mxu0 0
    %591 = vmatprep.subr.bf16.mxu0 0
    %592 = vmatpush1.bf16.msra.mxu0 0
    %593 = vmatprep.subr.bf16.mxu0 0
    %594 = vmatpush1.bf16.msra.mxu0 0
    %595 = vmatprep.subr.bf16.mxu0 0
    %596 = vmatpush1.bf16.msra.mxu0 0
    %597 = vmatprep.subr.bf16.mxu0 0
    %598 = vmatpush1.bf16.msra.mxu0 0
    %599 = vmatprep.subr.bf16.mxu0 0
    %600 = vmatpush1.bf16.msra.mxu0 0
    %601 = vmatprep.subr.bf16.mxu0 0
    %602 = vmatpush1.bf16.msra.mxu0 0
    %603 = vmatprep.subr.bf16.mxu0 0
    %604 = vmatpush1.bf16.msra.mxu0 0
    %605 = vmatprep.subr.bf16.mxu0 0
    %606 = vmatpush1.bf16.msra.mxu0 0
    %607 = vmatprep.subr.bf16.mxu0 0
    %608 = vmatpush1.bf16.msra.mxu0 0
    %609 = vmatprep.subr.bf16.mxu0 0
    %610 = vmatpush1.bf16.msra.mxu0 0
    %611 = vmatprep.subr.bf16.mxu0 0
    %612 = vmatpush1.bf16.msra.mxu0 0
    %613 = vmatprep.subr.bf16.mxu0 0
    %614 = vmatpush1.bf16.msra.mxu0 0
    %615 = vmatprep.mubr.bf16.mxu0 0
    %616 = vmatmul.mubr.bf16.gmra.mrb[0].mxu0 %v521
    %v617 = vpop.f32.mrb[0].mxu0
    %v618 = vadd.f32 %v517, %v617
    %v619 = vpop.f32.mrb[0].mxu0
    %v620 = vadd.f32 %v517, %v619
    %v621 = vpop.f32.mrb[0].mxu0
    %v622 = vpop.f32.mrb[0].mxu0
    %623 = vdwg.mxu0
    %624 = vmatprep.subr.bf16.mxu0 %v507
    %625 = vmatpush1.bf16.msra.mxu0 %v506
    %626 = vmatprep.subr.bf16.mxu0 %v540
    %627 = vmatpush1.bf16.msra.mxu0 %v537
    %628 = vmatprep.subr.bf16.mxu0 0
    %629 = vmatpush1.bf16.msra.mxu0 0
    %630 = vmatprep.subr.bf16.mxu0 0
    %631 = vmatpush1.bf16.msra.mxu0 0
    %632 = vmatprep.subr.bf16.mxu0 0
    %633 = vmatpush1.bf16.msra.mxu0 0
    %634 = vmatprep.subr.bf16.mxu0 0
    %635 = vmatpush1.bf16.msra.mxu0 0
    %636 = vmatprep.subr.bf16.mxu0 0
    %637 = vmatpush1.bf16.msra.mxu0 0
    %638 = vmatprep.subr.bf16.mxu0 0
    %639 = vmatpush1.bf16.msra.mxu0 0
    %640 = vmatprep.subr.bf16.mxu0 0
    %641 = vmatpush1.bf16.msra.mxu0 0
    %642 = vmatprep.subr.bf16.mxu0 0
    %643 = vmatpush1.bf16.msra.mxu0 0
    %644 = vmatprep.subr.bf16.mxu0 0
    %645 = vmatpush1.bf16.msra.mxu0 0
    %646 = vmatprep.subr.bf16.mxu0 0
    %647 = vmatpush1.bf16.msra.mxu0 0
    %648 = vmatprep.subr.bf16.mxu0 0
    %649 = vmatpush1.bf16.msra.mxu0 0
    %650 = vmatprep.subr.bf16.mxu0 0
    %651 = vmatpush1.bf16.msra.mxu0 0
    %652 = vmatprep.subr.bf16.mxu0 0
    %653 = vmatpush1.bf16.msra.mxu0 0
    %654 = vmatprep.subr.bf16.mxu0 0
    %655 = vmatpush1.bf16.msra.mxu0 0
    %656 = vmatprep.mubr.bf16.mxu0 0
    %657 = vmatmul.mubr.bf16.gmra.mrb[0].mxu0 %v521
    %v658 = vpop.f32.mrb[0].mxu0
    %v659 = vadd.f32 %v517, %v658
    %v660 = vpop.f32.mrb[0].mxu0
    %v661 = vadd.f32 %v517, %v660
    %v662 = vpop.f32.mrb[0].mxu0
    %v663 = vpop.f32.mrb[0].mxu0
    %664 = vdwg.mxu0
    %v665 = vmax.f32 %v577, 0.0
    %v666 = vmax.f32 %v579, 0.0
    %v667 = vmax.f32 %v618, 0.0
    %v668 = vmax.f32 %v620, 0.0
    %v669 = vmax.f32 %v659, 0.0
    %v670 = vmax.f32 %v661, 0.0
    %671 = vrot.lane.b32.xlu0 %v665, 1
    %v672 = vpop.permute.xlu0 %671
    %673 = vrot.lane.b32.xlu0 %v666, 1
    %v674 = vpop.permute.xlu0 %673
    %675 = vrot.lane.b32.xlu0 %v667, 1
    %v676 = vpop.permute.xlu0 %675
    %677 = vrot.lane.b32.xlu0 %v668, 1
    %v678 = vpop.permute.xlu0 %677
    %679 = vrot.lane.b32.xlu0 %v669, 1
    %v680 = vpop.permute.xlu0 %679
    %681 = vrot.lane.b32.xlu0 %v670, 1
    %v682 = vpop.permute.xlu0 %681
    %v683 = vsel %vm154, %v680, %v682
    %v684 = vsel %vm154, %v678, %v680
    %v685 = vsel %vm154, %v676, %v678
    %v686 = vsel %vm154, %v674, %v676
    %v687 = vsel %vm154, %v672, %v674
    %v688 = vsel %vm154, %v682, %v672
    %v689 = vmul.f32 %v688, %v165
    %v690 = vmul.f32 %v687, %v169
    %v691 = vmul.f32 %v686, %v173
    %v692 = vmul.f32 %v685, %v177
    %v693 = vmul.f32 %v684, %v181
    %v694 = vmul.f32 %v683, %v185
    %695 = vrot.lane.b32.xlu0 %v665, 127
    %v696 = vpop.permute.xlu0 %695
    %697 = vrot.lane.b32.xlu0 %v666, 127
    %v698 = vpop.permute.xlu0 %697
    %699 = vrot.lane.b32.xlu0 %v667, 127
    %v700 = vpop.permute.xlu0 %699
    %701 = vrot.lane.b32.xlu0 %v668, 127
    %v702 = vpop.permute.xlu0 %701
    %703 = vrot.lane.b32.xlu0 %v669, 127
    %v704 = vpop.permute.xlu0 %703
    %705 = vrot.lane.b32.xlu0 %v670, 127
    %v706 = vpop.permute.xlu0 %705
    %v707 = vsel %vm210, %v704, %v706
    %v708 = vsel %vm210, %v702, %v704
    %v709 = vsel %vm210, %v700, %v702
    %v710 = vsel %vm210, %v698, %v700
    %v711 = vsel %vm210, %v696, %v698
    %v712 = vsel %vm210, %v706, %v696
    %v713 = vmul.f32 %v711, %v221
    %v714 = vmul.f32 %v710, %v225
    %v715 = vmul.f32 %v709, %v229
    %v716 = vmul.f32 %v708, %v233
    %v717 = vmul.f32 %v707, %v237
    %v718 = vmul.f32 %v712, %v241
    %v725 = vrot.slane %v665, 4
    %v726 = vrot.slane %v666, 4
    %v727 = vrot.slane %v667, 4
    %v728 = vrot.slane %v668, 4
    %v729 = vrot.slane %v669, 4
    %v730 = vrot.slane %v670, 4
    %v737 = vsel %vm523, %v689, %v725
    %v738 = vsel %vm523, %v690, %v726
    %v739 = vsel %vm523, %v691, %v727
    %v740 = vsel %vm523, %v692, %v728
    %v741 = vsel %vm523, %v693, %v729
    %v742 = vsel %vm523, %v694, %v730
    %v743 = vld [vmem:[#allocation7 + $0x10] sm:$0xf]
    %v744 = vpack.c.bf16 %v743, %v743
    %v745 = vpack.c.bf16 %v713, %v737
    %v746 = vpack.c.bf16 %v714, %v738
    %v747 = vpack.c.bf16 %v715, %v739
    %v748 = vpack.c.bf16 %v716, %v740
    %v749 = vpack.c.bf16 %v717, %v741
    %v750 = vpack.c.bf16 %v718, %v742
    %752 = vset.pattern.permute.xlu0 12
    %753 = vperm.xlu0 %752, %v743
    %v754 = vpop.permute.xlu0 %753
    %vm756 = vcmask 97280
    %v758 = vsel %vm756, %v744, 0
    %vm760 = vcmask 1045504
    %v762 = vsel %vm760, %v745, 0
    %v765 = vsel %vm760, %v746, 0
    %v768 = vsel %vm760, %v747, 0
    %v771 = vsel %vm760, %v748, 0
    %v774 = vsel %vm760, %v749, 0
    %v777 = vsel %vm760, %v750, 0
    %779 = vmatprep.subr.bf16.mxu0 %v765
    %780 = vmatpush1.bf16.msra.mxu0 %v762
    %781 = vmatprep.subr.bf16.mxu0 0
    %782 = vmatpush1.bf16.msra.mxu0 0
    %783 = vmatprep.subr.bf16.mxu0 0
    %784 = vmatpush1.bf16.msra.mxu0 0
    %785 = vmatprep.subr.bf16.mxu0 0
    %786 = vmatpush1.bf16.msra.mxu0 0
    %787 = vmatprep.subr.bf16.mxu0 0
    %788 = vmatpush1.bf16.msra.mxu0 0
    %789 = vmatprep.subr.bf16.mxu0 0
    %790 = vmatpush1.bf16.msra.mxu0 0
    %791 = vmatprep.subr.bf16.mxu0 0
    %792 = vmatpush1.bf16.msra.mxu0 0
    %793 = vmatprep.subr.bf16.mxu0 0
    %794 = vmatpush1.bf16.msra.mxu0 0
    %795 = vmatprep.subr.bf16.mxu0 0
    %796 = vmatpush1.bf16.msra.mxu0 0
    %797 = vmatprep.subr.bf16.mxu0 0
    %798 = vmatpush1.bf16.msra.mxu0 0
    %799 = vmatprep.subr.bf16.mxu0 0
    %800 = vmatpush1.bf16.msra.mxu0 0
    %801 = vmatprep.subr.bf16.mxu0 0
    %802 = vmatpush1.bf16.msra.mxu0 0
    %803 = vmatprep.subr.bf16.mxu0 0
    %804 = vmatpush1.bf16.msra.mxu0 0
    %805 = vmatprep.subr.bf16.mxu0 0
    %806 = vmatpush1.bf16.msra.mxu0 0
    %807 = vmatprep.subr.bf16.mxu0 0
    %808 = vmatpush1.bf16.msra.mxu0 0
    %809 = vmatprep.subr.bf16.mxu0 0
    %810 = vmatpush1.bf16.msra.mxu0 0
    %811 = vmatprep.mubr.bf16.mxu0 0
    %812 = vmatmul.mubr.bf16.gmra.mrb[0].mxu0 %v758
    %v813 = vpop.f32.mrb[0].mxu0
    %v814 = vadd.f32 %v754, %v813
    %v815 = vpop.f32.mrb[0].mxu0
    %v816 = vadd.f32 %v754, %v815
    %v817 = vpop.f32.mrb[0].mxu0
    %v818 = vpop.f32.mrb[0].mxu0
    %819 = vdwg.mxu0
    %820 = vmatprep.subr.bf16.mxu0 %v771
    %821 = vmatpush1.bf16.msra.mxu0 %v768
    %822 = vmatprep.subr.bf16.mxu0 0
    %823 = vmatpush1.bf16.msra.mxu0 0
    %824 = vmatprep.subr.bf16.mxu0 0
    %825 = vmatpush1.bf16.msra.mxu0 0
    %826 = vmatprep.subr.bf16.mxu0 0
    %827 = vmatpush1.bf16.msra.mxu0 0
    %828 = vmatprep.subr.bf16.mxu0 0
    %829 = vmatpush1.bf16.msra.mxu0 0
    %830 = vmatprep.subr.bf16.mxu0 0
    %831 = vmatpush1.bf16.msra.mxu0 0
    %832 = vmatprep.subr.bf16.mxu0 0
    %833 = vmatpush1.bf16.msra.mxu0 0
    %834 = vmatprep.subr.bf16.mxu0 0
    %835 = vmatpush1.bf16.msra.mxu0 0
    %836 = vmatprep.subr.bf16.mxu0 0
    %837 = vmatpush1.bf16.msra.mxu0 0
    %838 = vmatprep.subr.bf16.mxu0 0
    %839 = vmatpush1.bf16.msra.mxu0 0
    %840 = vmatprep.subr.bf16.mxu0 0
    %841 = vmatpush1.bf16.msra.mxu0 0
    %842 = vmatprep.subr.bf16.mxu0 0
    %843 = vmatpush1.bf16.msra.mxu0 0
    %844 = vmatprep.subr.bf16.mxu0 0
    %845 = vmatpush1.bf16.msra.mxu0 0
    %846 = vmatprep.subr.bf16.mxu0 0
    %847 = vmatpush1.bf16.msra.mxu0 0
    %848 = vmatprep.subr.bf16.mxu0 0
    %849 = vmatpush1.bf16.msra.mxu0 0
    %850 = vmatprep.subr.bf16.mxu0 0
    %851 = vmatpush1.bf16.msra.mxu0 0
    %852 = vmatprep.mubr.bf16.mxu0 0
    %853 = vmatmul.mubr.bf16.gmra.mrb[0].mxu0 %v758
    %v854 = vpop.f32.mrb[0].mxu0
    %v855 = vadd.f32 %v754, %v854
    %v856 = vpop.f32.mrb[0].mxu0
    %v857 = vadd.f32 %v754, %v856
    %v858 = vpop.f32.mrb[0].mxu0
    %v859 = vpop.f32.mrb[0].mxu0
    %860 = vdwg.mxu0
    %861 = vmatprep.subr.bf16.mxu0 %v777
    %862 = vmatpush1.bf16.msra.mxu0 %v774
    %863 = vmatprep.subr.bf16.mxu0 0
    %864 = vmatpush1.bf16.msra.mxu0 0
    %865 = vmatprep.subr.bf16.mxu0 0
    %866 = vmatpush1.bf16.msra.mxu0 0
    %867 = vmatprep.subr.bf16.mxu0 0
    %868 = vmatpush1.bf16.msra.mxu0 0
    %869 = vmatprep.subr.bf16.mxu0 0
    %870 = vmatpush1.bf16.msra.mxu0 0
    %871 = vmatprep.subr.bf16.mxu0 0
    %872 = vmatpush1.bf16.msra.mxu0 0
    %873 = vmatprep.subr.bf16.mxu0 0
    %874 = vmatpush1.bf16.msra.mxu0 0
    %875 = vmatprep.subr.bf16.mxu0 0
    %876 = vmatpush1.bf16.msra.mxu0 0
    %877 = vmatprep.subr.bf16.mxu0 0
    %878 = vmatpush1.bf16.msra.mxu0 0
    %879 = vmatprep.subr.bf16.mxu0 0
    %880 = vmatpush1.bf16.msra.mxu0 0
    %881 = vmatprep.subr.bf16.mxu0 0
    %882 = vmatpush1.bf16.msra.mxu0 0
    %883 = vmatprep.subr.bf16.mxu0 0
    %884 = vmatpush1.bf16.msra.mxu0 0
    %885 = vmatprep.subr.bf16.mxu0 0
    %886 = vmatpush1.bf16.msra.mxu0 0
    %887 = vmatprep.subr.bf16.mxu0 0
    %888 = vmatpush1.bf16.msra.mxu0 0
    %889 = vmatprep.subr.bf16.mxu0 0
    %890 = vmatpush1.bf16.msra.mxu0 0
    %891 = vmatprep.subr.bf16.mxu0 0
    %892 = vmatpush1.bf16.msra.mxu0 0
    %893 = vmatprep.mubr.bf16.mxu0 0
    %894 = vmatmul.mubr.bf16.gmra.mrb[0].mxu0 %v758
    %v895 = vpop.f32.mrb[0].mxu0
    %v896 = vadd.f32 %v754, %v895
    %v897 = vpop.f32.mrb[0].mxu0
    %v898 = vadd.f32 %v754, %v897
    %v899 = vpop.f32.mrb[0].mxu0
    %v900 = vpop.f32.mrb[0].mxu0
    %901 = vdwg.mxu0
    %v908 = vrot.slane %v577, 4
    %v909 = vrot.slane %v579, 4
    %v910 = vrot.slane %v618, 4
    %v911 = vrot.slane %v620, 4
    %v912 = vrot.slane %v659, 4
    %v913 = vrot.slane %v661, 4
    %v920 = vadd.f32 %v814, %v908
    %v921 = vadd.f32 %v816, %v909
    %v922 = vadd.f32 %v855, %v910
    %v923 = vadd.f32 %v857, %v911
    %v924 = vadd.f32 %v896, %v912
    %v925 = vadd.f32 %v898, %v913
    %v926 = vmax.f32 %v920, 0.0
    %v927 = vmax.f32 %v921, 0.0
    %v928 = vmax.f32 %v922, 0.0
    %v929 = vmax.f32 %v923, 0.0
    %v930 = vmax.f32 %v924, 0.0
    %v931 = vmax.f32 %v925, 0.0
    %932 = vrot.lane.b32.xlu0 %v926, 1
    %v933 = vpop.permute.xlu0 %932
    %934 = vrot.lane.b32.xlu0 %v927, 1
    %v935 = vpop.permute.xlu0 %934
    %936 = vrot.lane.b32.xlu0 %v928, 1
    %v937 = vpop.permute.xlu0 %936
    %938 = vrot.lane.b32.xlu0 %v929, 1
    %v939 = vpop.permute.xlu0 %938
    %940 = vrot.lane.b32.xlu0 %v930, 1
    %v941 = vpop.permute.xlu0 %940
    %942 = vrot.lane.b32.xlu0 %v931, 1
    %v943 = vpop.permute.xlu0 %942
    %v944 = vsel %vm154, %v941, %v943
    %v945 = vsel %vm154, %v939, %v941
    %v946 = vsel %vm154, %v937, %v939
    %v947 = vsel %vm154, %v935, %v937
    %v948 = vsel %vm154, %v933, %v935
    %v949 = vsel %vm154, %v943, %v933
    %v950 = vmul.f32 %v949, %v165
    %v951 = vmul.f32 %v948, %v169
    %v952 = vmul.f32 %v947, %v173
    %v953 = vmul.f32 %v946, %v177
    %v954 = vmul.f32 %v945, %v181
    %v955 = vmul.f32 %v944, %v185
    %956 = vrot.lane.b32.xlu0 %v926, 127
    %v957 = vpop.permute.xlu0 %956
    %958 = vrot.lane.b32.xlu0 %v927, 127
    %v959 = vpop.permute.xlu0 %958
    %960 = vrot.lane.b32.xlu0 %v928, 127
    %v961 = vpop.permute.xlu0 %960
    %962 = vrot.lane.b32.xlu0 %v929, 127
    %v963 = vpop.permute.xlu0 %962
    %964 = vrot.lane.b32.xlu0 %v930, 127
    %v965 = vpop.permute.xlu0 %964
    %966 = vrot.lane.b32.xlu0 %v931, 127
    %v967 = vpop.permute.xlu0 %966
    %v968 = vsel %vm210, %v965, %v967
    %v969 = vsel %vm210, %v963, %v965
    %v970 = vsel %vm210, %v961, %v963
    %v971 = vsel %vm210, %v959, %v961
    %v972 = vsel %vm210, %v957, %v959
    %v973 = vsel %vm210, %v967, %v957
    %v974 = vmul.f32 %v972, %v221
    %v975 = vmul.f32 %v971, %v225
    %v976 = vmul.f32 %v970, %v229
    %v977 = vmul.f32 %v969, %v233
    %v978 = vmul.f32 %v968, %v237
    %v979 = vmul.f32 %v973, %v241
    %v986 = vrot.slane %v926, 4
    %v987 = vrot.slane %v927, 4
    %v988 = vrot.slane %v928, 4
    %v989 = vrot.slane %v929, 4
    %v990 = vrot.slane %v930, 4
    %v991 = vrot.slane %v931, 4
    %v998 = vsel %vm523, %v950, %v986
    %v999 = vsel %vm523, %v951, %v987
    %v1000 = vsel %vm523, %v952, %v988
    %v1001 = vsel %vm523, %v953, %v989
    %v1002 = vsel %vm523, %v954, %v990
    %v1003 = vsel %vm523, %v955, %v991
    %v1004 = vld [vmem:[#allocation7 + $0x18] sm:$0xf]
    %v1005 = vpack.c.bf16 %v1004, %v1004
    %v1006 = vpack.c.bf16 %v974, %v998
    %v1007 = vpack.c.bf16 %v975, %v999
    %v1008 = vpack.c.bf16 %v976, %v1000
    %v1009 = vpack.c.bf16 %v977, %v1001
    %v1010 = vpack.c.bf16 %v978, %v1002
    %v1011 = vpack.c.bf16 %v979, %v1003
    %1013 = vset.pattern.permute.xlu0 12
    %1014 = vperm.xlu0 %1013, %v1004
    %v1015 = vpop.permute.xlu0 %1014
    %v1018 = vsel %vm756, %v1005, 0
    %v1021 = vsel %vm760, %v1006, 0
    %v1024 = vsel %vm760, %v1007, 0
    %v1027 = vsel %vm760, %v1008, 0
    %v1030 = vsel %vm760, %v1009, 0
    %v1033 = vsel %vm760, %v1010, 0
    %v1036 = vsel %vm760, %v1011, 0
    %1038 = vmatprep.subr.bf16.mxu0 %v1024
    %1039 = vmatpush1.bf16.msra.mxu0 %v1021
    %1040 = vmatprep.subr.bf16.mxu0 0
    %1041 = vmatpush1.bf16.msra.mxu0 0
    %1042 = vmatprep.subr.bf16.mxu0 0
    %1043 = vmatpush1.bf16.msra.mxu0 0
    %1044 = vmatprep.subr.bf16.mxu0 0
    %1045 = vmatpush1.bf16.msra.mxu0 0
    %1046 = vmatprep.subr.bf16.mxu0 0
    %1047 = vmatpush1.bf16.msra.mxu0 0
    %1048 = vmatprep.subr.bf16.mxu0 0
    %1049 = vmatpush1.bf16.msra.mxu0 0
    %1050 = vmatprep.subr.bf16.mxu0 0
    %1051 = vmatpush1.bf16.msra.mxu0 0
    %1052 = vmatprep.subr.bf16.mxu0 0
    %1053 = vmatpush1.bf16.msra.mxu0 0
    %1054 = vmatprep.subr.bf16.mxu0 0
    %1055 = vmatpush1.bf16.msra.mxu0 0
    %1056 = vmatprep.subr.bf16.mxu0 0
    %1057 = vmatpush1.bf16.msra.mxu0 0
    %1058 = vmatprep.subr.bf16.mxu0 0
    %1059 = vmatpush1.bf16.msra.mxu0 0
    %1060 = vmatprep.subr.bf16.mxu0 0
    %1061 = vmatpush1.bf16.msra.mxu0 0
    %1062 = vmatprep.subr.bf16.mxu0 0
    %1063 = vmatpush1.bf16.msra.mxu0 0
    %1064 = vmatprep.subr.bf16.mxu0 0
    %1065 = vmatpush1.bf16.msra.mxu0 0
    %1066 = vmatprep.subr.bf16.mxu0 0
    %1067 = vmatpush1.bf16.msra.mxu0 0
    %1068 = vmatprep.subr.bf16.mxu0 0
    %1069 = vmatpush1.bf16.msra.mxu0 0
    %1070 = vmatprep.mubr.bf16.mxu0 0
    %1071 = vmatmul.mubr.bf16.gmra.mrb[0].mxu0 %v1018
    %v1072 = vpop.f32.mrb[0].mxu0
    %v1073 = vadd.f32 %v1015, %v1072
    %v1074 = vpop.f32.mrb[0].mxu0
    %v1075 = vadd.f32 %v1015, %v1074
    %v1076 = vpop.f32.mrb[0].mxu0
    %v1077 = vpop.f32.mrb[0].mxu0
    %1078 = vdwg.mxu0
    %1079 = vmatprep.subr.bf16.mxu0 %v1030
    %1080 = vmatpush1.bf16.msra.mxu0 %v1027
    %1081 = vmatprep.subr.bf16.mxu0 0
    %1082 = vmatpush1.bf16.msra.mxu0 0
    %1083 = vmatprep.subr.bf16.mxu0 0
    %1084 = vmatpush1.bf16.msra.mxu0 0
    %1085 = vmatprep.subr.bf16.mxu0 0
    %1086 = vmatpush1.bf16.msra.mxu0 0
    %1087 = vmatprep.subr.bf16.mxu0 0
    %1088 = vmatpush1.bf16.msra.mxu0 0
    %1089 = vmatprep.subr.bf16.mxu0 0
    %1090 = vmatpush1.bf16.msra.mxu0 0
    %1091 = vmatprep.subr.bf16.mxu0 0
    %1092 = vmatpush1.bf16.msra.mxu0 0
    %1093 = vmatprep.subr.bf16.mxu0 0
    %1094 = vmatpush1.bf16.msra.mxu0 0
    %1095 = vmatprep.subr.bf16.mxu0 0
    %1096 = vmatpush1.bf16.msra.mxu0 0
    %1097 = vmatprep.subr.bf16.mxu0 0
    %1098 = vmatpush1.bf16.msra.mxu0 0
    %1099 = vmatprep.subr.bf16.mxu0 0
    %1100 = vmatpush1.bf16.msra.mxu0 0
    %1101 = vmatprep.subr.bf16.mxu0 0
    %1102 = vmatpush1.bf16.msra.mxu0 0
    %1103 = vmatprep.subr.bf16.mxu0 0
    %1104 = vmatpush1.bf16.msra.mxu0 0
    %1105 = vmatprep.subr.bf16.mxu0 0
    %1106 = vmatpush1.bf16.msra.mxu0 0
    %1107 = vmatprep.subr.bf16.mxu0 0
    %1108 = vmatpush1.bf16.msra.mxu0 0
    %1109 = vmatprep.subr.bf16.mxu0 0
    %1110 = vmatpush1.bf16.msra.mxu0 0
    %1111 = vmatprep.mubr.bf16.mxu0 0
    %1112 = vmatmul.mubr.bf16.gmra.mrb[0].mxu0 %v1018
    %v1113 = vpop.f32.mrb[0].mxu0
    %v1114 = vadd.f32 %v1015, %v1113
    %v1115 = vpop.f32.mrb[0].mxu0
    %v1116 = vadd.f32 %v1015, %v1115
    %v1117 = vpop.f32.mrb[0].mxu0
    %v1118 = vpop.f32.mrb[0].mxu0
    %1119 = vdwg.mxu0
    %1120 = vmatprep.subr.bf16.mxu0 %v1036
    %1121 = vmatpush1.bf16.msra.mxu0 %v1033
    %1122 = vmatprep.subr.bf16.mxu0 0
    %1123 = vmatpush1.bf16.msra.mxu0 0
    %1124 = vmatprep.subr.bf16.mxu0 0
    %1125 = vmatpush1.bf16.msra.mxu0 0
    %1126 = vmatprep.subr.bf16.mxu0 0
    %1127 = vmatpush1.bf16.msra.mxu0 0
    %1128 = vmatprep.subr.bf16.mxu0 0
    %1129 = vmatpush1.bf16.msra.mxu0 0
    %1130 = vmatprep.subr.bf16.mxu0 0
    %1131 = vmatpush1.bf16.msra.mxu0 0
    %1132 = vmatprep.subr.bf16.mxu0 0
    %1133 = vmatpush1.bf16.msra.mxu0 0
    %1134 = vmatprep.subr.bf16.mxu0 0
    %1135 = vmatpush1.bf16.msra.mxu0 0
    %1136 = vmatprep.subr.bf16.mxu0 0
    %1137 = vmatpush1.bf16.msra.mxu0 0
    %1138 = vmatprep.subr.bf16.mxu0 0
    %1139 = vmatpush1.bf16.msra.mxu0 0
    %1140 = vmatprep.subr.bf16.mxu0 0
    %1141 = vmatpush1.bf16.msra.mxu0 0
    %1142 = vmatprep.subr.bf16.mxu0 0
    %1143 = vmatpush1.bf16.msra.mxu0 0
    %1144 = vmatprep.subr.bf16.mxu0 0
    %1145 = vmatpush1.bf16.msra.mxu0 0
    %1146 = vmatprep.subr.bf16.mxu0 0
    %1147 = vmatpush1.bf16.msra.mxu0 0
    %1148 = vmatprep.subr.bf16.mxu0 0
    %1149 = vmatpush1.bf16.msra.mxu0 0
    %1150 = vmatprep.subr.bf16.mxu0 0
    %1151 = vmatpush1.bf16.msra.mxu0 0
    %1152 = vmatprep.mubr.bf16.mxu0 0
    %1153 = vmatmul.mubr.bf16.gmra.mrb[0].mxu0 %v1018
    %v1154 = vpop.f32.mrb[0].mxu0
    %v1155 = vadd.f32 %v1015, %v1154
    %v1156 = vpop.f32.mrb[0].mxu0
    %v1157 = vadd.f32 %v1015, %v1156
    %v1158 = vpop.f32.mrb[0].mxu0
    %v1159 = vpop.f32.mrb[0].mxu0
    %1160 = vdwg.mxu0
    %v1161 = vmax.f32 %v1073, 0.0
    %v1162 = vmax.f32 %v1075, 0.0
    %v1163 = vmax.f32 %v1114, 0.0
    %v1164 = vmax.f32 %v1116, 0.0
    %v1165 = vmax.f32 %v1155, 0.0
    %v1166 = vmax.f32 %v1157, 0.0
    %1167 = vrot.lane.b32.xlu0 %v1161, 1
    %v1168 = vpop.permute.xlu0 %1167
    %1169 = vrot.lane.b32.xlu0 %v1162, 1
    %v1170 = vpop.permute.xlu0 %1169
    %1171 = vrot.lane.b32.xlu0 %v1163, 1
    %v1172 = vpop.permute.xlu0 %1171
    %1173 = vrot.lane.b32.xlu0 %v1164, 1
    %v1174 = vpop.permute.xlu0 %1173
    %1175 = vrot.lane.b32.xlu0 %v1165, 1
    %v1176 = vpop.permute.xlu0 %1175
    %1177 = vrot.lane.b32.xlu0 %v1166, 1
    %v1178 = vpop.permute.xlu0 %1177
    %v1179 = vsel %vm154, %v1176, %v1178
    %v1180 = vsel %vm154, %v1174, %v1176
    %v1181 = vsel %vm154, %v1172, %v1174
    %v1182 = vsel %vm154, %v1170, %v1172
    %v1183 = vsel %vm154, %v1168, %v1170
    %v1184 = vsel %vm154, %v1178, %v1168
    %v1185 = vmul.f32 %v1184, %v165
    %v1186 = vmul.f32 %v1183, %v169
    %v1187 = vmul.f32 %v1182, %v173
    %v1188 = vmul.f32 %v1181, %v177
    %v1189 = vmul.f32 %v1180, %v181
    %v1190 = vmul.f32 %v1179, %v185
    %1191 = vrot.lane.b32.xlu0 %v1161, 127
    %v1192 = vpop.permute.xlu0 %1191
    %1193 = vrot.lane.b32.xlu0 %v1162, 127
    %v1194 = vpop.permute.xlu0 %1193
    %1195 = vrot.lane.b32.xlu0 %v1163, 127
    %v1196 = vpop.permute.xlu0 %1195
    %1197 = vrot.lane.b32.xlu0 %v1164, 127
    %v1198 = vpop.permute.xlu0 %1197
    %1199 = vrot.lane.b32.xlu0 %v1165, 127
    %v1200 = vpop.permute.xlu0 %1199
    %1201 = vrot.lane.b32.xlu0 %v1166, 127
    %v1202 = vpop.permute.xlu0 %1201
    %v1203 = vsel %vm210, %v1200, %v1202
    %v1204 = vsel %vm210, %v1198, %v1200
    %v1205 = vsel %vm210, %v1196, %v1198
    %v1206 = vsel %vm210, %v1194, %v1196
    %v1207 = vsel %vm210, %v1192, %v1194
    %v1208 = vsel %vm210, %v1202, %v1192
    %v1209 = vmul.f32 %v1207, %v221
    %v1210 = vmul.f32 %v1206, %v225
    %v1211 = vmul.f32 %v1205, %v229
    %v1212 = vmul.f32 %v1204, %v233
    %v1213 = vmul.f32 %v1203, %v237
    %v1214 = vmul.f32 %v1208, %v241
    %v1221 = vrot.slane %v1161, 4
    %v1222 = vrot.slane %v1162, 4
    %v1223 = vrot.slane %v1163, 4
    %v1224 = vrot.slane %v1164, 4
    %v1225 = vrot.slane %v1165, 4
    %v1226 = vrot.slane %v1166, 4
    %v1233 = vsel %vm523, %v1185, %v1221
    %v1234 = vsel %vm523, %v1186, %v1222
    %v1235 = vsel %vm523, %v1187, %v1223
    %v1236 = vsel %vm523, %v1188, %v1224
    %v1237 = vsel %vm523, %v1189, %v1225
    %v1238 = vsel %vm523, %v1190, %v1226
    %v1239 = vld [vmem:[#allocation7 + $0x20] sm:$0xf]
    %v1240 = vpack.c.bf16 %v1239, %v1239
    %v1241 = vpack.c.bf16 %v1209, %v1233
    %v1242 = vpack.c.bf16 %v1210, %v1234
    %v1243 = vpack.c.bf16 %v1211, %v1235
    %v1244 = vpack.c.bf16 %v1212, %v1236
    %v1245 = vpack.c.bf16 %v1213, %v1237
    %v1246 = vpack.c.bf16 %v1214, %v1238
    %1248 = vset.pattern.permute.xlu0 12
    %1249 = vperm.xlu0 %1248, %v1239
    %v1250 = vpop.permute.xlu0 %1249
    %v1253 = vsel %vm756, %v1240, 0
    %v1256 = vsel %vm760, %v1241, 0
    %v1259 = vsel %vm760, %v1242, 0
    %v1262 = vsel %vm760, %v1243, 0
    %v1265 = vsel %vm760, %v1244, 0
    %v1268 = vsel %vm760, %v1245, 0
    %v1271 = vsel %vm760, %v1246, 0
    %1273 = vmatprep.subr.bf16.mxu0 %v1259
    %1274 = vmatpush1.bf16.msra.mxu0 %v1256
    %1275 = vmatprep.subr.bf16.mxu0 0
    %1276 = vmatpush1.bf16.msra.mxu0 0
    %1277 = vmatprep.subr.bf16.mxu0 0
    %1278 = vmatpush1.bf16.msra.mxu0 0
    %1279 = vmatprep.subr.bf16.mxu0 0
    %1280 = vmatpush1.bf16.msra.mxu0 0
    %1281 = vmatprep.subr.bf16.mxu0 0
    %1282 = vmatpush1.bf16.msra.mxu0 0
    %1283 = vmatprep.subr.bf16.mxu0 0
    %1284 = vmatpush1.bf16.msra.mxu0 0
    %1285 = vmatprep.subr.bf16.mxu0 0
    %1286 = vmatpush1.bf16.msra.mxu0 0
    %1287 = vmatprep.subr.bf16.mxu0 0
    %1288 = vmatpush1.bf16.msra.mxu0 0
    %1289 = vmatprep.subr.bf16.mxu0 0
    %1290 = vmatpush1.bf16.msra.mxu0 0
    %1291 = vmatprep.subr.bf16.mxu0 0
    %1292 = vmatpush1.bf16.msra.mxu0 0
    %1293 = vmatprep.subr.bf16.mxu0 0
    %1294 = vmatpush1.bf16.msra.mxu0 0
    %1295 = vmatprep.subr.bf16.mxu0 0
    %1296 = vmatpush1.bf16.msra.mxu0 0
    %1297 = vmatprep.subr.bf16.mxu0 0
    %1298 = vmatpush1.bf16.msra.mxu0 0
    %1299 = vmatprep.subr.bf16.mxu0 0
    %1300 = vmatpush1.bf16.msra.mxu0 0
    %1301 = vmatprep.subr.bf16.mxu0 0
    %1302 = vmatpush1.bf16.msra.mxu0 0
    %1303 = vmatprep.subr.bf16.mxu0 0
    %1304 = vmatpush1.bf16.msra.mxu0 0
    %1305 = vmatprep.mubr.bf16.mxu0 0
    %1306 = vmatmul.mubr.bf16.gmra.mrb[0].mxu0 %v1253
    %v1307 = vpop.f32.mrb[0].mxu0
    %v1308 = vadd.f32 %v1250, %v1307
    %v1309 = vpop.f32.mrb[0].mxu0
    %v1310 = vadd.f32 %v1250, %v1309
    %v1311 = vpop.f32.mrb[0].mxu0
    %v1312 = vpop.f32.mrb[0].mxu0
    %1313 = vdwg.mxu0
    %1314 = vmatprep.subr.bf16.mxu0 %v1265
    %1315 = vmatpush1.bf16.msra.mxu0 %v1262
    %1316 = vmatprep.subr.bf16.mxu0 0
    %1317 = vmatpush1.bf16.msra.mxu0 0
    %1318 = vmatprep.subr.bf16.mxu0 0
    %1319 = vmatpush1.bf16.msra.mxu0 0
    %1320 = vmatprep.subr.bf16.mxu0 0
    %1321 = vmatpush1.bf16.msra.mxu0 0
    %1322 = vmatprep.subr.bf16.mxu0 0
    %1323 = vmatpush1.bf16.msra.mxu0 0
    %1324 = vmatprep.subr.bf16.mxu0 0
    %1325 = vmatpush1.bf16.msra.mxu0 0
    %1326 = vmatprep.subr.bf16.mxu0 0
    %1327 = vmatpush1.bf16.msra.mxu0 0
    %1328 = vmatprep.subr.bf16.mxu0 0
    %1329 = vmatpush1.bf16.msra.mxu0 0
    %1330 = vmatprep.subr.bf16.mxu0 0
    %1331 = vmatpush1.bf16.msra.mxu0 0
    %1332 = vmatprep.subr.bf16.mxu0 0
    %1333 = vmatpush1.bf16.msra.mxu0 0
    %1334 = vmatprep.subr.bf16.mxu0 0
    %1335 = vmatpush1.bf16.msra.mxu0 0
    %1336 = vmatprep.subr.bf16.mxu0 0
    %1337 = vmatpush1.bf16.msra.mxu0 0
    %1338 = vmatprep.subr.bf16.mxu0 0
    %1339 = vmatpush1.bf16.msra.mxu0 0
    %1340 = vmatprep.subr.bf16.mxu0 0
    %1341 = vmatpush1.bf16.msra.mxu0 0
    %1342 = vmatprep.subr.bf16.mxu0 0
    %1343 = vmatpush1.bf16.msra.mxu0 0
    %1344 = vmatprep.subr.bf16.mxu0 0
    %1345 = vmatpush1.bf16.msra.mxu0 0
    %1346 = vmatprep.mubr.bf16.mxu0 0
    %1347 = vmatmul.mubr.bf16.gmra.mrb[0].mxu0 %v1253
    %v1348 = vpop.f32.mrb[0].mxu0
    %v1349 = vadd.f32 %v1250, %v1348
    %v1350 = vpop.f32.mrb[0].mxu0
    %v1351 = vadd.f32 %v1250, %v1350
    %v1352 = vpop.f32.mrb[0].mxu0
    %v1353 = vpop.f32.mrb[0].mxu0
    %1354 = vdwg.mxu0
    %1355 = vmatprep.subr.bf16.mxu0 %v1271
    %1356 = vmatpush1.bf16.msra.mxu0 %v1268
    %1357 = vmatprep.subr.bf16.mxu0 0
    %1358 = vmatpush1.bf16.msra.mxu0 0
    %1359 = vmatprep.subr.bf16.mxu0 0
    %1360 = vmatpush1.bf16.msra.mxu0 0
    %1361 = vmatprep.subr.bf16.mxu0 0
    %1362 = vmatpush1.bf16.msra.mxu0 0
    %1363 = vmatprep.subr.bf16.mxu0 0
    %1364 = vmatpush1.bf16.msra.mxu0 0
    %1365 = vmatprep.subr.bf16.mxu0 0
    %1366 = vmatpush1.bf16.msra.mxu0 0
    %1367 = vmatprep.subr.bf16.mxu0 0
    %1368 = vmatpush1.bf16.msra.mxu0 0
    %1369 = vmatprep.subr.bf16.mxu0 0
    %1370 = vmatpush1.bf16.msra.mxu0 0
    %1371 = vmatprep.subr.bf16.mxu0 0
    %1372 = vmatpush1.bf16.msra.mxu0 0
    %1373 = vmatprep.subr.bf16.mxu0 0
    %1374 = vmatpush1.bf16.msra.mxu0 0
    %1375 = vmatprep.subr.bf16.mxu0 0
    %1376 = vmatpush1.bf16.msra.mxu0 0
    %1377 = vmatprep.subr.bf16.mxu0 0
    %1378 = vmatpush1.bf16.msra.mxu0 0
    %1379 = vmatprep.subr.bf16.mxu0 0
    %1380 = vmatpush1.bf16.msra.mxu0 0
    %1381 = vmatprep.subr.bf16.mxu0 0
    %1382 = vmatpush1.bf16.msra.mxu0 0
    %1383 = vmatprep.subr.bf16.mxu0 0
    %1384 = vmatpush1.bf16.msra.mxu0 0
    %1385 = vmatprep.subr.bf16.mxu0 0
    %1386 = vmatpush1.bf16.msra.mxu0 0
    %1387 = vmatprep.mubr.bf16.mxu0 0
    %1388 = vmatmul.mubr.bf16.gmra.mrb[0].mxu0 %v1253
    %v1389 = vpop.f32.mrb[0].mxu0
    %v1390 = vadd.f32 %v1250, %v1389
    %v1391 = vpop.f32.mrb[0].mxu0
    %v1392 = vadd.f32 %v1250, %v1391
    %v1393 = vpop.f32.mrb[0].mxu0
    %v1394 = vpop.f32.mrb[0].mxu0
    %1395 = vdwg.mxu0
    %v1396 = vadd.f32 %v1308, %v926
    %v1397 = vadd.f32 %v1310, %v927
    %v1398 = vadd.f32 %v1349, %v928
    %v1399 = vadd.f32 %v1351, %v929
    %v1400 = vadd.f32 %v1390, %v930
    %v1401 = vadd.f32 %v1392, %v931
    %v1402 = vmax.f32 %v1396, 0.0
    %v1403 = vmax.f32 %v1397, 0.0
    %v1404 = vmax.f32 %v1398, 0.0
    %v1405 = vmax.f32 %v1399, 0.0
    %v1406 = vmax.f32 %v1400, 0.0
    %v1407 = vmax.f32 %v1401, 0.0
    %1408 = vrot.lane.b32.xlu0 %v1402, 1
    %v1409 = vpop.permute.xlu0 %1408
    %1410 = vrot.lane.b32.xlu0 %v1403, 1
    %v1411 = vpop.permute.xlu0 %1410
    %1412 = vrot.lane.b32.xlu0 %v1404, 1
    %v1413 = vpop.permute.xlu0 %1412
    %1414 = vrot.lane.b32.xlu0 %v1405, 1
    %v1415 = vpop.permute.xlu0 %1414
    %1416 = vrot.lane.b32.xlu0 %v1406, 1
    %v1417 = vpop.permute.xlu0 %1416
    %1418 = vrot.lane.b32.xlu0 %v1407, 1
    %v1419 = vpop.permute.xlu0 %1418
    %v1420 = vsel %vm154, %v1417, %v1419
    %v1421 = vsel %vm154, %v1415, %v1417
    %v1422 = vsel %vm154, %v1413, %v1415
    %v1423 = vsel %vm154, %v1411, %v1413
    %v1424 = vsel %vm154, %v1409, %v1411
    %v1425 = vsel %vm154, %v1419, %v1409
    %v1426 = vmul.f32 %v1425, %v165
    %v1427 = vmul.f32 %v1424, %v169
    %v1428 = vmul.f32 %v1423, %v173
    %v1429 = vmul.f32 %v1422, %v177
    %v1430 = vmul.f32 %v1421, %v181
    %v1431 = vmul.f32 %v1420, %v185
    %1432 = vrot.lane.b32.xlu0 %v1402, 127
    %v1433 = vpop.permute.xlu0 %1432
    %1434 = vrot.lane.b32.xlu0 %v1403, 127
    %v1435 = vpop.permute.xlu0 %1434
    %1436 = vrot.lane.b32.xlu0 %v1404, 127
    %v1437 = vpop.permute.xlu0 %1436
    %1438 = vrot.lane.b32.xlu0 %v1405, 127
    %v1439 = vpop.permute.xlu0 %1438
    %1440 = vrot.lane.b32.xlu0 %v1406, 127
    %v1441 = vpop.permute.xlu0 %1440
    %1442 = vrot.lane.b32.xlu0 %v1407, 127
    %v1443 = vpop.permute.xlu0 %1442
    %v1444 = vsel %vm210, %v1441, %v1443
    %v1445 = vsel %vm210, %v1439, %v1441
    %v1446 = vsel %vm210, %v1437, %v1439
    %v1447 = vsel %vm210, %v1435, %v1437
    %v1448 = vsel %vm210, %v1433, %v1435
    %v1449 = vsel %vm210, %v1443, %v1433
    %v1450 = vmul.f32 %v1448, %v221
    %v1451 = vmul.f32 %v1447, %v225
    %v1452 = vmul.f32 %v1446, %v229
    %v1453 = vmul.f32 %v1445, %v233
    %v1454 = vmul.f32 %v1444, %v237
    %v1455 = vmul.f32 %v1449, %v241
    %v1462 = vrot.slane %v1402, 4
    %v1463 = vrot.slane %v1403, 4
    %v1464 = vrot.slane %v1404, 4
    %v1465 = vrot.slane %v1405, 4
    %v1466 = vrot.slane %v1406, 4
    %v1467 = vrot.slane %v1407, 4
    %v1474 = vsel %vm523, %v1426, %v1462
    %v1475 = vsel %vm523, %v1427, %v1463
    %v1476 = vsel %vm523, %v1428, %v1464
    %v1477 = vsel %vm523, %v1429, %v1465
    %v1478 = vsel %vm523, %v1430, %v1466
    %v1479 = vsel %vm523, %v1431, %v1467
    %v1480 = vld [vmem:[#allocation7 + $0x28] sm:$0xff]
    %v1481 = vld [vmem:[#allocation7 + $0x30] sm:$0xff]
    %v1482 = vpack.c.bf16 %v1481, %v1480
    %v1483 = vpack.c.bf16 %v1450, %v1474
    %v1484 = vpack.c.bf16 %v1451, %v1475
    %v1485 = vpack.c.bf16 %v1452, %v1476
    %v1486 = vpack.c.bf16 %v1453, %v1477
    %v1487 = vpack.c.bf16 %v1454, %v1478
    %v1488 = vpack.c.bf16 %v1455, %v1479
    %1490 = vset.pattern.permute.xlu0 12
    %1491 = vperm.xlu0 %1490, %v1480
    %v1492 = vpop.permute.xlu0 %1491
    %1495 = vset.pattern.permute.xlu0 12
    %1496 = vperm.xlu0 %1495, %v1481
    %v1497 = vpop.permute.xlu0 %1496
    %v1500 = vsel %vm756, %v1482, 0
    %v1503 = vsel %vm760, %v1483, 0
    %v1506 = vsel %vm760, %v1484, 0
    %v1509 = vsel %vm760, %v1485, 0
    %v1512 = vsel %vm760, %v1486, 0
    %v1515 = vsel %vm760, %v1487, 0
    %v1518 = vsel %vm760, %v1488, 0
    %1520 = vmatprep.subr.bf16.mxu0 %v1506
    %1521 = vmatpush1.bf16.msra.mxu0 %v1503
    %1522 = vmatprep.subr.bf16.mxu0 0
    %1523 = vmatpush1.bf16.msra.mxu0 0
    %1524 = vmatprep.subr.bf16.mxu0 0
    %1525 = vmatpush1.bf16.msra.mxu0 0
    %1526 = vmatprep.subr.bf16.mxu0 0
    %1527 = vmatpush1.bf16.msra.mxu0 0
    %1528 = vmatprep.subr.bf16.mxu0 0
    %1529 = vmatpush1.bf16.msra.mxu0 0
    %1530 = vmatprep.subr.bf16.mxu0 0
    %1531 = vmatpush1.bf16.msra.mxu0 0
    %1532 = vmatprep.subr.bf16.mxu0 0
    %1533 = vmatpush1.bf16.msra.mxu0 0
    %1534 = vmatprep.subr.bf16.mxu0 0
    %1535 = vmatpush1.bf16.msra.mxu0 0
    %1536 = vmatprep.subr.bf16.mxu0 0
    %1537 = vmatpush1.bf16.msra.mxu0 0
    %1538 = vmatprep.subr.bf16.mxu0 0
    %1539 = vmatpush1.bf16.msra.mxu0 0
    %1540 = vmatprep.subr.bf16.mxu0 0
    %1541 = vmatpush1.bf16.msra.mxu0 0
    %1542 = vmatprep.subr.bf16.mxu0 0
    %1543 = vmatpush1.bf16.msra.mxu0 0
    %1544 = vmatprep.subr.bf16.mxu0 0
    %1545 = vmatpush1.bf16.msra.mxu0 0
    %1546 = vmatprep.subr.bf16.mxu0 0
    %1547 = vmatpush1.bf16.msra.mxu0 0
    %1548 = vmatprep.subr.bf16.mxu0 0
    %1549 = vmatpush1.bf16.msra.mxu0 0
    %1550 = vmatprep.subr.bf16.mxu0 0
    %1551 = vmatpush1.bf16.msra.mxu0 0
    %1552 = vmatprep.mubr.bf16.mxu0 0
    %1553 = vmatmul.mubr.bf16.gmra.mrb[0].mxu0 %v1500
    %v1554 = vpop.f32.mrb[0].mxu0
    %v1555 = vadd.f32 %v1492, %v1554
    %v1556 = vpop.f32.mrb[0].mxu0
    %v1557 = vadd.f32 %v1492, %v1556
    %v1558 = vpop.f32.mrb[0].mxu0
    %v1559 = vadd.f32 %v1497, %v1558
    %v1560 = vpop.f32.mrb[0].mxu0
    %v1561 = vadd.f32 %v1497, %v1560
    %1562 = vdwg.mxu0
    %1563 = vmatprep.subr.bf16.mxu0 %v1512
    %1564 = vmatpush1.bf16.msra.mxu0 %v1509
    %1565 = vmatprep.subr.bf16.mxu0 0
    %1566 = vmatpush1.bf16.msra.mxu0 0
    %1567 = vmatprep.subr.bf16.mxu0 0
    %1568 = vmatpush1.bf16.msra.mxu0 0
    %1569 = vmatprep.subr.bf16.mxu0 0
    %1570 = vmatpush1.bf16.msra.mxu0 0
    %1571 = vmatprep.subr.bf16.mxu0 0
    %1572 = vmatpush1.bf16.msra.mxu0 0
    %1573 = vmatprep.subr.bf16.mxu0 0
    %1574 = vmatpush1.bf16.msra.mxu0 0
    %1575 = vmatprep.subr.bf16.mxu0 0
    %1576 = vmatpush1.bf16.msra.mxu0 0
    %1577 = vmatprep.subr.bf16.mxu0 0
    %1578 = vmatpush1.bf16.msra.mxu0 0
    %1579 = vmatprep.subr.bf16.mxu0 0
    %1580 = vmatpush1.bf16.msra.mxu0 0
    %1581 = vmatprep.subr.bf16.mxu0 0
    %1582 = vmatpush1.bf16.msra.mxu0 0
    %1583 = vmatprep.subr.bf16.mxu0 0
    %1584 = vmatpush1.bf16.msra.mxu0 0
    %1585 = vmatprep.subr.bf16.mxu0 0
    %1586 = vmatpush1.bf16.msra.mxu0 0
    %1587 = vmatprep.subr.bf16.mxu0 0
    %1588 = vmatpush1.bf16.msra.mxu0 0
    %1589 = vmatprep.subr.bf16.mxu0 0
    %1590 = vmatpush1.bf16.msra.mxu0 0
    %1591 = vmatprep.subr.bf16.mxu0 0
    %1592 = vmatpush1.bf16.msra.mxu0 0
    %1593 = vmatprep.subr.bf16.mxu0 0
    %1594 = vmatpush1.bf16.msra.mxu0 0
    %1595 = vmatprep.mubr.bf16.mxu0 0
    %1596 = vmatmul.mubr.bf16.gmra.mrb[0].mxu0 %v1500
    %v1597 = vpop.f32.mrb[0].mxu0
    %v1598 = vadd.f32 %v1492, %v1597
    %v1599 = vpop.f32.mrb[0].mxu0
    %v1600 = vadd.f32 %v1492, %v1599
    %v1601 = vpop.f32.mrb[0].mxu0
    %v1602 = vadd.f32 %v1497, %v1601
    %v1603 = vpop.f32.mrb[0].mxu0
    %v1604 = vadd.f32 %v1497, %v1603
    %1605 = vdwg.mxu0
    %1606 = vmatprep.subr.bf16.mxu0 %v1518
    %1607 = vmatpush1.bf16.msra.mxu0 %v1515
    %1608 = vmatprep.subr.bf16.mxu0 0
    %1609 = vmatpush1.bf16.msra.mxu0 0
    %1610 = vmatprep.subr.bf16.mxu0 0
    %1611 = vmatpush1.bf16.msra.mxu0 0
    %1612 = vmatprep.subr.bf16.mxu0 0
    %1613 = vmatpush1.bf16.msra.mxu0 0
    %1614 = vmatprep.subr.bf16.mxu0 0
    %1615 = vmatpush1.bf16.msra.mxu0 0
    %1616 = vmatprep.subr.bf16.mxu0 0
    %1617 = vmatpush1.bf16.msra.mxu0 0
    %1618 = vmatprep.subr.bf16.mxu0 0
    %1619 = vmatpush1.bf16.msra.mxu0 0
    %1620 = vmatprep.subr.bf16.mxu0 0
    %1621 = vmatpush1.bf16.msra.mxu0 0
    %1622 = vmatprep.subr.bf16.mxu0 0
    %1623 = vmatpush1.bf16.msra.mxu0 0
    %1624 = vmatprep.subr.bf16.mxu0 0
    %1625 = vmatpush1.bf16.msra.mxu0 0
    %1626 = vmatprep.subr.bf16.mxu0 0
    %1627 = vmatpush1.bf16.msra.mxu0 0
    %1628 = vmatprep.subr.bf16.mxu0 0
    %1629 = vmatpush1.bf16.msra.mxu0 0
    %1630 = vmatprep.subr.bf16.mxu0 0
    %1631 = vmatpush1.bf16.msra.mxu0 0
    %1632 = vmatprep.subr.bf16.mxu0 0
    %1633 = vmatpush1.bf16.msra.mxu0 0
    %1634 = vmatprep.subr.bf16.mxu0 0
    %1635 = vmatpush1.bf16.msra.mxu0 0
    %1636 = vmatprep.subr.bf16.mxu0 0
    %1637 = vmatpush1.bf16.msra.mxu0 0
    %1638 = vmatprep.mubr.bf16.mxu0 0
    %1639 = vmatmul.mubr.bf16.gmra.mrb[0].mxu0 %v1500
    %v1640 = vpop.f32.mrb[0].mxu0
    %v1641 = vadd.f32 %v1492, %v1640
    %v1642 = vpop.f32.mrb[0].mxu0
    %v1643 = vadd.f32 %v1492, %v1642
    %v1644 = vpop.f32.mrb[0].mxu0
    %v1645 = vadd.f32 %v1497, %v1644
    %v1646 = vpop.f32.mrb[0].mxu0
    %v1647 = vadd.f32 %v1497, %v1646
    %1648 = vdwg.mxu0
    %v1649 = vmax.f32 %v1555, 0.0
    %v1650 = vmax.f32 %v1557, 0.0
    %v1651 = vmax.f32 %v1598, 0.0
    %v1652 = vmax.f32 %v1600, 0.0
    %v1653 = vmax.f32 %v1641, 0.0
    %v1654 = vmax.f32 %v1643, 0.0
    %1655 = vrot.lane.b32.xlu0 %v1649, 2
    %v1656 = vpop.permute.xlu0 %1655
    %1657 = vrot.lane.b32.xlu0 %v1650, 2
    %v1658 = vpop.permute.xlu0 %1657
    %1659 = vrot.lane.b32.xlu0 %v1651, 2
    %v1660 = vpop.permute.xlu0 %1659
    %1661 = vrot.lane.b32.xlu0 %v1652, 2
    %v1662 = vpop.permute.xlu0 %1661
    %1663 = vrot.lane.b32.xlu0 %v1653, 2
    %v1664 = vpop.permute.xlu0 %1663
    %1665 = vrot.lane.b32.xlu0 %v1654, 2
    %v1666 = vpop.permute.xlu0 %1665
    %vm1667 = vcmp.lt.s32.totalorder %v153, 2
    %v1668 = vsel %vm1667, %v1664, %v1666
    %v1669 = vsel %vm1667, %v1662, %v1664
    %v1670 = vsel %vm1667, %v1660, %v1662
    %v1671 = vsel %vm1667, %v1658, %v1660
    %v1672 = vsel %vm1667, %v1656, %v1658
    %v1673 = vsel %vm1667, %v1666, %v1656
    %v1675 = vlaneseq
    %v1676 = vshrl.u32 %v1675, 7
    %v1677 = vsub.s32 0, %v1676
    %v1678 = vrot.slane %v87, %v1677
    %v1679 = vlaneseq
    %v1680 = vshrl.u32 %v1679, 7
    %v1681 = vsub.s32 1, %v1680
    %v1682 = vrot.slane %v87, %v1681
    %v1683 = vlaneseq
    %v1684 = vshrl.u32 %v1683, 7
    %v1685 = vsub.s32 2, %v1684
    %v1686 = vrot.slane %v87, %v1685
    %v1687 = vlaneseq
    %v1688 = vshrl.u32 %v1687, 7
    %v1689 = vsub.s32 3, %v1688
    %v1690 = vrot.slane %v87, %v1689
    %v1691 = vlaneseq
    %v1692 = vshrl.u32 %v1691, 7
    %v1693 = vsub.s32 4, %v1692
    %v1694 = vrot.slane %v87, %v1693
    %v1695 = vlaneseq
    %v1696 = vshrl.u32 %v1695, 7
    %v1697 = vsub.s32 5, %v1696
    %v1698 = vrot.slane %v87, %v1697
    %v1705 = vmul.f32 %v1673, %v1678
    %v1706 = vmul.f32 %v1672, %v1682
    %v1707 = vmul.f32 %v1671, %v1686
    %v1708 = vmul.f32 %v1670, %v1690
    %v1709 = vmul.f32 %v1669, %v1694
    %v1710 = vmul.f32 %v1668, %v1698
    %1711 = vrot.lane.b32.xlu0 %v1649, 126
    %v1712 = vpop.permute.xlu0 %1711
    %1713 = vrot.lane.b32.xlu0 %v1650, 126
    %v1714 = vpop.permute.xlu0 %1713
    %1715 = vrot.lane.b32.xlu0 %v1651, 126
    %v1716 = vpop.permute.xlu0 %1715
    %1717 = vrot.lane.b32.xlu0 %v1652, 126
    %v1718 = vpop.permute.xlu0 %1717
    %1719 = vrot.lane.b32.xlu0 %v1653, 126
    %v1720 = vpop.permute.xlu0 %1719
    %1721 = vrot.lane.b32.xlu0 %v1654, 126
    %v1722 = vpop.permute.xlu0 %1721
    %vm1723 = vcmp.lt.s32.totalorder %v153, 126
    %v1724 = vsel %vm1723, %v1720, %v1722
    %v1725 = vsel %vm1723, %v1718, %v1720
    %v1726 = vsel %vm1723, %v1716, %v1718
    %v1727 = vsel %vm1723, %v1714, %v1716
    %v1728 = vsel %vm1723, %v1712, %v1714
    %v1729 = vsel %vm1723, %v1722, %v1712
    %v1731 = vlaneseq
    %v1732 = vshrl.u32 %v1731, 7
    %v1733 = vsub.s32 0, %v1732
    %v1734 = vrot.slane %v91, %v1733
    %v1735 = vlaneseq
    %v1736 = vshrl.u32 %v1735, 7
    %v1737 = vsub.s32 1, %v1736
    %v1738 = vrot.slane %v91, %v1737
    %v1739 = vlaneseq
    %v1740 = vshrl.u32 %v1739, 7
    %v1741 = vsub.s32 2, %v1740
    %v1742 = vrot.slane %v91, %v1741
    %v1743 = vlaneseq
    %v1744 = vshrl.u32 %v1743, 7
    %v1745 = vsub.s32 3, %v1744
    %v1746 = vrot.slane %v91, %v1745
    %v1747 = vlaneseq
    %v1748 = vshrl.u32 %v1747, 7
    %v1749 = vsub.s32 4, %v1748
    %v1750 = vrot.slane %v91, %v1749
    %v1751 = vlaneseq
    %v1752 = vshrl.u32 %v1751, 7
    %v1753 = vsub.s32 5, %v1752
    %v1754 = vrot.slane %v91, %v1753
    %v1761 = vmul.f32 %v1728, %v1734
    %v1762 = vmul.f32 %v1727, %v1738
    %v1763 = vmul.f32 %v1726, %v1742
    %v1764 = vmul.f32 %v1725, %v1746
    %v1765 = vmul.f32 %v1724, %v1750
    %v1766 = vmul.f32 %v1729, %v1754
    %v1767 = vld [vmem:[#allocation7 + $0x38] sm:$0xff]
    %v1768 = vpack.c.bf16 %v1767, %v1767
    %v1769 = vpack.c.bf16 %v1649, %v1705
    %v1770 = vpack.c.bf16 %v1650, %v1706
    %v1771 = vpack.c.bf16 %v1651, %v1707
    %v1772 = vpack.c.bf16 %v1652, %v1708
    %v1773 = vpack.c.bf16 %v1653, %v1709
    %v1774 = vpack.c.bf16 %v1654, %v1710
    %v1775 = vpack.c.bf16 %v1761, %v1761
    %v1776 = vpack.c.bf16 %v1762, %v1762
    %v1777 = vpack.c.bf16 %v1763, %v1763
    %v1778 = vpack.c.bf16 %v1764, %v1764
    %v1779 = vpack.c.bf16 %v1765, %v1765
    %v1780 = vpack.c.bf16 %v1766, %v1766
    %1782 = vset.pattern.permute.xlu0 24
    %1783 = vperm.xlu0 %1782, %v1767
    %v1784 = vpop.permute.xlu0 %1783
    %v1787 = vsel %vm519, %v1768, 0
    %v1790 = vsel %vm523, %v1775, 0
    %v1793 = vsel %vm523, %v1776, 0
    %v1796 = vsel %vm523, %v1777, 0
    %v1799 = vsel %vm523, %v1778, 0
    %v1802 = vsel %vm523, %v1779, 0
    %v1805 = vsel %vm523, %v1780, 0
    %1807 = vmatprep.subr.bf16.mxu0 %v1770
    %1808 = vmatpush1.bf16.msra.mxu0 %v1769
    %1809 = vmatprep.subr.bf16.mxu0 %v1793
    %1810 = vmatpush1.bf16.msra.mxu0 %v1790
    %1811 = vmatprep.subr.bf16.mxu0 0
    %1812 = vmatpush1.bf16.msra.mxu0 0
    %1813 = vmatprep.subr.bf16.mxu0 0
    %1814 = vmatpush1.bf16.msra.mxu0 0
    %1815 = vmatprep.subr.bf16.mxu0 0
    %1816 = vmatpush1.bf16.msra.mxu0 0
    %1817 = vmatprep.subr.bf16.mxu0 0
    %1818 = vmatpush1.bf16.msra.mxu0 0
    %1819 = vmatprep.subr.bf16.mxu0 0
    %1820 = vmatpush1.bf16.msra.mxu0 0
    %1821 = vmatprep.subr.bf16.mxu0 0
    %1822 = vmatpush1.bf16.msra.mxu0 0
    %1823 = vmatprep.subr.bf16.mxu0 0
    %1824 = vmatpush1.bf16.msra.mxu0 0
    %1825 = vmatprep.subr.bf16.mxu0 0
    %1826 = vmatpush1.bf16.msra.mxu0 0
    %1827 = vmatprep.subr.bf16.mxu0 0
    %1828 = vmatpush1.bf16.msra.mxu0 0
    %1829 = vmatprep.subr.bf16.mxu0 0
    %1830 = vmatpush1.bf16.msra.mxu0 0
    %1831 = vmatprep.subr.bf16.mxu0 0
    %1832 = vmatpush1.bf16.msra.mxu0 0
    %1833 = vmatprep.subr.bf16.mxu0 0
    %1834 = vmatpush1.bf16.msra.mxu0 0
    %1835 = vmatprep.subr.bf16.mxu0 0
    %1836 = vmatpush1.bf16.msra.mxu0 0
    %1837 = vmatprep.subr.bf16.mxu0 0
    %1838 = vmatpush1.bf16.msra.mxu0 0
    %1839 = vmatprep.mubr.bf16.mxu0 0
    %1840 = vmatmul.mubr.bf16.gmra.mrb[0].mxu0 %v1787
    %v1841 = vpop.f32.mrb[0].mxu0
    %v1842 = vadd.f32 %v1784, %v1841
    %v1843 = vpop.f32.mrb[0].mxu0
    %v1844 = vadd.f32 %v1784, %v1843
    %v1845 = vpop.f32.mrb[0].mxu0
    %v1846 = vpop.f32.mrb[0].mxu0
    %1847 = vdwg.mxu0
    %1848 = vmatprep.subr.bf16.mxu0 %v1772
    %1849 = vmatpush1.bf16.msra.mxu0 %v1771
    %1850 = vmatprep.subr.bf16.mxu0 %v1799
    %1851 = vmatpush1.bf16.msra.mxu0 %v1796
    %1852 = vmatprep.subr.bf16.mxu0 0
    %1853 = vmatpush1.bf16.msra.mxu0 0
    %1854 = vmatprep.subr.bf16.mxu0 0
    %1855 = vmatpush1.bf16.msra.mxu0 0
    %1856 = vmatprep.subr.bf16.mxu0 0
    %1857 = vmatpush1.bf16.msra.mxu0 0
    %1858 = vmatprep.subr.bf16.mxu0 0
    %1859 = vmatpush1.bf16.msra.mxu0 0
    %1860 = vmatprep.subr.bf16.mxu0 0
    %1861 = vmatpush1.bf16.msra.mxu0 0
    %1862 = vmatprep.subr.bf16.mxu0 0
    %1863 = vmatpush1.bf16.msra.mxu0 0
    %1864 = vmatprep.subr.bf16.mxu0 0
    %1865 = vmatpush1.bf16.msra.mxu0 0
    %1866 = vmatprep.subr.bf16.mxu0 0
    %1867 = vmatpush1.bf16.msra.mxu0 0
    %1868 = vmatprep.subr.bf16.mxu0 0
    %1869 = vmatpush1.bf16.msra.mxu0 0
    %1870 = vmatprep.subr.bf16.mxu0 0
    %1871 = vmatpush1.bf16.msra.mxu0 0
    %1872 = vmatprep.subr.bf16.mxu0 0
    %1873 = vmatpush1.bf16.msra.mxu0 0
    %1874 = vmatprep.subr.bf16.mxu0 0
    %1875 = vmatpush1.bf16.msra.mxu0 0
    %1876 = vmatprep.subr.bf16.mxu0 0
    %1877 = vmatpush1.bf16.msra.mxu0 0
    %1878 = vmatprep.subr.bf16.mxu0 0
    %1879 = vmatpush1.bf16.msra.mxu0 0
    %1880 = vmatprep.mubr.bf16.mxu0 0
    %1881 = vmatmul.mubr.bf16.gmra.mrb[0].mxu0 %v1787
    %v1882 = vpop.f32.mrb[0].mxu0
    %v1883 = vadd.f32 %v1784, %v1882
    %v1884 = vpop.f32.mrb[0].mxu0
    %v1885 = vadd.f32 %v1784, %v1884
    %v1886 = vpop.f32.mrb[0].mxu0
    %v1887 = vpop.f32.mrb[0].mxu0
    %1888 = vdwg.mxu0
    %1889 = vmatprep.subr.bf16.mxu0 %v1774
    %1890 = vmatpush1.bf16.msra.mxu0 %v1773
    %1891 = vmatprep.subr.bf16.mxu0 %v1805
    %1892 = vmatpush1.bf16.msra.mxu0 %v1802
    %1893 = vmatprep.subr.bf16.mxu0 0
    %1894 = vmatpush1.bf16.msra.mxu0 0
    %1895 = vmatprep.subr.bf16.mxu0 0
    %1896 = vmatpush1.bf16.msra.mxu0 0
    %1897 = vmatprep.subr.bf16.mxu0 0
    %1898 = vmatpush1.bf16.msra.mxu0 0
    %1899 = vmatprep.subr.bf16.mxu0 0
    %1900 = vmatpush1.bf16.msra.mxu0 0
    %1901 = vmatprep.subr.bf16.mxu0 0
    %1902 = vmatpush1.bf16.msra.mxu0 0
    %1903 = vmatprep.subr.bf16.mxu0 0
    %1904 = vmatpush1.bf16.msra.mxu0 0
    %1905 = vmatprep.subr.bf16.mxu0 0
    %1906 = vmatpush1.bf16.msra.mxu0 0
    %1907 = vmatprep.subr.bf16.mxu0 0
    %1908 = vmatpush1.bf16.msra.mxu0 0
    %1909 = vmatprep.subr.bf16.mxu0 0
    %1910 = vmatpush1.bf16.msra.mxu0 0
    %1911 = vmatprep.subr.bf16.mxu0 0
    %1912 = vmatpush1.bf16.msra.mxu0 0
    %1913 = vmatprep.subr.bf16.mxu0 0
    %1914 = vmatpush1.bf16.msra.mxu0 0
    %1915 = vmatprep.subr.bf16.mxu0 0
    %1916 = vmatpush1.bf16.msra.mxu0 0
    %1917 = vmatprep.subr.bf16.mxu0 0
    %1918 = vmatpush1.bf16.msra.mxu0 0
    %1919 = vmatprep.subr.bf16.mxu0 0
    %1920 = vmatpush1.bf16.msra.mxu0 0
    %1921 = vmatprep.mubr.bf16.mxu0 0
    %1922 = vmatmul.mubr.bf16.gmra.mrb[0].mxu0 %v1787
    %v1923 = vpop.f32.mrb[0].mxu0
    %v1924 = vadd.f32 %v1784, %v1923
    %v1925 = vpop.f32.mrb[0].mxu0
    %v1926 = vadd.f32 %v1784, %v1925
    %v1927 = vpop.f32.mrb[0].mxu0
    %v1928 = vpop.f32.mrb[0].mxu0
    %1929 = vdwg.mxu0
    %v1930 = vadd.f32 %v1842, %v1559
    %v1931 = vadd.f32 %v1844, %v1561
    %v1932 = vadd.f32 %v1883, %v1602
    %v1933 = vadd.f32 %v1885, %v1604
    %v1934 = vadd.f32 %v1924, %v1645
    %v1935 = vadd.f32 %v1926, %v1647
    %v1936 = vmax.f32 %v1930, 0.0
    %v1937 = vmax.f32 %v1931, 0.0
    %v1938 = vmax.f32 %v1932, 0.0
    %v1939 = vmax.f32 %v1933, 0.0
    %v1940 = vmax.f32 %v1934, 0.0
    %v1941 = vmax.f32 %v1935, 0.0
    %1942 = vrot.lane.b32.xlu0 %v1936, 2
    %v1943 = vpop.permute.xlu0 %1942
    %1944 = vrot.lane.b32.xlu0 %v1937, 2
    %v1945 = vpop.permute.xlu0 %1944
    %1946 = vrot.lane.b32.xlu0 %v1938, 2
    %v1947 = vpop.permute.xlu0 %1946
    %1948 = vrot.lane.b32.xlu0 %v1939, 2
    %v1949 = vpop.permute.xlu0 %1948
    %1950 = vrot.lane.b32.xlu0 %v1940, 2
    %v1951 = vpop.permute.xlu0 %1950
    %1952 = vrot.lane.b32.xlu0 %v1941, 2
    %v1953 = vpop.permute.xlu0 %1952
    %v1954 = vsel %vm1667, %v1951, %v1953
    %v1955 = vsel %vm1667, %v1949, %v1951
    %v1956 = vsel %vm1667, %v1947, %v1949
    %v1957 = vsel %vm1667, %v1945, %v1947
    %v1958 = vsel %vm1667, %v1943, %v1945
    %v1959 = vsel %vm1667, %v1953, %v1943
    %v1960 = vmul.f32 %v1959, %v1678
    %v1961 = vmul.f32 %v1958, %v1682
    %v1962 = vmul.f32 %v1957, %v1686
    %v1963 = vmul.f32 %v1956, %v1690
    %v1964 = vmul.f32 %v1955, %v1694
    %v1965 = vmul.f32 %v1954, %v1698
    %1966 = vrot.lane.b32.xlu0 %v1936, 126
    %v1967 = vpop.permute.xlu0 %1966
    %1968 = vrot.lane.b32.xlu0 %v1937, 126
    %v1969 = vpop.permute.xlu0 %1968
    %1970 = vrot.lane.b32.xlu0 %v1938, 126
    %v1971 = vpop.permute.xlu0 %1970
    %1972 = vrot.lane.b32.xlu0 %v1939, 126
    %v1973 = vpop.permute.xlu0 %1972
    %1974 = vrot.lane.b32.xlu0 %v1940, 126
    %v1975 = vpop.permute.xlu0 %1974
    %1976 = vrot.lane.b32.xlu0 %v1941, 126
    %v1977 = vpop.permute.xlu0 %1976
    %v1978 = vsel %vm1723, %v1975, %v1977
    %v1979 = vsel %vm1723, %v1973, %v1975
    %v1980 = vsel %vm1723, %v1971, %v1973
    %v1981 = vsel %vm1723, %v1969, %v1971
    %v1982 = vsel %vm1723, %v1967, %v1969
    %v1983 = vsel %vm1723, %v1977, %v1967
    %v1984 = vmul.f32 %v1982, %v1734
    %v1985 = vmul.f32 %v1981, %v1738
    %v1986 = vmul.f32 %v1980, %v1742
    %v1987 = vmul.f32 %v1979, %v1746
    %v1988 = vmul.f32 %v1978, %v1750
    %v1989 = vmul.f32 %v1983, %v1754
    %v1990 = vld [vmem:[#allocation7 + $0x40] sm:$0xff]
    %v1991 = vpack.c.bf16 %v1990, %v1990
    %v1992 = vpack.c.bf16 %v1936, %v1960
    %v1993 = vpack.c.bf16 %v1937, %v1961
    %v1994 = vpack.c.bf16 %v1938, %v1962
    %v1995 = vpack.c.bf16 %v1939, %v1963
    %v1996 = vpack.c.bf16 %v1940, %v1964
    %v1997 = vpack.c.bf16 %v1941, %v1965
    %v1998 = vpack.c.bf16 %v1984, %v1984
    %v1999 = vpack.c.bf16 %v1985, %v1985
    %v2000 = vpack.c.bf16 %v1986, %v1986
    %v2001 = vpack.c.bf16 %v1987, %v1987
    %v2002 = vpack.c.bf16 %v1988, %v1988
    %v2003 = vpack.c.bf16 %v1989, %v1989
    %2005 = vset.pattern.permute.xlu0 24
    %2006 = vperm.xlu0 %2005, %v1990
    %v2007 = vpop.permute.xlu0 %2006
    %v2010 = vsel %vm519, %v1991, 0
    %v2013 = vsel %vm523, %v1998, 0
    %v2016 = vsel %vm523, %v1999, 0
    %v2019 = vsel %vm523, %v2000, 0
    %v2022 = vsel %vm523, %v2001, 0
    %v2025 = vsel %vm523, %v2002, 0
    %v2028 = vsel %vm523, %v2003, 0
    %2030 = vmatprep.subr.bf16.mxu0 %v1993
    %2031 = vmatpush1.bf16.msra.mxu0 %v1992
    %2032 = vmatprep.subr.bf16.mxu0 %v2016
    %2033 = vmatpush1.bf16.msra.mxu0 %v2013
    %2034 = vmatprep.subr.bf16.mxu0 0
    %2035 = vmatpush1.bf16.msra.mxu0 0
    %2036 = vmatprep.subr.bf16.mxu0 0
    %2037 = vmatpush1.bf16.msra.mxu0 0
    %2038 = vmatprep.subr.bf16.mxu0 0
    %2039 = vmatpush1.bf16.msra.mxu0 0
    %2040 = vmatprep.subr.bf16.mxu0 0
    %2041 = vmatpush1.bf16.msra.mxu0 0
    %2042 = vmatprep.subr.bf16.mxu0 0
    %2043 = vmatpush1.bf16.msra.mxu0 0
    %2044 = vmatprep.subr.bf16.mxu0 0
    %2045 = vmatpush1.bf16.msra.mxu0 0
    %2046 = vmatprep.subr.bf16.mxu0 0
    %2047 = vmatpush1.bf16.msra.mxu0 0
    %2048 = vmatprep.subr.bf16.mxu0 0
    %2049 = vmatpush1.bf16.msra.mxu0 0
    %2050 = vmatprep.subr.bf16.mxu0 0
    %2051 = vmatpush1.bf16.msra.mxu0 0
    %2052 = vmatprep.subr.bf16.mxu0 0
    %2053 = vmatpush1.bf16.msra.mxu0 0
    %2054 = vmatprep.subr.bf16.mxu0 0
    %2055 = vmatpush1.bf16.msra.mxu0 0
    %2056 = vmatprep.subr.bf16.mxu0 0
    %2057 = vmatpush1.bf16.msra.mxu0 0
    %2058 = vmatprep.subr.bf16.mxu0 0
    %2059 = vmatpush1.bf16.msra.mxu0 0
    %2060 = vmatprep.subr.bf16.mxu0 0
    %2061 = vmatpush1.bf16.msra.mxu0 0
    %2062 = vmatprep.mubr.bf16.mxu0 0
    %2063 = vmatmul.mubr.bf16.gmra.mrb[0].mxu0 %v2010
    %v2064 = vpop.f32.mrb[0].mxu0
    %v2065 = vadd.f32 %v2007, %v2064
    %v2066 = vpop.f32.mrb[0].mxu0
    %v2067 = vadd.f32 %v2007, %v2066
    %v2068 = vpop.f32.mrb[0].mxu0
    %v2069 = vpop.f32.mrb[0].mxu0
    %2070 = vdwg.mxu0
    %2071 = vmatprep.subr.bf16.mxu0 %v1995
    %2072 = vmatpush1.bf16.msra.mxu0 %v1994
    %2073 = vmatprep.subr.bf16.mxu0 %v2022
    %2074 = vmatpush1.bf16.msra.mxu0 %v2019
    %2075 = vmatprep.subr.bf16.mxu0 0
    %2076 = vmatpush1.bf16.msra.mxu0 0
    %2077 = vmatprep.subr.bf16.mxu0 0
    %2078 = vmatpush1.bf16.msra.mxu0 0
    %2079 = vmatprep.subr.bf16.mxu0 0
    %2080 = vmatpush1.bf16.msra.mxu0 0
    %2081 = vmatprep.subr.bf16.mxu0 0
    %2082 = vmatpush1.bf16.msra.mxu0 0
    %2083 = vmatprep.subr.bf16.mxu0 0
    %2084 = vmatpush1.bf16.msra.mxu0 0
    %2085 = vmatprep.subr.bf16.mxu0 0
    %2086 = vmatpush1.bf16.msra.mxu0 0
    %2087 = vmatprep.subr.bf16.mxu0 0
    %2088 = vmatpush1.bf16.msra.mxu0 0
    %2089 = vmatprep.subr.bf16.mxu0 0
    %2090 = vmatpush1.bf16.msra.mxu0 0
    %2091 = vmatprep.subr.bf16.mxu0 0
    %2092 = vmatpush1.bf16.msra.mxu0 0
    %2093 = vmatprep.subr.bf16.mxu0 0
    %2094 = vmatpush1.bf16.msra.mxu0 0
    %2095 = vmatprep.subr.bf16.mxu0 0
    %2096 = vmatpush1.bf16.msra.mxu0 0
    %2097 = vmatprep.subr.bf16.mxu0 0
    %2098 = vmatpush1.bf16.msra.mxu0 0
    %2099 = vmatprep.subr.bf16.mxu0 0
    %2100 = vmatpush1.bf16.msra.mxu0 0
    %2101 = vmatprep.subr.bf16.mxu0 0
    %2102 = vmatpush1.bf16.msra.mxu0 0
    %2103 = vmatprep.mubr.bf16.mxu0 0
    %2104 = vmatmul.mubr.bf16.gmra.mrb[0].mxu0 %v2010
    %v2105 = vpop.f32.mrb[0].mxu0
    %v2106 = vadd.f32 %v2007, %v2105
    %v2107 = vpop.f32.mrb[0].mxu0
    %v2108 = vadd.f32 %v2007, %v2107
    %v2109 = vpop.f32.mrb[0].mxu0
    %v2110 = vpop.f32.mrb[0].mxu0
    %2111 = vdwg.mxu0
    %2112 = vmatprep.subr.bf16.mxu0 %v1997
    %2113 = vmatpush1.bf16.msra.mxu0 %v1996
    %2114 = vmatprep.subr.bf16.mxu0 %v2028
    %2115 = vmatpush1.bf16.msra.mxu0 %v2025
    %2116 = vmatprep.subr.bf16.mxu0 0
    %2117 = vmatpush1.bf16.msra.mxu0 0
    %2118 = vmatprep.subr.bf16.mxu0 0
    %2119 = vmatpush1.bf16.msra.mxu0 0
    %2120 = vmatprep.subr.bf16.mxu0 0
    %2121 = vmatpush1.bf16.msra.mxu0 0
    %2122 = vmatprep.subr.bf16.mxu0 0
    %2123 = vmatpush1.bf16.msra.mxu0 0
    %2124 = vmatprep.subr.bf16.mxu0 0
    %2125 = vmatpush1.bf16.msra.mxu0 0
    %2126 = vmatprep.subr.bf16.mxu0 0
    %2127 = vmatpush1.bf16.msra.mxu0 0
    %2128 = vmatprep.subr.bf16.mxu0 0
    %2129 = vmatpush1.bf16.msra.mxu0 0
    %2130 = vmatprep.subr.bf16.mxu0 0
    %2131 = vmatpush1.bf16.msra.mxu0 0
    %2132 = vmatprep.subr.bf16.mxu0 0
    %2133 = vmatpush1.bf16.msra.mxu0 0
    %2134 = vmatprep.subr.bf16.mxu0 0
    %2135 = vmatpush1.bf16.msra.mxu0 0
    %2136 = vmatprep.subr.bf16.mxu0 0
    %2137 = vmatpush1.bf16.msra.mxu0 0
    %2138 = vmatprep.subr.bf16.mxu0 0
    %2139 = vmatpush1.bf16.msra.mxu0 0
    %2140 = vmatprep.subr.bf16.mxu0 0
    %2141 = vmatpush1.bf16.msra.mxu0 0
    %2142 = vmatprep.subr.bf16.mxu0 0
    %2143 = vmatpush1.bf16.msra.mxu0 0
    %2144 = vmatprep.mubr.bf16.mxu0 0
    %2145 = vmatmul.mubr.bf16.gmra.mrb[0].mxu0 %v2010
    %v2146 = vpop.f32.mrb[0].mxu0
    %v2147 = vadd.f32 %v2007, %v2146
    %v2148 = vpop.f32.mrb[0].mxu0
    %v2149 = vadd.f32 %v2007, %v2148
    %v2150 = vpop.f32.mrb[0].mxu0
    %v2151 = vpop.f32.mrb[0].mxu0
    %2152 = vdwg.mxu0
    %v2153 = vmax.f32 %v2065, 0.0
    %v2154 = vmax.f32 %v2067, 0.0
    %v2155 = vmax.f32 %v2106, 0.0
    %v2156 = vmax.f32 %v2108, 0.0
    %v2157 = vmax.f32 %v2147, 0.0
    %v2158 = vmax.f32 %v2149, 0.0
    %2159 = vrot.lane.b32.xlu0 %v2153, 2
    %v2160 = vpop.permute.xlu0 %2159
    %2161 = vrot.lane.b32.xlu0 %v2154, 2
    %v2162 = vpop.permute.xlu0 %2161
    %2163 = vrot.lane.b32.xlu0 %v2155, 2
    %v2164 = vpop.permute.xlu0 %2163
    %2165 = vrot.lane.b32.xlu0 %v2156, 2
    %v2166 = vpop.permute.xlu0 %2165
    %2167 = vrot.lane.b32.xlu0 %v2157, 2
    %v2168 = vpop.permute.xlu0 %2167
    %2169 = vrot.lane.b32.xlu0 %v2158, 2
    %v2170 = vpop.permute.xlu0 %2169
    %v2171 = vsel %vm1667, %v2168, %v2170
    %v2172 = vsel %vm1667, %v2166, %v2168
    %v2173 = vsel %vm1667, %v2164, %v2166
    %v2174 = vsel %vm1667, %v2162, %v2164
    %v2175 = vsel %vm1667, %v2160, %v2162
    %v2176 = vsel %vm1667, %v2170, %v2160
    %v2177 = vmul.f32 %v2176, %v1678
    %v2178 = vmul.f32 %v2175, %v1682
    %v2179 = vmul.f32 %v2174, %v1686
    %v2180 = vmul.f32 %v2173, %v1690
    %v2181 = vmul.f32 %v2172, %v1694
    %v2182 = vmul.f32 %v2171, %v1698
    %2183 = vrot.lane.b32.xlu0 %v2153, 126
    %v2184 = vpop.permute.xlu0 %2183
    %2185 = vrot.lane.b32.xlu0 %v2154, 126
    %v2186 = vpop.permute.xlu0 %2185
    %2187 = vrot.lane.b32.xlu0 %v2155, 126
    %v2188 = vpop.permute.xlu0 %2187
    %2189 = vrot.lane.b32.xlu0 %v2156, 126
    %v2190 = vpop.permute.xlu0 %2189
    %2191 = vrot.lane.b32.xlu0 %v2157, 126
    %v2192 = vpop.permute.xlu0 %2191
    %2193 = vrot.lane.b32.xlu0 %v2158, 126
    %v2194 = vpop.permute.xlu0 %2193
    %v2195 = vsel %vm1723, %v2192, %v2194
    %v2196 = vsel %vm1723, %v2190, %v2192
    %v2197 = vsel %vm1723, %v2188, %v2190
    %v2198 = vsel %vm1723, %v2186, %v2188
    %v2199 = vsel %vm1723, %v2184, %v2186
    %v2200 = vsel %vm1723, %v2194, %v2184
    %v2201 = vmul.f32 %v2199, %v1734
    %v2202 = vmul.f32 %v2198, %v1738
    %v2203 = vmul.f32 %v2197, %v1742
    %v2204 = vmul.f32 %v2196, %v1746
    %v2205 = vmul.f32 %v2195, %v1750
    %v2206 = vmul.f32 %v2200, %v1754
    %v2207 = vld [vmem:[#allocation7 + $0x48] sm:$0xff]
    %v2208 = vpack.c.bf16 %v2207, %v2207
    %v2209 = vpack.c.bf16 %v2153, %v2177
    %v2210 = vpack.c.bf16 %v2154, %v2178
    %v2211 = vpack.c.bf16 %v2155, %v2179
    %v2212 = vpack.c.bf16 %v2156, %v2180
    %v2213 = vpack.c.bf16 %v2157, %v2181
    %v2214 = vpack.c.bf16 %v2158, %v2182
    %v2215 = vpack.c.bf16 %v2201, %v2201
    %v2216 = vpack.c.bf16 %v2202, %v2202
    %v2217 = vpack.c.bf16 %v2203, %v2203
    %v2218 = vpack.c.bf16 %v2204, %v2204
    %v2219 = vpack.c.bf16 %v2205, %v2205
    %v2220 = vpack.c.bf16 %v2206, %v2206
    %2222 = vset.pattern.permute.xlu0 24
    %2223 = vperm.xlu0 %2222, %v2207
    %v2224 = vpop.permute.xlu0 %2223
    %v2227 = vsel %vm519, %v2208, 0
    %v2230 = vsel %vm523, %v2215, 0
    %v2233 = vsel %vm523, %v2216, 0
    %v2236 = vsel %vm523, %v2217, 0
    %v2239 = vsel %vm523, %v2218, 0
    %v2242 = vsel %vm523, %v2219, 0
    %v2245 = vsel %vm523, %v2220, 0
    %2247 = vmatprep.subr.bf16.mxu0 %v2210
    %2248 = vmatpush1.bf16.msra.mxu0 %v2209
    %2249 = vmatprep.subr.bf16.mxu0 %v2233
    %2250 = vmatpush1.bf16.msra.mxu0 %v2230
    %2251 = vmatprep.subr.bf16.mxu0 0
    %2252 = vmatpush1.bf16.msra.mxu0 0
    %2253 = vmatprep.subr.bf16.mxu0 0
    %2254 = vmatpush1.bf16.msra.mxu0 0
    %2255 = vmatprep.subr.bf16.mxu0 0
    %2256 = vmatpush1.bf16.msra.mxu0 0
    %2257 = vmatprep.subr.bf16.mxu0 0
    %2258 = vmatpush1.bf16.msra.mxu0 0
    %2259 = vmatprep.subr.bf16.mxu0 0
    %2260 = vmatpush1.bf16.msra.mxu0 0
    %2261 = vmatprep.subr.bf16.mxu0 0
    %2262 = vmatpush1.bf16.msra.mxu0 0
    %2263 = vmatprep.subr.bf16.mxu0 0
    %2264 = vmatpush1.bf16.msra.mxu0 0
    %2265 = vmatprep.subr.bf16.mxu0 0
    %2266 = vmatpush1.bf16.msra.mxu0 0
    %2267 = vmatprep.subr.bf16.mxu0 0
    %2268 = vmatpush1.bf16.msra.mxu0 0
    %2269 = vmatprep.subr.bf16.mxu0 0
    %2270 = vmatpush1.bf16.msra.mxu0 0
    %2271 = vmatprep.subr.bf16.mxu0 0
    %2272 = vmatpush1.bf16.msra.mxu0 0
    %2273 = vmatprep.subr.bf16.mxu0 0
    %2274 = vmatpush1.bf16.msra.mxu0 0
    %2275 = vmatprep.subr.bf16.mxu0 0
    %2276 = vmatpush1.bf16.msra.mxu0 0
    %2277 = vmatprep.subr.bf16.mxu0 0
    %2278 = vmatpush1.bf16.msra.mxu0 0
    %2279 = vmatprep.mubr.bf16.mxu0 0
    %2280 = vmatmul.mubr.bf16.gmra.mrb[0].mxu0 %v2227
    %v2281 = vpop.f32.mrb[0].mxu0
    %v2282 = vadd.f32 %v2224, %v2281
    %v2283 = vpop.f32.mrb[0].mxu0
    %v2284 = vadd.f32 %v2224, %v2283
    %v2285 = vpop.f32.mrb[0].mxu0
    %v2286 = vpop.f32.mrb[0].mxu0
    %2287 = vdwg.mxu0
    %2288 = vmatprep.subr.bf16.mxu0 %v2212
    %2289 = vmatpush1.bf16.msra.mxu0 %v2211
    %2290 = vmatprep.subr.bf16.mxu0 %v2239
    %2291 = vmatpush1.bf16.msra.mxu0 %v2236
    %2292 = vmatprep.subr.bf16.mxu0 0
    %2293 = vmatpush1.bf16.msra.mxu0 0
    %2294 = vmatprep.subr.bf16.mxu0 0
    %2295 = vmatpush1.bf16.msra.mxu0 0
    %2296 = vmatprep.subr.bf16.mxu0 0
    %2297 = vmatpush1.bf16.msra.mxu0 0
    %2298 = vmatprep.subr.bf16.mxu0 0
    %2299 = vmatpush1.bf16.msra.mxu0 0
    %2300 = vmatprep.subr.bf16.mxu0 0
    %2301 = vmatpush1.bf16.msra.mxu0 0
    %2302 = vmatprep.subr.bf16.mxu0 0
    %2303 = vmatpush1.bf16.msra.mxu0 0
    %2304 = vmatprep.subr.bf16.mxu0 0
    %2305 = vmatpush1.bf16.msra.mxu0 0
    %2306 = vmatprep.subr.bf16.mxu0 0
    %2307 = vmatpush1.bf16.msra.mxu0 0
    %2308 = vmatprep.subr.bf16.mxu0 0
    %2309 = vmatpush1.bf16.msra.mxu0 0
    %2310 = vmatprep.subr.bf16.mxu0 0
    %2311 = vmatpush1.bf16.msra.mxu0 0
    %2312 = vmatprep.subr.bf16.mxu0 0
    %2313 = vmatpush1.bf16.msra.mxu0 0
    %2314 = vmatprep.subr.bf16.mxu0 0
    %2315 = vmatpush1.bf16.msra.mxu0 0
    %2316 = vmatprep.subr.bf16.mxu0 0
    %2317 = vmatpush1.bf16.msra.mxu0 0
    %2318 = vmatprep.subr.bf16.mxu0 0
    %2319 = vmatpush1.bf16.msra.mxu0 0
    %2320 = vmatprep.mubr.bf16.mxu0 0
    %2321 = vmatmul.mubr.bf16.gmra.mrb[0].mxu0 %v2227
    %v2322 = vpop.f32.mrb[0].mxu0
    %v2323 = vadd.f32 %v2224, %v2322
    %v2324 = vpop.f32.mrb[0].mxu0
    %v2325 = vadd.f32 %v2224, %v2324
    %v2326 = vpop.f32.mrb[0].mxu0
    %v2327 = vpop.f32.mrb[0].mxu0
    %2328 = vdwg.mxu0
    %2329 = vmatprep.subr.bf16.mxu0 %v2214
    %2330 = vmatpush1.bf16.msra.mxu0 %v2213
    %2331 = vmatprep.subr.bf16.mxu0 %v2245
    %2332 = vmatpush1.bf16.msra.mxu0 %v2242
    %2333 = vmatprep.subr.bf16.mxu0 0
    %2334 = vmatpush1.bf16.msra.mxu0 0
    %2335 = vmatprep.subr.bf16.mxu0 0
    %2336 = vmatpush1.bf16.msra.mxu0 0
    %2337 = vmatprep.subr.bf16.mxu0 0
    %2338 = vmatpush1.bf16.msra.mxu0 0
    %2339 = vmatprep.subr.bf16.mxu0 0
    %2340 = vmatpush1.bf16.msra.mxu0 0
    %2341 = vmatprep.subr.bf16.mxu0 0
    %2342 = vmatpush1.bf16.msra.mxu0 0
    %2343 = vmatprep.subr.bf16.mxu0 0
    %2344 = vmatpush1.bf16.msra.mxu0 0
    %2345 = vmatprep.subr.bf16.mxu0 0
    %2346 = vmatpush1.bf16.msra.mxu0 0
    %2347 = vmatprep.subr.bf16.mxu0 0
    %2348 = vmatpush1.bf16.msra.mxu0 0
    %2349 = vmatprep.subr.bf16.mxu0 0
    %2350 = vmatpush1.bf16.msra.mxu0 0
    %2351 = vmatprep.subr.bf16.mxu0 0
    %2352 = vmatpush1.bf16.msra.mxu0 0
    %2353 = vmatprep.subr.bf16.mxu0 0
    %2354 = vmatpush1.bf16.msra.mxu0 0
    %2355 = vmatprep.subr.bf16.mxu0 0
    %2356 = vmatpush1.bf16.msra.mxu0 0
    %2357 = vmatprep.subr.bf16.mxu0 0
    %2358 = vmatpush1.bf16.msra.mxu0 0
    %2359 = vmatprep.subr.bf16.mxu0 0
    %2360 = vmatpush1.bf16.msra.mxu0 0
    %2361 = vmatprep.mubr.bf16.mxu0 0
    %2362 = vmatmul.mubr.bf16.gmra.mrb[0].mxu0 %v2227
    %v2363 = vpop.f32.mrb[0].mxu0
    %v2364 = vadd.f32 %v2224, %v2363
    %v2365 = vpop.f32.mrb[0].mxu0
    %v2366 = vadd.f32 %v2224, %v2365
    %v2367 = vpop.f32.mrb[0].mxu0
    %v2368 = vpop.f32.mrb[0].mxu0
    %2369 = vdwg.mxu0
    %v2370 = vadd.f32 %v2282, %v1936
    %v2371 = vadd.f32 %v2284, %v1937
    %v2372 = vadd.f32 %v2323, %v1938
    %v2373 = vadd.f32 %v2325, %v1939
    %v2374 = vadd.f32 %v2364, %v1940
    %v2375 = vadd.f32 %v2366, %v1941
    %v2376 = vmax.f32 %v2370, 0.0
    %v2377 = vmax.f32 %v2371, 0.0
    %v2378 = vmax.f32 %v2372, 0.0
    %v2379 = vmax.f32 %v2373, 0.0
    %v2380 = vmax.f32 %v2374, 0.0
    %v2381 = vmax.f32 %v2375, 0.0
    %2382 = vrot.lane.b32.xlu0 %v2376, 2
    %v2383 = vpop.permute.xlu0 %2382
    %2384 = vrot.lane.b32.xlu0 %v2377, 2
    %v2385 = vpop.permute.xlu0 %2384
    %2386 = vrot.lane.b32.xlu0 %v2378, 2
    %v2387 = vpop.permute.xlu0 %2386
    %2388 = vrot.lane.b32.xlu0 %v2379, 2
    %v2389 = vpop.permute.xlu0 %2388
    %2390 = vrot.lane.b32.xlu0 %v2380, 2
    %v2391 = vpop.permute.xlu0 %2390
    %2392 = vrot.lane.b32.xlu0 %v2381, 2
    %v2393 = vpop.permute.xlu0 %2392
    %v2394 = vsel %vm1667, %v2391, %v2393
    %v2395 = vsel %vm1667, %v2389, %v2391
    %v2396 = vsel %vm1667, %v2387, %v2389
    %v2397 = vsel %vm1667, %v2385, %v2387
    %v2398 = vsel %vm1667, %v2383, %v2385
    %v2399 = vsel %vm1667, %v2393, %v2383
    %v2400 = vmul.f32 %v2399, %v1678
    %v2401 = vmul.f32 %v2398, %v1682
    %v2402 = vmul.f32 %v2397, %v1686
    %v2403 = vmul.f32 %v2396, %v1690
    %v2404 = vmul.f32 %v2395, %v1694
    %v2405 = vmul.f32 %v2394, %v1698
    %2406 = vrot.lane.b32.xlu0 %v2376, 126
    %v2407 = vpop.permute.xlu0 %2406
    %2408 = vrot.lane.b32.xlu0 %v2377, 126
    %v2409 = vpop.permute.xlu0 %2408
    %2410 = vrot.lane.b32.xlu0 %v2378, 126
    %v2411 = vpop.permute.xlu0 %2410
    %2412 = vrot.lane.b32.xlu0 %v2379, 126
    %v2413 = vpop.permute.xlu0 %2412
    %2414 = vrot.lane.b32.xlu0 %v2380, 126
    %v2415 = vpop.permute.xlu0 %2414
    %2416 = vrot.lane.b32.xlu0 %v2381, 126
    %v2417 = vpop.permute.xlu0 %2416
    %v2418 = vsel %vm1723, %v2415, %v2417
    %v2419 = vsel %vm1723, %v2413, %v2415
    %v2420 = vsel %vm1723, %v2411, %v2413
    %v2421 = vsel %vm1723, %v2409, %v2411
    %v2422 = vsel %vm1723, %v2407, %v2409
    %v2423 = vsel %vm1723, %v2417, %v2407
    %v2424 = vmul.f32 %v2422, %v1734
    %v2425 = vmul.f32 %v2421, %v1738
    %v2426 = vmul.f32 %v2420, %v1742
    %v2427 = vmul.f32 %v2419, %v1746
    %v2428 = vmul.f32 %v2418, %v1750
    %v2429 = vmul.f32 %v2423, %v1754
    %v2430 = vld [vmem:[#allocation7 + $0x50] sm:$0xff]
    %v2431 = vld [vmem:[#allocation7 + $0x58] sm:$0xff]
    %v2432 = vld [vmem:[#allocation7 + $0x60] sm:$0xff]
    %v2433 = vld [vmem:[#allocation7 + $0x68] sm:$0xff]
    %v2434 = vpack.c.bf16 %v2431, %v2430
    %v2435 = vpack.c.bf16 %v2433, %v2432
    %v2436 = vpack.c.bf16 %v2376, %v2400
    %v2437 = vpack.c.bf16 %v2377, %v2401
    %v2438 = vpack.c.bf16 %v2378, %v2402
    %v2439 = vpack.c.bf16 %v2379, %v2403
    %v2440 = vpack.c.bf16 %v2380, %v2404
    %v2441 = vpack.c.bf16 %v2381, %v2405
    %v2442 = vpack.c.bf16 %v2424, %v2424
    %v2443 = vpack.c.bf16 %v2425, %v2425
    %v2444 = vpack.c.bf16 %v2426, %v2426
    %v2445 = vpack.c.bf16 %v2427, %v2427
    %v2446 = vpack.c.bf16 %v2428, %v2428
    %v2447 = vpack.c.bf16 %v2429, %v2429
    %2449 = vset.pattern.permute.xlu0 24
    %2450 = vperm.xlu0 %2449, %v2430
    %v2451 = vpop.permute.xlu0 %2450
    %2454 = vset.pattern.permute.xlu0 24
    %2455 = vperm.xlu0 %2454, %v2431
    %v2456 = vpop.permute.xlu0 %2455
    %2459 = vset.pattern.permute.xlu0 24
    %2460 = vperm.xlu0 %2459, %v2432
    %v2461 = vpop.permute.xlu0 %2460
    %2464 = vset.pattern.permute.xlu0 24
    %2465 = vperm.xlu0 %2464, %v2433
    %v2466 = vpop.permute.xlu0 %2465
    %v2469 = vsel %vm519, %v2434, 0
    %v2472 = vsel %vm519, %v2435, 0
    %v2475 = vsel %vm523, %v2442, 0
    %v2478 = vsel %vm523, %v2443, 0
    %v2481 = vsel %vm523, %v2444, 0
    %v2484 = vsel %vm523, %v2445, 0
    %v2487 = vsel %vm523, %v2446, 0
    %v2490 = vsel %vm523, %v2447, 0
    %2492 = vmatprep.subr.bf16.mxu0 %v2437
    %2493 = vmatpush1.bf16.msra.mxu0 %v2436
    %2494 = vmatprep.subr.bf16.mxu0 %v2478
    %2495 = vmatpush1.bf16.msra.mxu0 %v2475
    %2496 = vmatprep.subr.bf16.mxu0 0
    %2497 = vmatpush1.bf16.msra.mxu0 0
    %2498 = vmatprep.subr.bf16.mxu0 0
    %2499 = vmatpush1.bf16.msra.mxu0 0
    %2500 = vmatprep.subr.bf16.mxu0 0
    %2501 = vmatpush1.bf16.msra.mxu0 0
    %2502 = vmatprep.subr.bf16.mxu0 0
    %2503 = vmatpush1.bf16.msra.mxu0 0
    %2504 = vmatprep.subr.bf16.mxu0 0
    %2505 = vmatpush1.bf16.msra.mxu0 0
    %2506 = vmatprep.subr.bf16.mxu0 0
    %2507 = vmatpush1.bf16.msra.mxu0 0
    %2508 = vmatprep.subr.bf16.mxu0 0
    %2509 = vmatpush1.bf16.msra.mxu0 0
    %2510 = vmatprep.subr.bf16.mxu0 0
    %2511 = vmatpush1.bf16.msra.mxu0 0
    %2512 = vmatprep.subr.bf16.mxu0 0
    %2513 = vmatpush1.bf16.msra.mxu0 0
    %2514 = vmatprep.subr.bf16.mxu0 0
    %2515 = vmatpush1.bf16.msra.mxu0 0
    %2516 = vmatprep.subr.bf16.mxu0 0
    %2517 = vmatpush1.bf16.msra.mxu0 0
    %2518 = vmatprep.subr.bf16.mxu0 0
    %2519 = vmatpush1.bf16.msra.mxu0 0
    %2520 = vmatprep.subr.bf16.mxu0 0
    %2521 = vmatpush1.bf16.msra.mxu0 0
    %2522 = vmatprep.subr.bf16.mxu0 0
    %2523 = vmatpush1.bf16.msra.mxu0 0
    %2524 = vmatprep.mubr.bf16.mxu0 0
    %2525 = vmatmul.mubr.bf16.gmra.mrb[0].mxu0 %v2469
    %v2526 = vpop.f32.mrb[0].mxu0
    %v2527 = vadd.f32 %v2451, %v2526
    %v2528 = vpop.f32.mrb[0].mxu0
    %v2529 = vadd.f32 %v2451, %v2528
    %v2530 = vpop.f32.mrb[0].mxu0
    %v2531 = vadd.f32 %v2456, %v2530
    %v2532 = vpop.f32.mrb[0].mxu0
    %v2533 = vadd.f32 %v2456, %v2532
    %2534 = vmatprep.mubr.bf16.mxu0 0
    %2535 = vmatmul.mubr.bf16.gmra.mrb[0].mxu0 %v2472
    %v2536 = vpop.f32.mrb[0].mxu0
    %v2537 = vadd.f32 %v2461, %v2536
    %v2538 = vpop.f32.mrb[0].mxu0
    %v2539 = vadd.f32 %v2461, %v2538
    %v2540 = vpop.f32.mrb[0].mxu0
    %v2541 = vadd.f32 %v2466, %v2540
    %v2542 = vpop.f32.mrb[0].mxu0
    %v2543 = vadd.f32 %v2466, %v2542
    %2544 = vdwg.mxu0
    %2545 = vmatprep.subr.bf16.mxu0 %v2439
    %2546 = vmatpush1.bf16.msra.mxu0 %v2438
    %2547 = vmatprep.subr.bf16.mxu0 %v2484
    %2548 = vmatpush1.bf16.msra.mxu0 %v2481
    %2549 = vmatprep.subr.bf16.mxu0 0
    %2550 = vmatpush1.bf16.msra.mxu0 0
    %2551 = vmatprep.subr.bf16.mxu0 0
    %2552 = vmatpush1.bf16.msra.mxu0 0
    %2553 = vmatprep.subr.bf16.mxu0 0
    %2554 = vmatpush1.bf16.msra.mxu0 0
    %2555 = vmatprep.subr.bf16.mxu0 0
    %2556 = vmatpush1.bf16.msra.mxu0 0
    %2557 = vmatprep.subr.bf16.mxu0 0
    %2558 = vmatpush1.bf16.msra.mxu0 0
    %2559 = vmatprep.subr.bf16.mxu0 0
    %2560 = vmatpush1.bf16.msra.mxu0 0
    %2561 = vmatprep.subr.bf16.mxu0 0
    %2562 = vmatpush1.bf16.msra.mxu0 0
    %2563 = vmatprep.subr.bf16.mxu0 0
    %2564 = vmatpush1.bf16.msra.mxu0 0
    %2565 = vmatprep.subr.bf16.mxu0 0
    %2566 = vmatpush1.bf16.msra.mxu0 0
    %2567 = vmatprep.subr.bf16.mxu0 0
    %2568 = vmatpush1.bf16.msra.mxu0 0
    %2569 = vmatprep.subr.bf16.mxu0 0
    %2570 = vmatpush1.bf16.msra.mxu0 0
    %2571 = vmatprep.subr.bf16.mxu0 0
    %2572 = vmatpush1.bf16.msra.mxu0 0
    %2573 = vmatprep.subr.bf16.mxu0 0
    %2574 = vmatpush1.bf16.msra.mxu0 0
    %2575 = vmatprep.subr.bf16.mxu0 0
    %2576 = vmatpush1.bf16.msra.mxu0 0
    %2577 = vmatprep.mubr.bf16.mxu0 0
    %2578 = vmatmul.mubr.bf16.gmra.mrb[0].mxu0 %v2469
    %v2579 = vpop.f32.mrb[0].mxu0
    %v2580 = vadd.f32 %v2451, %v2579
    %v2581 = vpop.f32.mrb[0].mxu0
    %v2582 = vadd.f32 %v2451, %v2581
    %v2583 = vpop.f32.mrb[0].mxu0
    %v2584 = vadd.f32 %v2456, %v2583
    %v2585 = vpop.f32.mrb[0].mxu0
    %v2586 = vadd.f32 %v2456, %v2585
    %2587 = vmatprep.mubr.bf16.mxu0 0
    %2588 = vmatmul.mubr.bf16.gmra.mrb[0].mxu0 %v2472
    %v2589 = vpop.f32.mrb[0].mxu0
    %v2590 = vadd.f32 %v2461, %v2589
    %v2591 = vpop.f32.mrb[0].mxu0
    %v2592 = vadd.f32 %v2461, %v2591
    %v2593 = vpop.f32.mrb[0].mxu0
    %v2594 = vadd.f32 %v2466, %v2593
    %v2595 = vpop.f32.mrb[0].mxu0
    %v2596 = vadd.f32 %v2466, %v2595
    %2597 = vdwg.mxu0
    %2598 = vmatprep.subr.bf16.mxu0 %v2441
    %2599 = vmatpush1.bf16.msra.mxu0 %v2440
    %2600 = vmatprep.subr.bf16.mxu0 %v2490
    %2601 = vmatpush1.bf16.msra.mxu0 %v2487
    %2602 = vmatprep.subr.bf16.mxu0 0
    %2603 = vmatpush1.bf16.msra.mxu0 0
    %2604 = vmatprep.subr.bf16.mxu0 0
    %2605 = vmatpush1.bf16.msra.mxu0 0
    %2606 = vmatprep.subr.bf16.mxu0 0
    %2607 = vmatpush1.bf16.msra.mxu0 0
    %2608 = vmatprep.subr.bf16.mxu0 0
    %2609 = vmatpush1.bf16.msra.mxu0 0
    %2610 = vmatprep.subr.bf16.mxu0 0
    %2611 = vmatpush1.bf16.msra.mxu0 0
    %2612 = vmatprep.subr.bf16.mxu0 0
    %2613 = vmatpush1.bf16.msra.mxu0 0
    %2614 = vmatprep.subr.bf16.mxu0 0
    %2615 = vmatpush1.bf16.msra.mxu0 0
    %2616 = vmatprep.subr.bf16.mxu0 0
    %2617 = vmatpush1.bf16.msra.mxu0 0
    %2618 = vmatprep.subr.bf16.mxu0 0
    %2619 = vmatpush1.bf16.msra.mxu0 0
    %2620 = vmatprep.subr.bf16.mxu0 0
    %2621 = vmatpush1.bf16.msra.mxu0 0
    %2622 = vmatprep.subr.bf16.mxu0 0
    %2623 = vmatpush1.bf16.msra.mxu0 0
    %2624 = vmatprep.subr.bf16.mxu0 0
    %2625 = vmatpush1.bf16.msra.mxu0 0
    %2626 = vmatprep.subr.bf16.mxu0 0
    %2627 = vmatpush1.bf16.msra.mxu0 0
    %2628 = vmatprep.subr.bf16.mxu0 0
    %2629 = vmatpush1.bf16.msra.mxu0 0
    %2630 = vmatprep.mubr.bf16.mxu0 0
    %2631 = vmatmul.mubr.bf16.gmra.mrb[0].mxu0 %v2469
    %v2632 = vpop.f32.mrb[0].mxu0
    %v2633 = vadd.f32 %v2451, %v2632
    %v2634 = vpop.f32.mrb[0].mxu0
    %v2635 = vadd.f32 %v2451, %v2634
    %v2636 = vpop.f32.mrb[0].mxu0
    %v2637 = vadd.f32 %v2456, %v2636
    %v2638 = vpop.f32.mrb[0].mxu0
    %v2639 = vadd.f32 %v2456, %v2638
    %2640 = vmatprep.mubr.bf16.mxu0 0
    %2641 = vmatmul.mubr.bf16.gmra.mrb[0].mxu0 %v2472
    %v2642 = vpop.f32.mrb[0].mxu0
    %v2643 = vadd.f32 %v2461, %v2642
    %v2644 = vpop.f32.mrb[0].mxu0
    %v2645 = vadd.f32 %v2461, %v2644
    %v2646 = vpop.f32.mrb[0].mxu0
    %v2647 = vadd.f32 %v2466, %v2646
    %v2648 = vpop.f32.mrb[0].mxu0
    %v2649 = vadd.f32 %v2466, %v2648
    %2650 = vdwg.mxu0
    %v2651 = vmax.f32 %v2527, 0.0
    %v2652 = vmax.f32 %v2529, 0.0
    %v2653 = vmax.f32 %v2580, 0.0
    %v2654 = vmax.f32 %v2582, 0.0
    %v2655 = vmax.f32 %v2633, 0.0
    %v2656 = vmax.f32 %v2635, 0.0
    %v2657 = vmax.f32 %v2531, 0.0
    %v2658 = vmax.f32 %v2533, 0.0
    %v2659 = vmax.f32 %v2584, 0.0
    %v2660 = vmax.f32 %v2586, 0.0
    %v2661 = vmax.f32 %v2637, 0.0
    %v2662 = vmax.f32 %v2639, 0.0
    %2663 = vrot.lane.b32.xlu0 %v2651, 4
    %v2664 = vpop.permute.xlu0 %2663
    %2665 = vrot.lane.b32.xlu0 %v2657, 4
    %v2666 = vpop.permute.xlu0 %2665
    %2667 = vrot.lane.b32.xlu0 %v2652, 4
    %v2668 = vpop.permute.xlu0 %2667
    %2669 = vrot.lane.b32.xlu0 %v2658, 4
    %v2670 = vpop.permute.xlu0 %2669
    %2671 = vrot.lane.b32.xlu0 %v2653, 4
    %v2672 = vpop.permute.xlu0 %2671
    %2673 = vrot.lane.b32.xlu0 %v2659, 4
    %v2674 = vpop.permute.xlu0 %2673
    %2675 = vrot.lane.b32.xlu0 %v2654, 4
    %v2676 = vpop.permute.xlu0 %2675
    %2677 = vrot.lane.b32.xlu0 %v2660, 4
    %v2678 = vpop.permute.xlu0 %2677
    %2679 = vrot.lane.b32.xlu0 %v2655, 4
    %v2680 = vpop.permute.xlu0 %2679
    %2681 = vrot.lane.b32.xlu0 %v2661, 4
    %v2682 = vpop.permute.xlu0 %2681
    %2683 = vrot.lane.b32.xlu0 %v2656, 4
    %v2684 = vpop.permute.xlu0 %2683
    %2685 = vrot.lane.b32.xlu0 %v2662, 4
    %v2686 = vpop.permute.xlu0 %2685
    %vm2687 = vcmp.lt.s32.totalorder %v153, 4
    %v2688 = vsel %vm2687, %v2680, %v2684
    %v2689 = vsel %vm2687, %v2682, %v2686
    %v2690 = vsel %vm2687, %v2676, %v2680
    %v2691 = vsel %vm2687, %v2678, %v2682
    %v2692 = vsel %vm2687, %v2672, %v2676
    %v2693 = vsel %vm2687, %v2674, %v2678
    %v2694 = vsel %vm2687, %v2668, %v2672
    %v2695 = vsel %vm2687, %v2670, %v2674
    %v2696 = vsel %vm2687, %v2664, %v2668
    %v2697 = vsel %vm2687, %v2666, %v2670
    %v2698 = vsel %vm2687, %v2684, %v2664
    %v2699 = vsel %vm2687, %v2686, %v2666
    %v2701 = vlaneseq
    %v2702 = vshrl.u32 %v2701, 7
    %v2703 = vsub.s32 0, %v2702
    %v2704 = vrot.slane %v95, %v2703
    %v2705 = vlaneseq
    %v2706 = vshrl.u32 %v2705, 7
    %v2707 = vsub.s32 1, %v2706
    %v2708 = vrot.slane %v95, %v2707
    %v2709 = vlaneseq
    %v2710 = vshrl.u32 %v2709, 7
    %v2711 = vsub.s32 2, %v2710
    %v2712 = vrot.slane %v95, %v2711
    %v2713 = vlaneseq
    %v2714 = vshrl.u32 %v2713, 7
    %v2715 = vsub.s32 3, %v2714
    %v2716 = vrot.slane %v95, %v2715
    %v2717 = vlaneseq
    %v2718 = vshrl.u32 %v2717, 7
    %v2719 = vsub.s32 4, %v2718
    %v2720 = vrot.slane %v95, %v2719
    %v2721 = vlaneseq
    %v2722 = vshrl.u32 %v2721, 7
    %v2723 = vsub.s32 5, %v2722
    %v2724 = vrot.slane %v95, %v2723
    %v2731 = vmul.f32 %v2698, %v2704
    %v2732 = vmul.f32 %v2696, %v2708
    %v2733 = vmul.f32 %v2694, %v2712
    %v2734 = vmul.f32 %v2692, %v2716
    %v2735 = vmul.f32 %v2690, %v2720
    %v2736 = vmul.f32 %v2688, %v2724
    %v2737 = vmul.f32 %v2699, %v2704
    %v2738 = vmul.f32 %v2697, %v2708
    %v2739 = vmul.f32 %v2695, %v2712
    %v2740 = vmul.f32 %v2693, %v2716
    %v2741 = vmul.f32 %v2691, %v2720
    %v2742 = vmul.f32 %v2689, %v2724
    %2743 = vrot.lane.b32.xlu0 %v2651, 124
    %v2744 = vpop.permute.xlu0 %2743
    %2745 = vrot.lane.b32.xlu0 %v2657, 124
    %v2746 = vpop.permute.xlu0 %2745
    %2747 = vrot.lane.b32.xlu0 %v2652, 124
    %v2748 = vpop.permute.xlu0 %2747
    %2749 = vrot.lane.b32.xlu0 %v2658, 124
    %v2750 = vpop.permute.xlu0 %2749
    %2751 = vrot.lane.b32.xlu0 %v2653, 124
    %v2752 = vpop.permute.xlu0 %2751
    %2753 = vrot.lane.b32.xlu0 %v2659, 124
    %v2754 = vpop.permute.xlu0 %2753
    %2755 = vrot.lane.b32.xlu0 %v2654, 124
    %v2756 = vpop.permute.xlu0 %2755
    %2757 = vrot.lane.b32.xlu0 %v2660, 124
    %v2758 = vpop.permute.xlu0 %2757
    %2759 = vrot.lane.b32.xlu0 %v2655, 124
    %v2760 = vpop.permute.xlu0 %2759
    %2761 = vrot.lane.b32.xlu0 %v2661, 124
    %v2762 = vpop.permute.xlu0 %2761
    %2763 = vrot.lane.b32.xlu0 %v2656, 124
    %v2764 = vpop.permute.xlu0 %2763
    %2765 = vrot.lane.b32.xlu0 %v2662, 124
    %v2766 = vpop.permute.xlu0 %2765
    %vm2767 = vcmp.lt.s32.totalorder %v153, 124
    %v2768 = vsel %vm2767, %v2760, %v2764
    %v2769 = vsel %vm2767, %v2762, %v2766
    %v2770 = vsel %vm2767, %v2756, %v2760
    %v2771 = vsel %vm2767, %v2758, %v2762
    %v2772 = vsel %vm2767, %v2752, %v2756
    %v2773 = vsel %vm2767, %v2754, %v2758
    %v2774 = vsel %vm2767, %v2748, %v2752
    %v2775 = vsel %vm2767, %v2750, %v2754
    %v2776 = vsel %vm2767, %v2744, %v2748
    %v2777 = vsel %vm2767, %v2746, %v2750
    %v2778 = vsel %vm2767, %v2764, %v2744
    %v2779 = vsel %vm2767, %v2766, %v2746
    %v2781 = vlaneseq
    %v2782 = vshrl.u32 %v2781, 7
    %v2783 = vsub.s32 0, %v2782
    %v2784 = vrot.slane %v99, %v2783
    %v2785 = vlaneseq
    %v2786 = vshrl.u32 %v2785, 7
    %v2787 = vsub.s32 1, %v2786
    %v2788 = vrot.slane %v99, %v2787
    %v2789 = vlaneseq
    %v2790 = vshrl.u32 %v2789, 7
    %v2791 = vsub.s32 2, %v2790
    %v2792 = vrot.slane %v99, %v2791
    %v2793 = vlaneseq
    %v2794 = vshrl.u32 %v2793, 7
    %v2795 = vsub.s32 3, %v2794
    %v2796 = vrot.slane %v99, %v2795
    %v2797 = vlaneseq
    %v2798 = vshrl.u32 %v2797, 7
    %v2799 = vsub.s32 4, %v2798
    %v2800 = vrot.slane %v99, %v2799
    %v2801 = vlaneseq
    %v2802 = vshrl.u32 %v2801, 7
    %v2803 = vsub.s32 5, %v2802
    %v2804 = vrot.slane %v99, %v2803
    %v2811 = vmul.f32 %v2776, %v2784
    %v2812 = vmul.f32 %v2774, %v2788
    %v2813 = vmul.f32 %v2772, %v2792
    %v2814 = vmul.f32 %v2770, %v2796
    %v2815 = vmul.f32 %v2768, %v2800
    %v2816 = vmul.f32 %v2778, %v2804
    %v2817 = vmul.f32 %v2777, %v2784
    %v2818 = vmul.f32 %v2775, %v2788
    %v2819 = vmul.f32 %v2773, %v2792
    %v2820 = vmul.f32 %v2771, %v2796
    %v2821 = vmul.f32 %v2769, %v2800
    %v2822 = vmul.f32 %v2779, %v2804
    %v2823 = vld [vmem:[#allocation7 + $0x70] sm:$0xff]
    %v2824 = vld [vmem:[#allocation7 + $0x78] sm:$0xff]
    %v2825 = vpack.c.bf16 %v2824, %v2823
    %v2826 = vpack.c.bf16 %v2737, %v2731
    %v2827 = vpack.c.bf16 %v2738, %v2732
    %v2828 = vpack.c.bf16 %v2739, %v2733
    %v2829 = vpack.c.bf16 %v2740, %v2734
    %v2830 = vpack.c.bf16 %v2741, %v2735
    %v2831 = vpack.c.bf16 %v2742, %v2736
    %v2832 = vpack.c.bf16 %v2657, %v2651
    %v2833 = vpack.c.bf16 %v2658, %v2652
    %v2834 = vpack.c.bf16 %v2659, %v2653
    %v2835 = vpack.c.bf16 %v2660, %v2654
    %v2836 = vpack.c.bf16 %v2661, %v2655
    %v2837 = vpack.c.bf16 %v2662, %v2656
    %v2838 = vpack.c.bf16 %v2817, %v2811
    %v2839 = vpack.c.bf16 %v2818, %v2812
    %v2840 = vpack.c.bf16 %v2819, %v2813
    %v2841 = vpack.c.bf16 %v2820, %v2814
    %v2842 = vpack.c.bf16 %v2821, %v2815
    %v2843 = vpack.c.bf16 %v2822, %v2816
    %2845 = vset.pattern.permute.xlu0 48
    %2846 = vperm.xlu0 %2845, %v2823
    %v2847 = vpop.permute.xlu0 %2846
    %2850 = vset.pattern.permute.xlu0 48
    %2851 = vperm.xlu0 %2850, %v2824
    %v2852 = vpop.permute.xlu0 %2851
    %vm2854 = vcmask 392192
    %v2856 = vsel %vm2854, %v2825, 0
    %2858 = vmatprep.subr.bf16.mxu0 %v2827
    %2859 = vmatpush1.bf16.msra.mxu0 %v2826
    %2860 = vmatprep.subr.bf16.mxu0 %v2833
    %2861 = vmatpush1.bf16.msra.mxu0 %v2832
    %2862 = vmatprep.subr.bf16.mxu0 %v2839
    %2863 = vmatpush1.bf16.msra.mxu0 %v2838
    %2864 = vmatprep.subr.bf16.mxu0 0
    %2865 = vmatpush1.bf16.msra.mxu0 0
    %2866 = vmatprep.subr.bf16.mxu0 0
    %2867 = vmatpush1.bf16.msra.mxu0 0
    %2868 = vmatprep.subr.bf16.mxu0 0
    %2869 = vmatpush1.bf16.msra.mxu0 0
    %2870 = vmatprep.subr.bf16.mxu0 0
    %2871 = vmatpush1.bf16.msra.mxu0 0
    %2872 = vmatprep.subr.bf16.mxu0 0
    %2873 = vmatpush1.bf16.msra.mxu0 0
    %2874 = vmatprep.subr.bf16.mxu0 0
    %2875 = vmatpush1.bf16.msra.mxu0 0
    %2876 = vmatprep.subr.bf16.mxu0 0
    %2877 = vmatpush1.bf16.msra.mxu0 0
    %2878 = vmatprep.subr.bf16.mxu0 0
    %2879 = vmatpush1.bf16.msra.mxu0 0
    %2880 = vmatprep.subr.bf16.mxu0 0
    %2881 = vmatpush1.bf16.msra.mxu0 0
    %2882 = vmatprep.subr.bf16.mxu0 0
    %2883 = vmatpush1.bf16.msra.mxu0 0
    %2884 = vmatprep.subr.bf16.mxu0 0
    %2885 = vmatpush1.bf16.msra.mxu0 0
    %2886 = vmatprep.subr.bf16.mxu0 0
    %2887 = vmatpush1.bf16.msra.mxu0 0
    %2888 = vmatprep.subr.bf16.mxu0 0
    %2889 = vmatpush1.bf16.msra.mxu0 0
    %2890 = vmatprep.mubr.bf16.mxu0 0
    %2891 = vmatmul.mubr.bf16.gmra.mrb[0].mxu0 %v2856
    %v2892 = vpop.f32.mrb[0].mxu0
    %v2893 = vadd.f32 %v2847, %v2892
    %v2894 = vpop.f32.mrb[0].mxu0
    %v2895 = vadd.f32 %v2847, %v2894
    %v2896 = vpop.f32.mrb[0].mxu0
    %v2897 = vadd.f32 %v2852, %v2896
    %v2898 = vpop.f32.mrb[0].mxu0
    %v2899 = vadd.f32 %v2852, %v2898
    %2900 = vdwg.mxu0
    %2901 = vmatprep.subr.bf16.mxu0 %v2829
    %2902 = vmatpush1.bf16.msra.mxu0 %v2828
    %2903 = vmatprep.subr.bf16.mxu0 %v2835
    %2904 = vmatpush1.bf16.msra.mxu0 %v2834
    %2905 = vmatprep.subr.bf16.mxu0 %v2841
    %2906 = vmatpush1.bf16.msra.mxu0 %v2840
    %2907 = vmatprep.subr.bf16.mxu0 0
    %2908 = vmatpush1.bf16.msra.mxu0 0
    %2909 = vmatprep.subr.bf16.mxu0 0
    %2910 = vmatpush1.bf16.msra.mxu0 0
    %2911 = vmatprep.subr.bf16.mxu0 0
    %2912 = vmatpush1.bf16.msra.mxu0 0
    %2913 = vmatprep.subr.bf16.mxu0 0
    %2914 = vmatpush1.bf16.msra.mxu0 0
    %2915 = vmatprep.subr.bf16.mxu0 0
    %2916 = vmatpush1.bf16.msra.mxu0 0
    %2917 = vmatprep.subr.bf16.mxu0 0
    %2918 = vmatpush1.bf16.msra.mxu0 0
    %2919 = vmatprep.subr.bf16.mxu0 0
    %2920 = vmatpush1.bf16.msra.mxu0 0
    %2921 = vmatprep.subr.bf16.mxu0 0
    %2922 = vmatpush1.bf16.msra.mxu0 0
    %2923 = vmatprep.subr.bf16.mxu0 0
    %2924 = vmatpush1.bf16.msra.mxu0 0
    %2925 = vmatprep.subr.bf16.mxu0 0
    %2926 = vmatpush1.bf16.msra.mxu0 0
    %2927 = vmatprep.subr.bf16.mxu0 0
    %2928 = vmatpush1.bf16.msra.mxu0 0
    %2929 = vmatprep.subr.bf16.mxu0 0
    %2930 = vmatpush1.bf16.msra.mxu0 0
    %2931 = vmatprep.subr.bf16.mxu0 0
    %2932 = vmatpush1.bf16.msra.mxu0 0
    %2933 = vmatprep.mubr.bf16.mxu0 0
    %2934 = vmatmul.mubr.bf16.gmra.mrb[0].mxu0 %v2856
    %v2935 = vpop.f32.mrb[0].mxu0
    %v2936 = vadd.f32 %v2847, %v2935
    %v2937 = vpop.f32.mrb[0].mxu0
    %v2938 = vadd.f32 %v2847, %v2937
    %v2939 = vpop.f32.mrb[0].mxu0
    %v2940 = vadd.f32 %v2852, %v2939
    %v2941 = vpop.f32.mrb[0].mxu0
    %v2942 = vadd.f32 %v2852, %v2941
    %2943 = vdwg.mxu0
    %2944 = vmatprep.subr.bf16.mxu0 %v2831
    %2945 = vmatpush1.bf16.msra.mxu0 %v2830
    %2946 = vmatprep.subr.bf16.mxu0 %v2837
    %2947 = vmatpush1.bf16.msra.mxu0 %v2836
    %2948 = vmatprep.subr.bf16.mxu0 %v2843
    %2949 = vmatpush1.bf16.msra.mxu0 %v2842
    %2950 = vmatprep.subr.bf16.mxu0 0
    %2951 = vmatpush1.bf16.msra.mxu0 0
    %2952 = vmatprep.subr.bf16.mxu0 0
    %2953 = vmatpush1.bf16.msra.mxu0 0
    %2954 = vmatprep.subr.bf16.mxu0 0
    %2955 = vmatpush1.bf16.msra.mxu0 0
    %2956 = vmatprep.subr.bf16.mxu0 0
    %2957 = vmatpush1.bf16.msra.mxu0 0
    %2958 = vmatprep.subr.bf16.mxu0 0
    %2959 = vmatpush1.bf16.msra.mxu0 0
    %2960 = vmatprep.subr.bf16.mxu0 0
    %2961 = vmatpush1.bf16.msra.mxu0 0
    %2962 = vmatprep.subr.bf16.mxu0 0
    %2963 = vmatpush1.bf16.msra.mxu0 0
    %2964 = vmatprep.subr.bf16.mxu0 0
    %2965 = vmatpush1.bf16.msra.mxu0 0
    %2966 = vmatprep.subr.bf16.mxu0 0
    %2967 = vmatpush1.bf16.msra.mxu0 0
    %2968 = vmatprep.subr.bf16.mxu0 0
    %2969 = vmatpush1.bf16.msra.mxu0 0
    %2970 = vmatprep.subr.bf16.mxu0 0
    %2971 = vmatpush1.bf16.msra.mxu0 0
    %2972 = vmatprep.subr.bf16.mxu0 0
    %2973 = vmatpush1.bf16.msra.mxu0 0
    %2974 = vmatprep.subr.bf16.mxu0 0
    %2975 = vmatpush1.bf16.msra.mxu0 0
    %2976 = vmatprep.mubr.bf16.mxu0 0
    %2977 = vmatmul.mubr.bf16.gmra.mrb[0].mxu0 %v2856
    %v2978 = vpop.f32.mrb[0].mxu0
    %v2979 = vadd.f32 %v2847, %v2978
    %v2980 = vpop.f32.mrb[0].mxu0
    %v2981 = vadd.f32 %v2847, %v2980
    %v2982 = vpop.f32.mrb[0].mxu0
    %v2983 = vadd.f32 %v2852, %v2982
    %v2984 = vpop.f32.mrb[0].mxu0
    %v2985 = vadd.f32 %v2852, %v2984
    %2986 = vdwg.mxu0
    %v2987 = vadd.f32 %v2893, %v2537
    %v2988 = vadd.f32 %v2895, %v2539
    %v2989 = vadd.f32 %v2936, %v2590
    %v2990 = vadd.f32 %v2938, %v2592
    %v2991 = vadd.f32 %v2979, %v2643
    %v2992 = vadd.f32 %v2981, %v2645
    %v2993 = vadd.f32 %v2897, %v2541
    %v2994 = vadd.f32 %v2899, %v2543
    %v2995 = vadd.f32 %v2940, %v2594
    %v2996 = vadd.f32 %v2942, %v2596
    %v2997 = vadd.f32 %v2983, %v2647
    %v2998 = vadd.f32 %v2985, %v2649
    %v2999 = vmax.f32 %v2987, 0.0
    %v3000 = vmax.f32 %v2988, 0.0
    %v3001 = vmax.f32 %v2989, 0.0
    %v3002 = vmax.f32 %v2990, 0.0
    %v3003 = vmax.f32 %v2991, 0.0
    %v3004 = vmax.f32 %v2992, 0.0
    %v3005 = vmax.f32 %v2993, 0.0
    %v3006 = vmax.f32 %v2994, 0.0
    %v3007 = vmax.f32 %v2995, 0.0
    %v3008 = vmax.f32 %v2996, 0.0
    %v3009 = vmax.f32 %v2997, 0.0
    %v3010 = vmax.f32 %v2998, 0.0
    %3011 = vrot.lane.b32.xlu0 %v2999, 4
    %v3012 = vpop.permute.xlu0 %3011
    %3013 = vrot.lane.b32.xlu0 %v3005, 4
    %v3014 = vpop.permute.xlu0 %3013
    %3015 = vrot.lane.b32.xlu0 %v3000, 4
    %v3016 = vpop.permute.xlu0 %3015
    %3017 = vrot.lane.b32.xlu0 %v3006, 4
    %v3018 = vpop.permute.xlu0 %3017
    %3019 = vrot.lane.b32.xlu0 %v3001, 4
    %v3020 = vpop.permute.xlu0 %3019
    %3021 = vrot.lane.b32.xlu0 %v3007, 4
    %v3022 = vpop.permute.xlu0 %3021
    %3023 = vrot.lane.b32.xlu0 %v3002, 4
    %v3024 = vpop.permute.xlu0 %3023
    %3025 = vrot.lane.b32.xlu0 %v3008, 4
    %v3026 = vpop.permute.xlu0 %3025
    %3027 = vrot.lane.b32.xlu0 %v3003, 4
    %v3028 = vpop.permute.xlu0 %3027
    %3029 = vrot.lane.b32.xlu0 %v3009, 4
    %v3030 = vpop.permute.xlu0 %3029
    %3031 = vrot.lane.b32.xlu0 %v3004, 4
    %v3032 = vpop.permute.xlu0 %3031
    %3033 = vrot.lane.b32.xlu0 %v3010, 4
    %v3034 = vpop.permute.xlu0 %3033
    %v3035 = vsel %vm2687, %v3028, %v3032
    %v3036 = vsel %vm2687, %v3030, %v3034
    %v3037 = vsel %vm2687, %v3024, %v3028
    %v3038 = vsel %vm2687, %v3026, %v3030
    %v3039 = vsel %vm2687, %v3020, %v3024
    %v3040 = vsel %vm2687, %v3022, %v3026
    %v3041 = vsel %vm2687, %v3016, %v3020
    %v3042 = vsel %vm2687, %v3018, %v3022
    %v3043 = vsel %vm2687, %v3012, %v3016
    %v3044 = vsel %vm2687, %v3014, %v3018
    %v3045 = vsel %vm2687, %v3032, %v3012
    %v3046 = vsel %vm2687, %v3034, %v3014
    %v3047 = vmul.f32 %v3045, %v2704
    %v3048 = vmul.f32 %v3043, %v2708
    %v3049 = vmul.f32 %v3041, %v2712
    %v3050 = vmul.f32 %v3039, %v2716
    %v3051 = vmul.f32 %v3037, %v2720
    %v3052 = vmul.f32 %v3035, %v2724
    %v3053 = vmul.f32 %v3046, %v2704
    %v3054 = vmul.f32 %v3044, %v2708
    %v3055 = vmul.f32 %v3042, %v2712
    %v3056 = vmul.f32 %v3040, %v2716
    %v3057 = vmul.f32 %v3038, %v2720
    %v3058 = vmul.f32 %v3036, %v2724
    %3059 = vrot.lane.b32.xlu0 %v2999, 124
    %v3060 = vpop.permute.xlu0 %3059
    %3061 = vrot.lane.b32.xlu0 %v3005, 124
    %v3062 = vpop.permute.xlu0 %3061
    %3063 = vrot.lane.b32.xlu0 %v3000, 124
    %v3064 = vpop.permute.xlu0 %3063
    %3065 = vrot.lane.b32.xlu0 %v3006, 124
    %v3066 = vpop.permute.xlu0 %3065
    %3067 = vrot.lane.b32.xlu0 %v3001, 124
    %v3068 = vpop.permute.xlu0 %3067
    %3069 = vrot.lane.b32.xlu0 %v3007, 124
    %v3070 = vpop.permute.xlu0 %3069
    %3071 = vrot.lane.b32.xlu0 %v3002, 124
    %v3072 = vpop.permute.xlu0 %3071
    %3073 = vrot.lane.b32.xlu0 %v3008, 124
    %v3074 = vpop.permute.xlu0 %3073
    %3075 = vrot.lane.b32.xlu0 %v3003, 124
    %v3076 = vpop.permute.xlu0 %3075
    %3077 = vrot.lane.b32.xlu0 %v3009, 124
    %v3078 = vpop.permute.xlu0 %3077
    %3079 = vrot.lane.b32.xlu0 %v3004, 124
    %v3080 = vpop.permute.xlu0 %3079
    %3081 = vrot.lane.b32.xlu0 %v3010, 124
    %v3082 = vpop.permute.xlu0 %3081
    %v3083 = vsel %vm2767, %v3076, %v3080
    %v3084 = vsel %vm2767, %v3078, %v3082
    %v3085 = vsel %vm2767, %v3072, %v3076
    %v3086 = vsel %vm2767, %v3074, %v3078
    %v3087 = vsel %vm2767, %v3068, %v3072
    %v3088 = vsel %vm2767, %v3070, %v3074
    %v3089 = vsel %vm2767, %v3064, %v3068
    %v3090 = vsel %vm2767, %v3066, %v3070
    %v3091 = vsel %vm2767, %v3060, %v3064
    %v3092 = vsel %vm2767, %v3062, %v3066
    %v3093 = vsel %vm2767, %v3080, %v3060
    %v3094 = vsel %vm2767, %v3082, %v3062
    %v3095 = vmul.f32 %v3091, %v2784
    %v3096 = vmul.f32 %v3089, %v2788
    %v3097 = vmul.f32 %v3087, %v2792
    %v3098 = vmul.f32 %v3085, %v2796
    %v3099 = vmul.f32 %v3083, %v2800
    %v3100 = vmul.f32 %v3093, %v2804
    %v3101 = vmul.f32 %v3092, %v2784
    %v3102 = vmul.f32 %v3090, %v2788
    %v3103 = vmul.f32 %v3088, %v2792
    %v3104 = vmul.f32 %v3086, %v2796
    %v3105 = vmul.f32 %v3084, %v2800
    %v3106 = vmul.f32 %v3094, %v2804
    %v3107 = vld [vmem:[#allocation7 + $0x80] sm:$0xff]
    %v3108 = vld [vmem:[#allocation7 + $0x88] sm:$0xff]
    %v3109 = vpack.c.bf16 %v3108, %v3107
    %v3110 = vpack.c.bf16 %v3053, %v3047
    %v3111 = vpack.c.bf16 %v3054, %v3048
    %v3112 = vpack.c.bf16 %v3055, %v3049
    %v3113 = vpack.c.bf16 %v3056, %v3050
    %v3114 = vpack.c.bf16 %v3057, %v3051
    %v3115 = vpack.c.bf16 %v3058, %v3052
    %v3116 = vpack.c.bf16 %v3005, %v2999
    %v3117 = vpack.c.bf16 %v3006, %v3000
    %v3118 = vpack.c.bf16 %v3007, %v3001
    %v3119 = vpack.c.bf16 %v3008, %v3002
    %v3120 = vpack.c.bf16 %v3009, %v3003
    %v3121 = vpack.c.bf16 %v3010, %v3004
    %v3122 = vpack.c.bf16 %v3101, %v3095
    %v3123 = vpack.c.bf16 %v3102, %v3096
    %v3124 = vpack.c.bf16 %v3103, %v3097
    %v3125 = vpack.c.bf16 %v3104, %v3098
    %v3126 = vpack.c.bf16 %v3105, %v3099
    %v3127 = vpack.c.bf16 %v3106, %v3100
    %3129 = vset.pattern.permute.xlu0 48
    %3130 = vperm.xlu0 %3129, %v3107
    %v3131 = vpop.permute.xlu0 %3130
    %3134 = vset.pattern.permute.xlu0 48
    %3135 = vperm.xlu0 %3134, %v3108
    %v3136 = vpop.permute.xlu0 %3135
    %v3139 = vsel %vm2854, %v3109, 0
    %3141 = vmatprep.subr.bf16.mxu0 %v3111
    %3142 = vmatpush1.bf16.msra.mxu0 %v3110
    %3143 = vmatprep.subr.bf16.mxu0 %v3117
    %3144 = vmatpush1.bf16.msra.mxu0 %v3116
    %3145 = vmatprep.subr.bf16.mxu0 %v3123
    %3146 = vmatpush1.bf16.msra.mxu0 %v3122
    %3147 = vmatprep.subr.bf16.mxu0 0
    %3148 = vmatpush1.bf16.msra.mxu0 0
    %3149 = vmatprep.subr.bf16.mxu0 0
    %3150 = vmatpush1.bf16.msra.mxu0 0
    %3151 = vmatprep.subr.bf16.mxu0 0
    %3152 = vmatpush1.bf16.msra.mxu0 0
    %3153 = vmatprep.subr.bf16.mxu0 0
    %3154 = vmatpush1.bf16.msra.mxu0 0
    %3155 = vmatprep.subr.bf16.mxu0 0
    %3156 = vmatpush1.bf16.msra.mxu0 0
    %3157 = vmatprep.subr.bf16.mxu0 0
    %3158 = vmatpush1.bf16.msra.mxu0 0
    %3159 = vmatprep.subr.bf16.mxu0 0
    %3160 = vmatpush1.bf16.msra.mxu0 0
    %3161 = vmatprep.subr.bf16.mxu0 0
    %3162 = vmatpush1.bf16.msra.mxu0 0
    %3163 = vmatprep.subr.bf16.mxu0 0
    %3164 = vmatpush1.bf16.msra.mxu0 0
    %3165 = vmatprep.subr.bf16.mxu0 0
    %3166 = vmatpush1.bf16.msra.mxu0 0
    %3167 = vmatprep.subr.bf16.mxu0 0
    %3168 = vmatpush1.bf16.msra.mxu0 0
    %3169 = vmatprep.subr.bf16.mxu0 0
    %3170 = vmatpush1.bf16.msra.mxu0 0
    %3171 = vmatprep.subr.bf16.mxu0 0
    %3172 = vmatpush1.bf16.msra.mxu0 0
    %3173 = vmatprep.mubr.bf16.mxu0 0
    %3174 = vmatmul.mubr.bf16.gmra.mrb[0].mxu0 %v3139
    %v3175 = vpop.f32.mrb[0].mxu0
    %v3176 = vadd.f32 %v3131, %v3175
    %v3177 = vpop.f32.mrb[0].mxu0
    %v3178 = vadd.f32 %v3131, %v3177
    %v3179 = vpop.f32.mrb[0].mxu0
    %v3180 = vadd.f32 %v3136, %v3179
    %v3181 = vpop.f32.mrb[0].mxu0
    %v3182 = vadd.f32 %v3136, %v3181
    %3183 = vdwg.mxu0
    %3184 = vmatprep.subr.bf16.mxu0 %v3113
    %3185 = vmatpush1.bf16.msra.mxu0 %v3112
    %3186 = vmatprep.subr.bf16.mxu0 %v3119
    %3187 = vmatpush1.bf16.msra.mxu0 %v3118
    %3188 = vmatprep.subr.bf16.mxu0 %v3125
    %3189 = vmatpush1.bf16.msra.mxu0 %v3124
    %3190 = vmatprep.subr.bf16.mxu0 0
    %3191 = vmatpush1.bf16.msra.mxu0 0
    %3192 = vmatprep.subr.bf16.mxu0 0
    %3193 = vmatpush1.bf16.msra.mxu0 0
    %3194 = vmatprep.subr.bf16.mxu0 0
    %3195 = vmatpush1.bf16.msra.mxu0 0
    %3196 = vmatprep.subr.bf16.mxu0 0
    %3197 = vmatpush1.bf16.msra.mxu0 0
    %3198 = vmatprep.subr.bf16.mxu0 0
    %3199 = vmatpush1.bf16.msra.mxu0 0
    %3200 = vmatprep.subr.bf16.mxu0 0
    %3201 = vmatpush1.bf16.msra.mxu0 0
    %3202 = vmatprep.subr.bf16.mxu0 0
    %3203 = vmatpush1.bf16.msra.mxu0 0
    %3204 = vmatprep.subr.bf16.mxu0 0
    %3205 = vmatpush1.bf16.msra.mxu0 0
    %3206 = vmatprep.subr.bf16.mxu0 0
    %3207 = vmatpush1.bf16.msra.mxu0 0
    %3208 = vmatprep.subr.bf16.mxu0 0
    %3209 = vmatpush1.bf16.msra.mxu0 0
    %3210 = vmatprep.subr.bf16.mxu0 0
    %3211 = vmatpush1.bf16.msra.mxu0 0
    %3212 = vmatprep.subr.bf16.mxu0 0
    %3213 = vmatpush1.bf16.msra.mxu0 0
    %3214 = vmatprep.subr.bf16.mxu0 0
    %3215 = vmatpush1.bf16.msra.mxu0 0
    %3216 = vmatprep.mubr.bf16.mxu0 0
    %3217 = vmatmul.mubr.bf16.gmra.mrb[0].mxu0 %v3139
    %v3218 = vpop.f32.mrb[0].mxu0
    %v3219 = vadd.f32 %v3131, %v3218
    %v3220 = vpop.f32.mrb[0].mxu0
    %v3221 = vadd.f32 %v3131, %v3220
    %v3222 = vpop.f32.mrb[0].mxu0
    %v3223 = vadd.f32 %v3136, %v3222
    %v3224 = vpop.f32.mrb[0].mxu0
    %v3225 = vadd.f32 %v3136, %v3224
    %3226 = vdwg.mxu0
    %3227 = vmatprep.subr.bf16.mxu0 %v3115
    %3228 = vmatpush1.bf16.msra.mxu0 %v3114
    %3229 = vmatprep.subr.bf16.mxu0 %v3121
    %3230 = vmatpush1.bf16.msra.mxu0 %v3120
    %3231 = vmatprep.subr.bf16.mxu0 %v3127
    %3232 = vmatpush1.bf16.msra.mxu0 %v3126
    %3233 = vmatprep.subr.bf16.mxu0 0
    %3234 = vmatpush1.bf16.msra.mxu0 0
    %3235 = vmatprep.subr.bf16.mxu0 0
    %3236 = vmatpush1.bf16.msra.mxu0 0
    %3237 = vmatprep.subr.bf16.mxu0 0
    %3238 = vmatpush1.bf16.msra.mxu0 0
    %3239 = vmatprep.subr.bf16.mxu0 0
    %3240 = vmatpush1.bf16.msra.mxu0 0
    %3241 = vmatprep.subr.bf16.mxu0 0
    %3242 = vmatpush1.bf16.msra.mxu0 0
    %3243 = vmatprep.subr.bf16.mxu0 0
    %3244 = vmatpush1.bf16.msra.mxu0 0
    %3245 = vmatprep.subr.bf16.mxu0 0
    %3246 = vmatpush1.bf16.msra.mxu0 0
    %3247 = vmatprep.subr.bf16.mxu0 0
    %3248 = vmatpush1.bf16.msra.mxu0 0
    %3249 = vmatprep.subr.bf16.mxu0 0
    %3250 = vmatpush1.bf16.msra.mxu0 0
    %3251 = vmatprep.subr.bf16.mxu0 0
    %3252 = vmatpush1.bf16.msra.mxu0 0
    %3253 = vmatprep.subr.bf16.mxu0 0
    %3254 = vmatpush1.bf16.msra.mxu0 0
    %3255 = vmatprep.subr.bf16.mxu0 0
    %3256 = vmatpush1.bf16.msra.mxu0 0
    %3257 = vmatprep.subr.bf16.mxu0 0
    %3258 = vmatpush1.bf16.msra.mxu0 0
    %3259 = vmatprep.mubr.bf16.mxu0 0
    %3260 = vmatmul.mubr.bf16.gmra.mrb[0].mxu0 %v3139
    %v3261 = vpop.f32.mrb[0].mxu0
    %v3262 = vadd.f32 %v3131, %v3261
    %v3263 = vpop.f32.mrb[0].mxu0
    %v3264 = vadd.f32 %v3131, %v3263
    %v3265 = vpop.f32.mrb[0].mxu0
    %v3266 = vadd.f32 %v3136, %v3265
    %v3267 = vpop.f32.mrb[0].mxu0
    %v3268 = vadd.f32 %v3136, %v3267
    %3269 = vdwg.mxu0
    %v3270 = vmax.f32 %v3176, 0.0
    %v3271 = vmax.f32 %v3178, 0.0
    %v3272 = vmax.f32 %v3219, 0.0
    %v3273 = vmax.f32 %v3221, 0.0
    %v3274 = vmax.f32 %v3262, 0.0
    %v3275 = vmax.f32 %v3264, 0.0
    %v3276 = vmax.f32 %v3180, 0.0
    %v3277 = vmax.f32 %v3182, 0.0
    %v3278 = vmax.f32 %v3223, 0.0
    %v3279 = vmax.f32 %v3225, 0.0
    %v3280 = vmax.f32 %v3266, 0.0
    %v3281 = vmax.f32 %v3268, 0.0
    %3282 = vrot.lane.b32.xlu0 %v3270, 4
    %v3283 = vpop.permute.xlu0 %3282
    %3284 = vrot.lane.b32.xlu0 %v3276, 4
    %v3285 = vpop.permute.xlu0 %3284
    %3286 = vrot.lane.b32.xlu0 %v3271, 4
    %v3287 = vpop.permute.xlu0 %3286
    %3288 = vrot.lane.b32.xlu0 %v3277, 4
    %v3289 = vpop.permute.xlu0 %3288
    %3290 = vrot.lane.b32.xlu0 %v3272, 4
    %v3291 = vpop.permute.xlu0 %3290
    %3292 = vrot.lane.b32.xlu0 %v3278, 4
    %v3293 = vpop.permute.xlu0 %3292
    %3294 = vrot.lane.b32.xlu0 %v3273, 4
    %v3295 = vpop.permute.xlu0 %3294
    %3296 = vrot.lane.b32.xlu0 %v3279, 4
    %v3297 = vpop.permute.xlu0 %3296
    %3298 = vrot.lane.b32.xlu0 %v3274, 4
    %v3299 = vpop.permute.xlu0 %3298
    %3300 = vrot.lane.b32.xlu0 %v3280, 4
    %v3301 = vpop.permute.xlu0 %3300
    %3302 = vrot.lane.b32.xlu0 %v3275, 4
    %v3303 = vpop.permute.xlu0 %3302
    %3304 = vrot.lane.b32.xlu0 %v3281, 4
    %v3305 = vpop.permute.xlu0 %3304
    %v3306 = vsel %vm2687, %v3299, %v3303
    %v3307 = vsel %vm2687, %v3301, %v3305
    %v3308 = vsel %vm2687, %v3295, %v3299
    %v3309 = vsel %vm2687, %v3297, %v3301
    %v3310 = vsel %vm2687, %v3291, %v3295
    %v3311 = vsel %vm2687, %v3293, %v3297
    %v3312 = vsel %vm2687, %v3287, %v3291
    %v3313 = vsel %vm2687, %v3289, %v3293
    %v3314 = vsel %vm2687, %v3283, %v3287
    %v3315 = vsel %vm2687, %v3285, %v3289
    %v3316 = vsel %vm2687, %v3303, %v3283
    %v3317 = vsel %vm2687, %v3305, %v3285
    %v3318 = vmul.f32 %v3316, %v2704
    %v3319 = vmul.f32 %v3314, %v2708
    %v3320 = vmul.f32 %v3312, %v2712
    %v3321 = vmul.f32 %v3310, %v2716
    %v3322 = vmul.f32 %v3308, %v2720
    %v3323 = vmul.f32 %v3306, %v2724
    %v3324 = vmul.f32 %v3317, %v2704
    %v3325 = vmul.f32 %v3315, %v2708
    %v3326 = vmul.f32 %v3313, %v2712
    %v3327 = vmul.f32 %v3311, %v2716
    %v3328 = vmul.f32 %v3309, %v2720
    %v3329 = vmul.f32 %v3307, %v2724
    %3330 = vrot.lane.b32.xlu0 %v3270, 124
    %v3331 = vpop.permute.xlu0 %3330
    %3332 = vrot.lane.b32.xlu0 %v3276, 124
    %v3333 = vpop.permute.xlu0 %3332
    %3334 = vrot.lane.b32.xlu0 %v3271, 124
    %v3335 = vpop.permute.xlu0 %3334
    %3336 = vrot.lane.b32.xlu0 %v3277, 124
    %v3337 = vpop.permute.xlu0 %3336
    %3338 = vrot.lane.b32.xlu0 %v3272, 124
    %v3339 = vpop.permute.xlu0 %3338
    %3340 = vrot.lane.b32.xlu0 %v3278, 124
    %v3341 = vpop.permute.xlu0 %3340
    %3342 = vrot.lane.b32.xlu0 %v3273, 124
    %v3343 = vpop.permute.xlu0 %3342
    %3344 = vrot.lane.b32.xlu0 %v3279, 124
    %v3345 = vpop.permute.xlu0 %3344
    %3346 = vrot.lane.b32.xlu0 %v3274, 124
    %v3347 = vpop.permute.xlu0 %3346
    %3348 = vrot.lane.b32.xlu0 %v3280, 124
    %v3349 = vpop.permute.xlu0 %3348
    %3350 = vrot.lane.b32.xlu0 %v3275, 124
    %v3351 = vpop.permute.xlu0 %3350
    %3352 = vrot.lane.b32.xlu0 %v3281, 124
    %v3353 = vpop.permute.xlu0 %3352
    %v3354 = vsel %vm2767, %v3347, %v3351
    %v3355 = vsel %vm2767, %v3349, %v3353
    %v3356 = vsel %vm2767, %v3343, %v3347
    %v3357 = vsel %vm2767, %v3345, %v3349
    %v3358 = vsel %vm2767, %v3339, %v3343
    %v3359 = vsel %vm2767, %v3341, %v3345
    %v3360 = vsel %vm2767, %v3335, %v3339
    %v3361 = vsel %vm2767, %v3337, %v3341
    %v3362 = vsel %vm2767, %v3331, %v3335
    %v3363 = vsel %vm2767, %v3333, %v3337
    %v3364 = vsel %vm2767, %v3351, %v3331
    %v3365 = vsel %vm2767, %v3353, %v3333
    %v3366 = vmul.f32 %v3362, %v2784
    %v3367 = vmul.f32 %v3360, %v2788
    %v3368 = vmul.f32 %v3358, %v2792
    %v3369 = vmul.f32 %v3356, %v2796
    %v3370 = vmul.f32 %v3354, %v2800
    %v3371 = vmul.f32 %v3364, %v2804
    %v3372 = vmul.f32 %v3363, %v2784
    %v3373 = vmul.f32 %v3361, %v2788
    %v3374 = vmul.f32 %v3359, %v2792
    %v3375 = vmul.f32 %v3357, %v2796
    %v3376 = vmul.f32 %v3355, %v2800
    %v3377 = vmul.f32 %v3365, %v2804
    %v3378 = vld [vmem:[#allocation7 + $0x90] sm:$0xff]
    %v3379 = vld [vmem:[#allocation7 + $0x98] sm:$0xff]
    %v3380 = vpack.c.bf16 %v3379, %v3378
    %v3381 = vpack.c.bf16 %v3324, %v3318
    %v3382 = vpack.c.bf16 %v3325, %v3319
    %v3383 = vpack.c.bf16 %v3326, %v3320
    %v3384 = vpack.c.bf16 %v3327, %v3321
    %v3385 = vpack.c.bf16 %v3328, %v3322
    %v3386 = vpack.c.bf16 %v3329, %v3323
    %v3387 = vpack.c.bf16 %v3276, %v3270
    %v3388 = vpack.c.bf16 %v3277, %v3271
    %v3389 = vpack.c.bf16 %v3278, %v3272
    %v3390 = vpack.c.bf16 %v3279, %v3273
    %v3391 = vpack.c.bf16 %v3280, %v3274
    %v3392 = vpack.c.bf16 %v3281, %v3275
    %v3393 = vpack.c.bf16 %v3372, %v3366
    %v3394 = vpack.c.bf16 %v3373, %v3367
    %v3395 = vpack.c.bf16 %v3374, %v3368
    %v3396 = vpack.c.bf16 %v3375, %v3369
    %v3397 = vpack.c.bf16 %v3376, %v3370
    %v3398 = vpack.c.bf16 %v3377, %v3371
    %3400 = vset.pattern.permute.xlu0 48
    %3401 = vperm.xlu0 %3400, %v3378
    %v3402 = vpop.permute.xlu0 %3401
    %3405 = vset.pattern.permute.xlu0 48
    %3406 = vperm.xlu0 %3405, %v3379
    %v3407 = vpop.permute.xlu0 %3406
    %v3410 = vsel %vm2854, %v3380, 0
    %3412 = vmatprep.subr.bf16.mxu0 %v3382
    %3413 = vmatpush1.bf16.msra.mxu0 %v3381
    %3414 = vmatprep.subr.bf16.mxu0 %v3388
    %3415 = vmatpush1.bf16.msra.mxu0 %v3387
    %3416 = vmatprep.subr.bf16.mxu0 %v3394
    %3417 = vmatpush1.bf16.msra.mxu0 %v3393
    %3418 = vmatprep.subr.bf16.mxu0 0
    %3419 = vmatpush1.bf16.msra.mxu0 0
    %3420 = vmatprep.subr.bf16.mxu0 0
    %3421 = vmatpush1.bf16.msra.mxu0 0
    %3422 = vmatprep.subr.bf16.mxu0 0
    %3423 = vmatpush1.bf16.msra.mxu0 0
    %3424 = vmatprep.subr.bf16.mxu0 0
    %3425 = vmatpush1.bf16.msra.mxu0 0
    %3426 = vmatprep.subr.bf16.mxu0 0
    %3427 = vmatpush1.bf16.msra.mxu0 0
    %3428 = vmatprep.subr.bf16.mxu0 0
    %3429 = vmatpush1.bf16.msra.mxu0 0
    %3430 = vmatprep.subr.bf16.mxu0 0
    %3431 = vmatpush1.bf16.msra.mxu0 0
    %3432 = vmatprep.subr.bf16.mxu0 0
    %3433 = vmatpush1.bf16.msra.mxu0 0
    %3434 = vmatprep.subr.bf16.mxu0 0
    %3435 = vmatpush1.bf16.msra.mxu0 0
    %3436 = vmatprep.subr.bf16.mxu0 0
    %3437 = vmatpush1.bf16.msra.mxu0 0
    %3438 = vmatprep.subr.bf16.mxu0 0
    %3439 = vmatpush1.bf16.msra.mxu0 0
    %3440 = vmatprep.subr.bf16.mxu0 0
    %3441 = vmatpush1.bf16.msra.mxu0 0
    %3442 = vmatprep.subr.bf16.mxu0 0
    %3443 = vmatpush1.bf16.msra.mxu0 0
    %3444 = vmatprep.mubr.bf16.mxu0 0
    %3445 = vmatmul.mubr.bf16.gmra.mrb[0].mxu0 %v3410
    %v3446 = vpop.f32.mrb[0].mxu0
    %v3447 = vadd.f32 %v3402, %v3446
    %v3448 = vpop.f32.mrb[0].mxu0
    %v3449 = vadd.f32 %v3402, %v3448
    %v3450 = vpop.f32.mrb[0].mxu0
    %v3451 = vadd.f32 %v3407, %v3450
    %v3452 = vpop.f32.mrb[0].mxu0
    %v3453 = vadd.f32 %v3407, %v3452
    %3454 = vdwg.mxu0
    %3455 = vmatprep.subr.bf16.mxu0 %v3384
    %3456 = vmatpush1.bf16.msra.mxu0 %v3383
    %3457 = vmatprep.subr.bf16.mxu0 %v3390
    %3458 = vmatpush1.bf16.msra.mxu0 %v3389
    %3459 = vmatprep.subr.bf16.mxu0 %v3396
    %3460 = vmatpush1.bf16.msra.mxu0 %v3395
    %3461 = vmatprep.subr.bf16.mxu0 0
    %3462 = vmatpush1.bf16.msra.mxu0 0
    %3463 = vmatprep.subr.bf16.mxu0 0
    %3464 = vmatpush1.bf16.msra.mxu0 0
    %3465 = vmatprep.subr.bf16.mxu0 0
    %3466 = vmatpush1.bf16.msra.mxu0 0
    %3467 = vmatprep.subr.bf16.mxu0 0
    %3468 = vmatpush1.bf16.msra.mxu0 0
    %3469 = vmatprep.subr.bf16.mxu0 0
    %3470 = vmatpush1.bf16.msra.mxu0 0
    %3471 = vmatprep.subr.bf16.mxu0 0
    %3472 = vmatpush1.bf16.msra.mxu0 0
    %3473 = vmatprep.subr.bf16.mxu0 0
    %3474 = vmatpush1.bf16.msra.mxu0 0
    %3475 = vmatprep.subr.bf16.mxu0 0
    %3476 = vmatpush1.bf16.msra.mxu0 0
    %3477 = vmatprep.subr.bf16.mxu0 0
    %3478 = vmatpush1.bf16.msra.mxu0 0
    %3479 = vmatprep.subr.bf16.mxu0 0
    %3480 = vmatpush1.bf16.msra.mxu0 0
    %3481 = vmatprep.subr.bf16.mxu0 0
    %3482 = vmatpush1.bf16.msra.mxu0 0
    %3483 = vmatprep.subr.bf16.mxu0 0
    %3484 = vmatpush1.bf16.msra.mxu0 0
    %3485 = vmatprep.subr.bf16.mxu0 0
    %3486 = vmatpush1.bf16.msra.mxu0 0
    %3487 = vmatprep.mubr.bf16.mxu0 0
    %3488 = vmatmul.mubr.bf16.gmra.mrb[0].mxu0 %v3410
    %v3489 = vpop.f32.mrb[0].mxu0
    %v3490 = vadd.f32 %v3402, %v3489
    %v3491 = vpop.f32.mrb[0].mxu0
    %v3492 = vadd.f32 %v3402, %v3491
    %v3493 = vpop.f32.mrb[0].mxu0
    %v3494 = vadd.f32 %v3407, %v3493
    %v3495 = vpop.f32.mrb[0].mxu0
    %v3496 = vadd.f32 %v3407, %v3495
    %3497 = vdwg.mxu0
    %3498 = vmatprep.subr.bf16.mxu0 %v3386
    %3499 = vmatpush1.bf16.msra.mxu0 %v3385
    %3500 = vmatprep.subr.bf16.mxu0 %v3392
    %3501 = vmatpush1.bf16.msra.mxu0 %v3391
    %3502 = vmatprep.subr.bf16.mxu0 %v3398
    %3503 = vmatpush1.bf16.msra.mxu0 %v3397
    %3504 = vmatprep.subr.bf16.mxu0 0
    %3505 = vmatpush1.bf16.msra.mxu0 0
    %3506 = vmatprep.subr.bf16.mxu0 0
    %3507 = vmatpush1.bf16.msra.mxu0 0
    %3508 = vmatprep.subr.bf16.mxu0 0
    %3509 = vmatpush1.bf16.msra.mxu0 0
    %3510 = vmatprep.subr.bf16.mxu0 0
    %3511 = vmatpush1.bf16.msra.mxu0 0
    %3512 = vmatprep.subr.bf16.mxu0 0
    %3513 = vmatpush1.bf16.msra.mxu0 0
    %3514 = vmatprep.subr.bf16.mxu0 0
    %3515 = vmatpush1.bf16.msra.mxu0 0
    %3516 = vmatprep.subr.bf16.mxu0 0
    %3517 = vmatpush1.bf16.msra.mxu0 0
    %3518 = vmatprep.subr.bf16.mxu0 0
    %3519 = vmatpush1.bf16.msra.mxu0 0
    %3520 = vmatprep.subr.bf16.mxu0 0
    %3521 = vmatpush1.bf16.msra.mxu0 0
    %3522 = vmatprep.subr.bf16.mxu0 0
    %3523 = vmatpush1.bf16.msra.mxu0 0
    %3524 = vmatprep.subr.bf16.mxu0 0
    %3525 = vmatpush1.bf16.msra.mxu0 0
    %3526 = vmatprep.subr.bf16.mxu0 0
    %3527 = vmatpush1.bf16.msra.mxu0 0
    %3528 = vmatprep.subr.bf16.mxu0 0
    %3529 = vmatpush1.bf16.msra.mxu0 0
    %3530 = vmatprep.mubr.bf16.mxu0 0
    %3531 = vmatmul.mubr.bf16.gmra.mrb[0].mxu0 %v3410
    %v3532 = vpop.f32.mrb[0].mxu0
    %v3533 = vadd.f32 %v3402, %v3532
    %v3534 = vpop.f32.mrb[0].mxu0
    %v3535 = vadd.f32 %v3402, %v3534
    %v3536 = vpop.f32.mrb[0].mxu0
    %v3537 = vadd.f32 %v3407, %v3536
    %v3538 = vpop.f32.mrb[0].mxu0
    %v3539 = vadd.f32 %v3407, %v3538
    %3540 = vdwg.mxu0
    %v3541 = vadd.f32 %v3447, %v2999
    %v3542 = vadd.f32 %v3449, %v3000
    %v3543 = vadd.f32 %v3490, %v3001
    %v3544 = vadd.f32 %v3492, %v3002
    %v3545 = vadd.f32 %v3533, %v3003
    %v3546 = vadd.f32 %v3535, %v3004
    %v3547 = vadd.f32 %v3451, %v3005
    %v3548 = vadd.f32 %v3453, %v3006
    %v3549 = vadd.f32 %v3494, %v3007
    %v3550 = vadd.f32 %v3496, %v3008
    %v3551 = vadd.f32 %v3537, %v3009
    %v3552 = vadd.f32 %v3539, %v3010
    %v3553 = vmax.f32 %v3541, 0.0
    %v3554 = vmax.f32 %v3542, 0.0
    %v3555 = vmax.f32 %v3543, 0.0
    %v3556 = vmax.f32 %v3544, 0.0
    %v3557 = vmax.f32 %v3545, 0.0
    %v3558 = vmax.f32 %v3546, 0.0
    %v3559 = vmax.f32 %v3547, 0.0
    %v3560 = vmax.f32 %v3548, 0.0
    %v3561 = vmax.f32 %v3549, 0.0
    %v3562 = vmax.f32 %v3550, 0.0
    %v3563 = vmax.f32 %v3551, 0.0
    %v3564 = vmax.f32 %v3552, 0.0
    %3565 = vrot.lane.b32.xlu0 %v3553, 4
    %v3566 = vpop.permute.xlu0 %3565
    %3567 = vrot.lane.b32.xlu0 %v3559, 4
    %v3568 = vpop.permute.xlu0 %3567
    %3569 = vrot.lane.b32.xlu0 %v3554, 4
    %v3570 = vpop.permute.xlu0 %3569
    %3571 = vrot.lane.b32.xlu0 %v3560, 4
    %v3572 = vpop.permute.xlu0 %3571
    %3573 = vrot.lane.b32.xlu0 %v3555, 4
    %v3574 = vpop.permute.xlu0 %3573
    %3575 = vrot.lane.b32.xlu0 %v3561, 4
    %v3576 = vpop.permute.xlu0 %3575
    %3577 = vrot.lane.b32.xlu0 %v3556, 4
    %v3578 = vpop.permute.xlu0 %3577
    %3579 = vrot.lane.b32.xlu0 %v3562, 4
    %v3580 = vpop.permute.xlu0 %3579
    %3581 = vrot.lane.b32.xlu0 %v3557, 4
    %v3582 = vpop.permute.xlu0 %3581
    %3583 = vrot.lane.b32.xlu0 %v3563, 4
    %v3584 = vpop.permute.xlu0 %3583
    %3585 = vrot.lane.b32.xlu0 %v3558, 4
    %v3586 = vpop.permute.xlu0 %3585
    %3587 = vrot.lane.b32.xlu0 %v3564, 4
    %v3588 = vpop.permute.xlu0 %3587
    %v3589 = vsel %vm2687, %v3582, %v3586
    %v3590 = vsel %vm2687, %v3584, %v3588
    %v3591 = vsel %vm2687, %v3578, %v3582
    %v3592 = vsel %vm2687, %v3580, %v3584
    %v3593 = vsel %vm2687, %v3574, %v3578
    %v3594 = vsel %vm2687, %v3576, %v3580
    %v3595 = vsel %vm2687, %v3570, %v3574
    %v3596 = vsel %vm2687, %v3572, %v3576
    %v3597 = vsel %vm2687, %v3566, %v3570
    %v3598 = vsel %vm2687, %v3568, %v3572
    %v3599 = vsel %vm2687, %v3586, %v3566
    %v3600 = vsel %vm2687, %v3588, %v3568
    %v3601 = vmul.f32 %v3599, %v2704
    %v3602 = vmul.f32 %v3597, %v2708
    %v3603 = vmul.f32 %v3595, %v2712
    %v3604 = vmul.f32 %v3593, %v2716
    %v3605 = vmul.f32 %v3591, %v2720
    %v3606 = vmul.f32 %v3589, %v2724
    %v3607 = vmul.f32 %v3600, %v2704
    %v3608 = vmul.f32 %v3598, %v2708
    %v3609 = vmul.f32 %v3596, %v2712
    %v3610 = vmul.f32 %v3594, %v2716
    %v3611 = vmul.f32 %v3592, %v2720
    %v3612 = vmul.f32 %v3590, %v2724
    %3613 = vrot.lane.b32.xlu0 %v3553, 124
    %v3614 = vpop.permute.xlu0 %3613
    %3615 = vrot.lane.b32.xlu0 %v3559, 124
    %v3616 = vpop.permute.xlu0 %3615
    %3617 = vrot.lane.b32.xlu0 %v3554, 124
    %v3618 = vpop.permute.xlu0 %3617
    %3619 = vrot.lane.b32.xlu0 %v3560, 124
    %v3620 = vpop.permute.xlu0 %3619
    %3621 = vrot.lane.b32.xlu0 %v3555, 124
    %v3622 = vpop.permute.xlu0 %3621
    %3623 = vrot.lane.b32.xlu0 %v3561, 124
    %v3624 = vpop.permute.xlu0 %3623
    %3625 = vrot.lane.b32.xlu0 %v3556, 124
    %v3626 = vpop.permute.xlu0 %3625
    %3627 = vrot.lane.b32.xlu0 %v3562, 124
    %v3628 = vpop.permute.xlu0 %3627
    %3629 = vrot.lane.b32.xlu0 %v3557, 124
    %v3630 = vpop.permute.xlu0 %3629
    %3631 = vrot.lane.b32.xlu0 %v3563, 124
    %v3632 = vpop.permute.xlu0 %3631
    %3633 = vrot.lane.b32.xlu0 %v3558, 124
    %v3634 = vpop.permute.xlu0 %3633
    %3635 = vrot.lane.b32.xlu0 %v3564, 124
    %v3636 = vpop.permute.xlu0 %3635
    %v3637 = vsel %vm2767, %v3630, %v3634
    %v3638 = vsel %vm2767, %v3632, %v3636
    %v3639 = vsel %vm2767, %v3626, %v3630
    %v3640 = vsel %vm2767, %v3628, %v3632
    %v3641 = vsel %vm2767, %v3622, %v3626
    %v3642 = vsel %vm2767, %v3624, %v3628
    %v3643 = vsel %vm2767, %v3618, %v3622
    %v3644 = vsel %vm2767, %v3620, %v3624
    %v3645 = vsel %vm2767, %v3614, %v3618
    %v3646 = vsel %vm2767, %v3616, %v3620
    %v3647 = vsel %vm2767, %v3634, %v3614
    %v3648 = vsel %vm2767, %v3636, %v3616
    %v3649 = vmul.f32 %v3645, %v2784
    %v3650 = vmul.f32 %v3643, %v2788
    %v3651 = vmul.f32 %v3641, %v2792
    %v3652 = vmul.f32 %v3639, %v2796
    %v3653 = vmul.f32 %v3637, %v2800
    %v3654 = vmul.f32 %v3647, %v2804
    %v3655 = vmul.f32 %v3646, %v2784
    %v3656 = vmul.f32 %v3644, %v2788
    %v3657 = vmul.f32 %v3642, %v2792
    %v3658 = vmul.f32 %v3640, %v2796
    %v3659 = vmul.f32 %v3638, %v2800
    %v3660 = vmul.f32 %v3648, %v2804
    %v3661 = vld [vmem:[#allocation7 + $0xa0] sm:$0xff]
    %v3662 = vld [vmem:[#allocation7 + $0xa8] sm:$0xff]
    %v3663 = vld [vmem:[#allocation7 + $0xb0] sm:$0xff]
    %v3664 = vld [vmem:[#allocation7 + $0xb8] sm:$0xff]
    %v3665 = vld [vmem:[#allocation7 + $0xc0] sm:$0xff]
    %v3666 = vld [vmem:[#allocation7 + $0xc8] sm:$0xff]
    %v3667 = vld [vmem:[#allocation7 + $0xd0] sm:$0xff]
    %v3668 = vld [vmem:[#allocation7 + $0xd8] sm:$0xff]
    %v3669 = vpack.c.bf16 %v3662, %v3661
    %v3670 = vpack.c.bf16 %v3664, %v3663
    %v3671 = vpack.c.bf16 %v3666, %v3665
    %v3672 = vpack.c.bf16 %v3668, %v3667
    %v3673 = vpack.c.bf16 %v3607, %v3601
    %v3674 = vpack.c.bf16 %v3608, %v3602
    %v3675 = vpack.c.bf16 %v3609, %v3603
    %v3676 = vpack.c.bf16 %v3610, %v3604
    %v3677 = vpack.c.bf16 %v3611, %v3605
    %v3678 = vpack.c.bf16 %v3612, %v3606
    %v3679 = vpack.c.bf16 %v3559, %v3553
    %v3680 = vpack.c.bf16 %v3560, %v3554
    %v3681 = vpack.c.bf16 %v3561, %v3555
    %v3682 = vpack.c.bf16 %v3562, %v3556
    %v3683 = vpack.c.bf16 %v3563, %v3557
    %v3684 = vpack.c.bf16 %v3564, %v3558
    %v3685 = vpack.c.bf16 %v3655, %v3649
    %v3686 = vpack.c.bf16 %v3656, %v3650
    %v3687 = vpack.c.bf16 %v3657, %v3651
    %v3688 = vpack.c.bf16 %v3658, %v3652
    %v3689 = vpack.c.bf16 %v3659, %v3653
    %v3690 = vpack.c.bf16 %v3660, %v3654
    %3692 = vset.pattern.permute.xlu0 48
    %3693 = vperm.xlu0 %3692, %v3661
    %v3694 = vpop.permute.xlu0 %3693
    %3697 = vset.pattern.permute.xlu0 48
    %3698 = vperm.xlu0 %3697, %v3662
    %v3699 = vpop.permute.xlu0 %3698
    %3702 = vset.pattern.permute.xlu0 48
    %3703 = vperm.xlu0 %3702, %v3663
    %v3704 = vpop.permute.xlu0 %3703
    %3707 = vset.pattern.permute.xlu0 48
    %3708 = vperm.xlu0 %3707, %v3664
    %v3709 = vpop.permute.xlu0 %3708
    %3712 = vset.pattern.permute.xlu0 48
    %3713 = vperm.xlu0 %3712, %v3665
    %v3714 = vpop.permute.xlu0 %3713
    %3717 = vset.pattern.permute.xlu0 48
    %3718 = vperm.xlu0 %3717, %v3666
    %v3719 = vpop.permute.xlu0 %3718
    %3722 = vset.pattern.permute.xlu0 48
    %3723 = vperm.xlu0 %3722, %v3667
    %v3724 = vpop.permute.xlu0 %3723
    %3727 = vset.pattern.permute.xlu0 48
    %3728 = vperm.xlu0 %3727, %v3668
    %v3729 = vpop.permute.xlu0 %3728
    %v3732 = vsel %vm2854, %v3669, 0
    %v3735 = vsel %vm2854, %v3670, 0
    %v3738 = vsel %vm2854, %v3671, 0
    %v3741 = vsel %vm2854, %v3672, 0
    %3743 = vmatprep.subr.bf16.mxu0 %v3674
    %3744 = vmatpush1.bf16.msra.mxu0 %v3673
    %3745 = vmatprep.subr.bf16.mxu0 %v3680
    %3746 = vmatpush1.bf16.msra.mxu0 %v3679
    %3747 = vmatprep.subr.bf16.mxu0 %v3686
    %3748 = vmatpush1.bf16.msra.mxu0 %v3685
    %3749 = vmatprep.subr.bf16.mxu0 0
    %3750 = vmatpush1.bf16.msra.mxu0 0
    %3751 = vmatprep.subr.bf16.mxu0 0
    %3752 = vmatpush1.bf16.msra.mxu0 0
    %3753 = vmatprep.subr.bf16.mxu0 0
    %3754 = vmatpush1.bf16.msra.mxu0 0
    %3755 = vmatprep.subr.bf16.mxu0 0
    %3756 = vmatpush1.bf16.msra.mxu0 0
    %3757 = vmatprep.subr.bf16.mxu0 0
    %3758 = vmatpush1.bf16.msra.mxu0 0
    %3759 = vmatprep.subr.bf16.mxu0 0
    %3760 = vmatpush1.bf16.msra.mxu0 0
    %3761 = vmatprep.subr.bf16.mxu0 0
    %3762 = vmatpush1.bf16.msra.mxu0 0
    %3763 = vmatprep.subr.bf16.mxu0 0
    %3764 = vmatpush1.bf16.msra.mxu0 0
    %3765 = vmatprep.subr.bf16.mxu0 0
    %3766 = vmatpush1.bf16.msra.mxu0 0
    %3767 = vmatprep.subr.bf16.mxu0 0
    %3768 = vmatpush1.bf16.msra.mxu0 0
    %3769 = vmatprep.subr.bf16.mxu0 0
    %3770 = vmatpush1.bf16.msra.mxu0 0
    %3771 = vmatprep.subr.bf16.mxu0 0
    %3772 = vmatpush1.bf16.msra.mxu0 0
    %3773 = vmatprep.subr.bf16.mxu0 0
    %3774 = vmatpush1.bf16.msra.mxu0 0
    %3775 = vmatprep.mubr.bf16.mxu0 0
    %3776 = vmatmul.mubr.bf16.gmra.mrb[0].mxu0 %v3732
    %v3777 = vpop.f32.mrb[0].mxu0
    %v3778 = vadd.f32 %v3694, %v3777
    %v3779 = vpop.f32.mrb[0].mxu0
    %v3780 = vadd.f32 %v3694, %v3779
    %v3781 = vpop.f32.mrb[0].mxu0
    %v3782 = vadd.f32 %v3699, %v3781
    %v3783 = vpop.f32.mrb[0].mxu0
    %v3784 = vadd.f32 %v3699, %v3783
    %3785 = vmatprep.mubr.bf16.mxu0 0
    %3786 = vmatmul.mubr.bf16.gmra.mrb[0].mxu0 %v3735
    %v3787 = vpop.f32.mrb[0].mxu0
    %v3788 = vadd.f32 %v3704, %v3787
    %v3789 = vpop.f32.mrb[0].mxu0
    %v3790 = vadd.f32 %v3704, %v3789
    %v3791 = vpop.f32.mrb[0].mxu0
    %v3792 = vadd.f32 %v3709, %v3791
    %v3793 = vpop.f32.mrb[0].mxu0
    %v3794 = vadd.f32 %v3709, %v3793
    %3795 = vmatprep.mubr.bf16.mxu0 0
    %3796 = vmatmul.mubr.bf16.gmra.mrb[0].mxu0 %v3738
    %v3797 = vpop.f32.mrb[0].mxu0
    %v3798 = vadd.f32 %v3714, %v3797
    %v3799 = vpop.f32.mrb[0].mxu0
    %v3800 = vadd.f32 %v3714, %v3799
    %v3801 = vpop.f32.mrb[0].mxu0
    %v3802 = vadd.f32 %v3719, %v3801
    %v3803 = vpop.f32.mrb[0].mxu0
    %v3804 = vadd.f32 %v3719, %v3803
    %3805 = vmatprep.mubr.bf16.mxu0 0
    %3806 = vmatmul.mubr.bf16.gmra.mrb[0].mxu0 %v3741
    %v3807 = vpop.f32.mrb[0].mxu0
    %v3808 = vadd.f32 %v3724, %v3807
    %v3809 = vpop.f32.mrb[0].mxu0
    %v3810 = vadd.f32 %v3724, %v3809
    %v3811 = vpop.f32.mrb[0].mxu0
    %v3812 = vadd.f32 %v3729, %v3811
    %v3813 = vpop.f32.mrb[0].mxu0
    %v3814 = vadd.f32 %v3729, %v3813
    %3815 = vdwg.mxu0
    %3816 = vmatprep.subr.bf16.mxu0 %v3676
    %3817 = vmatpush1.bf16.msra.mxu0 %v3675
    %3818 = vmatprep.subr.bf16.mxu0 %v3682
    %3819 = vmatpush1.bf16.msra.mxu0 %v3681
    %3820 = vmatprep.subr.bf16.mxu0 %v3688
    %3821 = vmatpush1.bf16.msra.mxu0 %v3687
    %3822 = vmatprep.subr.bf16.mxu0 0
    %3823 = vmatpush1.bf16.msra.mxu0 0
    %3824 = vmatprep.subr.bf16.mxu0 0
    %3825 = vmatpush1.bf16.msra.mxu0 0
    %3826 = vmatprep.subr.bf16.mxu0 0
    %3827 = vmatpush1.bf16.msra.mxu0 0
    %3828 = vmatprep.subr.bf16.mxu0 0
    %3829 = vmatpush1.bf16.msra.mxu0 0
    %3830 = vmatprep.subr.bf16.mxu0 0
    %3831 = vmatpush1.bf16.msra.mxu0 0
    %3832 = vmatprep.subr.bf16.mxu0 0
    %3833 = vmatpush1.bf16.msra.mxu0 0
    %3834 = vmatprep.subr.bf16.mxu0 0
    %3835 = vmatpush1.bf16.msra.mxu0 0
    %3836 = vmatprep.subr.bf16.mxu0 0
    %3837 = vmatpush1.bf16.msra.mxu0 0
    %3838 = vmatprep.subr.bf16.mxu0 0
    %3839 = vmatpush1.bf16.msra.mxu0 0
    %3840 = vmatprep.subr.bf16.mxu0 0
    %3841 = vmatpush1.bf16.msra.mxu0 0
    %3842 = vmatprep.subr.bf16.mxu0 0
    %3843 = vmatpush1.bf16.msra.mxu0 0
    %3844 = vmatprep.subr.bf16.mxu0 0
    %3845 = vmatpush1.bf16.msra.mxu0 0
    %3846 = vmatprep.subr.bf16.mxu0 0
    %3847 = vmatpush1.bf16.msra.mxu0 0
    %3848 = vmatprep.mubr.bf16.mxu0 0
    %3849 = vmatmul.mubr.bf16.gmra.mrb[0].mxu0 %v3732
    %v3850 = vpop.f32.mrb[0].mxu0
    %v3851 = vadd.f32 %v3694, %v3850
    %v3852 = vpop.f32.mrb[0].mxu0
    %v3853 = vadd.f32 %v3694, %v3852
    %v3854 = vpop.f32.mrb[0].mxu0
    %v3855 = vadd.f32 %v3699, %v3854
    %v3856 = vpop.f32.mrb[0].mxu0
    %v3857 = vadd.f32 %v3699, %v3856
    %3858 = vmatprep.mubr.bf16.mxu0 0
    %3859 = vmatmul.mubr.bf16.gmra.mrb[0].mxu0 %v3735
    %v3860 = vpop.f32.mrb[0].mxu0
    %v3861 = vadd.f32 %v3704, %v3860
    %v3862 = vpop.f32.mrb[0].mxu0
    %v3863 = vadd.f32 %v3704, %v3862
    %v3864 = vpop.f32.mrb[0].mxu0
    %v3865 = vadd.f32 %v3709, %v3864
    %v3866 = vpop.f32.mrb[0].mxu0
    %v3867 = vadd.f32 %v3709, %v3866
    %3868 = vmatprep.mubr.bf16.mxu0 0
    %3869 = vmatmul.mubr.bf16.gmra.mrb[0].mxu0 %v3738
    %v3870 = vpop.f32.mrb[0].mxu0
    %v3871 = vadd.f32 %v3714, %v3870
    %v3872 = vpop.f32.mrb[0].mxu0
    %v3873 = vadd.f32 %v3714, %v3872
    %v3874 = vpop.f32.mrb[0].mxu0
    %v3875 = vadd.f32 %v3719, %v3874
    %v3876 = vpop.f32.mrb[0].mxu0
    %v3877 = vadd.f32 %v3719, %v3876
    %3878 = vmatprep.mubr.bf16.mxu0 0
    %3879 = vmatmul.mubr.bf16.gmra.mrb[0].mxu0 %v3741
    %v3880 = vpop.f32.mrb[0].mxu0
    %v3881 = vadd.f32 %v3724, %v3880
    %v3882 = vpop.f32.mrb[0].mxu0
    %v3883 = vadd.f32 %v3724, %v3882
    %v3884 = vpop.f32.mrb[0].mxu0
    %v3885 = vadd.f32 %v3729, %v3884
    %v3886 = vpop.f32.mrb[0].mxu0
    %v3887 = vadd.f32 %v3729, %v3886
    %3888 = vdwg.mxu0
    %3889 = vmatprep.subr.bf16.mxu0 %v3678
    %3890 = vmatpush1.bf16.msra.mxu0 %v3677
    %3891 = vmatprep.subr.bf16.mxu0 %v3684
    %3892 = vmatpush1.bf16.msra.mxu0 %v3683
    %3893 = vmatprep.subr.bf16.mxu0 %v3690
    %3894 = vmatpush1.bf16.msra.mxu0 %v3689
    %3895 = vmatprep.subr.bf16.mxu0 0
    %3896 = vmatpush1.bf16.msra.mxu0 0
    %3897 = vmatprep.subr.bf16.mxu0 0
    %3898 = vmatpush1.bf16.msra.mxu0 0
    %3899 = vmatprep.subr.bf16.mxu0 0
    %3900 = vmatpush1.bf16.msra.mxu0 0
    %3901 = vmatprep.subr.bf16.mxu0 0
    %3902 = vmatpush1.bf16.msra.mxu0 0
    %3903 = vmatprep.subr.bf16.mxu0 0
    %3904 = vmatpush1.bf16.msra.mxu0 0
    %3905 = vmatprep.subr.bf16.mxu0 0
    %3906 = vmatpush1.bf16.msra.mxu0 0
    %3907 = vmatprep.subr.bf16.mxu0 0
    %3908 = vmatpush1.bf16.msra.mxu0 0
    %3909 = vmatprep.subr.bf16.mxu0 0
    %3910 = vmatpush1.bf16.msra.mxu0 0
    %3911 = vmatprep.subr.bf16.mxu0 0
    %3912 = vmatpush1.bf16.msra.mxu0 0
    %3913 = vmatprep.subr.bf16.mxu0 0
    %3914 = vmatpush1.bf16.msra.mxu0 0
    %3915 = vmatprep.subr.bf16.mxu0 0
    %3916 = vmatpush1.bf16.msra.mxu0 0
    %3917 = vmatprep.subr.bf16.mxu0 0
    %3918 = vmatpush1.bf16.msra.mxu0 0
    %3919 = vmatprep.subr.bf16.mxu0 0
    %3920 = vmatpush1.bf16.msra.mxu0 0
    %3921 = vmatprep.mubr.bf16.mxu0 0
    %3922 = vmatmul.mubr.bf16.gmra.mrb[0].mxu0 %v3732
    %v3923 = vpop.f32.mrb[0].mxu0
    %v3924 = vadd.f32 %v3694, %v3923
    %v3925 = vpop.f32.mrb[0].mxu0
    %v3926 = vadd.f32 %v3694, %v3925
    %v3927 = vpop.f32.mrb[0].mxu0
    %v3928 = vadd.f32 %v3699, %v3927
    %v3929 = vpop.f32.mrb[0].mxu0
    %v3930 = vadd.f32 %v3699, %v3929
    %3931 = vmatprep.mubr.bf16.mxu0 0
    %3932 = vmatmul.mubr.bf16.gmra.mrb[0].mxu0 %v3735
    %v3933 = vpop.f32.mrb[0].mxu0
    %v3934 = vadd.f32 %v3704, %v3933
    %v3935 = vpop.f32.mrb[0].mxu0
    %v3936 = vadd.f32 %v3704, %v3935
    %v3937 = vpop.f32.mrb[0].mxu0
    %v3938 = vadd.f32 %v3709, %v3937
    %v3939 = vpop.f32.mrb[0].mxu0
    %v3940 = vadd.f32 %v3709, %v3939
    %3941 = vmatprep.mubr.bf16.mxu0 0
    %3942 = vmatmul.mubr.bf16.gmra.mrb[0].mxu0 %v3738
    %v3943 = vpop.f32.mrb[0].mxu0
    %v3944 = vadd.f32 %v3714, %v3943
    %v3945 = vpop.f32.mrb[0].mxu0
    %v3946 = vadd.f32 %v3714, %v3945
    %v3947 = vpop.f32.mrb[0].mxu0
    %v3948 = vadd.f32 %v3719, %v3947
    %v3949 = vpop.f32.mrb[0].mxu0
    %v3950 = vadd.f32 %v3719, %v3949
    %3951 = vmatprep.mubr.bf16.mxu0 0
    %3952 = vmatmul.mubr.bf16.gmra.mrb[0].mxu0 %v3741
    %v3953 = vpop.f32.mrb[0].mxu0
    %v3954 = vadd.f32 %v3724, %v3953
    %v3955 = vpop.f32.mrb[0].mxu0
    %v3956 = vadd.f32 %v3724, %v3955
    %v3957 = vpop.f32.mrb[0].mxu0
    %v3958 = vadd.f32 %v3729, %v3957
    %v3959 = vpop.f32.mrb[0].mxu0
    %v3960 = vadd.f32 %v3729, %v3959
    %3961 = vdwg.mxu0
    %v3962 = vmax.f32 %v3778, 0.0
    %v3963 = vmax.f32 %v3780, 0.0
    %v3964 = vmax.f32 %v3851, 0.0
    %v3965 = vmax.f32 %v3853, 0.0
    %v3966 = vmax.f32 %v3924, 0.0
    %v3967 = vmax.f32 %v3926, 0.0
    %v3968 = vmax.f32 %v3782, 0.0
    %v3969 = vmax.f32 %v3784, 0.0
    %v3970 = vmax.f32 %v3855, 0.0
    %v3971 = vmax.f32 %v3857, 0.0
    %v3972 = vmax.f32 %v3928, 0.0
    %v3973 = vmax.f32 %v3930, 0.0
    %v3974 = vmax.f32 %v3788, 0.0
    %v3975 = vmax.f32 %v3790, 0.0
    %v3976 = vmax.f32 %v3861, 0.0
    %v3977 = vmax.f32 %v3863, 0.0
    %v3978 = vmax.f32 %v3934, 0.0
    %v3979 = vmax.f32 %v3936, 0.0
    %v3980 = vmax.f32 %v3792, 0.0
    %v3981 = vmax.f32 %v3794, 0.0
    %v3982 = vmax.f32 %v3865, 0.0
    %v3983 = vmax.f32 %v3867, 0.0
    %v3984 = vmax.f32 %v3938, 0.0
    %v3985 = vmax.f32 %v3940, 0.0
    %3986 = vrot.lane.b32.xlu0 %v3962, 8
    %v3987 = vpop.permute.xlu0 %3986
    %3988 = vrot.lane.b32.xlu0 %v3968, 8
    %v3989 = vpop.permute.xlu0 %3988
    %3990 = vrot.lane.b32.xlu0 %v3974, 8
    %v3991 = vpop.permute.xlu0 %3990
    %3992 = vrot.lane.b32.xlu0 %v3980, 8
    %v3993 = vpop.permute.xlu0 %3992
    %3994 = vrot.lane.b32.xlu0 %v3963, 8
    %v3995 = vpop.permute.xlu0 %3994
    %3996 = vrot.lane.b32.xlu0 %v3969, 8
    %v3997 = vpop.permute.xlu0 %3996
    %3998 = vrot.lane.b32.xlu0 %v3975, 8
    %v3999 = vpop.permute.xlu0 %3998
    %4000 = vrot.lane.b32.xlu0 %v3981, 8
    %v4001 = vpop.permute.xlu0 %4000
    %4002 = vrot.lane.b32.xlu0 %v3964, 8
    %v4003 = vpop.permute.xlu0 %4002
    %4004 = vrot.lane.b32.xlu0 %v3970, 8
    %v4005 = vpop.permute.xlu0 %4004
    %4006 = vrot.lane.b32.xlu0 %v3976, 8
    %v4007 = vpop.permute.xlu0 %4006
    %4008 = vrot.lane.b32.xlu0 %v3982, 8
    %v4009 = vpop.permute.xlu0 %4008
    %4010 = vrot.lane.b32.xlu0 %v3965, 8
    %v4011 = vpop.permute.xlu0 %4010
    %4012 = vrot.lane.b32.xlu0 %v3971, 8
    %v4013 = vpop.permute.xlu0 %4012
    %4014 = vrot.lane.b32.xlu0 %v3977, 8
    %v4015 = vpop.permute.xlu0 %4014
    %4016 = vrot.lane.b32.xlu0 %v3983, 8
    %v4017 = vpop.permute.xlu0 %4016
    %4018 = vrot.lane.b32.xlu0 %v3966, 8
    %v4019 = vpop.permute.xlu0 %4018
    %4020 = vrot.lane.b32.xlu0 %v3972, 8
    %v4021 = vpop.permute.xlu0 %4020
    %4022 = vrot.lane.b32.xlu0 %v3978, 8
    %v4023 = vpop.permute.xlu0 %4022
    %4024 = vrot.lane.b32.xlu0 %v3984, 8
    %v4025 = vpop.permute.xlu0 %4024
    %4026 = vrot.lane.b32.xlu0 %v3967, 8
    %v4027 = vpop.permute.xlu0 %4026
    %4028 = vrot.lane.b32.xlu0 %v3973, 8
    %v4029 = vpop.permute.xlu0 %4028
    %4030 = vrot.lane.b32.xlu0 %v3979, 8
    %v4031 = vpop.permute.xlu0 %4030
    %4032 = vrot.lane.b32.xlu0 %v3985, 8
    %v4033 = vpop.permute.xlu0 %4032
    %vm4034 = vcmp.lt.s32.totalorder %v153, 8
    %v4035 = vsel %vm4034, %v4019, %v4027
    %v4036 = vsel %vm4034, %v4021, %v4029
    %v4037 = vsel %vm4034, %v4023, %v4031
    %v4038 = vsel %vm4034, %v4025, %v4033
    %v4039 = vsel %vm4034, %v4011, %v4019
    %v4040 = vsel %vm4034, %v4013, %v4021
    %v4041 = vsel %vm4034, %v4015, %v4023
    %v4042 = vsel %vm4034, %v4017, %v4025
    %v4043 = vsel %vm4034, %v4003, %v4011
    %v4044 = vsel %vm4034, %v4005, %v4013
    %v4045 = vsel %vm4034, %v4007, %v4015
    %v4046 = vsel %vm4034, %v4009, %v4017
    %v4047 = vsel %vm4034, %v3995, %v4003
    %v4048 = vsel %vm4034, %v3997, %v4005
    %v4049 = vsel %vm4034, %v3999, %v4007
    %v4050 = vsel %vm4034, %v4001, %v4009
    %v4051 = vsel %vm4034, %v3987, %v3995
    %v4052 = vsel %vm4034, %v3989, %v3997
    %v4053 = vsel %vm4034, %v3991, %v3999
    %v4054 = vsel %vm4034, %v3993, %v4001
    %v4055 = vsel %vm4034, %v4027, %v3987
    %v4056 = vsel %vm4034, %v4029, %v3989
    %v4057 = vsel %vm4034, %v4031, %v3991
    %v4058 = vsel %vm4034, %v4033, %v3993
    %v4060 = vlaneseq
    %v4061 = vshrl.u32 %v4060, 7
    %v4062 = vsub.s32 0, %v4061
    %v4063 = vrot.slane %v103, %v4062
    %v4064 = vlaneseq
    %v4065 = vshrl.u32 %v4064, 7
    %v4066 = vsub.s32 1, %v4065
    %v4067 = vrot.slane %v103, %v4066
    %v4068 = vlaneseq
    %v4069 = vshrl.u32 %v4068, 7
    %v4070 = vsub.s32 2, %v4069
    %v4071 = vrot.slane %v103, %v4070
    %v4072 = vlaneseq
    %v4073 = vshrl.u32 %v4072, 7
    %v4074 = vsub.s32 3, %v4073
    %v4075 = vrot.slane %v103, %v4074
    %v4076 = vlaneseq
    %v4077 = vshrl.u32 %v4076, 7
    %v4078 = vsub.s32 4, %v4077
    %v4079 = vrot.slane %v103, %v4078
    %v4080 = vlaneseq
    %v4081 = vshrl.u32 %v4080, 7
    %v4082 = vsub.s32 5, %v4081
    %v4083 = vrot.slane %v103, %v4082
    %v4090 = vmul.f32 %v4055, %v4063
    %v4091 = vmul.f32 %v4051, %v4067
    %v4092 = vmul.f32 %v4047, %v4071
    %v4093 = vmul.f32 %v4043, %v4075
    %v4094 = vmul.f32 %v4039, %v4079
    %v4095 = vmul.f32 %v4035, %v4083
    %v4096 = vmul.f32 %v4056, %v4063
    %v4097 = vmul.f32 %v4052, %v4067
    %v4098 = vmul.f32 %v4048, %v4071
    %v4099 = vmul.f32 %v4044, %v4075
    %v4100 = vmul.f32 %v4040, %v4079
    %v4101 = vmul.f32 %v4036, %v4083
    %v4102 = vmul.f32 %v4057, %v4063
    %v4103 = vmul.f32 %v4053, %v4067
    %v4104 = vmul.f32 %v4049, %v4071
    %v4105 = vmul.f32 %v4045, %v4075
    %v4106 = vmul.f32 %v4041, %v4079
    %v4107 = vmul.f32 %v4037, %v4083
    %v4108 = vmul.f32 %v4058, %v4063
    %v4109 = vmul.f32 %v4054, %v4067
    %v4110 = vmul.f32 %v4050, %v4071
    %v4111 = vmul.f32 %v4046, %v4075
    %v4112 = vmul.f32 %v4042, %v4079
    %v4113 = vmul.f32 %v4038, %v4083
    %4114 = vrot.lane.b32.xlu0 %v3962, 120
    %v4115 = vpop.permute.xlu0 %4114
    %4116 = vrot.lane.b32.xlu0 %v3968, 120
    %v4117 = vpop.permute.xlu0 %4116
    %4118 = vrot.lane.b32.xlu0 %v3974, 120
    %v4119 = vpop.permute.xlu0 %4118
    %4120 = vrot.lane.b32.xlu0 %v3980, 120
    %v4121 = vpop.permute.xlu0 %4120
    %4122 = vrot.lane.b32.xlu0 %v3963, 120
    %v4123 = vpop.permute.xlu0 %4122
    %4124 = vrot.lane.b32.xlu0 %v3969, 120
    %v4125 = vpop.permute.xlu0 %4124
    %4126 = vrot.lane.b32.xlu0 %v3975, 120
    %v4127 = vpop.permute.xlu0 %4126
    %4128 = vrot.lane.b32.xlu0 %v3981, 120
    %v4129 = vpop.permute.xlu0 %4128
    %4130 = vrot.lane.b32.xlu0 %v3964, 120
    %v4131 = vpop.permute.xlu0 %4130
    %4132 = vrot.lane.b32.xlu0 %v3970, 120
    %v4133 = vpop.permute.xlu0 %4132
    %4134 = vrot.lane.b32.xlu0 %v3976, 120
    %v4135 = vpop.permute.xlu0 %4134
    %4136 = vrot.lane.b32.xlu0 %v3982, 120
    %v4137 = vpop.permute.xlu0 %4136
    %4138 = vrot.lane.b32.xlu0 %v3965, 120
    %v4139 = vpop.permute.xlu0 %4138
    %4140 = vrot.lane.b32.xlu0 %v3971, 120
    %v4141 = vpop.permute.xlu0 %4140
    %4142 = vrot.lane.b32.xlu0 %v3977, 120
    %v4143 = vpop.permute.xlu0 %4142
    %4144 = vrot.lane.b32.xlu0 %v3983, 120
    %v4145 = vpop.permute.xlu0 %4144
    %4146 = vrot.lane.b32.xlu0 %v3966, 120
    %v4147 = vpop.permute.xlu0 %4146
    %4148 = vrot.lane.b32.xlu0 %v3972, 120
    %v4149 = vpop.permute.xlu0 %4148
    %4150 = vrot.lane.b32.xlu0 %v3978, 120
    %v4151 = vpop.permute.xlu0 %4150
    %4152 = vrot.lane.b32.xlu0 %v3984, 120
    %v4153 = vpop.permute.xlu0 %4152
    %4154 = vrot.lane.b32.xlu0 %v3967, 120
    %v4155 = vpop.permute.xlu0 %4154
    %4156 = vrot.lane.b32.xlu0 %v3973, 120
    %v4157 = vpop.permute.xlu0 %4156
    %4158 = vrot.lane.b32.xlu0 %v3979, 120
    %v4159 = vpop.permute.xlu0 %4158
    %4160 = vrot.lane.b32.xlu0 %v3985, 120
    %v4161 = vpop.permute.xlu0 %4160
    %vm4162 = vcmp.lt.s32.totalorder %v153, 120
    %v4163 = vsel %vm4162, %v4147, %v4155
    %v4164 = vsel %vm4162, %v4149, %v4157
    %v4165 = vsel %vm4162, %v4151, %v4159
    %v4166 = vsel %vm4162, %v4153, %v4161
    %v4167 = vsel %vm4162, %v4139, %v4147
    %v4168 = vsel %vm4162, %v4141, %v4149
    %v4169 = vsel %vm4162, %v4143, %v4151
    %v4170 = vsel %vm4162, %v4145, %v4153
    %v4171 = vsel %vm4162, %v4131, %v4139
    %v4172 = vsel %vm4162, %v4133, %v4141
    %v4173 = vsel %vm4162, %v4135, %v4143
    %v4174 = vsel %vm4162, %v4137, %v4145
    %v4175 = vsel %vm4162, %v4123, %v4131
    %v4176 = vsel %vm4162, %v4125, %v4133
    %v4177 = vsel %vm4162, %v4127, %v4135
    %v4178 = vsel %vm4162, %v4129, %v4137
    %v4179 = vsel %vm4162, %v4115, %v4123
    %v4180 = vsel %vm4162, %v4117, %v4125
    %v4181 = vsel %vm4162, %v4119, %v4127
    %v4182 = vsel %vm4162, %v4121, %v4129
    %v4183 = vsel %vm4162, %v4155, %v4115
    %v4184 = vsel %vm4162, %v4157, %v4117
    %v4185 = vsel %vm4162, %v4159, %v4119
    %v4186 = vsel %vm4162, %v4161, %v4121
    %v4188 = vlaneseq
    %v4189 = vshrl.u32 %v4188, 7
    %v4190 = vsub.s32 0, %v4189
    %v4191 = vrot.slane %v107, %v4190
    %v4192 = vlaneseq
    %v4193 = vshrl.u32 %v4192, 7
    %v4194 = vsub.s32 1, %v4193
    %v4195 = vrot.slane %v107, %v4194
    %v4196 = vlaneseq
    %v4197 = vshrl.u32 %v4196, 7
    %v4198 = vsub.s32 2, %v4197
    %v4199 = vrot.slane %v107, %v4198
    %v4200 = vlaneseq
    %v4201 = vshrl.u32 %v4200, 7
    %v4202 = vsub.s32 3, %v4201
    %v4203 = vrot.slane %v107, %v4202
    %v4204 = vlaneseq
    %v4205 = vshrl.u32 %v4204, 7
    %v4206 = vsub.s32 4, %v4205
    %v4207 = vrot.slane %v107, %v4206
    %v4208 = vlaneseq
    %v4209 = vshrl.u32 %v4208, 7
    %v4210 = vsub.s32 5, %v4209
    %v4211 = vrot.slane %v107, %v4210
    %v4218 = vmul.f32 %v4179, %v4191
    %v4219 = vmul.f32 %v4175, %v4195
    %v4220 = vmul.f32 %v4171, %v4199
    %v4221 = vmul.f32 %v4167, %v4203
    %v4222 = vmul.f32 %v4163, %v4207
    %v4223 = vmul.f32 %v4183, %v4211
    %v4224 = vmul.f32 %v4180, %v4191
    %v4225 = vmul.f32 %v4176, %v4195
    %v4226 = vmul.f32 %v4172, %v4199
    %v4227 = vmul.f32 %v4168, %v4203
    %v4228 = vmul.f32 %v4164, %v4207
    %v4229 = vmul.f32 %v4184, %v4211
    %v4230 = vmul.f32 %v4181, %v4191
    %v4231 = vmul.f32 %v4177, %v4195
    %v4232 = vmul.f32 %v4173, %v4199
    %v4233 = vmul.f32 %v4169, %v4203
    %v4234 = vmul.f32 %v4165, %v4207
    %v4235 = vmul.f32 %v4185, %v4211
    %v4236 = vmul.f32 %v4182, %v4191
    %v4237 = vmul.f32 %v4178, %v4195
    %v4238 = vmul.f32 %v4174, %v4199
    %v4239 = vmul.f32 %v4170, %v4203
    %v4240 = vmul.f32 %v4166, %v4207
    %v4241 = vmul.f32 %v4186, %v4211
    %v4242 = vld [vmem:[#allocation7 + $0xe0] sm:$0xff]
    %v4243 = vld [vmem:[#allocation7 + $0xe8] sm:$0xff]
    %v4244 = vld [vmem:[#allocation7 + $0xf0] sm:$0xff]
    %v4245 = vld [vmem:[#allocation7 + $0xf8] sm:$0xff]
    %v4246 = vpack.c.bf16 %v4243, %v4242
    %v4247 = vpack.c.bf16 %v4245, %v4244
    %v4248 = vpack.c.bf16 %v4096, %v4090
    %v4249 = vpack.c.bf16 %v4097, %v4091
    %v4250 = vpack.c.bf16 %v4098, %v4092
    %v4251 = vpack.c.bf16 %v4099, %v4093
    %v4252 = vpack.c.bf16 %v4100, %v4094
    %v4253 = vpack.c.bf16 %v4101, %v4095
    %v4254 = vpack.c.bf16 %v4108, %v4102
    %v4255 = vpack.c.bf16 %v4109, %v4103
    %v4256 = vpack.c.bf16 %v4110, %v4104
    %v4257 = vpack.c.bf16 %v4111, %v4105
    %v4258 = vpack.c.bf16 %v4112, %v4106
    %v4259 = vpack.c.bf16 %v4113, %v4107
    %v4260 = vpack.c.bf16 %v3968, %v3962
    %v4261 = vpack.c.bf16 %v3969, %v3963
    %v4262 = vpack.c.bf16 %v3970, %v3964
    %v4263 = vpack.c.bf16 %v3971, %v3965
    %v4264 = vpack.c.bf16 %v3972, %v3966
    %v4265 = vpack.c.bf16 %v3973, %v3967
    %v4266 = vpack.c.bf16 %v3980, %v3974
    %v4267 = vpack.c.bf16 %v3981, %v3975
    %v4268 = vpack.c.bf16 %v3982, %v3976
    %v4269 = vpack.c.bf16 %v3983, %v3977
    %v4270 = vpack.c.bf16 %v3984, %v3978
    %v4271 = vpack.c.bf16 %v3985, %v3979
    %v4272 = vpack.c.bf16 %v4224, %v4218
    %v4273 = vpack.c.bf16 %v4225, %v4219
    %v4274 = vpack.c.bf16 %v4226, %v4220
    %v4275 = vpack.c.bf16 %v4227, %v4221
    %v4276 = vpack.c.bf16 %v4228, %v4222
    %v4277 = vpack.c.bf16 %v4229, %v4223
    %v4278 = vpack.c.bf16 %v4236, %v4230
    %v4279 = vpack.c.bf16 %v4237, %v4231
    %v4280 = vpack.c.bf16 %v4238, %v4232
    %v4281 = vpack.c.bf16 %v4239, %v4233
    %v4282 = vpack.c.bf16 %v4240, %v4234
    %v4283 = vpack.c.bf16 %v4241, %v4235
    %4285 = vset.pattern.permute.xlu0 96
    %4286 = vperm.xlu0 %4285, %v4242
    %v4287 = vpop.permute.xlu0 %4286
    %4290 = vset.pattern.permute.xlu0 96
    %4291 = vperm.xlu0 %4290, %v4243
    %v4292 = vpop.permute.xlu0 %4291
    %4295 = vset.pattern.permute.xlu0 96
    %4296 = vperm.xlu0 %4295, %v4244
    %v4297 = vpop.permute.xlu0 %4296
    %4300 = vset.pattern.permute.xlu0 96
    %4301 = vperm.xlu0 %4300, %v4245
    %v4302 = vpop.permute.xlu0 %4301
    %vm4304 = vcmask 785408
    %v4306 = vsel %vm4304, %v4246, 0
    %v4309 = vsel %vm4304, %v4247, 0
    %4311 = vmatprep.subr.bf16.mxu0 %v4249
    %4312 = vmatpush1.bf16.msra.mxu0 %v4248
    %4313 = vmatprep.subr.bf16.mxu0 %v4255
    %4314 = vmatpush1.bf16.msra.mxu0 %v4254
    %4315 = vmatprep.subr.bf16.mxu0 %v4261
    %4316 = vmatpush1.bf16.msra.mxu0 %v4260
    %4317 = vmatprep.subr.bf16.mxu0 %v4267
    %4318 = vmatpush1.bf16.msra.mxu0 %v4266
    %4319 = vmatprep.subr.bf16.mxu0 %v4273
    %4320 = vmatpush1.bf16.msra.mxu0 %v4272
    %4321 = vmatprep.subr.bf16.mxu0 %v4279
    %4322 = vmatpush1.bf16.msra.mxu0 %v4278
    %4323 = vmatprep.subr.bf16.mxu0 0
    %4324 = vmatpush1.bf16.msra.mxu0 0
    %4325 = vmatprep.subr.bf16.mxu0 0
    %4326 = vmatpush1.bf16.msra.mxu0 0
    %4327 = vmatprep.subr.bf16.mxu0 0
    %4328 = vmatpush1.bf16.msra.mxu0 0
    %4329 = vmatprep.subr.bf16.mxu0 0
    %4330 = vmatpush1.bf16.msra.mxu0 0
    %4331 = vmatprep.subr.bf16.mxu0 0
    %4332 = vmatpush1.bf16.msra.mxu0 0
    %4333 = vmatprep.subr.bf16.mxu0 0
    %4334 = vmatpush1.bf16.msra.mxu0 0
    %4335 = vmatprep.subr.bf16.mxu0 0
    %4336 = vmatpush1.bf16.msra.mxu0 0
    %4337 = vmatprep.subr.bf16.mxu0 0
    %4338 = vmatpush1.bf16.msra.mxu0 0
    %4339 = vmatprep.subr.bf16.mxu0 0
    %4340 = vmatpush1.bf16.msra.mxu0 0
    %4341 = vmatprep.subr.bf16.mxu0 0
    %4342 = vmatpush1.bf16.msra.mxu0 0
    %4343 = vmatprep.mubr.bf16.mxu0 0
    %4344 = vmatmul.mubr.bf16.gmra.mrb[0].mxu0 %v4306
    %v4345 = vpop.f32.mrb[0].mxu0
    %v4346 = vadd.f32 %v4287, %v4345
    %v4347 = vpop.f32.mrb[0].mxu0
    %v4348 = vadd.f32 %v4287, %v4347
    %v4349 = vpop.f32.mrb[0].mxu0
    %v4350 = vadd.f32 %v4292, %v4349
    %v4351 = vpop.f32.mrb[0].mxu0
    %v4352 = vadd.f32 %v4292, %v4351
    %4353 = vmatprep.mubr.bf16.mxu0 0
    %4354 = vmatmul.mubr.bf16.gmra.mrb[0].mxu0 %v4309
    %v4355 = vpop.f32.mrb[0].mxu0
    %v4356 = vadd.f32 %v4297, %v4355
    %v4357 = vpop.f32.mrb[0].mxu0
    %v4358 = vadd.f32 %v4297, %v4357
    %v4359 = vpop.f32.mrb[0].mxu0
    %v4360 = vadd.f32 %v4302, %v4359
    %v4361 = vpop.f32.mrb[0].mxu0
    %v4362 = vadd.f32 %v4302, %v4361
    %4363 = vdwg.mxu0
    %4364 = vmatprep.subr.bf16.mxu0 %v4251
    %4365 = vmatpush1.bf16.msra.mxu0 %v4250
    %4366 = vmatprep.subr.bf16.mxu0 %v4257
    %4367 = vmatpush1.bf16.msra.mxu0 %v4256
    %4368 = vmatprep.subr.bf16.mxu0 %v4263
    %4369 = vmatpush1.bf16.msra.mxu0 %v4262
    %4370 = vmatprep.subr.bf16.mxu0 %v4269
    %4371 = vmatpush1.bf16.msra.mxu0 %v4268
    %4372 = vmatprep.subr.bf16.mxu0 %v4275
    %4373 = vmatpush1.bf16.msra.mxu0 %v4274
    %4374 = vmatprep.subr.bf16.mxu0 %v4281
    %4375 = vmatpush1.bf16.msra.mxu0 %v4280
    %4376 = vmatprep.subr.bf16.mxu0 0
    %4377 = vmatpush1.bf16.msra.mxu0 0
    %4378 = vmatprep.subr.bf16.mxu0 0
    %4379 = vmatpush1.bf16.msra.mxu0 0
    %4380 = vmatprep.subr.bf16.mxu0 0
    %4381 = vmatpush1.bf16.msra.mxu0 0
    %4382 = vmatprep.subr.bf16.mxu0 0
    %4383 = vmatpush1.bf16.msra.mxu0 0
    %4384 = vmatprep.subr.bf16.mxu0 0
    %4385 = vmatpush1.bf16.msra.mxu0 0
    %4386 = vmatprep.subr.bf16.mxu0 0
    %4387 = vmatpush1.bf16.msra.mxu0 0
    %4388 = vmatprep.subr.bf16.mxu0 0
    %4389 = vmatpush1.bf16.msra.mxu0 0
    %4390 = vmatprep.subr.bf16.mxu0 0
    %4391 = vmatpush1.bf16.msra.mxu0 0
    %4392 = vmatprep.subr.bf16.mxu0 0
    %4393 = vmatpush1.bf16.msra.mxu0 0
    %4394 = vmatprep.subr.bf16.mxu0 0
    %4395 = vmatpush1.bf16.msra.mxu0 0
    %4396 = vmatprep.mubr.bf16.mxu0 0
    %4397 = vmatmul.mubr.bf16.gmra.mrb[0].mxu0 %v4306
    %v4398 = vpop.f32.mrb[0].mxu0
    %v4399 = vadd.f32 %v4287, %v4398
    %v4400 = vpop.f32.mrb[0].mxu0
    %v4401 = vadd.f32 %v4287, %v4400
    %v4402 = vpop.f32.mrb[0].mxu0
    %v4403 = vadd.f32 %v4292, %v4402
    %v4404 = vpop.f32.mrb[0].mxu0
    %v4405 = vadd.f32 %v4292, %v4404
    %4406 = vmatprep.mubr.bf16.mxu0 0
    %4407 = vmatmul.mubr.bf16.gmra.mrb[0].mxu0 %v4309
    %v4408 = vpop.f32.mrb[0].mxu0
    %v4409 = vadd.f32 %v4297, %v4408
    %v4410 = vpop.f32.mrb[0].mxu0
    %v4411 = vadd.f32 %v4297, %v4410
    %v4412 = vpop.f32.mrb[0].mxu0
    %v4413 = vadd.f32 %v4302, %v4412
    %v4414 = vpop.f32.mrb[0].mxu0
    %v4415 = vadd.f32 %v4302, %v4414
    %4416 = vdwg.mxu0
    %4417 = vmatprep.subr.bf16.mxu0 %v4253
    %4418 = vmatpush1.bf16.msra.mxu0 %v4252
    %4419 = vmatprep.subr.bf16.mxu0 %v4259
    %4420 = vmatpush1.bf16.msra.mxu0 %v4258
    %4421 = vmatprep.subr.bf16.mxu0 %v4265
    %4422 = vmatpush1.bf16.msra.mxu0 %v4264
    %4423 = vmatprep.subr.bf16.mxu0 %v4271
    %4424 = vmatpush1.bf16.msra.mxu0 %v4270
    %4425 = vmatprep.subr.bf16.mxu0 %v4277
    %4426 = vmatpush1.bf16.msra.mxu0 %v4276
    %4427 = vmatprep.subr.bf16.mxu0 %v4283
    %4428 = vmatpush1.bf16.msra.mxu0 %v4282
    %4429 = vmatprep.subr.bf16.mxu0 0
    %4430 = vmatpush1.bf16.msra.mxu0 0
    %4431 = vmatprep.subr.bf16.mxu0 0
    %4432 = vmatpush1.bf16.msra.mxu0 0
    %4433 = vmatprep.subr.bf16.mxu0 0
    %4434 = vmatpush1.bf16.msra.mxu0 0
    %4435 = vmatprep.subr.bf16.mxu0 0
    %4436 = vmatpush1.bf16.msra.mxu0 0
    %4437 = vmatprep.subr.bf16.mxu0 0
    %4438 = vmatpush1.bf16.msra.mxu0 0
    %4439 = vmatprep.subr.bf16.mxu0 0
    %4440 = vmatpush1.bf16.msra.mxu0 0
    %4441 = vmatprep.subr.bf16.mxu0 0
    %4442 = vmatpush1.bf16.msra.mxu0 0
    %4443 = vmatprep.subr.bf16.mxu0 0
    %4444 = vmatpush1.bf16.msra.mxu0 0
    %4445 = vmatprep.subr.bf16.mxu0 0
    %4446 = vmatpush1.bf16.msra.mxu0 0
    %4447 = vmatprep.subr.bf16.mxu0 0
    %4448 = vmatpush1.bf16.msra.mxu0 0
    %4449 = vmatprep.mubr.bf16.mxu0 0
    %4450 = vmatmul.mubr.bf16.gmra.mrb[0].mxu0 %v4306
    %v4451 = vpop.f32.mrb[0].mxu0
    %v4452 = vadd.f32 %v4287, %v4451
    %v4453 = vpop.f32.mrb[0].mxu0
    %v4454 = vadd.f32 %v4287, %v4453
    %v4455 = vpop.f32.mrb[0].mxu0
    %v4456 = vadd.f32 %v4292, %v4455
    %v4457 = vpop.f32.mrb[0].mxu0
    %v4458 = vadd.f32 %v4292, %v4457
    %4459 = vmatprep.mubr.bf16.mxu0 0
    %4460 = vmatmul.mubr.bf16.gmra.mrb[0].mxu0 %v4309
    %v4461 = vpop.f32.mrb[0].mxu0
    %v4462 = vadd.f32 %v4297, %v4461
    %v4463 = vpop.f32.mrb[0].mxu0
    %v4464 = vadd.f32 %v4297, %v4463
    %v4465 = vpop.f32.mrb[0].mxu0
    %v4466 = vadd.f32 %v4302, %v4465
    %v4467 = vpop.f32.mrb[0].mxu0
    %v4468 = vadd.f32 %v4302, %v4467
    %4469 = vdwg.mxu0
    %v4470 = vadd.f32 %v4346, %v3798
    %v4471 = vadd.f32 %v4348, %v3800
    %v4472 = vadd.f32 %v4399, %v3871
    %v4473 = vadd.f32 %v4401, %v3873
    %v4474 = vadd.f32 %v4452, %v3944
    %v4475 = vadd.f32 %v4454, %v3946
    %v4476 = vadd.f32 %v4350, %v3802
    %v4477 = vadd.f32 %v4352, %v3804
    %v4478 = vadd.f32 %v4403, %v3875
    %v4479 = vadd.f32 %v4405, %v3877
    %v4480 = vadd.f32 %v4456, %v3948
    %v4481 = vadd.f32 %v4458, %v3950
    %v4482 = vadd.f32 %v4356, %v3808
    %v4483 = vadd.f32 %v4358, %v3810
    %v4484 = vadd.f32 %v4409, %v3881
    %v4485 = vadd.f32 %v4411, %v3883
    %v4486 = vadd.f32 %v4462, %v3954
    %v4487 = vadd.f32 %v4464, %v3956
    %v4488 = vadd.f32 %v4360, %v3812
    %v4489 = vadd.f32 %v4362, %v3814
    %v4490 = vadd.f32 %v4413, %v3885
    %v4491 = vadd.f32 %v4415, %v3887
    %v4492 = vadd.f32 %v4466, %v3958
    %v4493 = vadd.f32 %v4468, %v3960
    %v4494 = vmax.f32 %v4470, 0.0
    %v4495 = vmax.f32 %v4471, 0.0
    %v4496 = vmax.f32 %v4472, 0.0
    %v4497 = vmax.f32 %v4473, 0.0
    %v4498 = vmax.f32 %v4474, 0.0
    %v4499 = vmax.f32 %v4475, 0.0
    %v4500 = vmax.f32 %v4476, 0.0
    %v4501 = vmax.f32 %v4477, 0.0
    %v4502 = vmax.f32 %v4478, 0.0
    %v4503 = vmax.f32 %v4479, 0.0
    %v4504 = vmax.f32 %v4480, 0.0
    %v4505 = vmax.f32 %v4481, 0.0
    %v4506 = vmax.f32 %v4482, 0.0
    %v4507 = vmax.f32 %v4483, 0.0
    %v4508 = vmax.f32 %v4484, 0.0
    %v4509 = vmax.f32 %v4485, 0.0
    %v4510 = vmax.f32 %v4486, 0.0
    %v4511 = vmax.f32 %v4487, 0.0
    %v4512 = vmax.f32 %v4488, 0.0
    %v4513 = vmax.f32 %v4489, 0.0
    %v4514 = vmax.f32 %v4490, 0.0
    %v4515 = vmax.f32 %v4491, 0.0
    %v4516 = vmax.f32 %v4492, 0.0
    %v4517 = vmax.f32 %v4493, 0.0
    %4518 = vrot.lane.b32.xlu0 %v4494, 8
    %v4519 = vpop.permute.xlu0 %4518
    %4520 = vrot.lane.b32.xlu0 %v4500, 8
    %v4521 = vpop.permute.xlu0 %4520
    %4522 = vrot.lane.b32.xlu0 %v4506, 8
    %v4523 = vpop.permute.xlu0 %4522
    %4524 = vrot.lane.b32.xlu0 %v4512, 8
    %v4525 = vpop.permute.xlu0 %4524
    %4526 = vrot.lane.b32.xlu0 %v4495, 8
    %v4527 = vpop.permute.xlu0 %4526
    %4528 = vrot.lane.b32.xlu0 %v4501, 8
    %v4529 = vpop.permute.xlu0 %4528
    %4530 = vrot.lane.b32.xlu0 %v4507, 8
    %v4531 = vpop.permute.xlu0 %4530
    %4532 = vrot.lane.b32.xlu0 %v4513, 8
    %v4533 = vpop.permute.xlu0 %4532
    %4534 = vrot.lane.b32.xlu0 %v4496, 8
    %v4535 = vpop.permute.xlu0 %4534
    %4536 = vrot.lane.b32.xlu0 %v4502, 8
    %v4537 = vpop.permute.xlu0 %4536
    %4538 = vrot.lane.b32.xlu0 %v4508, 8
    %v4539 = vpop.permute.xlu0 %4538
    %4540 = vrot.lane.b32.xlu0 %v4514, 8
    %v4541 = vpop.permute.xlu0 %4540
    %4542 = vrot.lane.b32.xlu0 %v4497, 8
    %v4543 = vpop.permute.xlu0 %4542
    %4544 = vrot.lane.b32.xlu0 %v4503, 8
    %v4545 = vpop.permute.xlu0 %4544
    %4546 = vrot.lane.b32.xlu0 %v4509, 8
    %v4547 = vpop.permute.xlu0 %4546
    %4548 = vrot.lane.b32.xlu0 %v4515, 8
    %v4549 = vpop.permute.xlu0 %4548
    %4550 = vrot.lane.b32.xlu0 %v4498, 8
    %v4551 = vpop.permute.xlu0 %4550
    %4552 = vrot.lane.b32.xlu0 %v4504, 8
    %v4553 = vpop.permute.xlu0 %4552
    %4554 = vrot.lane.b32.xlu0 %v4510, 8
    %v4555 = vpop.permute.xlu0 %4554
    %4556 = vrot.lane.b32.xlu0 %v4516, 8
    %v4557 = vpop.permute.xlu0 %4556
    %4558 = vrot.lane.b32.xlu0 %v4499, 8
    %v4559 = vpop.permute.xlu0 %4558
    %4560 = vrot.lane.b32.xlu0 %v4505, 8
    %v4561 = vpop.permute.xlu0 %4560
    %4562 = vrot.lane.b32.xlu0 %v4511, 8
    %v4563 = vpop.permute.xlu0 %4562
    %4564 = vrot.lane.b32.xlu0 %v4517, 8
    %v4565 = vpop.permute.xlu0 %4564
    %v4566 = vsel %vm4034, %v4551, %v4559
    %v4567 = vsel %vm4034, %v4553, %v4561
    %v4568 = vsel %vm4034, %v4555, %v4563
    %v4569 = vsel %vm4034, %v4557, %v4565
    %v4570 = vsel %vm4034, %v4543, %v4551
    %v4571 = vsel %vm4034, %v4545, %v4553
    %v4572 = vsel %vm4034, %v4547, %v4555
    %v4573 = vsel %vm4034, %v4549, %v4557
    %v4574 = vsel %vm4034, %v4535, %v4543
    %v4575 = vsel %vm4034, %v4537, %v4545
    %v4576 = vsel %vm4034, %v4539, %v4547
    %v4577 = vsel %vm4034, %v4541, %v4549
    %v4578 = vsel %vm4034, %v4527, %v4535
    %v4579 = vsel %vm4034, %v4529, %v4537
    %v4580 = vsel %vm4034, %v4531, %v4539
    %v4581 = vsel %vm4034, %v4533, %v4541
    %v4582 = vsel %vm4034, %v4519, %v4527
    %v4583 = vsel %vm4034, %v4521, %v4529
    %v4584 = vsel %vm4034, %v4523, %v4531
    %v4585 = vsel %vm4034, %v4525, %v4533
    %v4586 = vsel %vm4034, %v4559, %v4519
    %v4587 = vsel %vm4034, %v4561, %v4521
    %v4588 = vsel %vm4034, %v4563, %v4523
    %v4589 = vsel %vm4034, %v4565, %v4525
    %v4590 = vmul.f32 %v4586, %v4063
    %v4591 = vmul.f32 %v4582, %v4067
    %v4592 = vmul.f32 %v4578, %v4071
    %v4593 = vmul.f32 %v4574, %v4075
    %v4594 = vmul.f32 %v4570, %v4079
    %v4595 = vmul.f32 %v4566, %v4083
    %v4596 = vmul.f32 %v4587, %v4063
    %v4597 = vmul.f32 %v4583, %v4067
    %v4598 = vmul.f32 %v4579, %v4071
    %v4599 = vmul.f32 %v4575, %v4075
    %v4600 = vmul.f32 %v4571, %v4079
    %v4601 = vmul.f32 %v4567, %v4083
    %v4602 = vmul.f32 %v4588, %v4063
    %v4603 = vmul.f32 %v4584, %v4067
    %v4604 = vmul.f32 %v4580, %v4071
    %v4605 = vmul.f32 %v4576, %v4075
    %v4606 = vmul.f32 %v4572, %v4079
    %v4607 = vmul.f32 %v4568, %v4083
    %v4608 = vmul.f32 %v4589, %v4063
    %v4609 = vmul.f32 %v4585, %v4067
    %v4610 = vmul.f32 %v4581, %v4071
    %v4611 = vmul.f32 %v4577, %v4075
    %v4612 = vmul.f32 %v4573, %v4079
    %v4613 = vmul.f32 %v4569, %v4083
    %4614 = vrot.lane.b32.xlu0 %v4494, 120
    %v4615 = vpop.permute.xlu0 %4614
    %4616 = vrot.lane.b32.xlu0 %v4500, 120
    %v4617 = vpop.permute.xlu0 %4616
    %4618 = vrot.lane.b32.xlu0 %v4506, 120
    %v4619 = vpop.permute.xlu0 %4618
    %4620 = vrot.lane.b32.xlu0 %v4512, 120
    %v4621 = vpop.permute.xlu0 %4620
    %4622 = vrot.lane.b32.xlu0 %v4495, 120
    %v4623 = vpop.permute.xlu0 %4622
    %4624 = vrot.lane.b32.xlu0 %v4501, 120
    %v4625 = vpop.permute.xlu0 %4624
    %4626 = vrot.lane.b32.xlu0 %v4507, 120
    %v4627 = vpop.permute.xlu0 %4626
    %4628 = vrot.lane.b32.xlu0 %v4513, 120
    %v4629 = vpop.permute.xlu0 %4628
    %4630 = vrot.lane.b32.xlu0 %v4496, 120
    %v4631 = vpop.permute.xlu0 %4630
    %4632 = vrot.lane.b32.xlu0 %v4502, 120
    %v4633 = vpop.permute.xlu0 %4632
    %4634 = vrot.lane.b32.xlu0 %v4508, 120
    %v4635 = vpop.permute.xlu0 %4634
    %4636 = vrot.lane.b32.xlu0 %v4514, 120
    %v4637 = vpop.permute.xlu0 %4636
    %4638 = vrot.lane.b32.xlu0 %v4497, 120
    %v4639 = vpop.permute.xlu0 %4638
    %4640 = vrot.lane.b32.xlu0 %v4503, 120
    %v4641 = vpop.permute.xlu0 %4640
    %4642 = vrot.lane.b32.xlu0 %v4509, 120
    %v4643 = vpop.permute.xlu0 %4642
    %4644 = vrot.lane.b32.xlu0 %v4515, 120
    %v4645 = vpop.permute.xlu0 %4644
    %4646 = vrot.lane.b32.xlu0 %v4498, 120
    %v4647 = vpop.permute.xlu0 %4646
    %4648 = vrot.lane.b32.xlu0 %v4504, 120
    %v4649 = vpop.permute.xlu0 %4648
    %4650 = vrot.lane.b32.xlu0 %v4510, 120
    %v4651 = vpop.permute.xlu0 %4650
    %4652 = vrot.lane.b32.xlu0 %v4516, 120
    %v4653 = vpop.permute.xlu0 %4652
    %4654 = vrot.lane.b32.xlu0 %v4499, 120
    %v4655 = vpop.permute.xlu0 %4654
    %4656 = vrot.lane.b32.xlu0 %v4505, 120
    %v4657 = vpop.permute.xlu0 %4656
    %4658 = vrot.lane.b32.xlu0 %v4511, 120
    %v4659 = vpop.permute.xlu0 %4658
    %4660 = vrot.lane.b32.xlu0 %v4517, 120
    %v4661 = vpop.permute.xlu0 %4660
    %v4662 = vsel %vm4162, %v4647, %v4655
    %v4663 = vsel %vm4162, %v4649, %v4657
    %v4664 = vsel %vm4162, %v4651, %v4659
    %v4665 = vsel %vm4162, %v4653, %v4661
    %v4666 = vsel %vm4162, %v4639, %v4647
    %v4667 = vsel %vm4162, %v4641, %v4649
    %v4668 = vsel %vm4162, %v4643, %v4651
    %v4669 = vsel %vm4162, %v4645, %v4653
    %v4670 = vsel %vm4162, %v4631, %v4639
    %v4671 = vsel %vm4162, %v4633, %v4641
    %v4672 = vsel %vm4162, %v4635, %v4643
    %v4673 = vsel %vm4162, %v4637, %v4645
    %v4674 = vsel %vm4162, %v4623, %v4631
    %v4675 = vsel %vm4162, %v4625, %v4633
    %v4676 = vsel %vm4162, %v4627, %v4635
    %v4677 = vsel %vm4162, %v4629, %v4637
    %v4678 = vsel %vm4162, %v4615, %v4623
    %v4679 = vsel %vm4162, %v4617, %v4625
    %v4680 = vsel %vm4162, %v4619, %v4627
    %v4681 = vsel %vm4162, %v4621, %v4629
    %v4682 = vsel %vm4162, %v4655, %v4615
    %v4683 = vsel %vm4162, %v4657, %v4617
    %v4684 = vsel %vm4162, %v4659, %v4619
    %v4685 = vsel %vm4162, %v4661, %v4621
    %v4686 = vmul.f32 %v4678, %v4191
    %v4687 = vmul.f32 %v4674, %v4195
    %v4688 = vmul.f32 %v4670, %v4199
    %v4689 = vmul.f32 %v4666, %v4203
    %v4690 = vmul.f32 %v4662, %v4207
    %v4691 = vmul.f32 %v4682, %v4211
    %v4692 = vmul.f32 %v4679, %v4191
    %v4693 = vmul.f32 %v4675, %v4195
    %v4694 = vmul.f32 %v4671, %v4199
    %v4695 = vmul.f32 %v4667, %v4203
    %v4696 = vmul.f32 %v4663, %v4207
    %v4697 = vmul.f32 %v4683, %v4211
    %v4698 = vmul.f32 %v4680, %v4191
    %v4699 = vmul.f32 %v4676, %v4195
    %v4700 = vmul.f32 %v4672, %v4199
    %v4701 = vmul.f32 %v4668, %v4203
    %v4702 = vmul.f32 %v4664, %v4207
    %v4703 = vmul.f32 %v4684, %v4211
    %v4704 = vmul.f32 %v4681, %v4191
    %v4705 = vmul.f32 %v4677, %v4195
    %v4706 = vmul.f32 %v4673, %v4199
    %v4707 = vmul.f32 %v4669, %v4203
    %v4708 = vmul.f32 %v4665, %v4207
    %v4709 = vmul.f32 %v4685, %v4211
    %v4710 = vld [vmem:[#allocation7 + $0x100] sm:$0xff]
    %v4711 = vld [vmem:[#allocation7 + $0x108] sm:$0xff]
    %v4712 = vld [vmem:[#allocation7 + $0x110] sm:$0xff]
    %v4713 = vld [vmem:[#allocation7 + $0x118] sm:$0xff]
    %v4714 = vpack.c.bf16 %v4711, %v4710
    %v4715 = vpack.c.bf16 %v4713, %v4712
    %v4716 = vpack.c.bf16 %v4596, %v4590
    %v4717 = vpack.c.bf16 %v4597, %v4591
    %v4718 = vpack.c.bf16 %v4598, %v4592
    %v4719 = vpack.c.bf16 %v4599, %v4593
    %v4720 = vpack.c.bf16 %v4600, %v4594
    %v4721 = vpack.c.bf16 %v4601, %v4595
    %v4722 = vpack.c.bf16 %v4608, %v4602
    %v4723 = vpack.c.bf16 %v4609, %v4603
    %v4724 = vpack.c.bf16 %v4610, %v4604
    %v4725 = vpack.c.bf16 %v4611, %v4605
    %v4726 = vpack.c.bf16 %v4612, %v4606
    %v4727 = vpack.c.bf16 %v4613, %v4607
    %v4728 = vpack.c.bf16 %v4500, %v4494
    %v4729 = vpack.c.bf16 %v4501, %v4495
    %v4730 = vpack.c.bf16 %v4502, %v4496
    %v4731 = vpack.c.bf16 %v4503, %v4497
    %v4732 = vpack.c.bf16 %v4504, %v4498
    %v4733 = vpack.c.bf16 %v4505, %v4499
    %v4734 = vpack.c.bf16 %v4512, %v4506
    %v4735 = vpack.c.bf16 %v4513, %v4507
    %v4736 = vpack.c.bf16 %v4514, %v4508
    %v4737 = vpack.c.bf16 %v4515, %v4509
    %v4738 = vpack.c.bf16 %v4516, %v4510
    %v4739 = vpack.c.bf16 %v4517, %v4511
    %v4740 = vpack.c.bf16 %v4692, %v4686
    %v4741 = vpack.c.bf16 %v4693, %v4687
    %v4742 = vpack.c.bf16 %v4694, %v4688
    %v4743 = vpack.c.bf16 %v4695, %v4689
    %v4744 = vpack.c.bf16 %v4696, %v4690
    %v4745 = vpack.c.bf16 %v4697, %v4691
    %v4746 = vpack.c.bf16 %v4704, %v4698
    %v4747 = vpack.c.bf16 %v4705, %v4699
    %v4748 = vpack.c.bf16 %v4706, %v4700
    %v4749 = vpack.c.bf16 %v4707, %v4701
    %v4750 = vpack.c.bf16 %v4708, %v4702
    %v4751 = vpack.c.bf16 %v4709, %v4703
    %4753 = vset.pattern.permute.xlu0 96
    %4754 = vperm.xlu0 %4753, %v4710
    %v4755 = vpop.permute.xlu0 %4754
    %4758 = vset.pattern.permute.xlu0 96
    %4759 = vperm.xlu0 %4758, %v4711
    %v4760 = vpop.permute.xlu0 %4759
    %4763 = vset.pattern.permute.xlu0 96
    %4764 = vperm.xlu0 %4763, %v4712
    %v4765 = vpop.permute.xlu0 %4764
    %4768 = vset.pattern.permute.xlu0 96
    %4769 = vperm.xlu0 %4768, %v4713
    %v4770 = vpop.permute.xlu0 %4769
    %v4773 = vsel %vm4304, %v4714, 0
    %v4776 = vsel %vm4304, %v4715, 0
    %4778 = vmatprep.subr.bf16.mxu0 %v4717
    %4779 = vmatpush1.bf16.msra.mxu0 %v4716
    %4780 = vmatprep.subr.bf16.mxu0 %v4723
    %4781 = vmatpush1.bf16.msra.mxu0 %v4722
    %4782 = vmatprep.subr.bf16.mxu0 %v4729
    %4783 = vmatpush1.bf16.msra.mxu0 %v4728
    %4784 = vmatprep.subr.bf16.mxu0 %v4735
    %4785 = vmatpush1.bf16.msra.mxu0 %v4734
    %4786 = vmatprep.subr.bf16.mxu0 %v4741
    %4787 = vmatpush1.bf16.msra.mxu0 %v4740
    %4788 = vmatprep.subr.bf16.mxu0 %v4747
    %4789 = vmatpush1.bf16.msra.mxu0 %v4746
    %4790 = vmatprep.subr.bf16.mxu0 0
    %4791 = vmatpush1.bf16.msra.mxu0 0
    %4792 = vmatprep.subr.bf16.mxu0 0
    %4793 = vmatpush1.bf16.msra.mxu0 0
    %4794 = vmatprep.subr.bf16.mxu0 0
    %4795 = vmatpush1.bf16.msra.mxu0 0
    %4796 = vmatprep.subr.bf16.mxu0 0
    %4797 = vmatpush1.bf16.msra.mxu0 0
    %4798 = vmatprep.subr.bf16.mxu0 0
    %4799 = vmatpush1.bf16.msra.mxu0 0
    %4800 = vmatprep.subr.bf16.mxu0 0
    %4801 = vmatpush1.bf16.msra.mxu0 0
    %4802 = vmatprep.subr.bf16.mxu0 0
    %4803 = vmatpush1.bf16.msra.mxu0 0
    %4804 = vmatprep.subr.bf16.mxu0 0
    %4805 = vmatpush1.bf16.msra.mxu0 0
    %4806 = vmatprep.subr.bf16.mxu0 0
    %4807 = vmatpush1.bf16.msra.mxu0 0
    %4808 = vmatprep.subr.bf16.mxu0 0
    %4809 = vmatpush1.bf16.msra.mxu0 0
    %4810 = vmatprep.mubr.bf16.mxu0 0
    %4811 = vmatmul.mubr.bf16.gmra.mrb[0].mxu0 %v4773
    %v4812 = vpop.f32.mrb[0].mxu0
    %v4813 = vadd.f32 %v4755, %v4812
    %v4814 = vpop.f32.mrb[0].mxu0
    %v4815 = vadd.f32 %v4755, %v4814
    %v4816 = vpop.f32.mrb[0].mxu0
    %v4817 = vadd.f32 %v4760, %v4816
    %v4818 = vpop.f32.mrb[0].mxu0
    %v4819 = vadd.f32 %v4760, %v4818
    %4820 = vmatprep.mubr.bf16.mxu0 0
    %4821 = vmatmul.mubr.bf16.gmra.mrb[0].mxu0 %v4776
    %v4822 = vpop.f32.mrb[0].mxu0
    %v4823 = vadd.f32 %v4765, %v4822
    %v4824 = vpop.f32.mrb[0].mxu0
    %v4825 = vadd.f32 %v4765, %v4824
    %v4826 = vpop.f32.mrb[0].mxu0
    %v4827 = vadd.f32 %v4770, %v4826
    %v4828 = vpop.f32.mrb[0].mxu0
    %v4829 = vadd.f32 %v4770, %v4828
    %4830 = vdwg.mxu0
    %4831 = vmatprep.subr.bf16.mxu0 %v4719
    %4832 = vmatpush1.bf16.msra.mxu0 %v4718
    %4833 = vmatprep.subr.bf16.mxu0 %v4725
    %4834 = vmatpush1.bf16.msra.mxu0 %v4724
    %4835 = vmatprep.subr.bf16.mxu0 %v4731
    %4836 = vmatpush1.bf16.msra.mxu0 %v4730
    %4837 = vmatprep.subr.bf16.mxu0 %v4737
    %4838 = vmatpush1.bf16.msra.mxu0 %v4736
    %4839 = vmatprep.subr.bf16.mxu0 %v4743
    %4840 = vmatpush1.bf16.msra.mxu0 %v4742
    %4841 = vmatprep.subr.bf16.mxu0 %v4749
    %4842 = vmatpush1.bf16.msra.mxu0 %v4748
    %4843 = vmatprep.subr.bf16.mxu0 0
    %4844 = vmatpush1.bf16.msra.mxu0 0
    %4845 = vmatprep.subr.bf16.mxu0 0
    %4846 = vmatpush1.bf16.msra.mxu0 0
    %4847 = vmatprep.subr.bf16.mxu0 0
    %4848 = vmatpush1.bf16.msra.mxu0 0
    %4849 = vmatprep.subr.bf16.mxu0 0
    %4850 = vmatpush1.bf16.msra.mxu0 0
    %4851 = vmatprep.subr.bf16.mxu0 0
    %4852 = vmatpush1.bf16.msra.mxu0 0
    %4853 = vmatprep.subr.bf16.mxu0 0
    %4854 = vmatpush1.bf16.msra.mxu0 0
    %4855 = vmatprep.subr.bf16.mxu0 0
    %4856 = vmatpush1.bf16.msra.mxu0 0
    %4857 = vmatprep.subr.bf16.mxu0 0
    %4858 = vmatpush1.bf16.msra.mxu0 0
    %4859 = vmatprep.subr.bf16.mxu0 0
    %4860 = vmatpush1.bf16.msra.mxu0 0
    %4861 = vmatprep.subr.bf16.mxu0 0
    %4862 = vmatpush1.bf16.msra.mxu0 0
    %4863 = vmatprep.mubr.bf16.mxu0 0
    %4864 = vmatmul.mubr.bf16.gmra.mrb[0].mxu0 %v4773
    %v4865 = vpop.f32.mrb[0].mxu0
    %v4866 = vadd.f32 %v4755, %v4865
    %v4867 = vpop.f32.mrb[0].mxu0
    %v4868 = vadd.f32 %v4755, %v4867
    %v4869 = vpop.f32.mrb[0].mxu0
    %v4870 = vadd.f32 %v4760, %v4869
    %v4871 = vpop.f32.mrb[0].mxu0
    %v4872 = vadd.f32 %v4760, %v4871
    %4873 = vmatprep.mubr.bf16.mxu0 0
    %4874 = vmatmul.mubr.bf16.gmra.mrb[0].mxu0 %v4776
    %v4875 = vpop.f32.mrb[0].mxu0
    %v4876 = vadd.f32 %v4765, %v4875
    %v4877 = vpop.f32.mrb[0].mxu0
    %v4878 = vadd.f32 %v4765, %v4877
    %v4879 = vpop.f32.mrb[0].mxu0
    %v4880 = vadd.f32 %v4770, %v4879
    %v4881 = vpop.f32.mrb[0].mxu0
    %v4882 = vadd.f32 %v4770, %v4881
    %4883 = vdwg.mxu0
    %4884 = vmatprep.subr.bf16.mxu0 %v4721
    %4885 = vmatpush1.bf16.msra.mxu0 %v4720
    %4886 = vmatprep.subr.bf16.mxu0 %v4727
    %4887 = vmatpush1.bf16.msra.mxu0 %v4726
    %4888 = vmatprep.subr.bf16.mxu0 %v4733
    %4889 = vmatpush1.bf16.msra.mxu0 %v4732
    %4890 = vmatprep.subr.bf16.mxu0 %v4739
    %4891 = vmatpush1.bf16.msra.mxu0 %v4738
    %4892 = vmatprep.subr.bf16.mxu0 %v4745
    %4893 = vmatpush1.bf16.msra.mxu0 %v4744
    %4894 = vmatprep.subr.bf16.mxu0 %v4751
    %4895 = vmatpush1.bf16.msra.mxu0 %v4750
    %4896 = vmatprep.subr.bf16.mxu0 0
    %4897 = vmatpush1.bf16.msra.mxu0 0
    %4898 = vmatprep.subr.bf16.mxu0 0
    %4899 = vmatpush1.bf16.msra.mxu0 0
    %4900 = vmatprep.subr.bf16.mxu0 0
    %4901 = vmatpush1.bf16.msra.mxu0 0
    %4902 = vmatprep.subr.bf16.mxu0 0
    %4903 = vmatpush1.bf16.msra.mxu0 0
    %4904 = vmatprep.subr.bf16.mxu0 0
    %4905 = vmatpush1.bf16.msra.mxu0 0
    %4906 = vmatprep.subr.bf16.mxu0 0
    %4907 = vmatpush1.bf16.msra.mxu0 0
    %4908 = vmatprep.subr.bf16.mxu0 0
    %4909 = vmatpush1.bf16.msra.mxu0 0
    %4910 = vmatprep.subr.bf16.mxu0 0
    %4911 = vmatpush1.bf16.msra.mxu0 0
    %4912 = vmatprep.subr.bf16.mxu0 0
    %4913 = vmatpush1.bf16.msra.mxu0 0
    %4914 = vmatprep.subr.bf16.mxu0 0
    %4915 = vmatpush1.bf16.msra.mxu0 0
    %4916 = vmatprep.mubr.bf16.mxu0 0
    %4917 = vmatmul.mubr.bf16.gmra.mrb[0].mxu0 %v4773
    %v4918 = vpop.f32.mrb[0].mxu0
    %v4919 = vadd.f32 %v4755, %v4918
    %v4920 = vpop.f32.mrb[0].mxu0
    %v4921 = vadd.f32 %v4755, %v4920
    %v4922 = vpop.f32.mrb[0].mxu0
    %v4923 = vadd.f32 %v4760, %v4922
    %v4924 = vpop.f32.mrb[0].mxu0
    %v4925 = vadd.f32 %v4760, %v4924
    %4926 = vmatprep.mubr.bf16.mxu0 0
    %4927 = vmatmul.mubr.bf16.gmra.mrb[0].mxu0 %v4776
    %v4928 = vpop.f32.mrb[0].mxu0
    %v4929 = vadd.f32 %v4765, %v4928
    %v4930 = vpop.f32.mrb[0].mxu0
    %v4931 = vadd.f32 %v4765, %v4930
    %v4932 = vpop.f32.mrb[0].mxu0
    %v4933 = vadd.f32 %v4770, %v4932
    %v4934 = vpop.f32.mrb[0].mxu0
    %v4935 = vadd.f32 %v4770, %v4934
    %4936 = vdwg.mxu0
    %v4937 = vmax.f32 %v4813, 0.0
    %v4938 = vmax.f32 %v4815, 0.0
    %v4939 = vmax.f32 %v4866, 0.0
    %v4940 = vmax.f32 %v4868, 0.0
    %v4941 = vmax.f32 %v4919, 0.0
    %v4942 = vmax.f32 %v4921, 0.0
    %v4943 = vmax.f32 %v4817, 0.0
    %v4944 = vmax.f32 %v4819, 0.0
    %v4945 = vmax.f32 %v4870, 0.0
    %v4946 = vmax.f32 %v4872, 0.0
    %v4947 = vmax.f32 %v4923, 0.0
    %v4948 = vmax.f32 %v4925, 0.0
    %v4949 = vmax.f32 %v4823, 0.0
    %v4950 = vmax.f32 %v4825, 0.0
    %v4951 = vmax.f32 %v4876, 0.0
    %v4952 = vmax.f32 %v4878, 0.0
    %v4953 = vmax.f32 %v4929, 0.0
    %v4954 = vmax.f32 %v4931, 0.0
    %v4955 = vmax.f32 %v4827, 0.0
    %v4956 = vmax.f32 %v4829, 0.0
    %v4957 = vmax.f32 %v4880, 0.0
    %v4958 = vmax.f32 %v4882, 0.0
    %v4959 = vmax.f32 %v4933, 0.0
    %v4960 = vmax.f32 %v4935, 0.0
    %4961 = vrot.lane.b32.xlu0 %v4937, 8
    %v4962 = vpop.permute.xlu0 %4961
    %4963 = vrot.lane.b32.xlu0 %v4943, 8
    %v4964 = vpop.permute.xlu0 %4963
    %4965 = vrot.lane.b32.xlu0 %v4949, 8
    %v4966 = vpop.permute.xlu0 %4965
    %4967 = vrot.lane.b32.xlu0 %v4955, 8
    %v4968 = vpop.permute.xlu0 %4967
    %4969 = vrot.lane.b32.xlu0 %v4938, 8
    %v4970 = vpop.permute.xlu0 %4969
    %4971 = vrot.lane.b32.xlu0 %v4944, 8
    %v4972 = vpop.permute.xlu0 %4971
    %4973 = vrot.lane.b32.xlu0 %v4950, 8
    %v4974 = vpop.permute.xlu0 %4973
    %4975 = vrot.lane.b32.xlu0 %v4956, 8
    %v4976 = vpop.permute.xlu0 %4975
    %4977 = vrot.lane.b32.xlu0 %v4939, 8
    %v4978 = vpop.permute.xlu0 %4977
    %4979 = vrot.lane.b32.xlu0 %v4945, 8
    %v4980 = vpop.permute.xlu0 %4979
    %4981 = vrot.lane.b32.xlu0 %v4951, 8
    %v4982 = vpop.permute.xlu0 %4981
    %4983 = vrot.lane.b32.xlu0 %v4957, 8
    %v4984 = vpop.permute.xlu0 %4983
    %4985 = vrot.lane.b32.xlu0 %v4940, 8
    %v4986 = vpop.permute.xlu0 %4985
    %4987 = vrot.lane.b32.xlu0 %v4946, 8
    %v4988 = vpop.permute.xlu0 %4987
    %4989 = vrot.lane.b32.xlu0 %v4952, 8
    %v4990 = vpop.permute.xlu0 %4989
    %4991 = vrot.lane.b32.xlu0 %v4958, 8
    %v4992 = vpop.permute.xlu0 %4991
    %4993 = vrot.lane.b32.xlu0 %v4941, 8
    %v4994 = vpop.permute.xlu0 %4993
    %4995 = vrot.lane.b32.xlu0 %v4947, 8
    %v4996 = vpop.permute.xlu0 %4995
    %4997 = vrot.lane.b32.xlu0 %v4953, 8
    %v4998 = vpop.permute.xlu0 %4997
    %4999 = vrot.lane.b32.xlu0 %v4959, 8
    %v5000 = vpop.permute.xlu0 %4999
    %5001 = vrot.lane.b32.xlu0 %v4942, 8
    %v5002 = vpop.permute.xlu0 %5001
    %5003 = vrot.lane.b32.xlu0 %v4948, 8
    %v5004 = vpop.permute.xlu0 %5003
    %5005 = vrot.lane.b32.xlu0 %v4954, 8
    %v5006 = vpop.permute.xlu0 %5005
    %5007 = vrot.lane.b32.xlu0 %v4960, 8
    %v5008 = vpop.permute.xlu0 %5007
    %v5009 = vsel %vm4034, %v4994, %v5002
    %v5010 = vsel %vm4034, %v4996, %v5004
    %v5011 = vsel %vm4034, %v4998, %v5006
    %v5012 = vsel %vm4034, %v5000, %v5008
    %v5013 = vsel %vm4034, %v4986, %v4994
    %v5014 = vsel %vm4034, %v4988, %v4996
    %v5015 = vsel %vm4034, %v4990, %v4998
    %v5016 = vsel %vm4034, %v4992, %v5000
    %v5017 = vsel %vm4034, %v4978, %v4986
    %v5018 = vsel %vm4034, %v4980, %v4988
    %v5019 = vsel %vm4034, %v4982, %v4990
    %v5020 = vsel %vm4034, %v4984, %v4992
    %v5021 = vsel %vm4034, %v4970, %v4978
    %v5022 = vsel %vm4034, %v4972, %v4980
    %v5023 = vsel %vm4034, %v4974, %v4982
    %v5024 = vsel %vm4034, %v4976, %v4984
    %v5025 = vsel %vm4034, %v4962, %v4970
    %v5026 = vsel %vm4034, %v4964, %v4972
    %v5027 = vsel %vm4034, %v4966, %v4974
    %v5028 = vsel %vm4034, %v4968, %v4976
    %v5029 = vsel %vm4034, %v5002, %v4962
    %v5030 = vsel %vm4034, %v5004, %v4964
    %v5031 = vsel %vm4034, %v5006, %v4966
    %v5032 = vsel %vm4034, %v5008, %v4968
    %v5033 = vmul.f32 %v5029, %v4063
    %v5034 = vmul.f32 %v5025, %v4067
    %v5035 = vmul.f32 %v5021, %v4071
    %v5036 = vmul.f32 %v5017, %v4075
    %v5037 = vmul.f32 %v5013, %v4079
    %v5038 = vmul.f32 %v5009, %v4083
    %v5039 = vmul.f32 %v5030, %v4063
    %v5040 = vmul.f32 %v5026, %v4067
    %v5041 = vmul.f32 %v5022, %v4071
    %v5042 = vmul.f32 %v5018, %v4075
    %v5043 = vmul.f32 %v5014, %v4079
    %v5044 = vmul.f32 %v5010, %v4083
    %v5045 = vmul.f32 %v5031, %v4063
    %v5046 = vmul.f32 %v5027, %v4067
    %v5047 = vmul.f32 %v5023, %v4071
    %v5048 = vmul.f32 %v5019, %v4075
    %v5049 = vmul.f32 %v5015, %v4079
    %v5050 = vmul.f32 %v5011, %v4083
    %v5051 = vmul.f32 %v5032, %v4063
    %v5052 = vmul.f32 %v5028, %v4067
    %v5053 = vmul.f32 %v5024, %v4071
    %v5054 = vmul.f32 %v5020, %v4075
    %v5055 = vmul.f32 %v5016, %v4079
    %v5056 = vmul.f32 %v5012, %v4083
    %5057 = vrot.lane.b32.xlu0 %v4937, 120
    %v5058 = vpop.permute.xlu0 %5057
    %5059 = vrot.lane.b32.xlu0 %v4943, 120
    %v5060 = vpop.permute.xlu0 %5059
    %5061 = vrot.lane.b32.xlu0 %v4949, 120
    %v5062 = vpop.permute.xlu0 %5061
    %5063 = vrot.lane.b32.xlu0 %v4955, 120
    %v5064 = vpop.permute.xlu0 %5063
    %5065 = vrot.lane.b32.xlu0 %v4938, 120
    %v5066 = vpop.permute.xlu0 %5065
    %5067 = vrot.lane.b32.xlu0 %v4944, 120
    %v5068 = vpop.permute.xlu0 %5067
    %5069 = vrot.lane.b32.xlu0 %v4950, 120
    %v5070 = vpop.permute.xlu0 %5069
    %5071 = vrot.lane.b32.xlu0 %v4956, 120
    %v5072 = vpop.permute.xlu0 %5071
    %5073 = vrot.lane.b32.xlu0 %v4939, 120
    %v5074 = vpop.permute.xlu0 %5073
    %5075 = vrot.lane.b32.xlu0 %v4945, 120
    %v5076 = vpop.permute.xlu0 %5075
    %5077 = vrot.lane.b32.xlu0 %v4951, 120
    %v5078 = vpop.permute.xlu0 %5077
    %5079 = vrot.lane.b32.xlu0 %v4957, 120
    %v5080 = vpop.permute.xlu0 %5079
    %5081 = vrot.lane.b32.xlu0 %v4940, 120
    %v5082 = vpop.permute.xlu0 %5081
    %5083 = vrot.lane.b32.xlu0 %v4946, 120
    %v5084 = vpop.permute.xlu0 %5083
    %5085 = vrot.lane.b32.xlu0 %v4952, 120
    %v5086 = vpop.permute.xlu0 %5085
    %5087 = vrot.lane.b32.xlu0 %v4958, 120
    %v5088 = vpop.permute.xlu0 %5087
    %5089 = vrot.lane.b32.xlu0 %v4941, 120
    %v5090 = vpop.permute.xlu0 %5089
    %5091 = vrot.lane.b32.xlu0 %v4947, 120
    %v5092 = vpop.permute.xlu0 %5091
    %5093 = vrot.lane.b32.xlu0 %v4953, 120
    %v5094 = vpop.permute.xlu0 %5093
    %5095 = vrot.lane.b32.xlu0 %v4959, 120
    %v5096 = vpop.permute.xlu0 %5095
    %5097 = vrot.lane.b32.xlu0 %v4942, 120
    %v5098 = vpop.permute.xlu0 %5097
    %5099 = vrot.lane.b32.xlu0 %v4948, 120
    %v5100 = vpop.permute.xlu0 %5099
    %5101 = vrot.lane.b32.xlu0 %v4954, 120
    %v5102 = vpop.permute.xlu0 %5101
    %5103 = vrot.lane.b32.xlu0 %v4960, 120
    %v5104 = vpop.permute.xlu0 %5103
    %v5105 = vsel %vm4162, %v5090, %v5098
    %v5106 = vsel %vm4162, %v5092, %v5100
    %v5107 = vsel %vm4162, %v5094, %v5102
    %v5108 = vsel %vm4162, %v5096, %v5104
    %v5109 = vsel %vm4162, %v5082, %v5090
    %v5110 = vsel %vm4162, %v5084, %v5092
    %v5111 = vsel %vm4162, %v5086, %v5094
    %v5112 = vsel %vm4162, %v5088, %v5096
    %v5113 = vsel %vm4162, %v5074, %v5082
    %v5114 = vsel %vm4162, %v5076, %v5084
    %v5115 = vsel %vm4162, %v5078, %v5086
    %v5116 = vsel %vm4162, %v5080, %v5088
    %v5117 = vsel %vm4162, %v5066, %v5074
    %v5118 = vsel %vm4162, %v5068, %v5076
    %v5119 = vsel %vm4162, %v5070, %v5078
    %v5120 = vsel %vm4162, %v5072, %v5080
    %v5121 = vsel %vm4162, %v5058, %v5066
    %v5122 = vsel %vm4162, %v5060, %v5068
    %v5123 = vsel %vm4162, %v5062, %v5070
    %v5124 = vsel %vm4162, %v5064, %v5072
    %v5125 = vsel %vm4162, %v5098, %v5058
    %v5126 = vsel %vm4162, %v5100, %v5060
    %v5127 = vsel %vm4162, %v5102, %v5062
    %v5128 = vsel %vm4162, %v5104, %v5064
    %v5129 = vmul.f32 %v5121, %v4191
    %v5130 = vmul.f32 %v5117, %v4195
    %v5131 = vmul.f32 %v5113, %v4199
    %v5132 = vmul.f32 %v5109, %v4203
    %v5133 = vmul.f32 %v5105, %v4207
    %v5134 = vmul.f32 %v5125, %v4211
    %v5135 = vmul.f32 %v5122, %v4191
    %v5136 = vmul.f32 %v5118, %v4195
    %v5137 = vmul.f32 %v5114, %v4199
    %v5138 = vmul.f32 %v5110, %v4203
    %v5139 = vmul.f32 %v5106, %v4207
    %v5140 = vmul.f32 %v5126, %v4211
    %v5141 = vmul.f32 %v5123, %v4191
    %v5142 = vmul.f32 %v5119, %v4195
    %v5143 = vmul.f32 %v5115, %v4199
    %v5144 = vmul.f32 %v5111, %v4203
    %v5145 = vmul.f32 %v5107, %v4207
    %v5146 = vmul.f32 %v5127, %v4211
    %v5147 = vmul.f32 %v5124, %v4191
    %v5148 = vmul.f32 %v5120, %v4195
    %v5149 = vmul.f32 %v5116, %v4199
    %v5150 = vmul.f32 %v5112, %v4203
    %v5151 = vmul.f32 %v5108, %v4207
    %v5152 = vmul.f32 %v5128, %v4211
    %v5153 = vld [vmem:[#allocation7 + $0x120] sm:$0xff]
    %v5154 = vld [vmem:[#allocation7 + $0x128] sm:$0xff]
    %v5155 = vld [vmem:[#allocation7 + $0x130] sm:$0xff]
    %v5156 = vld [vmem:[#allocation7 + $0x138] sm:$0xff]
    %v5157 = vpack.c.bf16 %v5154, %v5153
    %v5158 = vpack.c.bf16 %v5156, %v5155
    %v5159 = vpack.c.bf16 %v5039, %v5033
    %v5160 = vpack.c.bf16 %v5040, %v5034
    %v5161 = vpack.c.bf16 %v5041, %v5035
    %v5162 = vpack.c.bf16 %v5042, %v5036
    %v5163 = vpack.c.bf16 %v5043, %v5037
    %v5164 = vpack.c.bf16 %v5044, %v5038
    %v5165 = vpack.c.bf16 %v5051, %v5045
    %v5166 = vpack.c.bf16 %v5052, %v5046
    %v5167 = vpack.c.bf16 %v5053, %v5047
    %v5168 = vpack.c.bf16 %v5054, %v5048
    %v5169 = vpack.c.bf16 %v5055, %v5049
    %v5170 = vpack.c.bf16 %v5056, %v5050
    %v5171 = vpack.c.bf16 %v4943, %v4937
    %v5172 = vpack.c.bf16 %v4944, %v4938
    %v5173 = vpack.c.bf16 %v4945, %v4939
    %v5174 = vpack.c.bf16 %v4946, %v4940
    %v5175 = vpack.c.bf16 %v4947, %v4941
    %v5176 = vpack.c.bf16 %v4948, %v4942
    %v5177 = vpack.c.bf16 %v4955, %v4949
    %v5178 = vpack.c.bf16 %v4956, %v4950
    %v5179 = vpack.c.bf16 %v4957, %v4951
    %v5180 = vpack.c.bf16 %v4958, %v4952
    %v5181 = vpack.c.bf16 %v4959, %v4953
    %v5182 = vpack.c.bf16 %v4960, %v4954
    %v5183 = vpack.c.bf16 %v5135, %v5129
    %v5184 = vpack.c.bf16 %v5136, %v5130
    %v5185 = vpack.c.bf16 %v5137, %v5131
    %v5186 = vpack.c.bf16 %v5138, %v5132
    %v5187 = vpack.c.bf16 %v5139, %v5133
    %v5188 = vpack.c.bf16 %v5140, %v5134
    %v5189 = vpack.c.bf16 %v5147, %v5141
    %v5190 = vpack.c.bf16 %v5148, %v5142
    %v5191 = vpack.c.bf16 %v5149, %v5143
    %v5192 = vpack.c.bf16 %v5150, %v5144
    %v5193 = vpack.c.bf16 %v5151, %v5145
    %v5194 = vpack.c.bf16 %v5152, %v5146
    %5196 = vset.pattern.permute.xlu0 96
    %5197 = vperm.xlu0 %5196, %v5153
    %v5198 = vpop.permute.xlu0 %5197
    %5201 = vset.pattern.permute.xlu0 96
    %5202 = vperm.xlu0 %5201, %v5154
    %v5203 = vpop.permute.xlu0 %5202
    %5206 = vset.pattern.permute.xlu0 96
    %5207 = vperm.xlu0 %5206, %v5155
    %v5208 = vpop.permute.xlu0 %5207
    %5211 = vset.pattern.permute.xlu0 96
    %5212 = vperm.xlu0 %5211, %v5156
    %v5213 = vpop.permute.xlu0 %5212
    %v5216 = vsel %vm4304, %v5157, 0
    %v5219 = vsel %vm4304, %v5158, 0
    %5221 = vmatprep.subr.bf16.mxu0 %v5160
    %5222 = vmatpush1.bf16.msra.mxu0 %v5159
    %5223 = vmatprep.subr.bf16.mxu0 %v5166
    %5224 = vmatpush1.bf16.msra.mxu0 %v5165
    %5225 = vmatprep.subr.bf16.mxu0 %v5172
    %5226 = vmatpush1.bf16.msra.mxu0 %v5171
    %5227 = vmatprep.subr.bf16.mxu0 %v5178
    %5228 = vmatpush1.bf16.msra.mxu0 %v5177
    %5229 = vmatprep.subr.bf16.mxu0 %v5184
    %5230 = vmatpush1.bf16.msra.mxu0 %v5183
    %5231 = vmatprep.subr.bf16.mxu0 %v5190
    %5232 = vmatpush1.bf16.msra.mxu0 %v5189
    %5233 = vmatprep.subr.bf16.mxu0 0
    %5234 = vmatpush1.bf16.msra.mxu0 0
    %5235 = vmatprep.subr.bf16.mxu0 0
    %5236 = vmatpush1.bf16.msra.mxu0 0
    %5237 = vmatprep.subr.bf16.mxu0 0
    %5238 = vmatpush1.bf16.msra.mxu0 0
    %5239 = vmatprep.subr.bf16.mxu0 0
    %5240 = vmatpush1.bf16.msra.mxu0 0
    %5241 = vmatprep.subr.bf16.mxu0 0
    %5242 = vmatpush1.bf16.msra.mxu0 0
    %5243 = vmatprep.subr.bf16.mxu0 0
    %5244 = vmatpush1.bf16.msra.mxu0 0
    %5245 = vmatprep.subr.bf16.mxu0 0
    %5246 = vmatpush1.bf16.msra.mxu0 0
    %5247 = vmatprep.subr.bf16.mxu0 0
    %5248 = vmatpush1.bf16.msra.mxu0 0
    %5249 = vmatprep.subr.bf16.mxu0 0
    %5250 = vmatpush1.bf16.msra.mxu0 0
    %5251 = vmatprep.subr.bf16.mxu0 0
    %5252 = vmatpush1.bf16.msra.mxu0 0
    %5253 = vmatprep.mubr.bf16.mxu0 0
    %5254 = vmatmul.mubr.bf16.gmra.mrb[0].mxu0 %v5216
    %v5255 = vpop.f32.mrb[0].mxu0
    %v5256 = vadd.f32 %v5198, %v5255
    %v5257 = vpop.f32.mrb[0].mxu0
    %v5258 = vadd.f32 %v5198, %v5257
    %v5259 = vpop.f32.mrb[0].mxu0
    %v5260 = vadd.f32 %v5203, %v5259
    %v5261 = vpop.f32.mrb[0].mxu0
    %v5262 = vadd.f32 %v5203, %v5261
    %5263 = vmatprep.mubr.bf16.mxu0 0
    %5264 = vmatmul.mubr.bf16.gmra.mrb[0].mxu0 %v5219
    %v5265 = vpop.f32.mrb[0].mxu0
    %v5266 = vadd.f32 %v5208, %v5265
    %v5267 = vpop.f32.mrb[0].mxu0
    %v5268 = vadd.f32 %v5208, %v5267
    %v5269 = vpop.f32.mrb[0].mxu0
    %v5270 = vadd.f32 %v5213, %v5269
    %v5271 = vpop.f32.mrb[0].mxu0
    %v5272 = vadd.f32 %v5213, %v5271
    %5273 = vdwg.mxu0
    %5274 = vmatprep.subr.bf16.mxu0 %v5162
    %5275 = vmatpush1.bf16.msra.mxu0 %v5161
    %5276 = vmatprep.subr.bf16.mxu0 %v5168
    %5277 = vmatpush1.bf16.msra.mxu0 %v5167
    %5278 = vmatprep.subr.bf16.mxu0 %v5174
    %5279 = vmatpush1.bf16.msra.mxu0 %v5173
    %5280 = vmatprep.subr.bf16.mxu0 %v5180
    %5281 = vmatpush1.bf16.msra.mxu0 %v5179
    %5282 = vmatprep.subr.bf16.mxu0 %v5186
    %5283 = vmatpush1.bf16.msra.mxu0 %v5185
    %5284 = vmatprep.subr.bf16.mxu0 %v5192
    %5285 = vmatpush1.bf16.msra.mxu0 %v5191
    %5286 = vmatprep.subr.bf16.mxu0 0
    %5287 = vmatpush1.bf16.msra.mxu0 0
    %5288 = vmatprep.subr.bf16.mxu0 0
    %5289 = vmatpush1.bf16.msra.mxu0 0
    %5290 = vmatprep.subr.bf16.mxu0 0
    %5291 = vmatpush1.bf16.msra.mxu0 0
    %5292 = vmatprep.subr.bf16.mxu0 0
    %5293 = vmatpush1.bf16.msra.mxu0 0
    %5294 = vmatprep.subr.bf16.mxu0 0
    %5295 = vmatpush1.bf16.msra.mxu0 0
    %5296 = vmatprep.subr.bf16.mxu0 0
    %5297 = vmatpush1.bf16.msra.mxu0 0
    %5298 = vmatprep.subr.bf16.mxu0 0
    %5299 = vmatpush1.bf16.msra.mxu0 0
    %5300 = vmatprep.subr.bf16.mxu0 0
    %5301 = vmatpush1.bf16.msra.mxu0 0
    %5302 = vmatprep.subr.bf16.mxu0 0
    %5303 = vmatpush1.bf16.msra.mxu0 0
    %5304 = vmatprep.subr.bf16.mxu0 0
    %5305 = vmatpush1.bf16.msra.mxu0 0
    %5306 = vmatprep.mubr.bf16.mxu0 0
    %5307 = vmatmul.mubr.bf16.gmra.mrb[0].mxu0 %v5216
    %v5308 = vpop.f32.mrb[0].mxu0
    %v5309 = vadd.f32 %v5198, %v5308
    %v5310 = vpop.f32.mrb[0].mxu0
    %v5311 = vadd.f32 %v5198, %v5310
    %v5312 = vpop.f32.mrb[0].mxu0
    %v5313 = vadd.f32 %v5203, %v5312
    %v5314 = vpop.f32.mrb[0].mxu0
    %v5315 = vadd.f32 %v5203, %v5314
    %5316 = vmatprep.mubr.bf16.mxu0 0
    %5317 = vmatmul.mubr.bf16.gmra.mrb[0].mxu0 %v5219
    %v5318 = vpop.f32.mrb[0].mxu0
    %v5319 = vadd.f32 %v5208, %v5318
    %v5320 = vpop.f32.mrb[0].mxu0
    %v5321 = vadd.f32 %v5208, %v5320
    %v5322 = vpop.f32.mrb[0].mxu0
    %v5323 = vadd.f32 %v5213, %v5322
    %v5324 = vpop.f32.mrb[0].mxu0
    %v5325 = vadd.f32 %v5213, %v5324
    %5326 = vdwg.mxu0
    %5327 = vmatprep.subr.bf16.mxu0 %v5164
    %5328 = vmatpush1.bf16.msra.mxu0 %v5163
    %5329 = vmatprep.subr.bf16.mxu0 %v5170
    %5330 = vmatpush1.bf16.msra.mxu0 %v5169
    %5331 = vmatprep.subr.bf16.mxu0 %v5176
    %5332 = vmatpush1.bf16.msra.mxu0 %v5175
    %5333 = vmatprep.subr.bf16.mxu0 %v5182
    %5334 = vmatpush1.bf16.msra.mxu0 %v5181
    %5335 = vmatprep.subr.bf16.mxu0 %v5188
    %5336 = vmatpush1.bf16.msra.mxu0 %v5187
    %5337 = vmatprep.subr.bf16.mxu0 %v5194
    %5338 = vmatpush1.bf16.msra.mxu0 %v5193
    %5339 = vmatprep.subr.bf16.mxu0 0
    %5340 = vmatpush1.bf16.msra.mxu0 0
    %5341 = vmatprep.subr.bf16.mxu0 0
    %5342 = vmatpush1.bf16.msra.mxu0 0
    %5343 = vmatprep.subr.bf16.mxu0 0
    %5344 = vmatpush1.bf16.msra.mxu0 0
    %5345 = vmatprep.subr.bf16.mxu0 0
    %5346 = vmatpush1.bf16.msra.mxu0 0
    %5347 = vmatprep.subr.bf16.mxu0 0
    %5348 = vmatpush1.bf16.msra.mxu0 0
    %5349 = vmatprep.subr.bf16.mxu0 0
    %5350 = vmatpush1.bf16.msra.mxu0 0
    %5351 = vmatprep.subr.bf16.mxu0 0
    %5352 = vmatpush1.bf16.msra.mxu0 0
    %5353 = vmatprep.subr.bf16.mxu0 0
    %5354 = vmatpush1.bf16.msra.mxu0 0
    %5355 = vmatprep.subr.bf16.mxu0 0
    %5356 = vmatpush1.bf16.msra.mxu0 0
    %5357 = vmatprep.subr.bf16.mxu0 0
    %5358 = vmatpush1.bf16.msra.mxu0 0
    %5359 = vmatprep.mubr.bf16.mxu0 0
    %5360 = vmatmul.mubr.bf16.gmra.mrb[0].mxu0 %v5216
    %v5361 = vpop.f32.mrb[0].mxu0
    %v5362 = vadd.f32 %v5198, %v5361
    %v5363 = vpop.f32.mrb[0].mxu0
    %v5364 = vadd.f32 %v5198, %v5363
    %v5365 = vpop.f32.mrb[0].mxu0
    %v5366 = vadd.f32 %v5203, %v5365
    %v5367 = vpop.f32.mrb[0].mxu0
    %v5368 = vadd.f32 %v5203, %v5367
    %5369 = vmatprep.mubr.bf16.mxu0 0
    %5370 = vmatmul.mubr.bf16.gmra.mrb[0].mxu0 %v5219
    %v5371 = vpop.f32.mrb[0].mxu0
    %v5372 = vadd.f32 %v5208, %v5371
    %v5373 = vpop.f32.mrb[0].mxu0
    %v5374 = vadd.f32 %v5208, %v5373
    %v5375 = vpop.f32.mrb[0].mxu0
    %v5376 = vadd.f32 %v5213, %v5375
    %v5377 = vpop.f32.mrb[0].mxu0
    %v5378 = vadd.f32 %v5213, %v5377
    %5379 = vdwg.mxu0
    %v5380 = vadd.f32 %v5256, %v4494
    %v5381 = vadd.f32 %v5258, %v4495
    %v5382 = vadd.f32 %v5309, %v4496
    %v5383 = vadd.f32 %v5311, %v4497
    %v5384 = vadd.f32 %v5362, %v4498
    %v5385 = vadd.f32 %v5364, %v4499
    %v5386 = vadd.f32 %v5260, %v4500
    %v5387 = vadd.f32 %v5262, %v4501
    %v5388 = vadd.f32 %v5313, %v4502
    %v5389 = vadd.f32 %v5315, %v4503
    %v5390 = vadd.f32 %v5366, %v4504
    %v5391 = vadd.f32 %v5368, %v4505
    %v5392 = vadd.f32 %v5266, %v4506
    %v5393 = vadd.f32 %v5268, %v4507
    %v5394 = vadd.f32 %v5319, %v4508
    %v5395 = vadd.f32 %v5321, %v4509
    %v5396 = vadd.f32 %v5372, %v4510
    %v5397 = vadd.f32 %v5374, %v4511
    %v5398 = vadd.f32 %v5270, %v4512
    %v5399 = vadd.f32 %v5272, %v4513
    %v5400 = vadd.f32 %v5323, %v4514
    %v5401 = vadd.f32 %v5325, %v4515
    %v5402 = vadd.f32 %v5376, %v4516
    %v5403 = vadd.f32 %v5378, %v4517
    %v5404 = vmax.f32 %v5380, 0.0
    %v5405 = vmax.f32 %v5381, 0.0
    %v5406 = vmax.f32 %v5382, 0.0
    %v5407 = vmax.f32 %v5383, 0.0
    %v5408 = vmax.f32 %v5384, 0.0
    %v5409 = vmax.f32 %v5385, 0.0
    %v5410 = vmax.f32 %v5386, 0.0
    %v5411 = vmax.f32 %v5387, 0.0
    %v5412 = vmax.f32 %v5388, 0.0
    %v5413 = vmax.f32 %v5389, 0.0
    %v5414 = vmax.f32 %v5390, 0.0
    %v5415 = vmax.f32 %v5391, 0.0
    %v5416 = vmax.f32 %v5392, 0.0
    %v5417 = vmax.f32 %v5393, 0.0
    %v5418 = vmax.f32 %v5394, 0.0
    %v5419 = vmax.f32 %v5395, 0.0
    %v5420 = vmax.f32 %v5396, 0.0
    %v5421 = vmax.f32 %v5397, 0.0
    %v5422 = vmax.f32 %v5398, 0.0
    %v5423 = vmax.f32 %v5399, 0.0
    %v5424 = vmax.f32 %v5400, 0.0
    %v5425 = vmax.f32 %v5401, 0.0
    %v5426 = vmax.f32 %v5402, 0.0
    %v5427 = vmax.f32 %v5403, 0.0
    %v5428 = vld [vmem:[#allocation8] sm:$0xff]
    %v5429 = vld [vmem:[#allocation8 + $0x8] sm:$0xff]
    %v5430 = vld [vmem:[#allocation8 + $0x10] sm:$0xff]
    %v5431 = vld [vmem:[#allocation8 + $0x18] sm:$0xff]
    %v5432 = vld [vmem:[#allocation8 + $0x20] sm:$0xff]
    %v5433 = vld [vmem:[#allocation8 + $0x28] sm:$0xff]
    %v5434 = vld [vmem:[#allocation8 + $0x30] sm:$0xff]
    %v5435 = vld [vmem:[#allocation8 + $0x38] sm:$0xff]
    %v5436 = vld [vmem:[#allocation8 + $0x40] sm:$0xff]
    %v5437 = vld [vmem:[#allocation8 + $0x48] sm:$0xff]
    %v5438 = vld [vmem:[#allocation8 + $0x50] sm:$0xff]
    %v5439 = vld [vmem:[#allocation8 + $0x58] sm:$0xff]
    %v5440 = vld [vmem:[#allocation8 + $0x60] sm:$0xff]
    %v5441 = vld [vmem:[#allocation8 + $0x68] sm:$0xff]
    %v5442 = vld [vmem:[#allocation8 + $0x70] sm:$0xff]
    %v5443 = vld [vmem:[#allocation8 + $0x78] sm:$0xff]
    %v5444 = vld [vmem:[#allocation8 + $0x80] sm:$0xff]
    %v5445 = vld [vmem:[#allocation8 + $0x88] sm:$0xff]
    %v5446 = vpack.c.bf16 %v5434, %v5428
    %v5447 = vpack.c.bf16 %v5435, %v5429
    %v5448 = vpack.c.bf16 %v5436, %v5430
    %v5449 = vpack.c.bf16 %v5437, %v5431
    %v5450 = vpack.c.bf16 %v5438, %v5432
    %v5451 = vpack.c.bf16 %v5439, %v5433
    %v5452 = vpack.c.bf16 %v5440, %v5440
    %v5453 = vpack.c.bf16 %v5441, %v5441
    %v5454 = vpack.c.bf16 %v5442, %v5442
    %v5455 = vpack.c.bf16 %v5443, %v5443
    %v5456 = vpack.c.bf16 %v5444, %v5444
    %v5457 = vpack.c.bf16 %v5445, %v5445
    %v5458 = vpack.c.bf16 %v5410, %v5404
    %v5459 = vpack.c.bf16 %v5411, %v5405
    %v5460 = vpack.c.bf16 %v5412, %v5406
    %v5461 = vpack.c.bf16 %v5413, %v5407
    %v5462 = vpack.c.bf16 %v5414, %v5408
    %v5463 = vpack.c.bf16 %v5415, %v5409
    %v5464 = vpack.c.bf16 %v5422, %v5416
    %v5465 = vpack.c.bf16 %v5423, %v5417
    %v5466 = vpack.c.bf16 %v5424, %v5418
    %v5467 = vpack.c.bf16 %v5425, %v5419
    %v5468 = vpack.c.bf16 %v5426, %v5420
    %v5469 = vpack.c.bf16 %v5427, %v5421
    %5470 = vmatprep.subr.bf16.mxu0 %v5459
    %5471 = vmatpush1.bf16.xpose.msra.mxu0 %v5458
    %5472 = vmatprep.subr.bf16.mxu0 %v5465
    %5473 = vmatpush1.bf16.xpose.msra.mxu0 %v5464
    %5474 = vmatprep.subr.bf16.mxu0 0
    %5475 = vmatpush1.bf16.xpose.msra.mxu0 0
    %5476 = vmatprep.subr.bf16.mxu0 0
    %5477 = vmatpush1.bf16.xpose.msra.mxu0 0
    %5478 = vmatprep.subr.bf16.mxu0 0
    %5479 = vmatpush1.bf16.xpose.msra.mxu0 0
    %5480 = vmatprep.subr.bf16.mxu0 0
    %5481 = vmatpush1.bf16.xpose.msra.mxu0 0
    %5482 = vmatprep.subr.bf16.mxu0 0
    %5483 = vmatpush1.bf16.xpose.msra.mxu0 0
    %5484 = vmatprep.subr.bf16.mxu0 0
    %5485 = vmatpush1.bf16.xpose.msra.mxu0 0
    %5486 = vmatprep.subr.bf16.mxu0 0
    %5487 = vmatpush1.bf16.xpose.msra.mxu0 0
    %5488 = vmatprep.subr.bf16.mxu0 0
    %5489 = vmatpush1.bf16.xpose.msra.mxu0 0
    %5490 = vmatprep.subr.bf16.mxu0 0
    %5491 = vmatpush1.bf16.xpose.msra.mxu0 0
    %5492 = vmatprep.subr.bf16.mxu0 0
    %5493 = vmatpush1.bf16.xpose.msra.mxu0 0
    %5494 = vmatprep.subr.bf16.mxu0 0
    %5495 = vmatpush1.bf16.xpose.msra.mxu0 0
    %5496 = vmatprep.subr.bf16.mxu0 0
    %5497 = vmatpush1.bf16.xpose.msra.mxu0 0
    %5498 = vmatprep.subr.bf16.mxu0 0
    %5499 = vmatpush1.bf16.xpose.msra.mxu0 0
    %5500 = vmatprep.subr.bf16.mxu0 0
    %5501 = vmatpush1.bf16.xpose.msra.mxu0 0
    %5502 = vmatprep.mubr.bf16.mxu0 %v5447
    %5503 = vmatmul.mubr.bf16.gmra.mrb[0].mxu0 %v5446
    %v5504 = vpop.f32.mrb[0].mxu0
    %v5505 = vadd.f32 0.0, %v5504
    %v5506 = vpop.f32.mrb[0].mxu0
    %v5507 = vpop.f32.mrb[0].mxu0
    %v5508 = vadd.f32 0.0, %v5507
    %v5509 = vpop.f32.mrb[0].mxu0
    %5510 = vmatprep.mubr.bf16.mxu0 %v5453
    %5511 = vmatmul.mubr.bf16.gmra.mrb[0].mxu0 %v5452
    %v5512 = vpop.f32.mrb[0].mxu0
    %v5513 = vadd.f32 0.0, %v5512
    %v5514 = vpop.f32.mrb[0].mxu0
    %v5515 = vpop.f32.mrb[0].mxu0
    %v5516 = vpop.f32.mrb[0].mxu0
    %5517 = vdwg.mxu0
    %5518 = vmatprep.subr.bf16.mxu0 %v5461
    %5519 = vmatpush1.bf16.xpose.msra.mxu0 %v5460
    %5520 = vmatprep.subr.bf16.mxu0 %v5467
    %5521 = vmatpush1.bf16.xpose.msra.mxu0 %v5466
    %5522 = vmatprep.subr.bf16.mxu0 0
    %5523 = vmatpush1.bf16.xpose.msra.mxu0 0
    %5524 = vmatprep.subr.bf16.mxu0 0
    %5525 = vmatpush1.bf16.xpose.msra.mxu0 0
    %5526 = vmatprep.subr.bf16.mxu0 0
    %5527 = vmatpush1.bf16.xpose.msra.mxu0 0
    %5528 = vmatprep.subr.bf16.mxu0 0
    %5529 = vmatpush1.bf16.xpose.msra.mxu0 0
    %5530 = vmatprep.subr.bf16.mxu0 0
    %5531 = vmatpush1.bf16.xpose.msra.mxu0 0
    %5532 = vmatprep.subr.bf16.mxu0 0
    %5533 = vmatpush1.bf16.xpose.msra.mxu0 0
    %5534 = vmatprep.subr.bf16.mxu0 0
    %5535 = vmatpush1.bf16.xpose.msra.mxu0 0
    %5536 = vmatprep.subr.bf16.mxu0 0
    %5537 = vmatpush1.bf16.xpose.msra.mxu0 0
    %5538 = vmatprep.subr.bf16.mxu0 0
    %5539 = vmatpush1.bf16.xpose.msra.mxu0 0
    %5540 = vmatprep.subr.bf16.mxu0 0
    %5541 = vmatpush1.bf16.xpose.msra.mxu0 0
    %5542 = vmatprep.subr.bf16.mxu0 0
    %5543 = vmatpush1.bf16.xpose.msra.mxu0 0
    %5544 = vmatprep.subr.bf16.mxu0 0
    %5545 = vmatpush1.bf16.xpose.msra.mxu0 0
    %5546 = vmatprep.subr.bf16.mxu0 0
    %5547 = vmatpush1.bf16.xpose.msra.mxu0 0
    %5548 = vmatprep.subr.bf16.mxu0 0
    %5549 = vmatpush1.bf16.xpose.msra.mxu0 0
    %5550 = vmatprep.mubr.bf16.mxu0 %v5449
    %5551 = vmatmul.mubr.bf16.gmra.mrb[0].mxu0 %v5448
    %v5552 = vpop.f32.mrb[0].mxu0
    %v5553 = vadd.f32 %v5505, %v5552
    %v5554 = vpop.f32.mrb[0].mxu0
    %v5555 = vpop.f32.mrb[0].mxu0
    %v5556 = vadd.f32 %v5508, %v5555
    %v5557 = vpop.f32.mrb[0].mxu0
    %5558 = vmatprep.mubr.bf16.mxu0 %v5455
    %5559 = vmatmul.mubr.bf16.gmra.mrb[0].mxu0 %v5454
    %v5560 = vpop.f32.mrb[0].mxu0
    %v5561 = vadd.f32 %v5513, %v5560
    %v5562 = vpop.f32.mrb[0].mxu0
    %v5563 = vpop.f32.mrb[0].mxu0
    %v5564 = vpop.f32.mrb[0].mxu0
    %5565 = vdwg.mxu0
    %5566 = vmatprep.subr.bf16.mxu0 %v5463
    %5567 = vmatpush1.bf16.xpose.msra.mxu0 %v5462
    %5568 = vmatprep.subr.bf16.mxu0 %v5469
    %5569 = vmatpush1.bf16.xpose.msra.mxu0 %v5468
    %5570 = vmatprep.subr.bf16.mxu0 0
    %5571 = vmatpush1.bf16.xpose.msra.mxu0 0
    %5572 = vmatprep.subr.bf16.mxu0 0
    %5573 = vmatpush1.bf16.xpose.msra.mxu0 0
    %5574 = vmatprep.subr.bf16.mxu0 0
    %5575 = vmatpush1.bf16.xpose.msra.mxu0 0
    %5576 = vmatprep.subr.bf16.mxu0 0
    %5577 = vmatpush1.bf16.xpose.msra.mxu0 0
    %5578 = vmatprep.subr.bf16.mxu0 0
    %5579 = vmatpush1.bf16.xpose.msra.mxu0 0
    %5580 = vmatprep.subr.bf16.mxu0 0
    %5581 = vmatpush1.bf16.xpose.msra.mxu0 0
    %5582 = vmatprep.subr.bf16.mxu0 0
    %5583 = vmatpush1.bf16.xpose.msra.mxu0 0
    %5584 = vmatprep.subr.bf16.mxu0 0
    %5585 = vmatpush1.bf16.xpose.msra.mxu0 0
    %5586 = vmatprep.subr.bf16.mxu0 0
    %5587 = vmatpush1.bf16.xpose.msra.mxu0 0
    %5588 = vmatprep.subr.bf16.mxu0 0
    %5589 = vmatpush1.bf16.xpose.msra.mxu0 0
    %5590 = vmatprep.subr.bf16.mxu0 0
    %5591 = vmatpush1.bf16.xpose.msra.mxu0 0
    %5592 = vmatprep.subr.bf16.mxu0 0
    %5593 = vmatpush1.bf16.xpose.msra.mxu0 0
    %5594 = vmatprep.subr.bf16.mxu0 0
    %5595 = vmatpush1.bf16.xpose.msra.mxu0 0
    %5596 = vmatprep.subr.bf16.mxu0 0
    %5597 = vmatpush1.bf16.xpose.msra.mxu0 0
    %5598 = vmatprep.mubr.bf16.mxu0 %v5451
    %5599 = vmatmul.mubr.bf16.gmra.mrb[0].mxu0 %v5450
    %v5600 = vpop.f32.mrb[0].mxu0
    %v5601 = vadd.f32 %v5553, %v5600
    %v5602 = vpop.f32.mrb[0].mxu0
    %v5603 = vpop.f32.mrb[0].mxu0
    %v5604 = vadd.f32 %v5556, %v5603
    %v5605 = vpop.f32.mrb[0].mxu0
    %5606 = vmatprep.mubr.bf16.mxu0 %v5457
    %5607 = vmatmul.mubr.bf16.gmra.mrb[0].mxu0 %v5456
    %v5608 = vpop.f32.mrb[0].mxu0
    %v5609 = vadd.f32 %v5561, %v5608
    %v5610 = vpop.f32.mrb[0].mxu0
    %v5611 = vpop.f32.mrb[0].mxu0
    %v5612 = vpop.f32.mrb[0].mxu0
    %5613 = vdwg.mxu0
    %vm5614 = vcmask 261120
    %5615 = vst.msk [vmem:[#allocation10] sm:$0xff] %vm5614, %v5601
    %5616 = vst.msk [vmem:[#allocation10 + $0x8] sm:$0xff] %vm5614, %v5604
    %5617 = vst.msk [vmem:[#allocation10 + $0x10] sm:$0xff] %vm5614, %v5609
    %v5619 = vsel %vm5614, %v5609, 0
    %v5622 = vsel %vm5614, %v5601, 0
    %v5625 = vsel %vm5614, %v5604, 0
    %5627 = vmatprep.subr.mxu0 0.0
    %5628 = vmatpush1.xpose.msra.mxu0 %v5622
    %5629 = vmatprep.subr.mxu0 0.0
    %5630 = vmatpush1.xpose.msra.mxu0 %v5625
    %5631 = vmatprep.subr.mxu0 0.0
    %5632 = vmatpush1.xpose.msra.mxu0 0.0
    %5633 = vmatprep.subr.mxu0 0.0
    %5634 = vmatpush1.xpose.msra.mxu0 0.0
    %5635 = vmatprep.subr.mxu0 0.0
    %5636 = vmatpush1.xpose.msra.mxu0 0.0
    %5637 = vmatprep.subr.mxu0 0.0
    %5638 = vmatpush1.xpose.msra.mxu0 0.0
    %5639 = vmatprep.subr.mxu0 0.0
    %5640 = vmatpush1.xpose.msra.mxu0 0.0
    %5641 = vmatprep.subr.mxu0 0.0
    %5642 = vmatpush1.xpose.msra.mxu0 0.0
    %5643 = vmatprep.subr.mxu0 0.0
    %5644 = vmatpush1.xpose.msra.mxu0 0.0
    %5645 = vmatprep.subr.mxu0 0.0
    %5646 = vmatpush1.xpose.msra.mxu0 0.0
    %5647 = vmatprep.subr.mxu0 0.0
    %5648 = vmatpush1.xpose.msra.mxu0 0.0
    %5649 = vmatprep.subr.mxu0 0.0
    %5650 = vmatpush1.xpose.msra.mxu0 0.0
    %5651 = vmatprep.subr.mxu0 0.0
    %5652 = vmatpush1.xpose.msra.mxu0 0.0
    %5653 = vmatprep.subr.mxu0 0.0
    %5654 = vmatpush1.xpose.msra.mxu0 0.0
    %5655 = vmatprep.subr.mxu0 0.0
    %5656 = vmatpush1.xpose.msra.mxu0 0.0
    %5657 = vmatprep.subr.mxu0 0.0
    %5658 = vmatpush1.xpose.msra.mxu0 0.0
    %5659 = vmatprep.subr.mxu0 0.0
    %5660 = vmatpush1.xpose.msra.mxu0 0.0
    %5661 = vmatprep.subr.mxu0 0.0
    %5662 = vmatpush1.xpose.msra.mxu0 0.0
    %5663 = vmatprep.subr.mxu0 0.0
    %5664 = vmatpush1.xpose.msra.mxu0 0.0
    %5665 = vmatprep.subr.mxu0 0.0
    %5666 = vmatpush1.xpose.msra.mxu0 0.0
    %5667 = vmatprep.subr.mxu0 0.0
    %5668 = vmatpush1.xpose.msra.mxu0 0.0
    %5669 = vmatprep.subr.mxu0 0.0
    %5670 = vmatpush1.xpose.msra.mxu0 0.0
    %5671 = vmatprep.subr.mxu0 0.0
    %5672 = vmatpush1.xpose.msra.mxu0 0.0
    %5673 = vmatprep.subr.mxu0 0.0
    %5674 = vmatpush1.xpose.msra.mxu0 0.0
    %5675 = vmatprep.subr.mxu0 0.0
    %5676 = vmatpush1.xpose.msra.mxu0 0.0
    %5677 = vmatprep.subr.mxu0 0.0
    %5678 = vmatpush1.xpose.msra.mxu0 0.0
    %5679 = vmatprep.subr.mxu0 0.0
    %5680 = vmatpush1.xpose.msra.mxu0 0.0
    %5681 = vmatprep.subr.mxu0 0.0
    %5682 = vmatpush1.xpose.msra.mxu0 0.0
    %5683 = vmatprep.subr.mxu0 0.0
    %5684 = vmatpush1.xpose.msra.mxu0 0.0
    %5685 = vmatprep.subr.mxu0 0.0
    %5686 = vmatpush1.xpose.msra.mxu0 0.0
    %5687 = vmatprep.subr.mxu0 0.0
    %5688 = vmatpush1.xpose.msra.mxu0 0.0
    %5689 = vmatprep.subr.mxu0 0.0
    %5690 = vmatpush1.xpose.msra.mxu0 0.0
    %5691 = vmatprep.mubr.f32.mxu0 0.0
    %5692 = vmatmul.mubr.f32.gmra.mrb[0].mxu0 %v5619
    %v5693 = vpop.f32.mrb[0].mxu0
    %v5694 = vadd.f32 0.0, %v5693
    %v5695 = vpop.f32.mrb[0].mxu0
    %5696 = vdwg.mxu0
    %v5697 = vand.u32 2147483647, %v5694
    %vm5698 = vcmask 130048
    %v5699 = vsel %vm5698, %v5697, 0.0
    %5700 = vadd.xlane.f32.xlu0 %v5699
    %v5701 = vpop.xlane.xlu0 %5700
    %v5702 = vmax.f32 %v5701, 1e-12
    %v5703 = vrcp.pop %v5702
    %v5704 = vmul.f32 %v5694, %v5703
    %v5705 = vld [vmem:[#allocation5] sm:$0xff]
    %v5706 = vld [vmem:[#allocation5 + $0x8] sm:$0xff]
    %v5707 = vld [vmem:[#allocation5 + $0x10] sm:$0xff]
    %v5709 = vsel %vm5698, %v5704, 0
    %5711 = vmatprep.subr.mxu0 0.0
    %5712 = vmatpush1.msra.mxu0 %v5705
    %5713 = vmatprep.subr.mxu0 0.0
    %5714 = vmatpush1.msra.mxu0 %v5706
    %5715 = vmatprep.subr.mxu0 0.0
    %5716 = vmatpush1.msra.mxu0 0.0
    %5717 = vmatprep.subr.mxu0 0.0
    %5718 = vmatpush1.msra.mxu0 0.0
    %5719 = vmatprep.subr.mxu0 0.0
    %5720 = vmatpush1.msra.mxu0 0.0
    %5721 = vmatprep.subr.mxu0 0.0
    %5722 = vmatpush1.msra.mxu0 0.0
    %5723 = vmatprep.subr.mxu0 0.0
    %5724 = vmatpush1.msra.mxu0 0.0
    %5725 = vmatprep.subr.mxu0 0.0
    %5726 = vmatpush1.msra.mxu0 0.0
    %5727 = vmatprep.subr.mxu0 0.0
    %5728 = vmatpush1.msra.mxu0 0.0
    %5729 = vmatprep.subr.mxu0 0.0
    %5730 = vmatpush1.msra.mxu0 0.0
    %5731 = vmatprep.subr.mxu0 0.0
    %5732 = vmatpush1.msra.mxu0 0.0
    %5733 = vmatprep.subr.mxu0 0.0
    %5734 = vmatpush1.msra.mxu0 0.0
    %5735 = vmatprep.subr.mxu0 0.0
    %5736 = vmatpush1.msra.mxu0 0.0
    %5737 = vmatprep.subr.mxu0 0.0
    %5738 = vmatpush1.msra.mxu0 0.0
    %5739 = vmatprep.subr.mxu0 0.0
    %5740 = vmatpush1.msra.mxu0 0.0
    %5741 = vmatprep.subr.mxu0 0.0
    %5742 = vmatpush1.msra.mxu0 0.0
    %5743 = vmatprep.subr.mxu0 0.0
    %5744 = vmatpush1.msra.mxu0 0.0
    %5745 = vmatprep.subr.mxu0 0.0
    %5746 = vmatpush1.msra.mxu0 0.0
    %5747 = vmatprep.subr.mxu0 0.0
    %5748 = vmatpush1.msra.mxu0 0.0
    %5749 = vmatprep.subr.mxu0 0.0
    %5750 = vmatpush1.msra.mxu0 0.0
    %5751 = vmatprep.subr.mxu0 0.0
    %5752 = vmatpush1.msra.mxu0 0.0
    %5753 = vmatprep.subr.mxu0 0.0
    %5754 = vmatpush1.msra.mxu0 0.0
    %5755 = vmatprep.subr.mxu0 0.0
    %5756 = vmatpush1.msra.mxu0 0.0
    %5757 = vmatprep.subr.mxu0 0.0
    %5758 = vmatpush1.msra.mxu0 0.0
    %5759 = vmatprep.subr.mxu0 0.0
    %5760 = vmatpush1.msra.mxu0 0.0
    %5761 = vmatprep.subr.mxu0 0.0
    %5762 = vmatpush1.msra.mxu0 0.0
    %5763 = vmatprep.subr.mxu0 0.0
    %5764 = vmatpush1.msra.mxu0 0.0
    %5765 = vmatprep.subr.mxu0 0.0
    %5766 = vmatpush1.msra.mxu0 0.0
    %5767 = vmatprep.subr.mxu0 0.0
    %5768 = vmatpush1.msra.mxu0 0.0
    %5769 = vmatprep.subr.mxu0 0.0
    %5770 = vmatpush1.msra.mxu0 0.0
    %5771 = vmatprep.subr.mxu0 0.0
    %5772 = vmatpush1.msra.mxu0 0.0
    %5773 = vmatprep.subr.mxu0 0.0
    %5774 = vmatpush1.msra.mxu0 0.0
    %5775 = vmatprep.mubr.f32.mxu0 0.0
    %5776 = vmatmul.mubr.f32.gmra.mrb[0].mxu0 %v5709
    %v5777 = vpop.f32.mrb[0].mxu0
    %v5778 = vadd.f32 0.0, %v5777
    %v5779 = vpop.f32.mrb[0].mxu0
    %5780 = vdwg.mxu0
    %5781 = vst [vmem:[#allocation11] sm:$0xff] %v5778
    %5782 = vmatprep.subr.mxu0 0.0
    %5783 = vmatpush1.xpose.msra.mxu0 %v5705
    %5784 = vmatprep.subr.mxu0 0.0
    %5785 = vmatpush1.xpose.msra.mxu0 %v5706
    %5786 = vmatprep.subr.mxu0 0.0
    %5787 = vmatpush1.xpose.msra.mxu0 %v5707
    %5788 = vmatprep.subr.mxu0 0.0
    %5789 = vmatpush1.xpose.msra.mxu0 0.0
    %5790 = vmatprep.subr.mxu0 0.0
    %5791 = vmatpush1.xpose.msra.mxu0 0.0
    %5792 = vmatprep.subr.mxu0 0.0
    %5793 = vmatpush1.xpose.msra.mxu0 0.0
    %5794 = vmatprep.subr.mxu0 0.0
    %5795 = vmatpush1.xpose.msra.mxu0 0.0
    %5796 = vmatprep.subr.mxu0 0.0
    %5797 = vmatpush1.xpose.msra.mxu0 0.0
    %5798 = vmatprep.subr.mxu0 0.0
    %5799 = vmatpush1.xpose.msra.mxu0 0.0
    %5800 = vmatprep.subr.mxu0 0.0
    %5801 = vmatpush1.xpose.msra.mxu0 0.0
    %5802 = vmatprep.subr.mxu0 0.0
    %5803 = vmatpush1.xpose.msra.mxu0 0.0
    %5804 = vmatprep.subr.mxu0 0.0
    %5805 = vmatpush1.xpose.msra.mxu0 0.0
    %5806 = vmatprep.subr.mxu0 0.0
    %5807 = vmatpush1.xpose.msra.mxu0 0.0
    %5808 = vmatprep.subr.mxu0 0.0
    %5809 = vmatpush1.xpose.msra.mxu0 0.0
    %5810 = vmatprep.subr.mxu0 0.0
    %5811 = vmatpush1.xpose.msra.mxu0 0.0
    %5812 = vmatprep.subr.mxu0 0.0
    %5813 = vmatpush1.xpose.msra.mxu0 0.0
    %5814 = vmatprep.subr.mxu0 0.0
    %5815 = vmatpush1.xpose.msra.mxu0 0.0
    %5816 = vmatprep.subr.mxu0 0.0
    %5817 = vmatpush1.xpose.msra.mxu0 0.0
    %5818 = vmatprep.subr.mxu0 0.0
    %5819 = vmatpush1.xpose.msra.mxu0 0.0
    %5820 = vmatprep.subr.mxu0 0.0
    %5821 = vmatpush1.xpose.msra.mxu0 0.0
    %5822 = vmatprep.subr.mxu0 0.0
    %5823 = vmatpush1.xpose.msra.mxu0 0.0
    %5824 = vmatprep.subr.mxu0 0.0
    %5825 = vmatpush1.xpose.msra.mxu0 0.0
    %5826 = vmatprep.subr.mxu0 0.0
    %5827 = vmatpush1.xpose.msra.mxu0 0.0
    %5828 = vmatprep.subr.mxu0 0.0
    %5829 = vmatpush1.xpose.msra.mxu0 0.0
    %5830 = vmatprep.subr.mxu0 0.0
    %5831 = vmatpush1.xpose.msra.mxu0 0.0
    %5832 = vmatprep.subr.mxu0 0.0
    %5833 = vmatpush1.xpose.msra.mxu0 0.0
    %5834 = vmatprep.subr.mxu0 0.0
    %5835 = vmatpush1.xpose.msra.mxu0 0.0
    %5836 = vmatprep.subr.mxu0 0.0
    %5837 = vmatpush1.xpose.msra.mxu0 0.0
    %5838 = vmatprep.subr.mxu0 0.0
    %5839 = vmatpush1.xpose.msra.mxu0 0.0
    %5840 = vmatprep.subr.mxu0 0.0
    %5841 = vmatpush1.xpose.msra.mxu0 0.0
    %5842 = vmatprep.subr.mxu0 0.0
    %5843 = vmatpush1.xpose.msra.mxu0 0.0
    %5844 = vmatprep.subr.mxu0 0.0
    %5845 = vmatpush1.xpose.msra.mxu0 0.0
    %5846 = vmatprep.mubr.f32.mxu0 0.0
    %5847 = vmatmul.mubr.f32.gmra.mrb[0].mxu0 %v5705
    %v5848 = vpop.f32.mrb[0].mxu0
    %v5849 = vadd.f32 0.0, %v5848
    %v5850 = vpop.f32.mrb[0].mxu0
    %5851 = vmatprep.mubr.f32.mxu0 0.0
    %5852 = vmatmul.mubr.f32.gmra.mrb[0].mxu0 %v5706
    %v5853 = vpop.f32.mrb[0].mxu0
    %v5854 = vadd.f32 0.0, %v5853
    %v5855 = vpop.f32.mrb[0].mxu0
    %5856 = vmatprep.mubr.f32.mxu0 0.0
    %5857 = vmatmul.mubr.f32.gmra.mrb[0].mxu0 %v5707
    %v5858 = vpop.f32.mrb[0].mxu0
    %v5859 = vadd.f32 0.0, %v5858
    %v5860 = vpop.f32.mrb[0].mxu0
    %5861 = vdwg.mxu0
    %v5862 = vmul.f32 %v5705, %v5705
    %v5863 = vmul.f32 %v5706, %v5706
    %v5864 = vmul.f32 %v5707, %v5707
    %5865 = vadd.xlane.f32.xlu0 %v5862
    %v5866 = vpop.xlane.xlu0 %5865
    %5867 = vadd.xlane.f32.xlu0 %v5863
    %v5868 = vpop.xlane.xlu0 %5867
    %5869 = vadd.xlane.f32.xlu0 %v5864
    %v5870 = vpop.xlane.xlu0 %5869
    %5871 = vmatprep.subr.mxu0 0.0
    %5872 = vmatpush1.xpose.msra.mxu0 %v5862
    %5873 = vmatprep.subr.mxu0 0.0
    %5874 = vmatpush1.xpose.msra.mxu0 %v5863
    %5875 = vmatprep.subr.mxu0 0.0
    %5876 = vmatpush1.xpose.msra.mxu0 %v5864
    %5877 = vmatprep.subr.mxu0 0.0
    %5878 = vmatpush1.xpose.msra.mxu0 0.0
    %5879 = vmatprep.subr.mxu0 0.0
    %5880 = vmatpush1.xpose.msra.mxu0 0.0
    %5881 = vmatprep.subr.mxu0 0.0
    %5882 = vmatpush1.xpose.msra.mxu0 0.0
    %5883 = vmatprep.subr.mxu0 0.0
    %5884 = vmatpush1.xpose.msra.mxu0 0.0
    %5885 = vmatprep.subr.mxu0 0.0
    %5886 = vmatpush1.xpose.msra.mxu0 0.0
    %5887 = vmatprep.subr.mxu0 0.0
    %5888 = vmatpush1.xpose.msra.mxu0 0.0
    %5889 = vmatprep.subr.mxu0 0.0
    %5890 = vmatpush1.xpose.msra.mxu0 0.0
    %5891 = vmatprep.subr.mxu0 0.0
    %5892 = vmatpush1.xpose.msra.mxu0 0.0
    %5893 = vmatprep.subr.mxu0 0.0
    %5894 = vmatpush1.xpose.msra.mxu0 0.0
    %5895 = vmatprep.subr.mxu0 0.0
    %5896 = vmatpush1.xpose.msra.mxu0 0.0
    %5897 = vmatprep.subr.mxu0 0.0
    %5898 = vmatpush1.xpose.msra.mxu0 0.0
    %5899 = vmatprep.subr.mxu0 0.0
    %5900 = vmatpush1.xpose.msra.mxu0 0.0
    %5901 = vmatprep.subr.mxu0 0.0
    %5902 = vmatpush1.xpose.msra.mxu0 0.0
    %5903 = vmatprep.subr.mxu0 0.0
    %5904 = vmatpush1.xpose.msra.mxu0 0.0
    %5905 = vmatprep.subr.mxu0 0.0
    %5906 = vmatpush1.xpose.msra.mxu0 0.0
    %5907 = vmatprep.subr.mxu0 0.0
    %5908 = vmatpush1.xpose.msra.mxu0 0.0
    %5909 = vmatprep.subr.mxu0 0.0
    %5910 = vmatpush1.xpose.msra.mxu0 0.0
    %5911 = vmatprep.subr.mxu0 0.0
    %5912 = vmatpush1.xpose.msra.mxu0 0.0
    %5913 = vmatprep.subr.mxu0 0.0
    %5914 = vmatpush1.xpose.msra.mxu0 0.0
    %5915 = vmatprep.subr.mxu0 0.0
    %5916 = vmatpush1.xpose.msra.mxu0 0.0
    %5917 = vmatprep.subr.mxu0 0.0
    %5918 = vmatpush1.xpose.msra.mxu0 0.0
    %5919 = vmatprep.subr.mxu0 0.0
    %5920 = vmatpush1.xpose.msra.mxu0 0.0
    %5921 = vmatprep.subr.mxu0 0.0
    %5922 = vmatpush1.xpose.msra.mxu0 0.0
    %5923 = vmatprep.subr.mxu0 0.0
    %5924 = vmatpush1.xpose.msra.mxu0 0.0
    %5925 = vmatprep.subr.mxu0 0.0
    %5926 = vmatpush1.xpose.msra.mxu0 0.0
    %5927 = vmatprep.subr.mxu0 0.0
    %5928 = vmatpush1.xpose.msra.mxu0 0.0
    %5929 = vmatprep.subr.mxu0 0.0
    %5930 = vmatpush1.xpose.msra.mxu0 0.0
    %5931 = vmatprep.subr.mxu0 0.0
    %5932 = vmatpush1.xpose.msra.mxu0 0.0
    %5933 = vmatprep.subr.mxu0 0.0
    %5934 = vmatpush1.xpose.msra.mxu0 0.0
    %5935 = vmatprep.mubr.f32.mxu0 0.0
    %5936 = vmatmul.mubr.f32.gmra.mrb[0].mxu0 1.0
    %v5937 = vpop.f32.mrb[0].mxu0
    %v5938 = vadd.f32 0.0, %v5937
    %v5939 = vpop.f32.mrb[0].mxu0
    %5940 = vdwg.mxu0
    %v5941 = vlaneseq
    %v5942 = vshrl.u32 %v5941, 7
    %v5943 = vsub.s32 0, %v5942
    %v5944 = vrot.slane %v5938, %v5943
    %v5945 = vadd.f32 %v5866, %v5944
    %v5946 = vadd.f32 %v5868, %v5944
    %v5947 = vadd.f32 %v5870, %v5944
    %v5948 = vmul.f32 %v5849, 2.0
    %v5949 = vmul.f32 %v5854, 2.0
    %v5950 = vmul.f32 %v5859, 2.0
    %v5951 = vsub.f32 %v5945, %v5948
    %v5952 = vsub.f32 %v5946, %v5949
    %v5953 = vsub.f32 %v5947, %v5950
    %v5954 = vmax.f32 %v5951, 0.0
    %v5955 = vmax.f32 %v5952, 0.0
    %v5956 = vmax.f32 %v5953, 0.0
    %v5957 = vcvt.s32.f32 %v153
    %v5958 = vsel %vm519, %v5954, inf
    %5959 = vmin.xlane.f32.xlu0 %v5958
    %v5960 = vpop.xlane.xlu0 %5959
    %v5961 = vsel %vm519, %v5955, inf
    %5962 = vmin.xlane.f32.xlu0 %v5961
    %v5963 = vpop.xlane.xlu0 %5962
    %v5964 = vsel %vm519, %v5956, inf
    %5965 = vmin.xlane.f32.xlu0 %v5964
    %v5966 = vpop.xlane.xlu0 %5965
    %vm5967 = vcmp.le.f32.partialorder %v5954, %v5960
    %vm5968 = vcmp.le.f32.partialorder %v5955, %v5963
    %vm5969 = vcmp.le.f32.partialorder %v5956, %v5966
    %v5970 = vsel %vm5967, %v5957, 24.0
    %v5971 = vsel %vm5968, %v5957, 24.0
    %v5972 = vsel %vm5969, %v5957, 24.0
    %v5973 = vsel %vm519, %v5970, inf
    %5974 = vmin.xlane.f32.xlu0 %v5973
    %v5975 = vpop.xlane.xlu0 %5974
    %v5976 = vsel %vm519, %v5971, inf
    %5977 = vmin.xlane.f32.xlu0 %v5976
    %v5978 = vpop.xlane.xlu0 %5977
    %v5979 = vsel %vm519, %v5972, inf
    %5980 = vmin.xlane.f32.xlu0 %v5979
    %v5981 = vpop.xlane.xlu0 %5980
    %vm5982 = vcmp.eq.f32.partialorder %v5957, %v5975
    %vm5983 = vcmp.eq.f32.partialorder %v5957, %v5978
    %vm5984 = vcmp.eq.f32.partialorder %v5957, %v5981
    %v5985 = vsel %vm5982, 1e+30, %v5954
    %v5986 = vsel %vm5983, 1e+30, %v5955
    %v5987 = vsel %vm5984, 1e+30, %v5956
    %v5988 = vsel %vm5982, 1.0, 0.0
    %v5989 = vsel %vm5983, 1.0, 0.0
    %v5990 = vsel %vm5984, 1.0, 0.0
    %v5991 = vsel %vm519, %v5985, inf
    %5992 = vmin.xlane.f32.xlu0 %v5991
    %v5993 = vpop.xlane.xlu0 %5992
    %v5994 = vsel %vm519, %v5986, inf
    %5995 = vmin.xlane.f32.xlu0 %v5994
    %v5996 = vpop.xlane.xlu0 %5995
    %v5997 = vsel %vm519, %v5987, inf
    %5998 = vmin.xlane.f32.xlu0 %v5997
    %v5999 = vpop.xlane.xlu0 %5998
    %vm6000 = vcmp.le.f32.partialorder %v5985, %v5993
    %vm6001 = vcmp.le.f32.partialorder %v5986, %v5996
    %vm6002 = vcmp.le.f32.partialorder %v5987, %v5999
    %v6003 = vsel %vm6000, %v5957, 24.0
    %v6004 = vsel %vm6001, %v5957, 24.0
    %v6005 = vsel %vm6002, %v5957, 24.0
    %v6006 = vsel %vm519, %v6003, inf
    %6007 = vmin.xlane.f32.xlu0 %v6006
    %v6008 = vpop.xlane.xlu0 %6007
    %v6009 = vsel %vm519, %v6004, inf
    %6010 = vmin.xlane.f32.xlu0 %v6009
    %v6011 = vpop.xlane.xlu0 %6010
    %v6012 = vsel %vm519, %v6005, inf
    %6013 = vmin.xlane.f32.xlu0 %v6012
    %v6014 = vpop.xlane.xlu0 %6013
    %vm6015 = vcmp.eq.f32.partialorder %v5957, %v6008
    %vm6016 = vcmp.eq.f32.partialorder %v5957, %v6011
    %vm6017 = vcmp.eq.f32.partialorder %v5957, %v6014
    %v6018 = vsel %vm6015, 1e+30, %v5985
    %v6019 = vsel %vm6016, 1e+30, %v5986
    %v6020 = vsel %vm6017, 1e+30, %v5987
    %v6021 = vsel %vm6015, 1.0, %v5988
    %v6022 = vsel %vm6016, 1.0, %v5989
    %v6023 = vsel %vm6017, 1.0, %v5990
    %v6024 = vsel %vm519, %v6018, inf
    %6025 = vmin.xlane.f32.xlu0 %v6024
    %v6026 = vpop.xlane.xlu0 %6025
    %v6027 = vsel %vm519, %v6019, inf
    %6028 = vmin.xlane.f32.xlu0 %v6027
    %v6029 = vpop.xlane.xlu0 %6028
    %v6030 = vsel %vm519, %v6020, inf
    %6031 = vmin.xlane.f32.xlu0 %v6030
    %v6032 = vpop.xlane.xlu0 %6031
    %vm6033 = vcmp.le.f32.partialorder %v6018, %v6026
    %vm6034 = vcmp.le.f32.partialorder %v6019, %v6029
    %vm6035 = vcmp.le.f32.partialorder %v6020, %v6032
    %v6036 = vsel %vm6033, %v5957, 24.0
    %v6037 = vsel %vm6034, %v5957, 24.0
    %v6038 = vsel %vm6035, %v5957, 24.0
    %v6039 = vsel %vm519, %v6036, inf
    %6040 = vmin.xlane.f32.xlu0 %v6039
    %v6041 = vpop.xlane.xlu0 %6040
    %v6042 = vsel %vm519, %v6037, inf
    %6043 = vmin.xlane.f32.xlu0 %v6042
    %v6044 = vpop.xlane.xlu0 %6043
    %v6045 = vsel %vm519, %v6038, inf
    %6046 = vmin.xlane.f32.xlu0 %v6045
    %v6047 = vpop.xlane.xlu0 %6046
    %vm6048 = vcmp.eq.f32.partialorder %v5957, %v6041
    %vm6049 = vcmp.eq.f32.partialorder %v5957, %v6044
    %vm6050 = vcmp.eq.f32.partialorder %v5957, %v6047
    %v6051 = vsel %vm6048, 1e+30, %v6018
    %v6052 = vsel %vm6049, 1e+30, %v6019
    %v6053 = vsel %vm6050, 1e+30, %v6020
    %v6054 = vsel %vm6048, 1.0, %v6021
    %v6055 = vsel %vm6049, 1.0, %v6022
    %v6056 = vsel %vm6050, 1.0, %v6023
    %v6057 = vsel %vm519, %v6051, inf
    %6058 = vmin.xlane.f32.xlu0 %v6057
    %v6059 = vpop.xlane.xlu0 %6058
    %v6060 = vsel %vm519, %v6052, inf
    %6061 = vmin.xlane.f32.xlu0 %v6060
    %v6062 = vpop.xlane.xlu0 %6061
    %v6063 = vsel %vm519, %v6053, inf
    %6064 = vmin.xlane.f32.xlu0 %v6063
    %v6065 = vpop.xlane.xlu0 %6064
    %vm6066 = vcmp.le.f32.partialorder %v6051, %v6059
    %vm6067 = vcmp.le.f32.partialorder %v6052, %v6062
    %vm6068 = vcmp.le.f32.partialorder %v6053, %v6065
    %v6069 = vsel %vm6066, %v5957, 24.0
    %v6070 = vsel %vm6067, %v5957, 24.0
    %v6071 = vsel %vm6068, %v5957, 24.0
    %v6072 = vsel %vm519, %v6069, inf
    %6073 = vmin.xlane.f32.xlu0 %v6072
    %v6074 = vpop.xlane.xlu0 %6073
    %v6075 = vsel %vm519, %v6070, inf
    %6076 = vmin.xlane.f32.xlu0 %v6075
    %v6077 = vpop.xlane.xlu0 %6076
    %v6078 = vsel %vm519, %v6071, inf
    %6079 = vmin.xlane.f32.xlu0 %v6078
    %v6080 = vpop.xlane.xlu0 %6079
    %vm6081 = vcmp.eq.f32.partialorder %v5957, %v6074
    %vm6082 = vcmp.eq.f32.partialorder %v5957, %v6077
    %vm6083 = vcmp.eq.f32.partialorder %v5957, %v6080
    %v6084 = vsel %vm6081, 1e+30, %v6051
    %v6085 = vsel %vm6082, 1e+30, %v6052
    %v6086 = vsel %vm6083, 1e+30, %v6053
    %v6087 = vsel %vm6081, 1.0, %v6054
    %v6088 = vsel %vm6082, 1.0, %v6055
    %v6089 = vsel %vm6083, 1.0, %v6056
    %v6090 = vsel %vm519, %v6084, inf
    %6091 = vmin.xlane.f32.xlu0 %v6090
    %v6092 = vpop.xlane.xlu0 %6091
    %v6093 = vsel %vm519, %v6085, inf
    %6094 = vmin.xlane.f32.xlu0 %v6093
    %v6095 = vpop.xlane.xlu0 %6094
    %v6096 = vsel %vm519, %v6086, inf
    %6097 = vmin.xlane.f32.xlu0 %v6096
    %v6098 = vpop.xlane.xlu0 %6097
    %vm6099 = vcmp.le.f32.partialorder %v6084, %v6092
    %vm6100 = vcmp.le.f32.partialorder %v6085, %v6095
    %vm6101 = vcmp.le.f32.partialorder %v6086, %v6098
    %v6102 = vsel %vm6099, %v5957, 24.0
    %v6103 = vsel %vm6100, %v5957, 24.0
    %v6104 = vsel %vm6101, %v5957, 24.0
    %v6105 = vsel %vm519, %v6102, inf
    %6106 = vmin.xlane.f32.xlu0 %v6105
    %v6107 = vpop.xlane.xlu0 %6106
    %v6108 = vsel %vm519, %v6103, inf
    %6109 = vmin.xlane.f32.xlu0 %v6108
    %v6110 = vpop.xlane.xlu0 %6109
    %v6111 = vsel %vm519, %v6104, inf
    %6112 = vmin.xlane.f32.xlu0 %v6111
    %v6113 = vpop.xlane.xlu0 %6112
    %vm6114 = vcmp.eq.f32.partialorder %v5957, %v6107
    %vm6115 = vcmp.eq.f32.partialorder %v5957, %v6110
    %vm6116 = vcmp.eq.f32.partialorder %v5957, %v6113
    %v6117 = vsel %vm6114, 1e+30, %v6084
    %v6118 = vsel %vm6115, 1e+30, %v6085
    %v6119 = vsel %vm6116, 1e+30, %v6086
    %v6120 = vsel %vm6114, 1.0, %v6087
    %v6121 = vsel %vm6115, 1.0, %v6088
    %v6122 = vsel %vm6116, 1.0, %v6089
    %v6123 = vsel %vm519, %v6117, inf
    %6124 = vmin.xlane.f32.xlu0 %v6123
    %v6125 = vpop.xlane.xlu0 %6124
    %v6126 = vsel %vm519, %v6118, inf
    %6127 = vmin.xlane.f32.xlu0 %v6126
    %v6128 = vpop.xlane.xlu0 %6127
    %v6129 = vsel %vm519, %v6119, inf
    %6130 = vmin.xlane.f32.xlu0 %v6129
    %v6131 = vpop.xlane.xlu0 %6130
    %vm6132 = vcmp.le.f32.partialorder %v6117, %v6125
    %vm6133 = vcmp.le.f32.partialorder %v6118, %v6128
    %vm6134 = vcmp.le.f32.partialorder %v6119, %v6131
    %v6135 = vsel %vm6132, %v5957, 24.0
    %v6136 = vsel %vm6133, %v5957, 24.0
    %v6137 = vsel %vm6134, %v5957, 24.0
    %v6138 = vsel %vm519, %v6135, inf
    %6139 = vmin.xlane.f32.xlu0 %v6138
    %v6140 = vpop.xlane.xlu0 %6139
    %v6141 = vsel %vm519, %v6136, inf
    %6142 = vmin.xlane.f32.xlu0 %v6141
    %v6143 = vpop.xlane.xlu0 %6142
    %v6144 = vsel %vm519, %v6137, inf
    %6145 = vmin.xlane.f32.xlu0 %v6144
    %v6146 = vpop.xlane.xlu0 %6145
    %vm6147 = vcmp.eq.f32.partialorder %v5957, %v6140
    %vm6148 = vcmp.eq.f32.partialorder %v5957, %v6143
    %vm6149 = vcmp.eq.f32.partialorder %v5957, %v6146
    %v6150 = vsel %vm6147, 1e+30, %v6117
    %v6151 = vsel %vm6148, 1e+30, %v6118
    %v6152 = vsel %vm6149, 1e+30, %v6119
    %v6153 = vsel %vm6147, 1.0, %v6120
    %v6154 = vsel %vm6148, 1.0, %v6121
    %v6155 = vsel %vm6149, 1.0, %v6122
    %v6156 = vsel %vm519, %v6150, inf
    %6157 = vmin.xlane.f32.xlu0 %v6156
    %v6158 = vpop.xlane.xlu0 %6157
    %v6159 = vsel %vm519, %v6151, inf
    %6160 = vmin.xlane.f32.xlu0 %v6159
    %v6161 = vpop.xlane.xlu0 %6160
    %v6162 = vsel %vm519, %v6152, inf
    %6163 = vmin.xlane.f32.xlu0 %v6162
    %v6164 = vpop.xlane.xlu0 %6163
    %vm6165 = vcmp.le.f32.partialorder %v6150, %v6158
    %vm6166 = vcmp.le.f32.partialorder %v6151, %v6161
    %vm6167 = vcmp.le.f32.partialorder %v6152, %v6164
    %v6168 = vsel %vm6165, %v5957, 24.0
    %v6169 = vsel %vm6166, %v5957, 24.0
    %v6170 = vsel %vm6167, %v5957, 24.0
    %v6171 = vsel %vm519, %v6168, inf
    %6172 = vmin.xlane.f32.xlu0 %v6171
    %v6173 = vpop.xlane.xlu0 %6172
    %v6174 = vsel %vm519, %v6169, inf
    %6175 = vmin.xlane.f32.xlu0 %v6174
    %v6176 = vpop.xlane.xlu0 %6175
    %v6177 = vsel %vm519, %v6170, inf
    %6178 = vmin.xlane.f32.xlu0 %v6177
    %v6179 = vpop.xlane.xlu0 %6178
    %vm6180 = vcmp.eq.f32.partialorder %v5957, %v6173
    %vm6181 = vcmp.eq.f32.partialorder %v5957, %v6176
    %vm6182 = vcmp.eq.f32.partialorder %v5957, %v6179
    %v6183 = vsel %vm6180, 1e+30, %v6150
    %v6184 = vsel %vm6181, 1e+30, %v6151
    %v6185 = vsel %vm6182, 1e+30, %v6152
    %v6186 = vsel %vm6180, 1.0, %v6153
    %v6187 = vsel %vm6181, 1.0, %v6154
    %v6188 = vsel %vm6182, 1.0, %v6155
    %v6189 = vsel %vm519, %v6183, inf
    %6190 = vmin.xlane.f32.xlu0 %v6189
    %v6191 = vpop.xlane.xlu0 %6190
    %v6192 = vsel %vm519, %v6184, inf
    %6193 = vmin.xlane.f32.xlu0 %v6192
    %v6194 = vpop.xlane.xlu0 %6193
    %v6195 = vsel %vm519, %v6185, inf
    %6196 = vmin.xlane.f32.xlu0 %v6195
    %v6197 = vpop.xlane.xlu0 %6196
    %vm6198 = vcmp.le.f32.partialorder %v6183, %v6191
    %vm6199 = vcmp.le.f32.partialorder %v6184, %v6194
    %vm6200 = vcmp.le.f32.partialorder %v6185, %v6197
    %v6201 = vsel %vm6198, %v5957, 24.0
    %v6202 = vsel %vm6199, %v5957, 24.0
    %v6203 = vsel %vm6200, %v5957, 24.0
    %v6204 = vsel %vm519, %v6201, inf
    %6205 = vmin.xlane.f32.xlu0 %v6204
    %v6206 = vpop.xlane.xlu0 %6205
    %v6207 = vsel %vm519, %v6202, inf
    %6208 = vmin.xlane.f32.xlu0 %v6207
    %v6209 = vpop.xlane.xlu0 %6208
    %v6210 = vsel %vm519, %v6203, inf
    %6211 = vmin.xlane.f32.xlu0 %v6210
    %v6212 = vpop.xlane.xlu0 %6211
    %vm6213 = vcmp.eq.f32.partialorder %v5957, %v6206
    %vm6214 = vcmp.eq.f32.partialorder %v5957, %v6209
    %vm6215 = vcmp.eq.f32.partialorder %v5957, %v6212
    %v6216 = vsel %vm6213, 1e+30, %v6183
    %v6217 = vsel %vm6214, 1e+30, %v6184
    %v6218 = vsel %vm6215, 1e+30, %v6185
    %v6219 = vsel %vm6213, 1.0, %v6186
    %v6220 = vsel %vm6214, 1.0, %v6187
    %v6221 = vsel %vm6215, 1.0, %v6188
    %v6222 = vsel %vm519, %v6216, inf
    %6223 = vmin.xlane.f32.xlu0 %v6222
    %v6224 = vpop.xlane.xlu0 %6223
    %v6225 = vsel %vm519, %v6217, inf
    %6226 = vmin.xlane.f32.xlu0 %v6225
    %v6227 = vpop.xlane.xlu0 %6226
    %v6228 = vsel %vm519, %v6218, inf
    %6229 = vmin.xlane.f32.xlu0 %v6228
    %v6230 = vpop.xlane.xlu0 %6229
    %vm6231 = vcmp.le.f32.partialorder %v6216, %v6224
    %vm6232 = vcmp.le.f32.partialorder %v6217, %v6227
    %vm6233 = vcmp.le.f32.partialorder %v6218, %v6230
    %v6234 = vsel %vm6231, %v5957, 24.0
    %v6235 = vsel %vm6232, %v5957, 24.0
    %v6236 = vsel %vm6233, %v5957, 24.0
    %v6237 = vsel %vm519, %v6234, inf
    %6238 = vmin.xlane.f32.xlu0 %v6237
    %v6239 = vpop.xlane.xlu0 %6238
    %v6240 = vsel %vm519, %v6235, inf
    %6241 = vmin.xlane.f32.xlu0 %v6240
    %v6242 = vpop.xlane.xlu0 %6241
    %v6243 = vsel %vm519, %v6236, inf
    %6244 = vmin.xlane.f32.xlu0 %v6243
    %v6245 = vpop.xlane.xlu0 %6244
    %vm6246 = vcmp.eq.f32.partialorder %v5957, %v6239
    %vm6247 = vcmp.eq.f32.partialorder %v5957, %v6242
    %vm6248 = vcmp.eq.f32.partialorder %v5957, %v6245
    %v6249 = vsel %vm6246, 1.0, %v6219
    %v6250 = vsel %vm6247, 1.0, %v6220
    %v6251 = vsel %vm6248, 1.0, %v6221
    %6252 = vst.msk [vmem:[#allocation13] sm:$0xff] %vm519, %v6249
    %6253 = vst.msk [vmem:[#allocation13 + $0x8] sm:$0xff] %vm519, %v6250
    %6254 = vst.msk [vmem:[#allocation13 + $0x10] sm:$0xff] %vm519, %v6251
    // Predicated region
    $region34: #{tpu_custom_call.1} parent=1 // pred_check
      _
    $region35: #{tpu_custom_call.1} parent=1 // pred_check_branch
      %6256 = sbr.rel (0) target = $region37
    $region36: #{tpu_custom_call.1} parent=1 // pred_region
      %s6258 = ssub.s32 384, 384
      %6259 = vsyncadd [#allocation4], %s6258
      %s6260 = sshll.u32 [#allocation10], 4
      %s6261 = int_to_ptr.vmem [resolvable:$true] %s6260
      %6266 = dma.vmem_to_hbm [thread:$0]  %s6261, 384, %s4, [#allocation4], 128, 128, 8
    $region37: #{tpu_custom_call.1} parent=1 // pred_fallthru
      _
    // Predicated region
    $region38: #{tpu_custom_call.1} parent=1 // pred_check
      _
    $region39: #{tpu_custom_call.1} parent=1 // pred_check_branch
      %6268 = sbr.rel (0) target = $region41
    $region40: #{tpu_custom_call.1} parent=1 // pred_region
      %s6270 = ssub.s32 128, 128
      %6271 = vsyncadd [#allocation12], %s6270
      %s6273 = sshll.u32 [#allocation11], 4
      %s6274 = int_to_ptr.vmem [resolvable:$true] %s6273
      %6276 = dma.vmem_to_hbm [thread:$0]  %s6274, 128, %s5, [#allocation12]
    $region41: #{tpu_custom_call.1} parent=1 // pred_fallthru
      _
    // Predicated region
    $region42: #{tpu_custom_call.1} parent=1 // pred_check
      _
    $region43: #{tpu_custom_call.1} parent=1 // pred_check_branch
      %6278 = sbr.rel (0) target = $region45
    $region44: #{tpu_custom_call.1} parent=1 // pred_region
      %s6280 = ssub.s32 384, 384
      %6281 = vsyncadd [#allocation12], %s6280
      %s6282 = sshll.u32 [#allocation13], 4
      %s6283 = int_to_ptr.vmem [resolvable:$true] %s6282
      %6288 = dma.vmem_to_hbm [thread:$0]  %s6283, 384, %s6, [#allocation12], 128, 128, 8
    $region45: #{tpu_custom_call.1} parent=1 // pred_fallthru
      _
    // Predicated region
    $region46: #{tpu_custom_call.1} parent=1 // pred_check
      _
    $region47: #{tpu_custom_call.1} parent=1 // pred_check_branch
      %6290 = sbr.rel (0) target = $region49
    $region48: #{tpu_custom_call.1} parent=1 // pred_region
      %6291 = dma.done [#allocation4], 384
    $region49: #{tpu_custom_call.1} parent=1 // pred_fallthru
      _
    // Predicated region
    $region50: #{tpu_custom_call.1} parent=1 // pred_check
      _
    $region51: #{tpu_custom_call.1} parent=1 // pred_check_branch
      %6293 = sbr.rel (0) target = $region53
    $region52: #{tpu_custom_call.1} parent=1 // pred_region
      %6294 = dma.done [#allocation12], 128
    $region53: #{tpu_custom_call.1} parent=1 // pred_fallthru
      _
    // Predicated region
    $region54: #{tpu_custom_call.1} parent=1 // pred_check
      _
    $region55: #{tpu_custom_call.1} parent=1 // pred_check_branch
      %6296 = sbr.rel (0) target = $region57
    $region56: #{tpu_custom_call.1} parent=1 // pred_region
      %6297 = dma.done [#allocation12], 384
    $region57: #{tpu_custom_call.1} parent=1 // pred_fallthru
      _
    %6298 = vsyncpa [#allocation3], 1
    %6299 = vsyncpa [#allocation6], 1
    %6300 = vsyncpa [#allocation9], 1
    %6301 = vsyncpa [#allocation4], 1
    %6302 = vsyncpa [#allocation12], 1

</llo_original>
